<compile_context>
chip_gen: v7x
topology: tpu7x:2x2x1
jax: 0.10.0
libtpu: 0.0.40
codegen_flags: <defaults>
</compile_context>

<pallas_src>
import math
from functools import partial

import jax
import jax.numpy as jnp
from jax import lax
from jax.experimental import pallas as pl
from jax.experimental.pallas import tpu as pltpu


def _flash_attn_kernel(q_ref, k_ref, v_ref, o_ref, m_sc, l_sc, acc_sc):
    """Online-softmax attention for one (batch, q-tile) block, heads batched.

    q_ref: (h, tq, d_k)  k_ref: (h, tk, d_k)  v_ref: (h, tk, d_v)
    o_ref: (tq, h*d_v)   scratch: m/l (h, tq, 1) f32, acc (h, tq, d_v) f32
    """
    kv = pl.program_id(2)

    @pl.when(kv == 0)
    def _():
        m_sc[...] = jnp.full(m_sc.shape, -jnp.inf, dtype=m_sc.dtype)
        l_sc[...] = jnp.zeros(l_sc.shape, dtype=l_sc.dtype)
        acc_sc[...] = jnp.zeros(acc_sc.shape, dtype=acc_sc.dtype)

    # Scores: heads batched, K^T folded into the contraction dims (no XLU transpose).
    s = lax.dot_general(
        q_ref[...], k_ref[...],
        dimension_numbers=(((2,), (2,)), ((0,), (0,))),
        preferred_element_type=jnp.float32)                      # (h, tq, tk)

    m_prev = m_sc[...]
    m_new = jnp.maximum(m_prev, s.max(axis=-1, keepdims=True))
    alpha = jnp.exp(m_prev - m_new)                              # rescale old stats
    p = jnp.exp(s - m_new)

    l_sc[...] = alpha * l_sc[...] + p.sum(axis=-1, keepdims=True)
    acc_sc[...] = alpha * acc_sc[...] + lax.dot_general(
        p.astype(v_ref.dtype), v_ref[...],
        dimension_numbers=(((2,), (1,)), ((0,), (0,))),
        preferred_element_type=jnp.float32)                      # (h, tq, d_v)
    m_sc[...] = m_new

    @pl.when(kv == pl.num_programs(2) - 1)
    def _():
        h, tq, d_v = acc_sc.shape
        # Exact softmax normalization (approx reciprocal was outside tolerance).
        out = acc_sc[...] / l_sc[...]
        # Fold heads into the lane axis -> (tq, h*d_v) lane-dense store, and the
        # wrapper needs no post-kernel transpose/reshape pass over HBM.
        o_ref[...] = jnp.transpose(out, (1, 0, 2)).reshape(tq, h * d_v).astype(o_ref.dtype)


def _vmem_budget_bytes():
    """Generation-aware VMEM budget (leave headroom for Mosaic internals)."""
    try:
        cap = int(pltpu.get_tpu_info().vmem_capacity_bytes)
    except Exception:
        cap = 64 << 20           # conservative default: assume v7x (64 MiB / TC)
    if cap <= (64 << 20):
        return 40 << 20          # v7x
    return 96 << 20              # v5e / v6e (128 MiB parts)


def _divisible_candidates(n, cands):
    out = [c for c in cands if c <= n and n % c == 0]
    return out or [n]


def _choose_tiles(nq, nk, h, d_k, d_v, in_itemsize, budget, b_s, tq=None, tk=None):
    # q-tile: as large as possible (fewest K/V re-streams from HBM).
    tq_cands = [tq] if tq else _divisible_candidates(
        nq, (2048, 1024, 512, 256, 128, 64, 32, 16, 8))
    # k-tile: lane axis of the score tile -> multiples of 128 only (or full nk).
    if tk:
        tk_cands = [tk]
    else:
        mult128 = [c for c in range((nk // 128) * 128, 0, -128) if nk % c == 0]
        tk_cands = mult128 or [nk]

    def est(tq_, tk_):
        blocks = 2 * in_itemsize * h * (tq_ * d_k + tk_ * d_k + tk_ * d_v)  # dbl-buffered in
        blocks += 2 * 4 * tq_ * h * d_v                                     # dbl-buffered out (f32)
        scratch = 4 * (2 * h * tq_ + h * tq_ * d_v)                         # m, l, acc
        live = 2 * 4 * h * tq_ * tk_                                        # score tile + exp copy
        return blocks + scratch + live

    best = None
    for tq_ in tq_cands:
        for tk_ in tk_cands:
            if 2 * est(tq_, tk_) <= budget:                                 # 2x headroom
                best = (tq_, tk_)
                break
        if best is not None:
            break
    if best is None:
        best = (tq_cands[-1], tk_cands[-1])
    tq_, tk_ = best

    # v7x has 2 TensorCores: keep >= 2 parallel grid slices so neither idles.
    if tq is None and b_s * (nq // tq_) < 2:
        smaller = [c for c in tq_cands if c < tq_]
        if smaller:
            tq_ = smaller[0]

    vmem_limit = int(min(max(2 * est(tq_, tk_), 16 << 20), budget))
    return tq_, tk_, vmem_limit


def attention_core(q, k, v, *, tq=None, tk=None):
    """q: (b, h, nq, d_k), k: (b, h, nk, d_k), v: (b, h, nk, d_v) -> (b, nq, h*d_v) f32."""
    b_s, h, nq, d_k = q.shape
    nk, d_v = v.shape[2], v.shape[3]

    budget = _vmem_budget_bytes()
    tq, tk, vmem_limit = _choose_tiles(
        nq, nk, h, d_k, d_v, jnp.dtype(q.dtype).itemsize, budget, b_s, tq=tq, tk=tk)
    assert nq % tq == 0 and nk % tk == 0, "tile sizes must divide nq / nk"

    grid = (b_s, nq // tq, nk // tk)

    grid_spec = pltpu.PrefetchScalarGridSpec(
        num_scalar_prefetch=0,
        grid=grid,
        in_specs=[
            pl.BlockSpec((None, h, tq, d_k), lambda b, qi, ki: (b, 0, qi, 0)),
            pl.BlockSpec((None, h, tk, d_k), lambda b, qi, ki: (b, 0, ki, 0)),
            pl.BlockSpec((None, h, tk, d_v), lambda b, qi, ki: (b, 0, ki, 0)),
        ],
        # Lane-dense output block: heads folded into the last axis.
        out_specs=pl.BlockSpec((None, tq, h * d_v), lambda b, qi, ki: (b, qi, 0)),
        scratch_shapes=[
            pltpu.VMEM((h, tq, 1), jnp.float32),    # running max
            pltpu.VMEM((h, tq, 1), jnp.float32),    # running denom
            pltpu.VMEM((h, tq, d_v), jnp.float32),  # running output accumulator
        ],
    )

    return pl.pallas_call(
        _flash_attn_kernel,
        out_shape=jax.ShapeDtypeStruct((b_s, nq, h * d_v), jnp.float32),
        grid_spec=grid_spec,
        compiler_params=pltpu.CompilerParams(
            dimension_semantics=("parallel", "parallel", "arbitrary"),
            vmem_limit_bytes=vmem_limit),
    )(q, k, v)


@partial(jax.jit, static_argnames=("h", "d_k", "d_v", "tq", "tk", "use_bf16"))
def scaled_dot_product_attention(queries, keys, values, params, *,
                                 h, d_k, d_v, tq=None, tk=None, use_bf16=False):
    """Forward pass of ScaledDotProductAttention (eval mode: dropout = identity)."""
    Wq, bq, Wk, bk, Wv, bv, Wo, bo = params        # PyTorch nn.Linear layout: W is (out, in)
    b_s, nq, d_model = queries.shape
    nk = keys.shape[1]
    scale = jnp.float32(1.0 / math.sqrt(d_k))

    # Projections directly in head-major (b, h, n, d) layout — no extra
    # reshape/transpose HBM passes. 1/sqrt(d_k) folded into the Q projection.
    q = jnp.einsum('bnm,hkm->bhnk', queries, (Wq * scale).reshape(h, d_k, d_model)) \
        + (bq * scale).reshape(1, h, 1, d_k)
    k = jnp.einsum('bnm,hkm->bhnk', keys, Wk.reshape(h, d_k, d_model)) \
        + bk.reshape(1, h, 1, d_k)
    v = jnp.einsum('bnm,hvm->bhnv', values, Wv.reshape(h, d_v, d_model)) \
        + bv.reshape(1, h, 1, d_v)

    if use_bf16:  # halves K/V DMA bytes & MXU push traffic; f32 accumulation kept
        q, k, v = (t.astype(jnp.bfloat16) for t in (q, k, v))

    out = attention_core(q, k, v, tq=tq, tk=tk)                  # (b, nq, h*d_v) f32

    return (out @ Wo.T + bo).astype(queries.dtype)


def reference_forward(queries, keys, values, W, *, h, d_k, d_v):
    """Pure-JAX re-implementation of the PyTorch forward (eval mode)."""
    Wq, bq, Wk, bk, Wv, bv, Wo, bo = W
    b_s, nq, d_model = queries.shape
    nk = keys.shape[1]
    q = (queries @ Wq.T + bq).reshape(b_s, nq, h, d_k).transpose(0, 2, 1, 3)
    k = (keys @ Wk.T + bk).reshape(b_s, nk, h, d_k).transpose(0, 2, 3, 1)
    v = (values @ Wv.T + bv).reshape(b_s, nk, h, d_v).transpose(0, 2, 1, 3)
    att = jnp.matmul(q, k) / jnp.sqrt(jnp.float32(d_k))
    att = jax.nn.softmax(att, axis=-1)
    out = jnp.matmul(att, v).transpose(0, 2, 1, 3).reshape(b_s, nq, h * d_v)
    return out @ Wo.T + bo


if __name__ == "__main__":
    # Small shapes consistent with the module's forward signature; nq/nk large
    # enough to exercise multiple q-tiles and multiple kv steps.
    b_s, nq, nk = 2, 256, 384
    d_model, d_k, d_v, h = 32, 16, 16, 4

    key = jax.random.PRNGKey(0)
    k_q, k_k, k_v, k_wq, k_wk, k_wv, k_wo = jax.random.split(key, 7)

    queries = jax.random.normal(k_q, (b_s, nq, d_model), jnp.float32)
    keys_in = jax.random.normal(k_k, (b_s, nk, d_model), jnp.float32)
    values = jax.random.normal(k_v, (b_s, nk, d_model), jnp.float32)

    # nn.Linear layout (out_features, in_features); bias = 0 as in init_weights().
    # std = 0.1 (rather than the module's 0.001) so the numerical check is meaningful.
    std = 0.1
    Wq = std * jax.random.normal(k_wq, (h * d_k, d_model), jnp.float32)
    Wk = std * jax.random.normal(k_wk, (h * d_k, d_model), jnp.float32)
    Wv = std * jax.random.normal(k_wv, (h * d_v, d_model), jnp.float32)
    Wo = std * jax.random.normal(k_wo, (d_model, h * d_v), jnp.float32)
    bq = jnp.zeros((h * d_k,), jnp.float32)
    bk = jnp.zeros((h * d_k,), jnp.float32)
    bv = jnp.zeros((h * d_v,), jnp.float32)
    bo = jnp.zeros((d_model,), jnp.float32)

    params = (Wq, bq, Wk, bk, Wv, bv, Wo, bo)
    ref = reference_forward(queries, keys_in, values, params, h=h, d_k=d_k, d_v=d_v)

    # 1) Explicit tiles: grid (2, 2, 3) exercises the multi-step online-softmax path.
    out = scaled_dot_product_attention(queries, keys_in, values, params,
                                       h=h, d_k=d_k, d_v=d_v, tq=128, tk=128)
    out = jax.block_until_ready(out)
    assert out.shape == (b_s, nq, d_model)
    err = float(jnp.max(jnp.abs(out - ref)))
    assert jnp.allclose(out, ref, rtol=2e-3, atol=5e-4), \
        f"mismatch vs reference (explicit tiles, max abs err {err})"

    # 2) Auto tile selection (largest tiles fitting the generation-aware VMEM budget).
    out_auto = scaled_dot_product_attention(queries, keys_in, values, params,
                                            h=h, d_k=d_k, d_v=d_v)
    out_auto = jax.block_until_ready(out_auto)
    err_auto = float(jnp.max(jnp.abs(out_auto - ref)))
    assert jnp.allclose(out_auto, ref, rtol=2e-3, atol=5e-4), \
        f"mismatch vs reference (auto tiles, max abs err {err_auto})"

    print("KERNEL_OK")
</pallas_src>

<mosaic_0001>
module attributes {stable_mosaic.version = 11 : i64} {
  func.func @_flash_attn_kernel(%arg0: i32, %arg1: i32, %arg2: i32, %arg3: memref<1x4x128x16xf32, #tpu.memory_space<vmem>>, %arg4: memref<1x4x128x16xf32, #tpu.memory_space<vmem>>, %arg5: memref<1x4x128x16xf32, #tpu.memory_space<vmem>>, %arg6: memref<1x128x64xf32, #tpu.memory_space<vmem>>, %arg7: memref<4x128x1xf32, #tpu.memory_space<vmem>>, %arg8: memref<4x128x1xf32, #tpu.memory_space<vmem>>, %arg9: memref<4x128x16xf32, #tpu.memory_space<vmem>>) attributes {dimension_semantics = [#tpu.dimension_semantics<parallel>, #tpu.dimension_semantics<parallel>, #tpu.dimension_semantics<arbitrary>], iteration_bounds = array<i64: 2, 2, 3>, scalar_prefetch = 0 : i64, scratch_operands = 3 : i64, tpu.core_type = #tpu.core_type<tc>, window_params = [{transform_indices = @transform_0, window_bounds = array<i64: 1, 4, 128, 16>}, {transform_indices = @transform_1, window_bounds = array<i64: 1, 4, 128, 16>}, {transform_indices = @transform_2, window_bounds = array<i64: 1, 4, 128, 16>}, {transform_indices = @transform_3, window_bounds = array<i64: 1, 128, 64>}]} {
    %c0_i32 = arith.constant 0 : i32
    %0 = arith.cmpi eq, %arg2, %c0_i32 : i32
    %1 = arith.extui %0 : i1 to i32
    %c0_i32_0 = arith.constant 0 : i32
    %2 = arith.cmpi ne, %1, %c0_i32_0 : i32
    scf.if %2 {
      %cst_34 = arith.constant 0xFF800000 : f32
      %35 = vector.broadcast %cst_34 : f32 to vector<4x128x1xf32>
      %c0_35 = arith.constant 0 : index
      %c0_36 = arith.constant 0 : index
      %c0_37 = arith.constant 0 : index
      %36 = vector.load %arg7[%c0_35, %c0_36, %c0_37] : memref<4x128x1xf32, #tpu.memory_space<vmem>>, vector<4x128x1xf32>
      tpu.vector_store %arg7[%c0_35, %c0_36, %c0_37], %35 {strides = array<i32>} : memref<4x128x1xf32, #tpu.memory_space<vmem>>, vector<4x128x1xf32>,
      %cst_38 = arith.constant 0.000000e+00 : f32
      %37 = vector.broadcast %cst_38 : f32 to vector<4x128x1xf32>
      %c0_39 = arith.constant 0 : index
      %c0_40 = arith.constant 0 : index
      %c0_41 = arith.constant 0 : index
      %38 = vector.load %arg8[%c0_39, %c0_40, %c0_41] : memref<4x128x1xf32, #tpu.memory_space<vmem>>, vector<4x128x1xf32>
      tpu.vector_store %arg8[%c0_39, %c0_40, %c0_41], %37 {strides = array<i32>} : memref<4x128x1xf32, #tpu.memory_space<vmem>>, vector<4x128x1xf32>,
      %cst_42 = arith.constant 0.000000e+00 : f32
      %39 = vector.broadcast %cst_42 : f32 to vector<4x128x16xf32>
      %c0_43 = arith.constant 0 : index
      %c0_44 = arith.constant 0 : index
      %c0_45 = arith.constant 0 : index
      %40 = vector.load %arg9[%c0_43, %c0_44, %c0_45] : memref<4x128x16xf32, #tpu.memory_space<vmem>>, vector<4x128x16xf32>
      tpu.vector_store %arg9[%c0_43, %c0_44, %c0_45], %39 {strides = array<i32>} : memref<4x128x16xf32, #tpu.memory_space<vmem>>, vector<4x128x16xf32>,
    } else {
    }
    %c0 = arith.constant 0 : index
    %c0_1 = arith.constant 0 : index
    %c0_2 = arith.constant 0 : index
    %c0_3 = arith.constant 0 : index
    %3 = vector.load %arg3[%c0, %c0_1, %c0_2, %c0_3] : memref<1x4x128x16xf32, #tpu.memory_space<vmem>>, vector<1x4x128x16xf32>
    %4 = vector.shape_cast %3 : vector<1x4x128x16xf32> to vector<4x128x16xf32>
    %c0_4 = arith.constant 0 : index
    %c0_5 = arith.constant 0 : index
    %c0_6 = arith.constant 0 : index
    %c0_7 = arith.constant 0 : index
    %5 = vector.load %arg4[%c0_4, %c0_5, %c0_6, %c0_7] : memref<1x4x128x16xf32, #tpu.memory_space<vmem>>, vector<1x4x128x16xf32>
    %6 = vector.shape_cast %5 : vector<1x4x128x16xf32> to vector<4x128x16xf32>
    %cst = arith.constant dense<0.000000e+00> : vector<4x128x128xf32>
    %7 = tpu.matmul %4, %6, %cst {dimension_numbers = #tpu.dot_dimension_numbers<[2], [2], [1], [1], [0, 0, 0, 1, 1, 1], [0], [0]>} : vector<4x128x16xf32>, vector<4x128x16xf32>, vector<4x128x128xf32> -> vector<4x128x128xf32>
    %c0_8 = arith.constant 0 : index
    %c0_9 = arith.constant 0 : index
    %c0_10 = arith.constant 0 : index
    %8 = vector.load %arg7[%c0_8, %c0_9, %c0_10] : memref<4x128x1xf32, #tpu.memory_space<vmem>>, vector<4x128x1xf32>
    %cst_11 = arith.constant dense<0xFF800000> : vector<4x128xf32>
    %9 = vector.multi_reduction <maximumf>, %7, %cst_11 [2] : vector<4x128x128xf32> to vector<4x128xf32>
    %10 = vector.shape_cast %9 : vector<4x128xf32> to vector<4x128x1xf32>
    %11 = arith.maximumf %8, %10 : vector<4x128x1xf32>
    %12 = arith.subf %8, %11 : vector<4x128x1xf32>
    %13 = math.exp %12 : vector<4x128x1xf32>
    %14 = vector.broadcast %11 : vector<4x128x1xf32> to vector<4x128x128xf32>
    %15 = arith.subf %7, %14 : vector<4x128x128xf32>
    %16 = math.exp %15 : vector<4x128x128xf32>
    %c0_12 = arith.constant 0 : index
    %c0_13 = arith.constant 0 : index
    %c0_14 = arith.constant 0 : index
    %17 = vector.load %arg8[%c0_12, %c0_13, %c0_14] : memref<4x128x1xf32, #tpu.memory_space<vmem>>, vector<4x128x1xf32>
    %18 = arith.mulf %13, %17 : vector<4x128x1xf32>
    %cst_15 = arith.constant dense<0.000000e+00> : vector<4x128xf32>
    %19 = vector.multi_reduction <add>, %16, %cst_15 [2] : vector<4x128x128xf32> to vector<4x128xf32>
    %20 = vector.shape_cast %19 : vector<4x128xf32> to vector<4x128x1xf32>
    %21 = arith.addf %18, %20 : vector<4x128x1xf32>
    %c0_16 = arith.constant 0 : index
    %c0_17 = arith.constant 0 : index
    %c0_18 = arith.constant 0 : index
    %22 = vector.load %arg8[%c0_16, %c0_17, %c0_18] : memref<4x128x1xf32, #tpu.memory_space<vmem>>, vector<4x128x1xf32>
    tpu.vector_store %arg8[%c0_16, %c0_17, %c0_18], %21 {strides = array<i32>} : memref<4x128x1xf32, #tpu.memory_space<vmem>>, vector<4x128x1xf32>,
    %c0_19 = arith.constant 0 : index
    %c0_20 = arith.constant 0 : index
    %c0_21 = arith.constant 0 : index
    %23 = vector.load %arg9[%c0_19, %c0_20, %c0_21] : memref<4x128x16xf32, #tpu.memory_space<vmem>>, vector<4x128x16xf32>
    %24 = vector.broadcast %13 : vector<4x128x1xf32> to vector<4x128x16xf32>
    %25 = arith.mulf %24, %23 : vector<4x128x16xf32>
    %c0_22 = arith.constant 0 : index
    %c0_23 = arith.constant 0 : index
    %c0_24 = arith.constant 0 : index
    %c0_25 = arith.constant 0 : index
    %26 = vector.load %arg5[%c0_22, %c0_23, %c0_24, %c0_25] : memref<1x4x128x16xf32, #tpu.memory_space<vmem>>, vector<1x4x128x16xf32>
    %27 = vector.shape_cast %26 : vector<1x4x128x16xf32> to vector<4x128x16xf32>
    %cst_26 = arith.constant dense<0.000000e+00> : vector<4x128x16xf32>
    %28 = tpu.matmul %16, %27, %cst_26 {dimension_numbers = #tpu.dot_dimension_numbers<[2], [1], [1], [2], [0, 0, 0, 1, 1, 2], [0], [0]>} : vector<4x128x128xf32>, vector<4x128x16xf32>, vector<4x128x16xf32> -> vector<4x128x16xf32>
    %29 = arith.addf %25, %28 : vector<4x128x16xf32>
    %c0_27 = arith.constant 0 : index
    %c0_28 = arith.constant 0 : index
    %c0_29 = arith.constant 0 : index
    %30 = vector.load %arg9[%c0_27, %c0_28, %c0_29] : memref<4x128x16xf32, #tpu.memory_space<vmem>>, vector<4x128x16xf32>
    tpu.vector_store %arg9[%c0_27, %c0_28, %c0_29], %29 {strides = array<i32>} : memref<4x128x16xf32, #tpu.memory_space<vmem>>, vector<4x128x16xf32>,
    %c0_30 = arith.constant 0 : index
    %c0_31 = arith.constant 0 : index
    %c0_32 = arith.constant 0 : index
    %31 = vector.load %arg7[%c0_30, %c0_31, %c0_32] : memref<4x128x1xf32, #tpu.memory_space<vmem>>, vector<4x128x1xf32>
    tpu.vector_store %arg7[%c0_30, %c0_31, %c0_32], %11 {strides = array<i32>} : memref<4x128x1xf32, #tpu.memory_space<vmem>>, vector<4x128x1xf32>,
    %c2_i32 = arith.constant 2 : i32
    %32 = arith.cmpi eq, %arg2, %c2_i32 : i32
    %33 = arith.extui %32 : i1 to i32
    %c0_i32_33 = arith.constant 0 : i32
    %34 = arith.cmpi ne, %33, %c0_i32_33 : i32
    scf.if %34 {
      %c0_34 = arith.constant 0 : index
      %c0_35 = arith.constant 0 : index
      %c0_36 = arith.constant 0 : index
      %35 = vector.load %arg9[%c0_34, %c0_35, %c0_36] : memref<4x128x16xf32, #tpu.memory_space<vmem>>, vector<4x128x16xf32>
      %c0_37 = arith.constant 0 : index
      %c0_38 = arith.constant 0 : index
      %c0_39 = arith.constant 0 : index
      %36 = vector.load %arg8[%c0_37, %c0_38, %c0_39] : memref<4x128x1xf32, #tpu.memory_space<vmem>>, vector<4x128x1xf32>
      %37 = vector.broadcast %36 : vector<4x128x1xf32> to vector<4x128x16xf32>
      %38 = arith.divf %35, %37 : vector<4x128x16xf32>
      %39 = tpu.transpose %38, [1, 0, 2] : vector<4x128x16xf32> -> vector<128x4x16xf32>
      %40 = vector.shape_cast %39 : vector<128x4x16xf32> to vector<128x64xf32>
      %c0_40 = arith.constant 0 : index
      %c0_41 = arith.constant 0 : index
      %c0_42 = arith.constant 0 : index
      %41 = vector.load %arg6[%c0_40, %c0_41, %c0_42] : memref<1x128x64xf32, #tpu.memory_space<vmem>>, vector<1x128x64xf32>
      %42 = vector.shape_cast %41 : vector<1x128x64xf32> to vector<128x64xf32>
      %43 = vector.shape_cast %40 : vector<128x64xf32> to vector<1x128x64xf32>
      tpu.vector_store %arg6[%c0_40, %c0_41, %c0_42], %43 {strides = array<i32>} : memref<1x128x64xf32, #tpu.memory_space<vmem>>, vector<1x128x64xf32>,
    } else {
    }
    return
  }
  func.func @transform_0(%arg0: i32, %arg1: i32, %arg2: i32) -> (i32, i32, i32, i32) {
    %c0_i32 = arith.constant 0 : i32
    %c0_i32_0 = arith.constant 0 : i32
    %c0_i32_1 = arith.constant 0 : i32
    return %arg0, %c0_i32, %arg1, %c0_i32_0 : i32, i32, i32, i32
  }
  func.func @transform_1(%arg0: i32, %arg1: i32, %arg2: i32) -> (i32, i32, i32, i32) {
    %c0_i32 = arith.constant 0 : i32
    %c0_i32_0 = arith.constant 0 : i32
    %c0_i32_1 = arith.constant 0 : i32
    return %arg0, %c0_i32, %arg2, %c0_i32_0 : i32, i32, i32, i32
  }
  func.func @transform_2(%arg0: i32, %arg1: i32, %arg2: i32) -> (i32, i32, i32, i32) {
    %c0_i32 = arith.constant 0 : i32
    %c0_i32_0 = arith.constant 0 : i32
    %c0_i32_1 = arith.constant 0 : i32
    return %arg0, %c0_i32, %arg2, %c0_i32_0 : i32, i32, i32, i32
  }
  func.func @transform_3(%arg0: i32, %arg1: i32, %arg2: i32) -> (i32, i32, i32) {
    %c0_i32 = arith.constant 0 : i32
    %c0_i32_0 = arith.constant 0 : i32
    return %arg0, %arg1, %c0_i32 : i32, i32, i32
  }
}

</mosaic_0001>

<llo_original>
// kernel: scaled_dot_product_attention.1
$region0: #{scaled_dot_product_attention.1}
  #allocation0 [shape = 'u32[]', space=smem, size = 0x4, offset = 0x4, fixed_abs, tag = 'smem constant byte address 0x4 - core index']
  #allocation1 [shape = 'u32[144,128]{1,0:T(1,128)}', space=vmem, size = 0x12000, scoped, tag = 'internal scratch']
  #allocation2 [shape = 'f32[4,128,1]{2,1,0:T(8,128)}', space=vmem, size = 0x40000, scoped, tag = 'scratch operand']
  #allocation3 [shape = 'f32[4,128,1]{2,1,0:T(8,128)}', space=vmem, size = 0x40000, scoped, tag = 'scratch operand']
  #allocation4 [shape = 'f32[4,128,16]{2,1,0:T(8,128)}', space=vmem, size = 0x40000, scoped, tag = 'scratch operand']
  %s0 = inlined_call_operand.vmem [shape: f32[2,4,256,16], index: 0, kind: input, shape index: {}]
  %s1 = inlined_call_operand.vmem [shape: f32[2,4,384,16], index: 1, kind: input, shape index: {}]
  %s2 = inlined_call_operand.vmem [shape: f32[2,4,384,16], index: 2, kind: input, shape index: {}]
  %s3 = inlined_call_operand.vmem [shape: f32[2,256,64], index: 3, kind: output, shape index: {}]
  %s4 = sld [smem:[#allocation0]]
  $region167: #{scaled_dot_product_attention.1} parent=0
    _
  %s6 = ssub.s32 1, %s4
  %s7 = scalar_select 0, %s6, %s4
  $region1: #{scaled_dot_product_attention.1} parent=0
    #allocation5 [shape = 'u8[524288]{0}', space=vmem, size = 0x80000, scoped, tag = 'input window, operand 0']
    #allocation6 [shape = 'u8[524288]{0}', space=vmem, size = 0x80000, scoped, tag = 'input window, operand 1']
    #allocation7 [shape = 'u8[524288]{0}', space=vmem, size = 0x80000, scoped, tag = 'input window, operand 2']
    loop: start=0, step=1, limit=14
    $region2: #{scaled_dot_product_attention.1} parent=1 // loop_pre_header
      _
    $region3: #{scaled_dot_product_attention.1} parent=1 // loop_header
      %s9 = sphi 0, %s13
      %p10 = scmp.ge.s32.totalorder %s9, 14
      %s16 = sphi 0, %s35
      %s17 = sphi 0, %s31
      %s18 = sphi 0, %s27
      %s19 = sphi 0, %s16
      %s20 = sphi 0, %s17
      %s21 = sphi 0, %s18
      %s22 = sphi 0, %s19
      %s23 = sphi 0, %s20
      %s24 = sphi 0, %s21
      %s40 = sphi 0, %s42
      %s43 = sphi 0, %s40
      %s44 = sphi 0, %s43
      %s60 = sphi 0, %s44
      %s68 = sphi 0, %s70
      %s71 = sphi 0, %s68
      %s72 = sphi 0, %s71
      %s88 = sphi 0, %s72
      %s96 = sphi 0, %s98
      %s99 = sphi 0, %s96
      %s100 = sphi 0, %s99
      %s116 = sphi 0, %s100
      %s124 = sphi 0, %s126
      %s127 = sphi 0, %s124
      %s128 = sphi 0, %s127
      %s144 = sphi 0, %s128
    $region4: #{scaled_dot_product_attention.1} parent=1 // loop_header_branch
      %12 = sbr.rel (%p10) target = $region8
    $region5: #{scaled_dot_product_attention.1} parent=1 // loop_body
      %s14 = ssub.s32 %s9, 1
      %s15 = ssub.s32 %s9, 2
      %s25 = sadd.s32 1, %s18
      %p26 = scmp.ge.s32.totalorder %s25, 3
      %s27 = scalar_select %p26, 0, %s25
      %s28 = sadd.s32 1, %s17
      %s29 = scalar_select %p26, %s28, %s17
      %p30 = scmp.ge.s32.totalorder %s29, 2
      %s31 = scalar_select %p30, 0, %s29
      %s32 = sadd.s32 1, %s16
      %s33 = scalar_select %p30, %s32, %s16
      %p34 = scmp.ge.s32.totalorder %s33, 2
      %s35 = scalar_select %p34, 0, %s33
      %s36 = ssub.s32 %s16, %s35
      %s37 = ssub.s32 %s17, %s31
      %s38 = sor.u32 %s36, %s37
      %p39 = scmp.eq.s32.totalorder %s38, 0
      %s41 = sadd.s32 %s40, 1
      %s42 = scalar_select %p39, %s40, %s41
      %p45 = pneg %p39
      %p46 = scmp.eq.s32.totalorder %s9, 11
      %p47 = por %p45, %p46
      %p48 = scmp.ne.s32.totalorder %s40, %s43
      %p49 = scmp.eq.s32.totalorder %s9, 0
      %p50 = por %p48, %p49
      %p51 = scmp.ne.s32.totalorder %s40, %s43
      %p52 = scmp.eq.s32.totalorder %s14, 11
      %p53 = por %p51, %p52
      %p54 = scmp.ne.s32.totalorder %s43, %s44
      %p55 = scmp.eq.s32.totalorder %s14, 0
      %p56 = por %p54, %p55
      %p57 = scmp.ne.s32.totalorder %s43, %s44
      %p58 = scmp.eq.s32.totalorder %s15, 11
      %p59 = por %p57, %p58
      %p61 = scmp.ne.s32.totalorder %s44, %s60
      %p62 = scmp.eq.s32.totalorder %s15, 0
      %p63 = por %p61, %p62
      %s64 = ssub.s32 %s16, %s35
      %s65 = ssub.s32 %s18, %s27
      %s66 = sor.u32 %s64, %s65
      %p67 = scmp.eq.s32.totalorder %s66, 0
      %s69 = sadd.s32 %s68, 1
      %s70 = scalar_select %p67, %s68, %s69
      %p73 = pneg %p67
      %p74 = scmp.eq.s32.totalorder %s9, 11
      %p75 = por %p73, %p74
      %p76 = scmp.ne.s32.totalorder %s68, %s71
      %p77 = scmp.eq.s32.totalorder %s9, 0
      %p78 = por %p76, %p77
      %p79 = scmp.ne.s32.totalorder %s68, %s71
      %p80 = scmp.eq.s32.totalorder %s14, 11
      %p81 = por %p79, %p80
      %p82 = scmp.ne.s32.totalorder %s71, %s72
      %p83 = scmp.eq.s32.totalorder %s14, 0
      %p84 = por %p82, %p83
      %p85 = scmp.ne.s32.totalorder %s71, %s72
      %p86 = scmp.eq.s32.totalorder %s15, 11
      %p87 = por %p85, %p86
      %p89 = scmp.ne.s32.totalorder %s72, %s88
      %p90 = scmp.eq.s32.totalorder %s15, 0
      %p91 = por %p89, %p90
      %s92 = ssub.s32 %s16, %s35
      %s93 = ssub.s32 %s18, %s27
      %s94 = sor.u32 %s92, %s93
      %p95 = scmp.eq.s32.totalorder %s94, 0
      %s97 = sadd.s32 %s96, 1
      %s98 = scalar_select %p95, %s96, %s97
      %p101 = pneg %p95
      %p102 = scmp.eq.s32.totalorder %s9, 11
      %p103 = por %p101, %p102
      %p104 = scmp.ne.s32.totalorder %s96, %s99
      %p105 = scmp.eq.s32.totalorder %s9, 0
      %p106 = por %p104, %p105
      %p107 = scmp.ne.s32.totalorder %s96, %s99
      %p108 = scmp.eq.s32.totalorder %s14, 11
      %p109 = por %p107, %p108
      %p110 = scmp.ne.s32.totalorder %s99, %s100
      %p111 = scmp.eq.s32.totalorder %s14, 0
      %p112 = por %p110, %p111
      %p113 = scmp.ne.s32.totalorder %s99, %s100
      %p114 = scmp.eq.s32.totalorder %s15, 11
      %p115 = por %p113, %p114
      %p117 = scmp.ne.s32.totalorder %s100, %s116
      %p118 = scmp.eq.s32.totalorder %s15, 0
      %p119 = por %p117, %p118
      %s120 = ssub.s32 %s16, %s35
      %s121 = ssub.s32 %s17, %s31
      %s122 = sor.u32 %s120, %s121
      %p123 = scmp.eq.s32.totalorder %s122, 0
      %s125 = sadd.s32 %s124, 1
      %s126 = scalar_select %p123, %s124, %s125
      %p129 = pneg %p123
      %p130 = scmp.eq.s32.totalorder %s9, 11
      %p131 = por %p129, %p130
      %p132 = scmp.ne.s32.totalorder %s124, %s127
      %p133 = scmp.eq.s32.totalorder %s9, 0
      %p134 = por %p132, %p133
      %p135 = scmp.ne.s32.totalorder %s124, %s127
      %p136 = scmp.eq.s32.totalorder %s14, 11
      %p137 = por %p135, %p136
      %p138 = scmp.ne.s32.totalorder %s127, %s128
      %p139 = scmp.eq.s32.totalorder %s14, 0
      %p140 = por %p138, %p139
      %p141 = scmp.ne.s32.totalorder %s127, %s128
      %p142 = scmp.eq.s32.totalorder %s15, 11
      %p143 = por %p141, %p142
      %p145 = scmp.ne.s32.totalorder %s128, %s144
      %p146 = scmp.eq.s32.totalorder %s15, 0
      %p147 = por %p145, %p146
      %p148 = scmp.le.s32.totalorder 1, %s9
      %p149 = scmp.lt.s32.totalorder %s9, 13
      %p150 = pnand %p148, %p149
      %p151 = pneg %p150
      // Predicated region
      $region9: #{scaled_dot_product_attention.1} parent=5 // pred_check
        _
      $region10: #{scaled_dot_product_attention.1} parent=5 // pred_check_branch
        %153 = sbr.rel (%p150) target = $region12
      $region11: #{scaled_dot_product_attention.1} parent=5 // pred_region
        %s154 = ssub.s32 %s9, 1
      $region12: #{scaled_dot_product_attention.1} parent=5 // pred_fallthru
        _
      %p155 = scmp.lt.s32.totalorder %s9, 12
      // Predicated region
      $region13: #{scaled_dot_product_attention.1} parent=5 // pred_check
        %p156 = pneg %p155
      $region14: #{scaled_dot_product_attention.1} parent=5 // pred_check_branch
        %158 = sbr.rel (%p156) target = $region16
      $region15: #{scaled_dot_product_attention.1} parent=5 // pred_region
        // Predicated region
        $region17: #{scaled_dot_product_attention.1} parent=15 // pred_check
          %p159 = pneg %p50
        $region18: #{scaled_dot_product_attention.1} parent=15 // pred_check_branch
          %161 = sbr.rel (%p159) target = $region20
        $region19: #{scaled_dot_product_attention.1} parent=15 // pred_region
          %s162 = sand.u32 %s40, 1
          %s163 = sand.u32 %s40, 1
          %s164 = smul.addr %s163, 512
          %s165 = scalar_lea.vmem [#allocation5], %s164
          %s166 = smul.u32 16, %s17
          %s167 = smul.addr %s16, 128
          %s168 = sadd.s32 %s166, %s167
          %s169 = smul.addr %s168, 8
          %s170 = scalar_lea.vmem %s0, %s169
          // Predicated region
          $region21: #{scaled_dot_product_attention.1} parent=19 // pred_check
            _
          $region22: #{scaled_dot_product_attention.1} parent=19 // pred_check_branch
            %172 = sbr.rel (0) target = $region24
          $region23: #{scaled_dot_product_attention.1} parent=19 // pred_region
            // Predicated region
            $region25: #{scaled_dot_product_attention.1} parent=23 // pred_check
              _
            $region26: #{scaled_dot_product_attention.1} parent=23 // pred_check_branch
              %174 = sbr.rel (0) target = $region28
            $region27: #{scaled_dot_product_attention.1} parent=23 // pred_region
              // Predicated region
              $region40: #{scaled_dot_product_attention.1} parent=27 // pred_check
                _
              $region41: #{scaled_dot_product_attention.1} parent=27 // pred_check_branch
                %315 = sbr.rel (0) target = $region43
              $region42: #{scaled_dot_product_attention.1} parent=27 // pred_region
                loop: start=0, step=1, limit=1
                $region44: #{scaled_dot_product_attention.1} parent=42 // loop_pre_header
                  _
                $region45: #{scaled_dot_product_attention.1} parent=42 // loop_header
                  %s317 = sphi 0, %s321
                  %p318 = scmp.ge.s32.totalorder %s317, 1
                  %s322 = sphi %s170, %s170
                  %s323 = sphi %s165, %s165
                $region46: #{scaled_dot_product_attention.1} parent=42 // loop_header_branch
                  %320 = sbr.rel (%p318) target = $region50
                $region47: #{scaled_dot_product_attention.1} parent=42 // loop_body
                  %v324 = vld [vmem:[%s322] sm:$0xff]
                  %325 = vst [vmem:[%s323] sm:$0xff] %v324
                  %v326 = vld [vmem:[%s322 + $0x8] sm:$0xff]
                  %327 = vst [vmem:[%s323 + $0x8] sm:$0xff] %v326
                  %v328 = vld [vmem:[%s322 + $0x10] sm:$0xff]
                  %329 = vst [vmem:[%s323 + $0x10] sm:$0xff] %v328
                  %v330 = vld [vmem:[%s322 + $0x18] sm:$0xff]
                  %331 = vst [vmem:[%s323 + $0x18] sm:$0xff] %v330
                  %v332 = vld [vmem:[%s322 + $0x20] sm:$0xff]
                  %333 = vst [vmem:[%s323 + $0x20] sm:$0xff] %v332
                  %v334 = vld [vmem:[%s322 + $0x28] sm:$0xff]
                  %335 = vst [vmem:[%s323 + $0x28] sm:$0xff] %v334
                  %v336 = vld [vmem:[%s322 + $0x30] sm:$0xff]
                  %337 = vst [vmem:[%s323 + $0x30] sm:$0xff] %v336
                  %v338 = vld [vmem:[%s322 + $0x38] sm:$0xff]
                  %339 = vst [vmem:[%s323 + $0x38] sm:$0xff] %v338
                  %v340 = vld [vmem:[%s322 + $0x40] sm:$0xff]
                  %341 = vst [vmem:[%s323 + $0x40] sm:$0xff] %v340
                  %v342 = vld [vmem:[%s322 + $0x48] sm:$0xff]
                  %343 = vst [vmem:[%s323 + $0x48] sm:$0xff] %v342
                  %v344 = vld [vmem:[%s322 + $0x50] sm:$0xff]
                  %345 = vst [vmem:[%s323 + $0x50] sm:$0xff] %v344
                  %v346 = vld [vmem:[%s322 + $0x58] sm:$0xff]
                  %347 = vst [vmem:[%s323 + $0x58] sm:$0xff] %v346
                  %v348 = vld [vmem:[%s322 + $0x60] sm:$0xff]
                  %349 = vst [vmem:[%s323 + $0x60] sm:$0xff] %v348
                  %v350 = vld [vmem:[%s322 + $0x68] sm:$0xff]
                  %351 = vst [vmem:[%s323 + $0x68] sm:$0xff] %v350
                  %v352 = vld [vmem:[%s322 + $0x70] sm:$0xff]
                  %353 = vst [vmem:[%s323 + $0x70] sm:$0xff] %v352
                  %v354 = vld [vmem:[%s322 + $0x78] sm:$0xff]
                  %355 = vst [vmem:[%s323 + $0x78] sm:$0xff] %v354
                  %v356 = vld [vmem:[%s322 + $0x100] sm:$0xff]
                  %357 = vst [vmem:[%s323 + $0x80] sm:$0xff] %v356
                  %v358 = vld [vmem:[%s322 + $0x108] sm:$0xff]
                  %359 = vst [vmem:[%s323 + $0x88] sm:$0xff] %v358
                  %v360 = vld [vmem:[%s322 + $0x110] sm:$0xff]
                  %361 = vst [vmem:[%s323 + $0x90] sm:$0xff] %v360
                  %v362 = vld [vmem:[%s322 + $0x118] sm:$0xff]
                  %363 = vst [vmem:[%s323 + $0x98] sm:$0xff] %v362
                  %v364 = vld [vmem:[%s322 + $0x120] sm:$0xff]
                  %365 = vst [vmem:[%s323 + $0xa0] sm:$0xff] %v364
                  %v366 = vld [vmem:[%s322 + $0x128] sm:$0xff]
                  %367 = vst [vmem:[%s323 + $0xa8] sm:$0xff] %v366
                  %v368 = vld [vmem:[%s322 + $0x130] sm:$0xff]
                  %369 = vst [vmem:[%s323 + $0xb0] sm:$0xff] %v368
                  %v370 = vld [vmem:[%s322 + $0x138] sm:$0xff]
                  %371 = vst [vmem:[%s323 + $0xb8] sm:$0xff] %v370
                  %v372 = vld [vmem:[%s322 + $0x140] sm:$0xff]
                  %373 = vst [vmem:[%s323 + $0xc0] sm:$0xff] %v372
                  %v374 = vld [vmem:[%s322 + $0x148] sm:$0xff]
                  %375 = vst [vmem:[%s323 + $0xc8] sm:$0xff] %v374
                  %v376 = vld [vmem:[%s322 + $0x150] sm:$0xff]
                  %377 = vst [vmem:[%s323 + $0xd0] sm:$0xff] %v376
                  %v378 = vld [vmem:[%s322 + $0x158] sm:$0xff]
                  %379 = vst [vmem:[%s323 + $0xd8] sm:$0xff] %v378
                  %v380 = vld [vmem:[%s322 + $0x160] sm:$0xff]
                  %381 = vst [vmem:[%s323 + $0xe0] sm:$0xff] %v380
                  %v382 = vld [vmem:[%s322 + $0x168] sm:$0xff]
                  %383 = vst [vmem:[%s323 + $0xe8] sm:$0xff] %v382
                  %v384 = vld [vmem:[%s322 + $0x170] sm:$0xff]
                  %385 = vst [vmem:[%s323 + $0xf0] sm:$0xff] %v384
                  %v386 = vld [vmem:[%s322 + $0x178] sm:$0xff]
                  %387 = vst [vmem:[%s323 + $0xf8] sm:$0xff] %v386
                  %v388 = vld [vmem:[%s322 + $0x200] sm:$0xff]
                  %389 = vst [vmem:[%s323 + $0x100] sm:$0xff] %v388
                  %v390 = vld [vmem:[%s322 + $0x208] sm:$0xff]
                  %391 = vst [vmem:[%s323 + $0x108] sm:$0xff] %v390
                  %v392 = vld [vmem:[%s322 + $0x210] sm:$0xff]
                  %393 = vst [vmem:[%s323 + $0x110] sm:$0xff] %v392
                  %v394 = vld [vmem:[%s322 + $0x218] sm:$0xff]
                  %395 = vst [vmem:[%s323 + $0x118] sm:$0xff] %v394
                  %v396 = vld [vmem:[%s322 + $0x220] sm:$0xff]
                  %397 = vst [vmem:[%s323 + $0x120] sm:$0xff] %v396
                  %v398 = vld [vmem:[%s322 + $0x228] sm:$0xff]
                  %399 = vst [vmem:[%s323 + $0x128] sm:$0xff] %v398
                  %v400 = vld [vmem:[%s322 + $0x230] sm:$0xff]
                  %401 = vst [vmem:[%s323 + $0x130] sm:$0xff] %v400
                  %v402 = vld [vmem:[%s322 + $0x238] sm:$0xff]
                  %403 = vst [vmem:[%s323 + $0x138] sm:$0xff] %v402
                  %v404 = vld [vmem:[%s322 + $0x240] sm:$0xff]
                  %405 = vst [vmem:[%s323 + $0x140] sm:$0xff] %v404
                  %v406 = vld [vmem:[%s322 + $0x248] sm:$0xff]
                  %407 = vst [vmem:[%s323 + $0x148] sm:$0xff] %v406
                  %v408 = vld [vmem:[%s322 + $0x250] sm:$0xff]
                  %409 = vst [vmem:[%s323 + $0x150] sm:$0xff] %v408
                  %v410 = vld [vmem:[%s322 + $0x258] sm:$0xff]
                  %411 = vst [vmem:[%s323 + $0x158] sm:$0xff] %v410
                  %v412 = vld [vmem:[%s322 + $0x260] sm:$0xff]
                  %413 = vst [vmem:[%s323 + $0x160] sm:$0xff] %v412
                  %v414 = vld [vmem:[%s322 + $0x268] sm:$0xff]
                  %415 = vst [vmem:[%s323 + $0x168] sm:$0xff] %v414
                  %v416 = vld [vmem:[%s322 + $0x270] sm:$0xff]
                  %417 = vst [vmem:[%s323 + $0x170] sm:$0xff] %v416
                  %v418 = vld [vmem:[%s322 + $0x278] sm:$0xff]
                  %419 = vst [vmem:[%s323 + $0x178] sm:$0xff] %v418
                  %v420 = vld [vmem:[%s322 + $0x300] sm:$0xff]
                  %421 = vst [vmem:[%s323 + $0x180] sm:$0xff] %v420
                  %v422 = vld [vmem:[%s322 + $0x308] sm:$0xff]
                  %423 = vst [vmem:[%s323 + $0x188] sm:$0xff] %v422
                  %v424 = vld [vmem:[%s322 + $0x310] sm:$0xff]
                  %425 = vst [vmem:[%s323 + $0x190] sm:$0xff] %v424
                  %v426 = vld [vmem:[%s322 + $0x318] sm:$0xff]
                  %427 = vst [vmem:[%s323 + $0x198] sm:$0xff] %v426
                  %v428 = vld [vmem:[%s322 + $0x320] sm:$0xff]
                  %429 = vst [vmem:[%s323 + $0x1a0] sm:$0xff] %v428
                  %v430 = vld [vmem:[%s322 + $0x328] sm:$0xff]
                  %431 = vst [vmem:[%s323 + $0x1a8] sm:$0xff] %v430
                  %v432 = vld [vmem:[%s322 + $0x330] sm:$0xff]
                  %433 = vst [vmem:[%s323 + $0x1b0] sm:$0xff] %v432
                  %v434 = vld [vmem:[%s322 + $0x338] sm:$0xff]
                  %435 = vst [vmem:[%s323 + $0x1b8] sm:$0xff] %v434
                  %v436 = vld [vmem:[%s322 + $0x340] sm:$0xff]
                  %437 = vst [vmem:[%s323 + $0x1c0] sm:$0xff] %v436
                  %v438 = vld [vmem:[%s322 + $0x348] sm:$0xff]
                  %439 = vst [vmem:[%s323 + $0x1c8] sm:$0xff] %v438
                  %v440 = vld [vmem:[%s322 + $0x350] sm:$0xff]
                  %441 = vst [vmem:[%s323 + $0x1d0] sm:$0xff] %v440
                  %v442 = vld [vmem:[%s322 + $0x358] sm:$0xff]
                  %443 = vst [vmem:[%s323 + $0x1d8] sm:$0xff] %v442
                  %v444 = vld [vmem:[%s322 + $0x360] sm:$0xff]
                  %445 = vst [vmem:[%s323 + $0x1e0] sm:$0xff] %v444
                  %v446 = vld [vmem:[%s322 + $0x368] sm:$0xff]
                  %447 = vst [vmem:[%s323 + $0x1e8] sm:$0xff] %v446
                  %v448 = vld [vmem:[%s322 + $0x370] sm:$0xff]
                  %449 = vst [vmem:[%s323 + $0x1f0] sm:$0xff] %v448
                  %v450 = vld [vmem:[%s322 + $0x378] sm:$0xff]
                  %451 = vst [vmem:[%s323 + $0x1f8] sm:$0xff] %v450
                $region48: #{scaled_dot_product_attention.1} parent=42 // loop_footer
                  %s321 = sadd.s32 1, %s317
                $region49: #{scaled_dot_product_attention.1} parent=42 // loop_footer_branch
                  %316 = sbr.rel target = $region45
                $region50: #{scaled_dot_product_attention.1} parent=42 // loop_exit
                  _
              $region43: #{scaled_dot_product_attention.1} parent=27 // pred_fallthru
                _
              // Predicated region
              $region51: #{scaled_dot_product_attention.1} parent=27 // pred_check
                _
              $region52: #{scaled_dot_product_attention.1} parent=27 // pred_check_branch
                %453 = sbr.rel target = $region54
              $region53: #{scaled_dot_product_attention.1} parent=27 // pred_region
                _
              $region54: #{scaled_dot_product_attention.1} parent=27 // pred_fallthru
                _
            $region28: #{scaled_dot_product_attention.1} parent=23 // pred_fallthru
              _
            // Predicated region
            $region29: #{scaled_dot_product_attention.1} parent=23 // pred_check
              _
            $region30: #{scaled_dot_product_attention.1} parent=23 // pred_check_branch
              %176 = sbr.rel target = $region32
            $region31: #{scaled_dot_product_attention.1} parent=23 // pred_region
              loop: start=0, step=1, limit=1
              $region33: #{scaled_dot_product_attention.1} parent=31 // loop_pre_header
                _
              $region34: #{scaled_dot_product_attention.1} parent=31 // loop_header
                %s179 = sphi 0, %s183
                %p180 = scmp.ge.s32.totalorder %s179, 1
                %s184 = sphi %s170, %s170
                %s185 = sphi %s165, %s165
              $region35: #{scaled_dot_product_attention.1} parent=31 // loop_header_branch
                %182 = sbr.rel (%p180) target = $region39
              $region36: #{scaled_dot_product_attention.1} parent=31 // loop_body
                %v186 = vld [vmem:[%s184] sm:$0xff]
                %187 = vst [vmem:[%s185] sm:$0xff] %v186
                %v188 = vld [vmem:[%s184 + $0x8] sm:$0xff]
                %189 = vst [vmem:[%s185 + $0x8] sm:$0xff] %v188
                %v190 = vld [vmem:[%s184 + $0x10] sm:$0xff]
                %191 = vst [vmem:[%s185 + $0x10] sm:$0xff] %v190
                %v192 = vld [vmem:[%s184 + $0x18] sm:$0xff]
                %193 = vst [vmem:[%s185 + $0x18] sm:$0xff] %v192
                %v194 = vld [vmem:[%s184 + $0x20] sm:$0xff]
                %195 = vst [vmem:[%s185 + $0x20] sm:$0xff] %v194
                %v196 = vld [vmem:[%s184 + $0x28] sm:$0xff]
                %197 = vst [vmem:[%s185 + $0x28] sm:$0xff] %v196
                %v198 = vld [vmem:[%s184 + $0x30] sm:$0xff]
                %199 = vst [vmem:[%s185 + $0x30] sm:$0xff] %v198
                %v200 = vld [vmem:[%s184 + $0x38] sm:$0xff]
                %201 = vst [vmem:[%s185 + $0x38] sm:$0xff] %v200
                %v202 = vld [vmem:[%s184 + $0x40] sm:$0xff]
                %203 = vst [vmem:[%s185 + $0x40] sm:$0xff] %v202
                %v204 = vld [vmem:[%s184 + $0x48] sm:$0xff]
                %205 = vst [vmem:[%s185 + $0x48] sm:$0xff] %v204
                %v206 = vld [vmem:[%s184 + $0x50] sm:$0xff]
                %207 = vst [vmem:[%s185 + $0x50] sm:$0xff] %v206
                %v208 = vld [vmem:[%s184 + $0x58] sm:$0xff]
                %209 = vst [vmem:[%s185 + $0x58] sm:$0xff] %v208
                %v210 = vld [vmem:[%s184 + $0x60] sm:$0xff]
                %211 = vst [vmem:[%s185 + $0x60] sm:$0xff] %v210
                %v212 = vld [vmem:[%s184 + $0x68] sm:$0xff]
                %213 = vst [vmem:[%s185 + $0x68] sm:$0xff] %v212
                %v214 = vld [vmem:[%s184 + $0x70] sm:$0xff]
                %215 = vst [vmem:[%s185 + $0x70] sm:$0xff] %v214
                %v216 = vld [vmem:[%s184 + $0x78] sm:$0xff]
                %217 = vst [vmem:[%s185 + $0x78] sm:$0xff] %v216
                %v218 = vld [vmem:[%s184 + $0x100] sm:$0xff]
                %219 = vst [vmem:[%s185 + $0x80] sm:$0xff] %v218
                %v220 = vld [vmem:[%s184 + $0x108] sm:$0xff]
                %221 = vst [vmem:[%s185 + $0x88] sm:$0xff] %v220
                %v222 = vld [vmem:[%s184 + $0x110] sm:$0xff]
                %223 = vst [vmem:[%s185 + $0x90] sm:$0xff] %v222
                %v224 = vld [vmem:[%s184 + $0x118] sm:$0xff]
                %225 = vst [vmem:[%s185 + $0x98] sm:$0xff] %v224
                %v226 = vld [vmem:[%s184 + $0x120] sm:$0xff]
                %227 = vst [vmem:[%s185 + $0xa0] sm:$0xff] %v226
                %v228 = vld [vmem:[%s184 + $0x128] sm:$0xff]
                %229 = vst [vmem:[%s185 + $0xa8] sm:$0xff] %v228
                %v230 = vld [vmem:[%s184 + $0x130] sm:$0xff]
                %231 = vst [vmem:[%s185 + $0xb0] sm:$0xff] %v230
                %v232 = vld [vmem:[%s184 + $0x138] sm:$0xff]
                %233 = vst [vmem:[%s185 + $0xb8] sm:$0xff] %v232
                %v234 = vld [vmem:[%s184 + $0x140] sm:$0xff]
                %235 = vst [vmem:[%s185 + $0xc0] sm:$0xff] %v234
                %v236 = vld [vmem:[%s184 + $0x148] sm:$0xff]
                %237 = vst [vmem:[%s185 + $0xc8] sm:$0xff] %v236
                %v238 = vld [vmem:[%s184 + $0x150] sm:$0xff]
                %239 = vst [vmem:[%s185 + $0xd0] sm:$0xff] %v238
                %v240 = vld [vmem:[%s184 + $0x158] sm:$0xff]
                %241 = vst [vmem:[%s185 + $0xd8] sm:$0xff] %v240
                %v242 = vld [vmem:[%s184 + $0x160] sm:$0xff]
                %243 = vst [vmem:[%s185 + $0xe0] sm:$0xff] %v242
                %v244 = vld [vmem:[%s184 + $0x168] sm:$0xff]
                %245 = vst [vmem:[%s185 + $0xe8] sm:$0xff] %v244
                %v246 = vld [vmem:[%s184 + $0x170] sm:$0xff]
                %247 = vst [vmem:[%s185 + $0xf0] sm:$0xff] %v246
                %v248 = vld [vmem:[%s184 + $0x178] sm:$0xff]
                %249 = vst [vmem:[%s185 + $0xf8] sm:$0xff] %v248
                %v250 = vld [vmem:[%s184 + $0x200] sm:$0xff]
                %251 = vst [vmem:[%s185 + $0x100] sm:$0xff] %v250
                %v252 = vld [vmem:[%s184 + $0x208] sm:$0xff]
                %253 = vst [vmem:[%s185 + $0x108] sm:$0xff] %v252
                %v254 = vld [vmem:[%s184 + $0x210] sm:$0xff]
                %255 = vst [vmem:[%s185 + $0x110] sm:$0xff] %v254
                %v256 = vld [vmem:[%s184 + $0x218] sm:$0xff]
                %257 = vst [vmem:[%s185 + $0x118] sm:$0xff] %v256
                %v258 = vld [vmem:[%s184 + $0x220] sm:$0xff]
                %259 = vst [vmem:[%s185 + $0x120] sm:$0xff] %v258
                %v260 = vld [vmem:[%s184 + $0x228] sm:$0xff]
                %261 = vst [vmem:[%s185 + $0x128] sm:$0xff] %v260
                %v262 = vld [vmem:[%s184 + $0x230] sm:$0xff]
                %263 = vst [vmem:[%s185 + $0x130] sm:$0xff] %v262
                %v264 = vld [vmem:[%s184 + $0x238] sm:$0xff]
                %265 = vst [vmem:[%s185 + $0x138] sm:$0xff] %v264
                %v266 = vld [vmem:[%s184 + $0x240] sm:$0xff]
                %267 = vst [vmem:[%s185 + $0x140] sm:$0xff] %v266
                %v268 = vld [vmem:[%s184 + $0x248] sm:$0xff]
                %269 = vst [vmem:[%s185 + $0x148] sm:$0xff] %v268
                %v270 = vld [vmem:[%s184 + $0x250] sm:$0xff]
                %271 = vst [vmem:[%s185 + $0x150] sm:$0xff] %v270
                %v272 = vld [vmem:[%s184 + $0x258] sm:$0xff]
                %273 = vst [vmem:[%s185 + $0x158] sm:$0xff] %v272
                %v274 = vld [vmem:[%s184 + $0x260] sm:$0xff]
                %275 = vst [vmem:[%s185 + $0x160] sm:$0xff] %v274
                %v276 = vld [vmem:[%s184 + $0x268] sm:$0xff]
                %277 = vst [vmem:[%s185 + $0x168] sm:$0xff] %v276
                %v278 = vld [vmem:[%s184 + $0x270] sm:$0xff]
                %279 = vst [vmem:[%s185 + $0x170] sm:$0xff] %v278
                %v280 = vld [vmem:[%s184 + $0x278] sm:$0xff]
                %281 = vst [vmem:[%s185 + $0x178] sm:$0xff] %v280
                %v282 = vld [vmem:[%s184 + $0x300] sm:$0xff]
                %283 = vst [vmem:[%s185 + $0x180] sm:$0xff] %v282
                %v284 = vld [vmem:[%s184 + $0x308] sm:$0xff]
                %285 = vst [vmem:[%s185 + $0x188] sm:$0xff] %v284
                %v286 = vld [vmem:[%s184 + $0x310] sm:$0xff]
                %287 = vst [vmem:[%s185 + $0x190] sm:$0xff] %v286
                %v288 = vld [vmem:[%s184 + $0x318] sm:$0xff]
                %289 = vst [vmem:[%s185 + $0x198] sm:$0xff] %v288
                %v290 = vld [vmem:[%s184 + $0x320] sm:$0xff]
                %291 = vst [vmem:[%s185 + $0x1a0] sm:$0xff] %v290
                %v292 = vld [vmem:[%s184 + $0x328] sm:$0xff]
                %293 = vst [vmem:[%s185 + $0x1a8] sm:$0xff] %v292
                %v294 = vld [vmem:[%s184 + $0x330] sm:$0xff]
                %295 = vst [vmem:[%s185 + $0x1b0] sm:$0xff] %v294
                %v296 = vld [vmem:[%s184 + $0x338] sm:$0xff]
                %297 = vst [vmem:[%s185 + $0x1b8] sm:$0xff] %v296
                %v298 = vld [vmem:[%s184 + $0x340] sm:$0xff]
                %299 = vst [vmem:[%s185 + $0x1c0] sm:$0xff] %v298
                %v300 = vld [vmem:[%s184 + $0x348] sm:$0xff]
                %301 = vst [vmem:[%s185 + $0x1c8] sm:$0xff] %v300
                %v302 = vld [vmem:[%s184 + $0x350] sm:$0xff]
                %303 = vst [vmem:[%s185 + $0x1d0] sm:$0xff] %v302
                %v304 = vld [vmem:[%s184 + $0x358] sm:$0xff]
                %305 = vst [vmem:[%s185 + $0x1d8] sm:$0xff] %v304
                %v306 = vld [vmem:[%s184 + $0x360] sm:$0xff]
                %307 = vst [vmem:[%s185 + $0x1e0] sm:$0xff] %v306
                %v308 = vld [vmem:[%s184 + $0x368] sm:$0xff]
                %309 = vst [vmem:[%s185 + $0x1e8] sm:$0xff] %v308
                %v310 = vld [vmem:[%s184 + $0x370] sm:$0xff]
                %311 = vst [vmem:[%s185 + $0x1f0] sm:$0xff] %v310
                %v312 = vld [vmem:[%s184 + $0x378] sm:$0xff]
                %313 = vst [vmem:[%s185 + $0x1f8] sm:$0xff] %v312
              $region37: #{scaled_dot_product_attention.1} parent=31 // loop_footer
                %s183 = sadd.s32 1, %s179
              $region38: #{scaled_dot_product_attention.1} parent=31 // loop_footer_branch
                %178 = sbr.rel target = $region34
              $region39: #{scaled_dot_product_attention.1} parent=31 // loop_exit
                _
            $region32: #{scaled_dot_product_attention.1} parent=23 // pred_fallthru
              _
          $region24: #{scaled_dot_product_attention.1} parent=19 // pred_fallthru
            _
          %454 = vnop
        $region20: #{scaled_dot_product_attention.1} parent=15 // pred_fallthru
          _
        // Predicated region
        $region55: #{scaled_dot_product_attention.1} parent=15 // pred_check
          %p455 = pneg %p78
        $region56: #{scaled_dot_product_attention.1} parent=15 // pred_check_branch
          %457 = sbr.rel (%p455) target = $region58
        $region57: #{scaled_dot_product_attention.1} parent=15 // pred_region
          %s458 = sand.u32 %s68, 1
          %s459 = sand.u32 %s68, 1
          %s460 = smul.addr %s459, 512
          %s461 = scalar_lea.vmem [#allocation6], %s460
          %s462 = smul.u32 16, %s18
          %s463 = smul.addr %s16, 192
          %s464 = sadd.s32 %s462, %s463
          %s465 = smul.addr %s464, 8
          %s466 = scalar_lea.vmem %s1, %s465
          // Predicated region
          $region59: #{scaled_dot_product_attention.1} parent=57 // pred_check
            _
          $region60: #{scaled_dot_product_attention.1} parent=57 // pred_check_branch
            %468 = sbr.rel (0) target = $region62
          $region61: #{scaled_dot_product_attention.1} parent=57 // pred_region
            // Predicated region
            $region63: #{scaled_dot_product_attention.1} parent=61 // pred_check
              _
            $region64: #{scaled_dot_product_attention.1} parent=61 // pred_check_branch
              %470 = sbr.rel (0) target = $region66
            $region65: #{scaled_dot_product_attention.1} parent=61 // pred_region
              // Predicated region
              $region78: #{scaled_dot_product_attention.1} parent=65 // pred_check
                _
              $region79: #{scaled_dot_product_attention.1} parent=65 // pred_check_branch
                %611 = sbr.rel (0) target = $region81
              $region80: #{scaled_dot_product_attention.1} parent=65 // pred_region
                loop: start=0, step=1, limit=1
                $region82: #{scaled_dot_product_attention.1} parent=80 // loop_pre_header
                  _
                $region83: #{scaled_dot_product_attention.1} parent=80 // loop_header
                  %s613 = sphi 0, %s617
                  %p614 = scmp.ge.s32.totalorder %s613, 1
                  %s618 = sphi %s466, %s466
                  %s619 = sphi %s461, %s461
                $region84: #{scaled_dot_product_attention.1} parent=80 // loop_header_branch
                  %616 = sbr.rel (%p614) target = $region88
                $region85: #{scaled_dot_product_attention.1} parent=80 // loop_body
                  %v620 = vld [vmem:[%s618] sm:$0xff]
                  %621 = vst [vmem:[%s619] sm:$0xff] %v620
                  %v622 = vld [vmem:[%s618 + $0x8] sm:$0xff]
                  %623 = vst [vmem:[%s619 + $0x8] sm:$0xff] %v622
                  %v624 = vld [vmem:[%s618 + $0x10] sm:$0xff]
                  %625 = vst [vmem:[%s619 + $0x10] sm:$0xff] %v624
                  %v626 = vld [vmem:[%s618 + $0x18] sm:$0xff]
                  %627 = vst [vmem:[%s619 + $0x18] sm:$0xff] %v626
                  %v628 = vld [vmem:[%s618 + $0x20] sm:$0xff]
                  %629 = vst [vmem:[%s619 + $0x20] sm:$0xff] %v628
                  %v630 = vld [vmem:[%s618 + $0x28] sm:$0xff]
                  %631 = vst [vmem:[%s619 + $0x28] sm:$0xff] %v630
                  %v632 = vld [vmem:[%s618 + $0x30] sm:$0xff]
                  %633 = vst [vmem:[%s619 + $0x30] sm:$0xff] %v632
                  %v634 = vld [vmem:[%s618 + $0x38] sm:$0xff]
                  %635 = vst [vmem:[%s619 + $0x38] sm:$0xff] %v634
                  %v636 = vld [vmem:[%s618 + $0x40] sm:$0xff]
                  %637 = vst [vmem:[%s619 + $0x40] sm:$0xff] %v636
                  %v638 = vld [vmem:[%s618 + $0x48] sm:$0xff]
                  %639 = vst [vmem:[%s619 + $0x48] sm:$0xff] %v638
                  %v640 = vld [vmem:[%s618 + $0x50] sm:$0xff]
                  %641 = vst [vmem:[%s619 + $0x50] sm:$0xff] %v640
                  %v642 = vld [vmem:[%s618 + $0x58] sm:$0xff]
                  %643 = vst [vmem:[%s619 + $0x58] sm:$0xff] %v642
                  %v644 = vld [vmem:[%s618 + $0x60] sm:$0xff]
                  %645 = vst [vmem:[%s619 + $0x60] sm:$0xff] %v644
                  %v646 = vld [vmem:[%s618 + $0x68] sm:$0xff]
                  %647 = vst [vmem:[%s619 + $0x68] sm:$0xff] %v646
                  %v648 = vld [vmem:[%s618 + $0x70] sm:$0xff]
                  %649 = vst [vmem:[%s619 + $0x70] sm:$0xff] %v648
                  %v650 = vld [vmem:[%s618 + $0x78] sm:$0xff]
                  %651 = vst [vmem:[%s619 + $0x78] sm:$0xff] %v650
                  %v652 = vld [vmem:[%s618 + $0x180] sm:$0xff]
                  %653 = vst [vmem:[%s619 + $0x80] sm:$0xff] %v652
                  %v654 = vld [vmem:[%s618 + $0x188] sm:$0xff]
                  %655 = vst [vmem:[%s619 + $0x88] sm:$0xff] %v654
                  %v656 = vld [vmem:[%s618 + $0x190] sm:$0xff]
                  %657 = vst [vmem:[%s619 + $0x90] sm:$0xff] %v656
                  %v658 = vld [vmem:[%s618 + $0x198] sm:$0xff]
                  %659 = vst [vmem:[%s619 + $0x98] sm:$0xff] %v658
                  %v660 = vld [vmem:[%s618 + $0x1a0] sm:$0xff]
                  %661 = vst [vmem:[%s619 + $0xa0] sm:$0xff] %v660
                  %v662 = vld [vmem:[%s618 + $0x1a8] sm:$0xff]
                  %663 = vst [vmem:[%s619 + $0xa8] sm:$0xff] %v662
                  %v664 = vld [vmem:[%s618 + $0x1b0] sm:$0xff]
                  %665 = vst [vmem:[%s619 + $0xb0] sm:$0xff] %v664
                  %v666 = vld [vmem:[%s618 + $0x1b8] sm:$0xff]
                  %667 = vst [vmem:[%s619 + $0xb8] sm:$0xff] %v666
                  %v668 = vld [vmem:[%s618 + $0x1c0] sm:$0xff]
                  %669 = vst [vmem:[%s619 + $0xc0] sm:$0xff] %v668
                  %v670 = vld [vmem:[%s618 + $0x1c8] sm:$0xff]
                  %671 = vst [vmem:[%s619 + $0xc8] sm:$0xff] %v670
                  %v672 = vld [vmem:[%s618 + $0x1d0] sm:$0xff]
                  %673 = vst [vmem:[%s619 + $0xd0] sm:$0xff] %v672
                  %v674 = vld [vmem:[%s618 + $0x1d8] sm:$0xff]
                  %675 = vst [vmem:[%s619 + $0xd8] sm:$0xff] %v674
                  %v676 = vld [vmem:[%s618 + $0x1e0] sm:$0xff]
                  %677 = vst [vmem:[%s619 + $0xe0] sm:$0xff] %v676
                  %v678 = vld [vmem:[%s618 + $0x1e8] sm:$0xff]
                  %679 = vst [vmem:[%s619 + $0xe8] sm:$0xff] %v678
                  %v680 = vld [vmem:[%s618 + $0x1f0] sm:$0xff]
                  %681 = vst [vmem:[%s619 + $0xf0] sm:$0xff] %v680
                  %v682 = vld [vmem:[%s618 + $0x1f8] sm:$0xff]
                  %683 = vst [vmem:[%s619 + $0xf8] sm:$0xff] %v682
                  %v684 = vld [vmem:[%s618 + $0x300] sm:$0xff]
                  %685 = vst [vmem:[%s619 + $0x100] sm:$0xff] %v684
                  %v686 = vld [vmem:[%s618 + $0x308] sm:$0xff]
                  %687 = vst [vmem:[%s619 + $0x108] sm:$0xff] %v686
                  %v688 = vld [vmem:[%s618 + $0x310] sm:$0xff]
                  %689 = vst [vmem:[%s619 + $0x110] sm:$0xff] %v688
                  %v690 = vld [vmem:[%s618 + $0x318] sm:$0xff]
                  %691 = vst [vmem:[%s619 + $0x118] sm:$0xff] %v690
                  %v692 = vld [vmem:[%s618 + $0x320] sm:$0xff]
                  %693 = vst [vmem:[%s619 + $0x120] sm:$0xff] %v692
                  %v694 = vld [vmem:[%s618 + $0x328] sm:$0xff]
                  %695 = vst [vmem:[%s619 + $0x128] sm:$0xff] %v694
                  %v696 = vld [vmem:[%s618 + $0x330] sm:$0xff]
                  %697 = vst [vmem:[%s619 + $0x130] sm:$0xff] %v696
                  %v698 = vld [vmem:[%s618 + $0x338] sm:$0xff]
                  %699 = vst [vmem:[%s619 + $0x138] sm:$0xff] %v698
                  %v700 = vld [vmem:[%s618 + $0x340] sm:$0xff]
                  %701 = vst [vmem:[%s619 + $0x140] sm:$0xff] %v700
                  %v702 = vld [vmem:[%s618 + $0x348] sm:$0xff]
                  %703 = vst [vmem:[%s619 + $0x148] sm:$0xff] %v702
                  %v704 = vld [vmem:[%s618 + $0x350] sm:$0xff]
                  %705 = vst [vmem:[%s619 + $0x150] sm:$0xff] %v704
                  %v706 = vld [vmem:[%s618 + $0x358] sm:$0xff]
                  %707 = vst [vmem:[%s619 + $0x158] sm:$0xff] %v706
                  %v708 = vld [vmem:[%s618 + $0x360] sm:$0xff]
                  %709 = vst [vmem:[%s619 + $0x160] sm:$0xff] %v708
                  %v710 = vld [vmem:[%s618 + $0x368] sm:$0xff]
                  %711 = vst [vmem:[%s619 + $0x168] sm:$0xff] %v710
                  %v712 = vld [vmem:[%s618 + $0x370] sm:$0xff]
                  %713 = vst [vmem:[%s619 + $0x170] sm:$0xff] %v712
                  %v714 = vld [vmem:[%s618 + $0x378] sm:$0xff]
                  %715 = vst [vmem:[%s619 + $0x178] sm:$0xff] %v714
                  %v716 = vld [vmem:[%s618 + $0x480] sm:$0xff]
                  %717 = vst [vmem:[%s619 + $0x180] sm:$0xff] %v716
                  %v718 = vld [vmem:[%s618 + $0x488] sm:$0xff]
                  %719 = vst [vmem:[%s619 + $0x188] sm:$0xff] %v718
                  %v720 = vld [vmem:[%s618 + $0x490] sm:$0xff]
                  %721 = vst [vmem:[%s619 + $0x190] sm:$0xff] %v720
                  %v722 = vld [vmem:[%s618 + $0x498] sm:$0xff]
                  %723 = vst [vmem:[%s619 + $0x198] sm:$0xff] %v722
                  %v724 = vld [vmem:[%s618 + $0x4a0] sm:$0xff]
                  %725 = vst [vmem:[%s619 + $0x1a0] sm:$0xff] %v724
                  %v726 = vld [vmem:[%s618 + $0x4a8] sm:$0xff]
                  %727 = vst [vmem:[%s619 + $0x1a8] sm:$0xff] %v726
                  %v728 = vld [vmem:[%s618 + $0x4b0] sm:$0xff]
                  %729 = vst [vmem:[%s619 + $0x1b0] sm:$0xff] %v728
                  %v730 = vld [vmem:[%s618 + $0x4b8] sm:$0xff]
                  %731 = vst [vmem:[%s619 + $0x1b8] sm:$0xff] %v730
                  %v732 = vld [vmem:[%s618 + $0x4c0] sm:$0xff]
                  %733 = vst [vmem:[%s619 + $0x1c0] sm:$0xff] %v732
                  %v734 = vld [vmem:[%s618 + $0x4c8] sm:$0xff]
                  %735 = vst [vmem:[%s619 + $0x1c8] sm:$0xff] %v734
                  %v736 = vld [vmem:[%s618 + $0x4d0] sm:$0xff]
                  %737 = vst [vmem:[%s619 + $0x1d0] sm:$0xff] %v736
                  %v738 = vld [vmem:[%s618 + $0x4d8] sm:$0xff]
                  %739 = vst [vmem:[%s619 + $0x1d8] sm:$0xff] %v738
                  %v740 = vld [vmem:[%s618 + $0x4e0] sm:$0xff]
                  %741 = vst [vmem:[%s619 + $0x1e0] sm:$0xff] %v740
                  %v742 = vld [vmem:[%s618 + $0x4e8] sm:$0xff]
                  %743 = vst [vmem:[%s619 + $0x1e8] sm:$0xff] %v742
                  %v744 = vld [vmem:[%s618 + $0x4f0] sm:$0xff]
                  %745 = vst [vmem:[%s619 + $0x1f0] sm:$0xff] %v744
                  %v746 = vld [vmem:[%s618 + $0x4f8] sm:$0xff]
                  %747 = vst [vmem:[%s619 + $0x1f8] sm:$0xff] %v746
                $region86: #{scaled_dot_product_attention.1} parent=80 // loop_footer
                  %s617 = sadd.s32 1, %s613
                $region87: #{scaled_dot_product_attention.1} parent=80 // loop_footer_branch
                  %612 = sbr.rel target = $region83
                $region88: #{scaled_dot_product_attention.1} parent=80 // loop_exit
                  _
              $region81: #{scaled_dot_product_attention.1} parent=65 // pred_fallthru
                _
              // Predicated region
              $region89: #{scaled_dot_product_attention.1} parent=65 // pred_check
                _
              $region90: #{scaled_dot_product_attention.1} parent=65 // pred_check_branch
                %749 = sbr.rel target = $region92
              $region91: #{scaled_dot_product_attention.1} parent=65 // pred_region
                _
              $region92: #{scaled_dot_product_attention.1} parent=65 // pred_fallthru
                _
            $region66: #{scaled_dot_product_attention.1} parent=61 // pred_fallthru
              _
            // Predicated region
            $region67: #{scaled_dot_product_attention.1} parent=61 // pred_check
              _
            $region68: #{scaled_dot_product_attention.1} parent=61 // pred_check_branch
              %472 = sbr.rel target = $region70
            $region69: #{scaled_dot_product_attention.1} parent=61 // pred_region
              loop: start=0, step=1, limit=1
              $region71: #{scaled_dot_product_attention.1} parent=69 // loop_pre_header
                _
              $region72: #{scaled_dot_product_attention.1} parent=69 // loop_header
                %s475 = sphi 0, %s479
                %p476 = scmp.ge.s32.totalorder %s475, 1
                %s480 = sphi %s466, %s466
                %s481 = sphi %s461, %s461
              $region73: #{scaled_dot_product_attention.1} parent=69 // loop_header_branch
                %478 = sbr.rel (%p476) target = $region77
              $region74: #{scaled_dot_product_attention.1} parent=69 // loop_body
                %v482 = vld [vmem:[%s480] sm:$0xff]
                %483 = vst [vmem:[%s481] sm:$0xff] %v482
                %v484 = vld [vmem:[%s480 + $0x8] sm:$0xff]
                %485 = vst [vmem:[%s481 + $0x8] sm:$0xff] %v484
                %v486 = vld [vmem:[%s480 + $0x10] sm:$0xff]
                %487 = vst [vmem:[%s481 + $0x10] sm:$0xff] %v486
                %v488 = vld [vmem:[%s480 + $0x18] sm:$0xff]
                %489 = vst [vmem:[%s481 + $0x18] sm:$0xff] %v488
                %v490 = vld [vmem:[%s480 + $0x20] sm:$0xff]
                %491 = vst [vmem:[%s481 + $0x20] sm:$0xff] %v490
                %v492 = vld [vmem:[%s480 + $0x28] sm:$0xff]
                %493 = vst [vmem:[%s481 + $0x28] sm:$0xff] %v492
                %v494 = vld [vmem:[%s480 + $0x30] sm:$0xff]
                %495 = vst [vmem:[%s481 + $0x30] sm:$0xff] %v494
                %v496 = vld [vmem:[%s480 + $0x38] sm:$0xff]
                %497 = vst [vmem:[%s481 + $0x38] sm:$0xff] %v496
                %v498 = vld [vmem:[%s480 + $0x40] sm:$0xff]
                %499 = vst [vmem:[%s481 + $0x40] sm:$0xff] %v498
                %v500 = vld [vmem:[%s480 + $0x48] sm:$0xff]
                %501 = vst [vmem:[%s481 + $0x48] sm:$0xff] %v500
                %v502 = vld [vmem:[%s480 + $0x50] sm:$0xff]
                %503 = vst [vmem:[%s481 + $0x50] sm:$0xff] %v502
                %v504 = vld [vmem:[%s480 + $0x58] sm:$0xff]
                %505 = vst [vmem:[%s481 + $0x58] sm:$0xff] %v504
                %v506 = vld [vmem:[%s480 + $0x60] sm:$0xff]
                %507 = vst [vmem:[%s481 + $0x60] sm:$0xff] %v506
                %v508 = vld [vmem:[%s480 + $0x68] sm:$0xff]
                %509 = vst [vmem:[%s481 + $0x68] sm:$0xff] %v508
                %v510 = vld [vmem:[%s480 + $0x70] sm:$0xff]
                %511 = vst [vmem:[%s481 + $0x70] sm:$0xff] %v510
                %v512 = vld [vmem:[%s480 + $0x78] sm:$0xff]
                %513 = vst [vmem:[%s481 + $0x78] sm:$0xff] %v512
                %v514 = vld [vmem:[%s480 + $0x180] sm:$0xff]
                %515 = vst [vmem:[%s481 + $0x80] sm:$0xff] %v514
                %v516 = vld [vmem:[%s480 + $0x188] sm:$0xff]
                %517 = vst [vmem:[%s481 + $0x88] sm:$0xff] %v516
                %v518 = vld [vmem:[%s480 + $0x190] sm:$0xff]
                %519 = vst [vmem:[%s481 + $0x90] sm:$0xff] %v518
                %v520 = vld [vmem:[%s480 + $0x198] sm:$0xff]
                %521 = vst [vmem:[%s481 + $0x98] sm:$0xff] %v520
                %v522 = vld [vmem:[%s480 + $0x1a0] sm:$0xff]
                %523 = vst [vmem:[%s481 + $0xa0] sm:$0xff] %v522
                %v524 = vld [vmem:[%s480 + $0x1a8] sm:$0xff]
                %525 = vst [vmem:[%s481 + $0xa8] sm:$0xff] %v524
                %v526 = vld [vmem:[%s480 + $0x1b0] sm:$0xff]
                %527 = vst [vmem:[%s481 + $0xb0] sm:$0xff] %v526
                %v528 = vld [vmem:[%s480 + $0x1b8] sm:$0xff]
                %529 = vst [vmem:[%s481 + $0xb8] sm:$0xff] %v528
                %v530 = vld [vmem:[%s480 + $0x1c0] sm:$0xff]
                %531 = vst [vmem:[%s481 + $0xc0] sm:$0xff] %v530
                %v532 = vld [vmem:[%s480 + $0x1c8] sm:$0xff]
                %533 = vst [vmem:[%s481 + $0xc8] sm:$0xff] %v532
                %v534 = vld [vmem:[%s480 + $0x1d0] sm:$0xff]
                %535 = vst [vmem:[%s481 + $0xd0] sm:$0xff] %v534
                %v536 = vld [vmem:[%s480 + $0x1d8] sm:$0xff]
                %537 = vst [vmem:[%s481 + $0xd8] sm:$0xff] %v536
                %v538 = vld [vmem:[%s480 + $0x1e0] sm:$0xff]
                %539 = vst [vmem:[%s481 + $0xe0] sm:$0xff] %v538
                %v540 = vld [vmem:[%s480 + $0x1e8] sm:$0xff]
                %541 = vst [vmem:[%s481 + $0xe8] sm:$0xff] %v540
                %v542 = vld [vmem:[%s480 + $0x1f0] sm:$0xff]
                %543 = vst [vmem:[%s481 + $0xf0] sm:$0xff] %v542
                %v544 = vld [vmem:[%s480 + $0x1f8] sm:$0xff]
                %545 = vst [vmem:[%s481 + $0xf8] sm:$0xff] %v544
                %v546 = vld [vmem:[%s480 + $0x300] sm:$0xff]
                %547 = vst [vmem:[%s481 + $0x100] sm:$0xff] %v546
                %v548 = vld [vmem:[%s480 + $0x308] sm:$0xff]
                %549 = vst [vmem:[%s481 + $0x108] sm:$0xff] %v548
                %v550 = vld [vmem:[%s480 + $0x310] sm:$0xff]
                %551 = vst [vmem:[%s481 + $0x110] sm:$0xff] %v550
                %v552 = vld [vmem:[%s480 + $0x318] sm:$0xff]
                %553 = vst [vmem:[%s481 + $0x118] sm:$0xff] %v552
                %v554 = vld [vmem:[%s480 + $0x320] sm:$0xff]
                %555 = vst [vmem:[%s481 + $0x120] sm:$0xff] %v554
                %v556 = vld [vmem:[%s480 + $0x328] sm:$0xff]
                %557 = vst [vmem:[%s481 + $0x128] sm:$0xff] %v556
                %v558 = vld [vmem:[%s480 + $0x330] sm:$0xff]
                %559 = vst [vmem:[%s481 + $0x130] sm:$0xff] %v558
                %v560 = vld [vmem:[%s480 + $0x338] sm:$0xff]
                %561 = vst [vmem:[%s481 + $0x138] sm:$0xff] %v560
                %v562 = vld [vmem:[%s480 + $0x340] sm:$0xff]
                %563 = vst [vmem:[%s481 + $0x140] sm:$0xff] %v562
                %v564 = vld [vmem:[%s480 + $0x348] sm:$0xff]
                %565 = vst [vmem:[%s481 + $0x148] sm:$0xff] %v564
                %v566 = vld [vmem:[%s480 + $0x350] sm:$0xff]
                %567 = vst [vmem:[%s481 + $0x150] sm:$0xff] %v566
                %v568 = vld [vmem:[%s480 + $0x358] sm:$0xff]
                %569 = vst [vmem:[%s481 + $0x158] sm:$0xff] %v568
                %v570 = vld [vmem:[%s480 + $0x360] sm:$0xff]
                %571 = vst [vmem:[%s481 + $0x160] sm:$0xff] %v570
                %v572 = vld [vmem:[%s480 + $0x368] sm:$0xff]
                %573 = vst [vmem:[%s481 + $0x168] sm:$0xff] %v572
                %v574 = vld [vmem:[%s480 + $0x370] sm:$0xff]
                %575 = vst [vmem:[%s481 + $0x170] sm:$0xff] %v574
                %v576 = vld [vmem:[%s480 + $0x378] sm:$0xff]
                %577 = vst [vmem:[%s481 + $0x178] sm:$0xff] %v576
                %v578 = vld [vmem:[%s480 + $0x480] sm:$0xff]
                %579 = vst [vmem:[%s481 + $0x180] sm:$0xff] %v578
                %v580 = vld [vmem:[%s480 + $0x488] sm:$0xff]
                %581 = vst [vmem:[%s481 + $0x188] sm:$0xff] %v580
                %v582 = vld [vmem:[%s480 + $0x490] sm:$0xff]
                %583 = vst [vmem:[%s481 + $0x190] sm:$0xff] %v582
                %v584 = vld [vmem:[%s480 + $0x498] sm:$0xff]
                %585 = vst [vmem:[%s481 + $0x198] sm:$0xff] %v584
                %v586 = vld [vmem:[%s480 + $0x4a0] sm:$0xff]
                %587 = vst [vmem:[%s481 + $0x1a0] sm:$0xff] %v586
                %v588 = vld [vmem:[%s480 + $0x4a8] sm:$0xff]
                %589 = vst [vmem:[%s481 + $0x1a8] sm:$0xff] %v588
                %v590 = vld [vmem:[%s480 + $0x4b0] sm:$0xff]
                %591 = vst [vmem:[%s481 + $0x1b0] sm:$0xff] %v590
                %v592 = vld [vmem:[%s480 + $0x4b8] sm:$0xff]
                %593 = vst [vmem:[%s481 + $0x1b8] sm:$0xff] %v592
                %v594 = vld [vmem:[%s480 + $0x4c0] sm:$0xff]
                %595 = vst [vmem:[%s481 + $0x1c0] sm:$0xff] %v594
                %v596 = vld [vmem:[%s480 + $0x4c8] sm:$0xff]
                %597 = vst [vmem:[%s481 + $0x1c8] sm:$0xff] %v596
                %v598 = vld [vmem:[%s480 + $0x4d0] sm:$0xff]
                %599 = vst [vmem:[%s481 + $0x1d0] sm:$0xff] %v598
                %v600 = vld [vmem:[%s480 + $0x4d8] sm:$0xff]
                %601 = vst [vmem:[%s481 + $0x1d8] sm:$0xff] %v600
                %v602 = vld [vmem:[%s480 + $0x4e0] sm:$0xff]
                %603 = vst [vmem:[%s481 + $0x1e0] sm:$0xff] %v602
                %v604 = vld [vmem:[%s480 + $0x4e8] sm:$0xff]
                %605 = vst [vmem:[%s481 + $0x1e8] sm:$0xff] %v604
                %v606 = vld [vmem:[%s480 + $0x4f0] sm:$0xff]
                %607 = vst [vmem:[%s481 + $0x1f0] sm:$0xff] %v606
                %v608 = vld [vmem:[%s480 + $0x4f8] sm:$0xff]
                %609 = vst [vmem:[%s481 + $0x1f8] sm:$0xff] %v608
              $region75: #{scaled_dot_product_attention.1} parent=69 // loop_footer
                %s479 = sadd.s32 1, %s475
              $region76: #{scaled_dot_product_attention.1} parent=69 // loop_footer_branch
                %474 = sbr.rel target = $region72
              $region77: #{scaled_dot_product_attention.1} parent=69 // loop_exit
                _
            $region70: #{scaled_dot_product_attention.1} parent=61 // pred_fallthru
              _
          $region62: #{scaled_dot_product_attention.1} parent=57 // pred_fallthru
            _
          %750 = vnop
        $region58: #{scaled_dot_product_attention.1} parent=15 // pred_fallthru
          _
        // Predicated region
        $region93: #{scaled_dot_product_attention.1} parent=15 // pred_check
          %p751 = pneg %p106
        $region94: #{scaled_dot_product_attention.1} parent=15 // pred_check_branch
          %753 = sbr.rel (%p751) target = $region96
        $region95: #{scaled_dot_product_attention.1} parent=15 // pred_region
          %s754 = sand.u32 %s96, 1
          %s755 = sand.u32 %s96, 1
          %s756 = smul.addr %s755, 512
          %s757 = scalar_lea.vmem [#allocation7], %s756
          %s758 = smul.u32 16, %s18
          %s759 = smul.addr %s16, 192
          %s760 = sadd.s32 %s758, %s759
          %s761 = smul.addr %s760, 8
          %s762 = scalar_lea.vmem %s2, %s761
          // Predicated region
          $region97: #{scaled_dot_product_attention.1} parent=95 // pred_check
            _
          $region98: #{scaled_dot_product_attention.1} parent=95 // pred_check_branch
            %764 = sbr.rel (0) target = $region100
          $region99: #{scaled_dot_product_attention.1} parent=95 // pred_region
            // Predicated region
            $region101: #{scaled_dot_product_attention.1} parent=99 // pred_check
              _
            $region102: #{scaled_dot_product_attention.1} parent=99 // pred_check_branch
              %766 = sbr.rel (0) target = $region104
            $region103: #{scaled_dot_product_attention.1} parent=99 // pred_region
              // Predicated region
              $region116: #{scaled_dot_product_attention.1} parent=103 // pred_check
                _
              $region117: #{scaled_dot_product_attention.1} parent=103 // pred_check_branch
                %907 = sbr.rel (0) target = $region119
              $region118: #{scaled_dot_product_attention.1} parent=103 // pred_region
                loop: start=0, step=1, limit=1
                $region120: #{scaled_dot_product_attention.1} parent=118 // loop_pre_header
                  _
                $region121: #{scaled_dot_product_attention.1} parent=118 // loop_header
                  %s909 = sphi 0, %s913
                  %p910 = scmp.ge.s32.totalorder %s909, 1
                  %s914 = sphi %s762, %s762
                  %s915 = sphi %s757, %s757
                $region122: #{scaled_dot_product_attention.1} parent=118 // loop_header_branch
                  %912 = sbr.rel (%p910) target = $region126
                $region123: #{scaled_dot_product_attention.1} parent=118 // loop_body
                  %v916 = vld [vmem:[%s914] sm:$0xff]
                  %917 = vst [vmem:[%s915] sm:$0xff] %v916
                  %v918 = vld [vmem:[%s914 + $0x8] sm:$0xff]
                  %919 = vst [vmem:[%s915 + $0x8] sm:$0xff] %v918
                  %v920 = vld [vmem:[%s914 + $0x10] sm:$0xff]
                  %921 = vst [vmem:[%s915 + $0x10] sm:$0xff] %v920
                  %v922 = vld [vmem:[%s914 + $0x18] sm:$0xff]
                  %923 = vst [vmem:[%s915 + $0x18] sm:$0xff] %v922
                  %v924 = vld [vmem:[%s914 + $0x20] sm:$0xff]
                  %925 = vst [vmem:[%s915 + $0x20] sm:$0xff] %v924
                  %v926 = vld [vmem:[%s914 + $0x28] sm:$0xff]
                  %927 = vst [vmem:[%s915 + $0x28] sm:$0xff] %v926
                  %v928 = vld [vmem:[%s914 + $0x30] sm:$0xff]
                  %929 = vst [vmem:[%s915 + $0x30] sm:$0xff] %v928
                  %v930 = vld [vmem:[%s914 + $0x38] sm:$0xff]
                  %931 = vst [vmem:[%s915 + $0x38] sm:$0xff] %v930
                  %v932 = vld [vmem:[%s914 + $0x40] sm:$0xff]
                  %933 = vst [vmem:[%s915 + $0x40] sm:$0xff] %v932
                  %v934 = vld [vmem:[%s914 + $0x48] sm:$0xff]
                  %935 = vst [vmem:[%s915 + $0x48] sm:$0xff] %v934
                  %v936 = vld [vmem:[%s914 + $0x50] sm:$0xff]
                  %937 = vst [vmem:[%s915 + $0x50] sm:$0xff] %v936
                  %v938 = vld [vmem:[%s914 + $0x58] sm:$0xff]
                  %939 = vst [vmem:[%s915 + $0x58] sm:$0xff] %v938
                  %v940 = vld [vmem:[%s914 + $0x60] sm:$0xff]
                  %941 = vst [vmem:[%s915 + $0x60] sm:$0xff] %v940
                  %v942 = vld [vmem:[%s914 + $0x68] sm:$0xff]
                  %943 = vst [vmem:[%s915 + $0x68] sm:$0xff] %v942
                  %v944 = vld [vmem:[%s914 + $0x70] sm:$0xff]
                  %945 = vst [vmem:[%s915 + $0x70] sm:$0xff] %v944
                  %v946 = vld [vmem:[%s914 + $0x78] sm:$0xff]
                  %947 = vst [vmem:[%s915 + $0x78] sm:$0xff] %v946
                  %v948 = vld [vmem:[%s914 + $0x180] sm:$0xff]
                  %949 = vst [vmem:[%s915 + $0x80] sm:$0xff] %v948
                  %v950 = vld [vmem:[%s914 + $0x188] sm:$0xff]
                  %951 = vst [vmem:[%s915 + $0x88] sm:$0xff] %v950
                  %v952 = vld [vmem:[%s914 + $0x190] sm:$0xff]
                  %953 = vst [vmem:[%s915 + $0x90] sm:$0xff] %v952
                  %v954 = vld [vmem:[%s914 + $0x198] sm:$0xff]
                  %955 = vst [vmem:[%s915 + $0x98] sm:$0xff] %v954
                  %v956 = vld [vmem:[%s914 + $0x1a0] sm:$0xff]
                  %957 = vst [vmem:[%s915 + $0xa0] sm:$0xff] %v956
                  %v958 = vld [vmem:[%s914 + $0x1a8] sm:$0xff]
                  %959 = vst [vmem:[%s915 + $0xa8] sm:$0xff] %v958
                  %v960 = vld [vmem:[%s914 + $0x1b0] sm:$0xff]
                  %961 = vst [vmem:[%s915 + $0xb0] sm:$0xff] %v960
                  %v962 = vld [vmem:[%s914 + $0x1b8] sm:$0xff]
                  %963 = vst [vmem:[%s915 + $0xb8] sm:$0xff] %v962
                  %v964 = vld [vmem:[%s914 + $0x1c0] sm:$0xff]
                  %965 = vst [vmem:[%s915 + $0xc0] sm:$0xff] %v964
                  %v966 = vld [vmem:[%s914 + $0x1c8] sm:$0xff]
                  %967 = vst [vmem:[%s915 + $0xc8] sm:$0xff] %v966
                  %v968 = vld [vmem:[%s914 + $0x1d0] sm:$0xff]
                  %969 = vst [vmem:[%s915 + $0xd0] sm:$0xff] %v968
                  %v970 = vld [vmem:[%s914 + $0x1d8] sm:$0xff]
                  %971 = vst [vmem:[%s915 + $0xd8] sm:$0xff] %v970
                  %v972 = vld [vmem:[%s914 + $0x1e0] sm:$0xff]
                  %973 = vst [vmem:[%s915 + $0xe0] sm:$0xff] %v972
                  %v974 = vld [vmem:[%s914 + $0x1e8] sm:$0xff]
                  %975 = vst [vmem:[%s915 + $0xe8] sm:$0xff] %v974
                  %v976 = vld [vmem:[%s914 + $0x1f0] sm:$0xff]
                  %977 = vst [vmem:[%s915 + $0xf0] sm:$0xff] %v976
                  %v978 = vld [vmem:[%s914 + $0x1f8] sm:$0xff]
                  %979 = vst [vmem:[%s915 + $0xf8] sm:$0xff] %v978
                  %v980 = vld [vmem:[%s914 + $0x300] sm:$0xff]
                  %981 = vst [vmem:[%s915 + $0x100] sm:$0xff] %v980
                  %v982 = vld [vmem:[%s914 + $0x308] sm:$0xff]
                  %983 = vst [vmem:[%s915 + $0x108] sm:$0xff] %v982
                  %v984 = vld [vmem:[%s914 + $0x310] sm:$0xff]
                  %985 = vst [vmem:[%s915 + $0x110] sm:$0xff] %v984
                  %v986 = vld [vmem:[%s914 + $0x318] sm:$0xff]
                  %987 = vst [vmem:[%s915 + $0x118] sm:$0xff] %v986
                  %v988 = vld [vmem:[%s914 + $0x320] sm:$0xff]
                  %989 = vst [vmem:[%s915 + $0x120] sm:$0xff] %v988
                  %v990 = vld [vmem:[%s914 + $0x328] sm:$0xff]
                  %991 = vst [vmem:[%s915 + $0x128] sm:$0xff] %v990
                  %v992 = vld [vmem:[%s914 + $0x330] sm:$0xff]
                  %993 = vst [vmem:[%s915 + $0x130] sm:$0xff] %v992
                  %v994 = vld [vmem:[%s914 + $0x338] sm:$0xff]
                  %995 = vst [vmem:[%s915 + $0x138] sm:$0xff] %v994
                  %v996 = vld [vmem:[%s914 + $0x340] sm:$0xff]
                  %997 = vst [vmem:[%s915 + $0x140] sm:$0xff] %v996
                  %v998 = vld [vmem:[%s914 + $0x348] sm:$0xff]
                  %999 = vst [vmem:[%s915 + $0x148] sm:$0xff] %v998
                  %v1000 = vld [vmem:[%s914 + $0x350] sm:$0xff]
                  %1001 = vst [vmem:[%s915 + $0x150] sm:$0xff] %v1000
                  %v1002 = vld [vmem:[%s914 + $0x358] sm:$0xff]
                  %1003 = vst [vmem:[%s915 + $0x158] sm:$0xff] %v1002
                  %v1004 = vld [vmem:[%s914 + $0x360] sm:$0xff]
                  %1005 = vst [vmem:[%s915 + $0x160] sm:$0xff] %v1004
                  %v1006 = vld [vmem:[%s914 + $0x368] sm:$0xff]
                  %1007 = vst [vmem:[%s915 + $0x168] sm:$0xff] %v1006
                  %v1008 = vld [vmem:[%s914 + $0x370] sm:$0xff]
                  %1009 = vst [vmem:[%s915 + $0x170] sm:$0xff] %v1008
                  %v1010 = vld [vmem:[%s914 + $0x378] sm:$0xff]
                  %1011 = vst [vmem:[%s915 + $0x178] sm:$0xff] %v1010
                  %v1012 = vld [vmem:[%s914 + $0x480] sm:$0xff]
                  %1013 = vst [vmem:[%s915 + $0x180] sm:$0xff] %v1012
                  %v1014 = vld [vmem:[%s914 + $0x488] sm:$0xff]
                  %1015 = vst [vmem:[%s915 + $0x188] sm:$0xff] %v1014
                  %v1016 = vld [vmem:[%s914 + $0x490] sm:$0xff]
                  %1017 = vst [vmem:[%s915 + $0x190] sm:$0xff] %v1016
                  %v1018 = vld [vmem:[%s914 + $0x498] sm:$0xff]
                  %1019 = vst [vmem:[%s915 + $0x198] sm:$0xff] %v1018
                  %v1020 = vld [vmem:[%s914 + $0x4a0] sm:$0xff]
                  %1021 = vst [vmem:[%s915 + $0x1a0] sm:$0xff] %v1020
                  %v1022 = vld [vmem:[%s914 + $0x4a8] sm:$0xff]
                  %1023 = vst [vmem:[%s915 + $0x1a8] sm:$0xff] %v1022
                  %v1024 = vld [vmem:[%s914 + $0x4b0] sm:$0xff]
                  %1025 = vst [vmem:[%s915 + $0x1b0] sm:$0xff] %v1024
                  %v1026 = vld [vmem:[%s914 + $0x4b8] sm:$0xff]
                  %1027 = vst [vmem:[%s915 + $0x1b8] sm:$0xff] %v1026
                  %v1028 = vld [vmem:[%s914 + $0x4c0] sm:$0xff]
                  %1029 = vst [vmem:[%s915 + $0x1c0] sm:$0xff] %v1028
                  %v1030 = vld [vmem:[%s914 + $0x4c8] sm:$0xff]
                  %1031 = vst [vmem:[%s915 + $0x1c8] sm:$0xff] %v1030
                  %v1032 = vld [vmem:[%s914 + $0x4d0] sm:$0xff]
                  %1033 = vst [vmem:[%s915 + $0x1d0] sm:$0xff] %v1032
                  %v1034 = vld [vmem:[%s914 + $0x4d8] sm:$0xff]
                  %1035 = vst [vmem:[%s915 + $0x1d8] sm:$0xff] %v1034
                  %v1036 = vld [vmem:[%s914 + $0x4e0] sm:$0xff]
                  %1037 = vst [vmem:[%s915 + $0x1e0] sm:$0xff] %v1036
                  %v1038 = vld [vmem:[%s914 + $0x4e8] sm:$0xff]
                  %1039 = vst [vmem:[%s915 + $0x1e8] sm:$0xff] %v1038
                  %v1040 = vld [vmem:[%s914 + $0x4f0] sm:$0xff]
                  %1041 = vst [vmem:[%s915 + $0x1f0] sm:$0xff] %v1040
                  %v1042 = vld [vmem:[%s914 + $0x4f8] sm:$0xff]
                  %1043 = vst [vmem:[%s915 + $0x1f8] sm:$0xff] %v1042
                $region124: #{scaled_dot_product_attention.1} parent=118 // loop_footer
                  %s913 = sadd.s32 1, %s909
                $region125: #{scaled_dot_product_attention.1} parent=118 // loop_footer_branch
                  %908 = sbr.rel target = $region121
                $region126: #{scaled_dot_product_attention.1} parent=118 // loop_exit
                  _
              $region119: #{scaled_dot_product_attention.1} parent=103 // pred_fallthru
                _
              // Predicated region
              $region127: #{scaled_dot_product_attention.1} parent=103 // pred_check
                _
              $region128: #{scaled_dot_product_attention.1} parent=103 // pred_check_branch
                %1045 = sbr.rel target = $region130
              $region129: #{scaled_dot_product_attention.1} parent=103 // pred_region
                _
              $region130: #{scaled_dot_product_attention.1} parent=103 // pred_fallthru
                _
            $region104: #{scaled_dot_product_attention.1} parent=99 // pred_fallthru
              _
            // Predicated region
            $region105: #{scaled_dot_product_attention.1} parent=99 // pred_check
              _
            $region106: #{scaled_dot_product_attention.1} parent=99 // pred_check_branch
              %768 = sbr.rel target = $region108
            $region107: #{scaled_dot_product_attention.1} parent=99 // pred_region
              loop: start=0, step=1, limit=1
              $region109: #{scaled_dot_product_attention.1} parent=107 // loop_pre_header
                _
              $region110: #{scaled_dot_product_attention.1} parent=107 // loop_header
                %s771 = sphi 0, %s775
                %p772 = scmp.ge.s32.totalorder %s771, 1
                %s776 = sphi %s762, %s762
                %s777 = sphi %s757, %s757
              $region111: #{scaled_dot_product_attention.1} parent=107 // loop_header_branch
                %774 = sbr.rel (%p772) target = $region115
              $region112: #{scaled_dot_product_attention.1} parent=107 // loop_body
                %v778 = vld [vmem:[%s776] sm:$0xff]
                %779 = vst [vmem:[%s777] sm:$0xff] %v778
                %v780 = vld [vmem:[%s776 + $0x8] sm:$0xff]
                %781 = vst [vmem:[%s777 + $0x8] sm:$0xff] %v780
                %v782 = vld [vmem:[%s776 + $0x10] sm:$0xff]
                %783 = vst [vmem:[%s777 + $0x10] sm:$0xff] %v782
                %v784 = vld [vmem:[%s776 + $0x18] sm:$0xff]
                %785 = vst [vmem:[%s777 + $0x18] sm:$0xff] %v784
                %v786 = vld [vmem:[%s776 + $0x20] sm:$0xff]
                %787 = vst [vmem:[%s777 + $0x20] sm:$0xff] %v786
                %v788 = vld [vmem:[%s776 + $0x28] sm:$0xff]
                %789 = vst [vmem:[%s777 + $0x28] sm:$0xff] %v788
                %v790 = vld [vmem:[%s776 + $0x30] sm:$0xff]
                %791 = vst [vmem:[%s777 + $0x30] sm:$0xff] %v790
                %v792 = vld [vmem:[%s776 + $0x38] sm:$0xff]
                %793 = vst [vmem:[%s777 + $0x38] sm:$0xff] %v792
                %v794 = vld [vmem:[%s776 + $0x40] sm:$0xff]
                %795 = vst [vmem:[%s777 + $0x40] sm:$0xff] %v794
                %v796 = vld [vmem:[%s776 + $0x48] sm:$0xff]
                %797 = vst [vmem:[%s777 + $0x48] sm:$0xff] %v796
                %v798 = vld [vmem:[%s776 + $0x50] sm:$0xff]
                %799 = vst [vmem:[%s777 + $0x50] sm:$0xff] %v798
                %v800 = vld [vmem:[%s776 + $0x58] sm:$0xff]
                %801 = vst [vmem:[%s777 + $0x58] sm:$0xff] %v800
                %v802 = vld [vmem:[%s776 + $0x60] sm:$0xff]
                %803 = vst [vmem:[%s777 + $0x60] sm:$0xff] %v802
                %v804 = vld [vmem:[%s776 + $0x68] sm:$0xff]
                %805 = vst [vmem:[%s777 + $0x68] sm:$0xff] %v804
                %v806 = vld [vmem:[%s776 + $0x70] sm:$0xff]
                %807 = vst [vmem:[%s777 + $0x70] sm:$0xff] %v806
                %v808 = vld [vmem:[%s776 + $0x78] sm:$0xff]
                %809 = vst [vmem:[%s777 + $0x78] sm:$0xff] %v808
                %v810 = vld [vmem:[%s776 + $0x180] sm:$0xff]
                %811 = vst [vmem:[%s777 + $0x80] sm:$0xff] %v810
                %v812 = vld [vmem:[%s776 + $0x188] sm:$0xff]
                %813 = vst [vmem:[%s777 + $0x88] sm:$0xff] %v812
                %v814 = vld [vmem:[%s776 + $0x190] sm:$0xff]
                %815 = vst [vmem:[%s777 + $0x90] sm:$0xff] %v814
                %v816 = vld [vmem:[%s776 + $0x198] sm:$0xff]
                %817 = vst [vmem:[%s777 + $0x98] sm:$0xff] %v816
                %v818 = vld [vmem:[%s776 + $0x1a0] sm:$0xff]
                %819 = vst [vmem:[%s777 + $0xa0] sm:$0xff] %v818
                %v820 = vld [vmem:[%s776 + $0x1a8] sm:$0xff]
                %821 = vst [vmem:[%s777 + $0xa8] sm:$0xff] %v820
                %v822 = vld [vmem:[%s776 + $0x1b0] sm:$0xff]
                %823 = vst [vmem:[%s777 + $0xb0] sm:$0xff] %v822
                %v824 = vld [vmem:[%s776 + $0x1b8] sm:$0xff]
                %825 = vst [vmem:[%s777 + $0xb8] sm:$0xff] %v824
                %v826 = vld [vmem:[%s776 + $0x1c0] sm:$0xff]
                %827 = vst [vmem:[%s777 + $0xc0] sm:$0xff] %v826
                %v828 = vld [vmem:[%s776 + $0x1c8] sm:$0xff]
                %829 = vst [vmem:[%s777 + $0xc8] sm:$0xff] %v828
                %v830 = vld [vmem:[%s776 + $0x1d0] sm:$0xff]
                %831 = vst [vmem:[%s777 + $0xd0] sm:$0xff] %v830
                %v832 = vld [vmem:[%s776 + $0x1d8] sm:$0xff]
                %833 = vst [vmem:[%s777 + $0xd8] sm:$0xff] %v832
                %v834 = vld [vmem:[%s776 + $0x1e0] sm:$0xff]
                %835 = vst [vmem:[%s777 + $0xe0] sm:$0xff] %v834
                %v836 = vld [vmem:[%s776 + $0x1e8] sm:$0xff]
                %837 = vst [vmem:[%s777 + $0xe8] sm:$0xff] %v836
                %v838 = vld [vmem:[%s776 + $0x1f0] sm:$0xff]
                %839 = vst [vmem:[%s777 + $0xf0] sm:$0xff] %v838
                %v840 = vld [vmem:[%s776 + $0x1f8] sm:$0xff]
                %841 = vst [vmem:[%s777 + $0xf8] sm:$0xff] %v840
                %v842 = vld [vmem:[%s776 + $0x300] sm:$0xff]
                %843 = vst [vmem:[%s777 + $0x100] sm:$0xff] %v842
                %v844 = vld [vmem:[%s776 + $0x308] sm:$0xff]
                %845 = vst [vmem:[%s777 + $0x108] sm:$0xff] %v844
                %v846 = vld [vmem:[%s776 + $0x310] sm:$0xff]
                %847 = vst [vmem:[%s777 + $0x110] sm:$0xff] %v846
                %v848 = vld [vmem:[%s776 + $0x318] sm:$0xff]
                %849 = vst [vmem:[%s777 + $0x118] sm:$0xff] %v848
                %v850 = vld [vmem:[%s776 + $0x320] sm:$0xff]
                %851 = vst [vmem:[%s777 + $0x120] sm:$0xff] %v850
                %v852 = vld [vmem:[%s776 + $0x328] sm:$0xff]
                %853 = vst [vmem:[%s777 + $0x128] sm:$0xff] %v852
                %v854 = vld [vmem:[%s776 + $0x330] sm:$0xff]
                %855 = vst [vmem:[%s777 + $0x130] sm:$0xff] %v854
                %v856 = vld [vmem:[%s776 + $0x338] sm:$0xff]
                %857 = vst [vmem:[%s777 + $0x138] sm:$0xff] %v856
                %v858 = vld [vmem:[%s776 + $0x340] sm:$0xff]
                %859 = vst [vmem:[%s777 + $0x140] sm:$0xff] %v858
                %v860 = vld [vmem:[%s776 + $0x348] sm:$0xff]
                %861 = vst [vmem:[%s777 + $0x148] sm:$0xff] %v860
                %v862 = vld [vmem:[%s776 + $0x350] sm:$0xff]
                %863 = vst [vmem:[%s777 + $0x150] sm:$0xff] %v862
                %v864 = vld [vmem:[%s776 + $0x358] sm:$0xff]
                %865 = vst [vmem:[%s777 + $0x158] sm:$0xff] %v864
                %v866 = vld [vmem:[%s776 + $0x360] sm:$0xff]
                %867 = vst [vmem:[%s777 + $0x160] sm:$0xff] %v866
                %v868 = vld [vmem:[%s776 + $0x368] sm:$0xff]
                %869 = vst [vmem:[%s777 + $0x168] sm:$0xff] %v868
                %v870 = vld [vmem:[%s776 + $0x370] sm:$0xff]
                %871 = vst [vmem:[%s777 + $0x170] sm:$0xff] %v870
                %v872 = vld [vmem:[%s776 + $0x378] sm:$0xff]
                %873 = vst [vmem:[%s777 + $0x178] sm:$0xff] %v872
                %v874 = vld [vmem:[%s776 + $0x480] sm:$0xff]
                %875 = vst [vmem:[%s777 + $0x180] sm:$0xff] %v874
                %v876 = vld [vmem:[%s776 + $0x488] sm:$0xff]
                %877 = vst [vmem:[%s777 + $0x188] sm:$0xff] %v876
                %v878 = vld [vmem:[%s776 + $0x490] sm:$0xff]
                %879 = vst [vmem:[%s777 + $0x190] sm:$0xff] %v878
                %v880 = vld [vmem:[%s776 + $0x498] sm:$0xff]
                %881 = vst [vmem:[%s777 + $0x198] sm:$0xff] %v880
                %v882 = vld [vmem:[%s776 + $0x4a0] sm:$0xff]
                %883 = vst [vmem:[%s777 + $0x1a0] sm:$0xff] %v882
                %v884 = vld [vmem:[%s776 + $0x4a8] sm:$0xff]
                %885 = vst [vmem:[%s777 + $0x1a8] sm:$0xff] %v884
                %v886 = vld [vmem:[%s776 + $0x4b0] sm:$0xff]
                %887 = vst [vmem:[%s777 + $0x1b0] sm:$0xff] %v886
                %v888 = vld [vmem:[%s776 + $0x4b8] sm:$0xff]
                %889 = vst [vmem:[%s777 + $0x1b8] sm:$0xff] %v888
                %v890 = vld [vmem:[%s776 + $0x4c0] sm:$0xff]
                %891 = vst [vmem:[%s777 + $0x1c0] sm:$0xff] %v890
                %v892 = vld [vmem:[%s776 + $0x4c8] sm:$0xff]
                %893 = vst [vmem:[%s777 + $0x1c8] sm:$0xff] %v892
                %v894 = vld [vmem:[%s776 + $0x4d0] sm:$0xff]
                %895 = vst [vmem:[%s777 + $0x1d0] sm:$0xff] %v894
                %v896 = vld [vmem:[%s776 + $0x4d8] sm:$0xff]
                %897 = vst [vmem:[%s777 + $0x1d8] sm:$0xff] %v896
                %v898 = vld [vmem:[%s776 + $0x4e0] sm:$0xff]
                %899 = vst [vmem:[%s777 + $0x1e0] sm:$0xff] %v898
                %v900 = vld [vmem:[%s776 + $0x4e8] sm:$0xff]
                %901 = vst [vmem:[%s777 + $0x1e8] sm:$0xff] %v900
                %v902 = vld [vmem:[%s776 + $0x4f0] sm:$0xff]
                %903 = vst [vmem:[%s777 + $0x1f0] sm:$0xff] %v902
                %v904 = vld [vmem:[%s776 + $0x4f8] sm:$0xff]
                %905 = vst [vmem:[%s777 + $0x1f8] sm:$0xff] %v904
              $region113: #{scaled_dot_product_attention.1} parent=107 // loop_footer
                %s775 = sadd.s32 1, %s771
              $region114: #{scaled_dot_product_attention.1} parent=107 // loop_footer_branch
                %770 = sbr.rel target = $region110
              $region115: #{scaled_dot_product_attention.1} parent=107 // loop_exit
                _
            $region108: #{scaled_dot_product_attention.1} parent=99 // pred_fallthru
              _
          $region100: #{scaled_dot_product_attention.1} parent=95 // pred_fallthru
            _
          %1046 = vnop
        $region96: #{scaled_dot_product_attention.1} parent=15 // pred_fallthru
          _
      $region16: #{scaled_dot_product_attention.1} parent=5 // pred_fallthru
        _
      %p1047 = scmp.le.s32.totalorder 1, %s9
      %p1048 = scmp.lt.s32.totalorder %s9, 13
      %p1049 = pnand %p1047, %p1048
      %p1050 = pneg %p1049
      // Predicated region
      $region131: #{scaled_dot_product_attention.1} parent=5 // pred_check
        _
      $region132: #{scaled_dot_product_attention.1} parent=5 // pred_check_branch
        %1052 = sbr.rel (%p1049) target = $region134
      $region133: #{scaled_dot_product_attention.1} parent=5 // pred_region
        %s1053 = ssub.s32 %s9, 1
        %s1054 = sand.u32 %s43, 1
        %s1055 = sand.u32 %s43, 1
        %s1056 = smul.addr %s1055, 512
        %s1057 = scalar_lea.vmem [#allocation5], %s1056
        // Predicated region
        $region135: #{scaled_dot_product_attention.1} parent=133 // pred_check
          %p1058 = pneg %p56
        $region136: #{scaled_dot_product_attention.1} parent=133 // pred_check_branch
          %1060 = sbr.rel (%p1058) target = $region138
        $region137: #{scaled_dot_product_attention.1} parent=133 // pred_region
          _
        $region138: #{scaled_dot_product_attention.1} parent=133 // pred_fallthru
          _
        %s1061 = sand.u32 %s71, 1
        %s1062 = sand.u32 %s71, 1
        %s1063 = smul.addr %s1062, 512
        %s1064 = scalar_lea.vmem [#allocation6], %s1063
        // Predicated region
        $region139: #{scaled_dot_product_attention.1} parent=133 // pred_check
          %p1065 = pneg %p84
        $region140: #{scaled_dot_product_attention.1} parent=133 // pred_check_branch
          %1067 = sbr.rel (%p1065) target = $region142
        $region141: #{scaled_dot_product_attention.1} parent=133 // pred_region
          _
        $region142: #{scaled_dot_product_attention.1} parent=133 // pred_fallthru
          _
        %s1068 = sand.u32 %s99, 1
        %s1069 = sand.u32 %s99, 1
        %s1070 = smul.addr %s1069, 512
        %s1071 = scalar_lea.vmem [#allocation7], %s1070
        // Predicated region
        $region143: #{scaled_dot_product_attention.1} parent=133 // pred_check
          %p1072 = pneg %p112
        $region144: #{scaled_dot_product_attention.1} parent=133 // pred_check_branch
          %1074 = sbr.rel (%p1072) target = $region146
        $region145: #{scaled_dot_product_attention.1} parent=133 // pred_region
          _
        $region146: #{scaled_dot_product_attention.1} parent=133 // pred_fallthru
          _
        %s1075 = sand.u32 %s43, 1
        %s1076 = sand.u32 %s43, 1
        %s1077 = smul.addr %s1076, 512
        %s1078 = scalar_lea.vmem [#allocation5], %s1077
        %p1079 = pneg %p56
        %p1080 = pneg %p53
        %s1081 = sand.u32 %s71, 1
        %s1082 = sand.u32 %s71, 1
        %s1083 = smul.addr %s1082, 512
        %s1084 = scalar_lea.vmem [#allocation6], %s1083
        %p1085 = pneg %p84
        %p1086 = pneg %p81
        %s1087 = sand.u32 %s99, 1
        %s1088 = sand.u32 %s99, 1
        %s1089 = smul.addr %s1088, 512
        %s1090 = scalar_lea.vmem [#allocation7], %s1089
        %p1091 = pneg %p112
        %p1092 = pneg %p109
        %p1093 = pneg %p140
        %p1094 = pneg %p137
        %s1095 = smul.u32 16, %s20
        %p1096 = scmp.lt.s32.totalorder %s19, 1
        %s1097 = scalar_select %p1096, %s19, 1
        %p1098 = scmp.lt.s32.totalorder %s1095, 31
        %s1099 = scalar_select %p1098, %s1095, 31
        %s1100 = smul.addr %s1097, 32
        %s1101 = sadd.s32 %s1099, %s1100
        %s1102 = smul.addr %s1101, 8
        %s1103 = scalar_lea.vmem %s3, %s1102
        %s1104 = smul.u32 16, %s20
        %s1105 = smul.u32 16, %s21
        %s1106 = smul.u32 16, %s21
        %s1107 = smul.u32 16, %s20
        %p1108 = scmp.lt.s32.totalorder %s19, 1
        %s1109 = scalar_select %p1108, %s19, 1
        %p1110 = scmp.lt.s32.totalorder %s1107, 31
        %s1111 = scalar_select %p1110, %s1107, 31
        %s1112 = smul.addr %s1109, 32
        %s1113 = sadd.s32 %s1111, %s1112
        %s1114 = smul.addr %s1113, 8
        %s1115 = scalar_lea.vmem %s3, %s1114
        %s1116 = smul.u32 16, %s20
        %p1117 = scmp.eq.s32.totalorder %s21, 0
        // Predicated region
        $region147: #{scaled_dot_product_attention.1} parent=133 // pred_check
          %p1118 = pneg %p1117
        $region148: #{scaled_dot_product_attention.1} parent=133 // pred_check_branch
          %1120 = sbr.rel (%p1118) target = $region150
        $region149: #{scaled_dot_product_attention.1} parent=133 // pred_region
          %vm1121 = vcmask 7168
          %1122 = vst.msk [vmem:[#allocation2] sm:$0xff] %vm1121, -inf
          %1123 = vst.msk [vmem:[#allocation2 + $0x8] sm:$0xff] %vm1121, -inf
          %1124 = vst.msk [vmem:[#allocation2 + $0x10] sm:$0xff] %vm1121, -inf
          %1125 = vst.msk [vmem:[#allocation2 + $0x18] sm:$0xff] %vm1121, -inf
          %1126 = vst.msk [vmem:[#allocation2 + $0x20] sm:$0xff] %vm1121, -inf
          %1127 = vst.msk [vmem:[#allocation2 + $0x28] sm:$0xff] %vm1121, -inf
          %1128 = vst.msk [vmem:[#allocation2 + $0x30] sm:$0xff] %vm1121, -inf
          %1129 = vst.msk [vmem:[#allocation2 + $0x38] sm:$0xff] %vm1121, -inf
          %1130 = vst.msk [vmem:[#allocation2 + $0x40] sm:$0xff] %vm1121, -inf
          %1131 = vst.msk [vmem:[#allocation2 + $0x48] sm:$0xff] %vm1121, -inf
          %1132 = vst.msk [vmem:[#allocation2 + $0x50] sm:$0xff] %vm1121, -inf
          %1133 = vst.msk [vmem:[#allocation2 + $0x58] sm:$0xff] %vm1121, -inf
          %1134 = vst.msk [vmem:[#allocation2 + $0x60] sm:$0xff] %vm1121, -inf
          %1135 = vst.msk [vmem:[#allocation2 + $0x68] sm:$0xff] %vm1121, -inf
          %1136 = vst.msk [vmem:[#allocation2 + $0x70] sm:$0xff] %vm1121, -inf
          %1137 = vst.msk [vmem:[#allocation2 + $0x78] sm:$0xff] %vm1121, -inf
          %1138 = vst.msk [vmem:[#allocation2 + $0x80] sm:$0xff] %vm1121, -inf
          %1139 = vst.msk [vmem:[#allocation2 + $0x88] sm:$0xff] %vm1121, -inf
          %1140 = vst.msk [vmem:[#allocation2 + $0x90] sm:$0xff] %vm1121, -inf
          %1141 = vst.msk [vmem:[#allocation2 + $0x98] sm:$0xff] %vm1121, -inf
          %1142 = vst.msk [vmem:[#allocation2 + $0xa0] sm:$0xff] %vm1121, -inf
          %1143 = vst.msk [vmem:[#allocation2 + $0xa8] sm:$0xff] %vm1121, -inf
          %1144 = vst.msk [vmem:[#allocation2 + $0xb0] sm:$0xff] %vm1121, -inf
          %1145 = vst.msk [vmem:[#allocation2 + $0xb8] sm:$0xff] %vm1121, -inf
          %1146 = vst.msk [vmem:[#allocation2 + $0xc0] sm:$0xff] %vm1121, -inf
          %1147 = vst.msk [vmem:[#allocation2 + $0xc8] sm:$0xff] %vm1121, -inf
          %1148 = vst.msk [vmem:[#allocation2 + $0xd0] sm:$0xff] %vm1121, -inf
          %1149 = vst.msk [vmem:[#allocation2 + $0xd8] sm:$0xff] %vm1121, -inf
          %1150 = vst.msk [vmem:[#allocation2 + $0xe0] sm:$0xff] %vm1121, -inf
          %1151 = vst.msk [vmem:[#allocation2 + $0xe8] sm:$0xff] %vm1121, -inf
          %1152 = vst.msk [vmem:[#allocation2 + $0xf0] sm:$0xff] %vm1121, -inf
          %1153 = vst.msk [vmem:[#allocation2 + $0xf8] sm:$0xff] %vm1121, -inf
          %1154 = vst.msk [vmem:[#allocation2 + $0x100] sm:$0xff] %vm1121, -inf
          %1155 = vst.msk [vmem:[#allocation2 + $0x108] sm:$0xff] %vm1121, -inf
          %1156 = vst.msk [vmem:[#allocation2 + $0x110] sm:$0xff] %vm1121, -inf
          %1157 = vst.msk [vmem:[#allocation2 + $0x118] sm:$0xff] %vm1121, -inf
          %1158 = vst.msk [vmem:[#allocation2 + $0x120] sm:$0xff] %vm1121, -inf
          %1159 = vst.msk [vmem:[#allocation2 + $0x128] sm:$0xff] %vm1121, -inf
          %1160 = vst.msk [vmem:[#allocation2 + $0x130] sm:$0xff] %vm1121, -inf
          %1161 = vst.msk [vmem:[#allocation2 + $0x138] sm:$0xff] %vm1121, -inf
          %1162 = vst.msk [vmem:[#allocation2 + $0x140] sm:$0xff] %vm1121, -inf
          %1163 = vst.msk [vmem:[#allocation2 + $0x148] sm:$0xff] %vm1121, -inf
          %1164 = vst.msk [vmem:[#allocation2 + $0x150] sm:$0xff] %vm1121, -inf
          %1165 = vst.msk [vmem:[#allocation2 + $0x158] sm:$0xff] %vm1121, -inf
          %1166 = vst.msk [vmem:[#allocation2 + $0x160] sm:$0xff] %vm1121, -inf
          %1167 = vst.msk [vmem:[#allocation2 + $0x168] sm:$0xff] %vm1121, -inf
          %1168 = vst.msk [vmem:[#allocation2 + $0x170] sm:$0xff] %vm1121, -inf
          %1169 = vst.msk [vmem:[#allocation2 + $0x178] sm:$0xff] %vm1121, -inf
          %1170 = vst.msk [vmem:[#allocation2 + $0x180] sm:$0xff] %vm1121, -inf
          %1171 = vst.msk [vmem:[#allocation2 + $0x188] sm:$0xff] %vm1121, -inf
          %1172 = vst.msk [vmem:[#allocation2 + $0x190] sm:$0xff] %vm1121, -inf
          %1173 = vst.msk [vmem:[#allocation2 + $0x198] sm:$0xff] %vm1121, -inf
          %1174 = vst.msk [vmem:[#allocation2 + $0x1a0] sm:$0xff] %vm1121, -inf
          %1175 = vst.msk [vmem:[#allocation2 + $0x1a8] sm:$0xff] %vm1121, -inf
          %1176 = vst.msk [vmem:[#allocation2 + $0x1b0] sm:$0xff] %vm1121, -inf
          %1177 = vst.msk [vmem:[#allocation2 + $0x1b8] sm:$0xff] %vm1121, -inf
          %1178 = vst.msk [vmem:[#allocation2 + $0x1c0] sm:$0xff] %vm1121, -inf
          %1179 = vst.msk [vmem:[#allocation2 + $0x1c8] sm:$0xff] %vm1121, -inf
          %1180 = vst.msk [vmem:[#allocation2 + $0x1d0] sm:$0xff] %vm1121, -inf
          %1181 = vst.msk [vmem:[#allocation2 + $0x1d8] sm:$0xff] %vm1121, -inf
          %1182 = vst.msk [vmem:[#allocation2 + $0x1e0] sm:$0xff] %vm1121, -inf
          %1183 = vst.msk [vmem:[#allocation2 + $0x1e8] sm:$0xff] %vm1121, -inf
          %1184 = vst.msk [vmem:[#allocation2 + $0x1f0] sm:$0xff] %vm1121, -inf
          %1185 = vst.msk [vmem:[#allocation2 + $0x1f8] sm:$0xff] %vm1121, -inf
          %1186 = vst.msk [vmem:[#allocation3] sm:$0xff] %vm1121, 0.0
          %1187 = vst.msk [vmem:[#allocation3 + $0x8] sm:$0xff] %vm1121, 0.0
          %1188 = vst.msk [vmem:[#allocation3 + $0x10] sm:$0xff] %vm1121, 0.0
          %1189 = vst.msk [vmem:[#allocation3 + $0x18] sm:$0xff] %vm1121, 0.0
          %1190 = vst.msk [vmem:[#allocation3 + $0x20] sm:$0xff] %vm1121, 0.0
          %1191 = vst.msk [vmem:[#allocation3 + $0x28] sm:$0xff] %vm1121, 0.0
          %1192 = vst.msk [vmem:[#allocation3 + $0x30] sm:$0xff] %vm1121, 0.0
          %1193 = vst.msk [vmem:[#allocation3 + $0x38] sm:$0xff] %vm1121, 0.0
          %1194 = vst.msk [vmem:[#allocation3 + $0x40] sm:$0xff] %vm1121, 0.0
          %1195 = vst.msk [vmem:[#allocation3 + $0x48] sm:$0xff] %vm1121, 0.0
          %1196 = vst.msk [vmem:[#allocation3 + $0x50] sm:$0xff] %vm1121, 0.0
          %1197 = vst.msk [vmem:[#allocation3 + $0x58] sm:$0xff] %vm1121, 0.0
          %1198 = vst.msk [vmem:[#allocation3 + $0x60] sm:$0xff] %vm1121, 0.0
          %1199 = vst.msk [vmem:[#allocation3 + $0x68] sm:$0xff] %vm1121, 0.0
          %1200 = vst.msk [vmem:[#allocation3 + $0x70] sm:$0xff] %vm1121, 0.0
          %1201 = vst.msk [vmem:[#allocation3 + $0x78] sm:$0xff] %vm1121, 0.0
          %1202 = vst.msk [vmem:[#allocation3 + $0x80] sm:$0xff] %vm1121, 0.0
          %1203 = vst.msk [vmem:[#allocation3 + $0x88] sm:$0xff] %vm1121, 0.0
          %1204 = vst.msk [vmem:[#allocation3 + $0x90] sm:$0xff] %vm1121, 0.0
          %1205 = vst.msk [vmem:[#allocation3 + $0x98] sm:$0xff] %vm1121, 0.0
          %1206 = vst.msk [vmem:[#allocation3 + $0xa0] sm:$0xff] %vm1121, 0.0
          %1207 = vst.msk [vmem:[#allocation3 + $0xa8] sm:$0xff] %vm1121, 0.0
          %1208 = vst.msk [vmem:[#allocation3 + $0xb0] sm:$0xff] %vm1121, 0.0
          %1209 = vst.msk [vmem:[#allocation3 + $0xb8] sm:$0xff] %vm1121, 0.0
          %1210 = vst.msk [vmem:[#allocation3 + $0xc0] sm:$0xff] %vm1121, 0.0
          %1211 = vst.msk [vmem:[#allocation3 + $0xc8] sm:$0xff] %vm1121, 0.0
          %1212 = vst.msk [vmem:[#allocation3 + $0xd0] sm:$0xff] %vm1121, 0.0
          %1213 = vst.msk [vmem:[#allocation3 + $0xd8] sm:$0xff] %vm1121, 0.0
          %1214 = vst.msk [vmem:[#allocation3 + $0xe0] sm:$0xff] %vm1121, 0.0
          %1215 = vst.msk [vmem:[#allocation3 + $0xe8] sm:$0xff] %vm1121, 0.0
          %1216 = vst.msk [vmem:[#allocation3 + $0xf0] sm:$0xff] %vm1121, 0.0
          %1217 = vst.msk [vmem:[#allocation3 + $0xf8] sm:$0xff] %vm1121, 0.0
          %1218 = vst.msk [vmem:[#allocation3 + $0x100] sm:$0xff] %vm1121, 0.0
          %1219 = vst.msk [vmem:[#allocation3 + $0x108] sm:$0xff] %vm1121, 0.0
          %1220 = vst.msk [vmem:[#allocation3 + $0x110] sm:$0xff] %vm1121, 0.0
          %1221 = vst.msk [vmem:[#allocation3 + $0x118] sm:$0xff] %vm1121, 0.0
          %1222 = vst.msk [vmem:[#allocation3 + $0x120] sm:$0xff] %vm1121, 0.0
          %1223 = vst.msk [vmem:[#allocation3 + $0x128] sm:$0xff] %vm1121, 0.0
          %1224 = vst.msk [vmem:[#allocation3 + $0x130] sm:$0xff] %vm1121, 0.0
          %1225 = vst.msk [vmem:[#allocation3 + $0x138] sm:$0xff] %vm1121, 0.0
          %1226 = vst.msk [vmem:[#allocation3 + $0x140] sm:$0xff] %vm1121, 0.0
          %1227 = vst.msk [vmem:[#allocation3 + $0x148] sm:$0xff] %vm1121, 0.0
          %1228 = vst.msk [vmem:[#allocation3 + $0x150] sm:$0xff] %vm1121, 0.0
          %1229 = vst.msk [vmem:[#allocation3 + $0x158] sm:$0xff] %vm1121, 0.0
          %1230 = vst.msk [vmem:[#allocation3 + $0x160] sm:$0xff] %vm1121, 0.0
          %1231 = vst.msk [vmem:[#allocation3 + $0x168] sm:$0xff] %vm1121, 0.0
          %1232 = vst.msk [vmem:[#allocation3 + $0x170] sm:$0xff] %vm1121, 0.0
          %1233 = vst.msk [vmem:[#allocation3 + $0x178] sm:$0xff] %vm1121, 0.0
          %1234 = vst.msk [vmem:[#allocation3 + $0x180] sm:$0xff] %vm1121, 0.0
          %1235 = vst.msk [vmem:[#allocation3 + $0x188] sm:$0xff] %vm1121, 0.0
          %1236 = vst.msk [vmem:[#allocation3 + $0x190] sm:$0xff] %vm1121, 0.0
          %1237 = vst.msk [vmem:[#allocation3 + $0x198] sm:$0xff] %vm1121, 0.0
          %1238 = vst.msk [vmem:[#allocation3 + $0x1a0] sm:$0xff] %vm1121, 0.0
          %1239 = vst.msk [vmem:[#allocation3 + $0x1a8] sm:$0xff] %vm1121, 0.0
          %1240 = vst.msk [vmem:[#allocation3 + $0x1b0] sm:$0xff] %vm1121, 0.0
          %1241 = vst.msk [vmem:[#allocation3 + $0x1b8] sm:$0xff] %vm1121, 0.0
          %1242 = vst.msk [vmem:[#allocation3 + $0x1c0] sm:$0xff] %vm1121, 0.0
          %1243 = vst.msk [vmem:[#allocation3 + $0x1c8] sm:$0xff] %vm1121, 0.0
          %1244 = vst.msk [vmem:[#allocation3 + $0x1d0] sm:$0xff] %vm1121, 0.0
          %1245 = vst.msk [vmem:[#allocation3 + $0x1d8] sm:$0xff] %vm1121, 0.0
          %1246 = vst.msk [vmem:[#allocation3 + $0x1e0] sm:$0xff] %vm1121, 0.0
          %1247 = vst.msk [vmem:[#allocation3 + $0x1e8] sm:$0xff] %vm1121, 0.0
          %1248 = vst.msk [vmem:[#allocation3 + $0x1f0] sm:$0xff] %vm1121, 0.0
          %1249 = vst.msk [vmem:[#allocation3 + $0x1f8] sm:$0xff] %vm1121, 0.0
          %vm1250 = vcmask 130048
          %1251 = vst.msk [vmem:[#allocation4] sm:$0xff] %vm1250, 0.0
          %1252 = vst.msk [vmem:[#allocation4 + $0x8] sm:$0xff] %vm1250, 0.0
          %1253 = vst.msk [vmem:[#allocation4 + $0x10] sm:$0xff] %vm1250, 0.0
          %1254 = vst.msk [vmem:[#allocation4 + $0x18] sm:$0xff] %vm1250, 0.0
          %1255 = vst.msk [vmem:[#allocation4 + $0x20] sm:$0xff] %vm1250, 0.0
          %1256 = vst.msk [vmem:[#allocation4 + $0x28] sm:$0xff] %vm1250, 0.0
          %1257 = vst.msk [vmem:[#allocation4 + $0x30] sm:$0xff] %vm1250, 0.0
          %1258 = vst.msk [vmem:[#allocation4 + $0x38] sm:$0xff] %vm1250, 0.0
          %1259 = vst.msk [vmem:[#allocation4 + $0x40] sm:$0xff] %vm1250, 0.0
          %1260 = vst.msk [vmem:[#allocation4 + $0x48] sm:$0xff] %vm1250, 0.0
          %1261 = vst.msk [vmem:[#allocation4 + $0x50] sm:$0xff] %vm1250, 0.0
          %1262 = vst.msk [vmem:[#allocation4 + $0x58] sm:$0xff] %vm1250, 0.0
          %1263 = vst.msk [vmem:[#allocation4 + $0x60] sm:$0xff] %vm1250, 0.0
          %1264 = vst.msk [vmem:[#allocation4 + $0x68] sm:$0xff] %vm1250, 0.0
          %1265 = vst.msk [vmem:[#allocation4 + $0x70] sm:$0xff] %vm1250, 0.0
          %1266 = vst.msk [vmem:[#allocation4 + $0x78] sm:$0xff] %vm1250, 0.0
          %1267 = vst.msk [vmem:[#allocation4 + $0x80] sm:$0xff] %vm1250, 0.0
          %1268 = vst.msk [vmem:[#allocation4 + $0x88] sm:$0xff] %vm1250, 0.0
          %1269 = vst.msk [vmem:[#allocation4 + $0x90] sm:$0xff] %vm1250, 0.0
          %1270 = vst.msk [vmem:[#allocation4 + $0x98] sm:$0xff] %vm1250, 0.0
          %1271 = vst.msk [vmem:[#allocation4 + $0xa0] sm:$0xff] %vm1250, 0.0
          %1272 = vst.msk [vmem:[#allocation4 + $0xa8] sm:$0xff] %vm1250, 0.0
          %1273 = vst.msk [vmem:[#allocation4 + $0xb0] sm:$0xff] %vm1250, 0.0
          %1274 = vst.msk [vmem:[#allocation4 + $0xb8] sm:$0xff] %vm1250, 0.0
          %1275 = vst.msk [vmem:[#allocation4 + $0xc0] sm:$0xff] %vm1250, 0.0
          %1276 = vst.msk [vmem:[#allocation4 + $0xc8] sm:$0xff] %vm1250, 0.0
          %1277 = vst.msk [vmem:[#allocation4 + $0xd0] sm:$0xff] %vm1250, 0.0
          %1278 = vst.msk [vmem:[#allocation4 + $0xd8] sm:$0xff] %vm1250, 0.0
          %1279 = vst.msk [vmem:[#allocation4 + $0xe0] sm:$0xff] %vm1250, 0.0
          %1280 = vst.msk [vmem:[#allocation4 + $0xe8] sm:$0xff] %vm1250, 0.0
          %1281 = vst.msk [vmem:[#allocation4 + $0xf0] sm:$0xff] %vm1250, 0.0
          %1282 = vst.msk [vmem:[#allocation4 + $0xf8] sm:$0xff] %vm1250, 0.0
          %1283 = vst.msk [vmem:[#allocation4 + $0x100] sm:$0xff] %vm1250, 0.0
          %1284 = vst.msk [vmem:[#allocation4 + $0x108] sm:$0xff] %vm1250, 0.0
          %1285 = vst.msk [vmem:[#allocation4 + $0x110] sm:$0xff] %vm1250, 0.0
          %1286 = vst.msk [vmem:[#allocation4 + $0x118] sm:$0xff] %vm1250, 0.0
          %1287 = vst.msk [vmem:[#allocation4 + $0x120] sm:$0xff] %vm1250, 0.0
          %1288 = vst.msk [vmem:[#allocation4 + $0x128] sm:$0xff] %vm1250, 0.0
          %1289 = vst.msk [vmem:[#allocation4 + $0x130] sm:$0xff] %vm1250, 0.0
          %1290 = vst.msk [vmem:[#allocation4 + $0x138] sm:$0xff] %vm1250, 0.0
          %1291 = vst.msk [vmem:[#allocation4 + $0x140] sm:$0xff] %vm1250, 0.0
          %1292 = vst.msk [vmem:[#allocation4 + $0x148] sm:$0xff] %vm1250, 0.0
          %1293 = vst.msk [vmem:[#allocation4 + $0x150] sm:$0xff] %vm1250, 0.0
          %1294 = vst.msk [vmem:[#allocation4 + $0x158] sm:$0xff] %vm1250, 0.0
          %1295 = vst.msk [vmem:[#allocation4 + $0x160] sm:$0xff] %vm1250, 0.0
          %1296 = vst.msk [vmem:[#allocation4 + $0x168] sm:$0xff] %vm1250, 0.0
          %1297 = vst.msk [vmem:[#allocation4 + $0x170] sm:$0xff] %vm1250, 0.0
          %1298 = vst.msk [vmem:[#allocation4 + $0x178] sm:$0xff] %vm1250, 0.0
          %1299 = vst.msk [vmem:[#allocation4 + $0x180] sm:$0xff] %vm1250, 0.0
          %1300 = vst.msk [vmem:[#allocation4 + $0x188] sm:$0xff] %vm1250, 0.0
          %1301 = vst.msk [vmem:[#allocation4 + $0x190] sm:$0xff] %vm1250, 0.0
          %1302 = vst.msk [vmem:[#allocation4 + $0x198] sm:$0xff] %vm1250, 0.0
          %1303 = vst.msk [vmem:[#allocation4 + $0x1a0] sm:$0xff] %vm1250, 0.0
          %1304 = vst.msk [vmem:[#allocation4 + $0x1a8] sm:$0xff] %vm1250, 0.0
          %1305 = vst.msk [vmem:[#allocation4 + $0x1b0] sm:$0xff] %vm1250, 0.0
          %1306 = vst.msk [vmem:[#allocation4 + $0x1b8] sm:$0xff] %vm1250, 0.0
          %1307 = vst.msk [vmem:[#allocation4 + $0x1c0] sm:$0xff] %vm1250, 0.0
          %1308 = vst.msk [vmem:[#allocation4 + $0x1c8] sm:$0xff] %vm1250, 0.0
          %1309 = vst.msk [vmem:[#allocation4 + $0x1d0] sm:$0xff] %vm1250, 0.0
          %1310 = vst.msk [vmem:[#allocation4 + $0x1d8] sm:$0xff] %vm1250, 0.0
          %1311 = vst.msk [vmem:[#allocation4 + $0x1e0] sm:$0xff] %vm1250, 0.0
          %1312 = vst.msk [vmem:[#allocation4 + $0x1e8] sm:$0xff] %vm1250, 0.0
          %1313 = vst.msk [vmem:[#allocation4 + $0x1f0] sm:$0xff] %vm1250, 0.0
          %1314 = vst.msk [vmem:[#allocation4 + $0x1f8] sm:$0xff] %vm1250, 0.0
        $region150: #{scaled_dot_product_attention.1} parent=133 // pred_fallthru
          _
        %v1315 = vld [vmem:[%s1057] sm:$0xff]
        %v1316 = vld [vmem:[%s1057 + $0x8] sm:$0xff]
        %v1317 = vld [vmem:[%s1057 + $0x10] sm:$0xff]
        %v1318 = vld [vmem:[%s1057 + $0x18] sm:$0xff]
        %v1319 = vld [vmem:[%s1057 + $0x20] sm:$0xff]
        %v1320 = vld [vmem:[%s1057 + $0x28] sm:$0xff]
        %v1321 = vld [vmem:[%s1057 + $0x30] sm:$0xff]
        %v1322 = vld [vmem:[%s1057 + $0x38] sm:$0xff]
        %v1323 = vld [vmem:[%s1057 + $0x40] sm:$0xff]
        %v1324 = vld [vmem:[%s1057 + $0x48] sm:$0xff]
        %v1325 = vld [vmem:[%s1057 + $0x50] sm:$0xff]
        %v1326 = vld [vmem:[%s1057 + $0x58] sm:$0xff]
        %v1327 = vld [vmem:[%s1057 + $0x60] sm:$0xff]
        %v1328 = vld [vmem:[%s1057 + $0x68] sm:$0xff]
        %v1329 = vld [vmem:[%s1057 + $0x70] sm:$0xff]
        %v1330 = vld [vmem:[%s1057 + $0x78] sm:$0xff]
        %v1331 = vld [vmem:[%s1057 + $0x80] sm:$0xff]
        %v1332 = vld [vmem:[%s1057 + $0x88] sm:$0xff]
        %v1333 = vld [vmem:[%s1057 + $0x90] sm:$0xff]
        %v1334 = vld [vmem:[%s1057 + $0x98] sm:$0xff]
        %v1335 = vld [vmem:[%s1057 + $0xa0] sm:$0xff]
        %v1336 = vld [vmem:[%s1057 + $0xa8] sm:$0xff]
        %v1337 = vld [vmem:[%s1057 + $0xb0] sm:$0xff]
        %v1338 = vld [vmem:[%s1057 + $0xb8] sm:$0xff]
        %v1339 = vld [vmem:[%s1057 + $0xc0] sm:$0xff]
        %v1340 = vld [vmem:[%s1057 + $0xc8] sm:$0xff]
        %v1341 = vld [vmem:[%s1057 + $0xd0] sm:$0xff]
        %v1342 = vld [vmem:[%s1057 + $0xd8] sm:$0xff]
        %v1343 = vld [vmem:[%s1057 + $0xe0] sm:$0xff]
        %v1344 = vld [vmem:[%s1057 + $0xe8] sm:$0xff]
        %v1345 = vld [vmem:[%s1057 + $0xf0] sm:$0xff]
        %v1346 = vld [vmem:[%s1057 + $0xf8] sm:$0xff]
        %v1347 = vld [vmem:[%s1057 + $0x100] sm:$0xff]
        %v1348 = vld [vmem:[%s1057 + $0x108] sm:$0xff]
        %v1349 = vld [vmem:[%s1057 + $0x110] sm:$0xff]
        %v1350 = vld [vmem:[%s1057 + $0x118] sm:$0xff]
        %v1351 = vld [vmem:[%s1057 + $0x120] sm:$0xff]
        %v1352 = vld [vmem:[%s1057 + $0x128] sm:$0xff]
        %v1353 = vld [vmem:[%s1057 + $0x130] sm:$0xff]
        %v1354 = vld [vmem:[%s1057 + $0x138] sm:$0xff]
        %v1355 = vld [vmem:[%s1057 + $0x140] sm:$0xff]
        %v1356 = vld [vmem:[%s1057 + $0x148] sm:$0xff]
        %v1357 = vld [vmem:[%s1057 + $0x150] sm:$0xff]
        %v1358 = vld [vmem:[%s1057 + $0x158] sm:$0xff]
        %v1359 = vld [vmem:[%s1057 + $0x160] sm:$0xff]
        %v1360 = vld [vmem:[%s1057 + $0x168] sm:$0xff]
        %v1361 = vld [vmem:[%s1057 + $0x170] sm:$0xff]
        %v1362 = vld [vmem:[%s1057 + $0x178] sm:$0xff]
        %v1363 = vld [vmem:[%s1057 + $0x180] sm:$0xff]
        %v1364 = vld [vmem:[%s1057 + $0x188] sm:$0xff]
        %v1365 = vld [vmem:[%s1057 + $0x190] sm:$0xff]
        %v1366 = vld [vmem:[%s1057 + $0x198] sm:$0xff]
        %v1367 = vld [vmem:[%s1057 + $0x1a0] sm:$0xff]
        %v1368 = vld [vmem:[%s1057 + $0x1a8] sm:$0xff]
        %v1369 = vld [vmem:[%s1057 + $0x1b0] sm:$0xff]
        %v1370 = vld [vmem:[%s1057 + $0x1b8] sm:$0xff]
        %v1371 = vld [vmem:[%s1057 + $0x1c0] sm:$0xff]
        %v1372 = vld [vmem:[%s1057 + $0x1c8] sm:$0xff]
        %v1373 = vld [vmem:[%s1057 + $0x1d0] sm:$0xff]
        %v1374 = vld [vmem:[%s1057 + $0x1d8] sm:$0xff]
        %v1375 = vld [vmem:[%s1057 + $0x1e0] sm:$0xff]
        %v1376 = vld [vmem:[%s1057 + $0x1e8] sm:$0xff]
        %v1377 = vld [vmem:[%s1057 + $0x1f0] sm:$0xff]
        %v1378 = vld [vmem:[%s1057 + $0x1f8] sm:$0xff]
        %v1379 = vld [vmem:[%s1064] sm:$0xff]
        %v1380 = vld [vmem:[%s1064 + $0x8] sm:$0xff]
        %v1381 = vld [vmem:[%s1064 + $0x10] sm:$0xff]
        %v1382 = vld [vmem:[%s1064 + $0x18] sm:$0xff]
        %v1383 = vld [vmem:[%s1064 + $0x20] sm:$0xff]
        %v1384 = vld [vmem:[%s1064 + $0x28] sm:$0xff]
        %v1385 = vld [vmem:[%s1064 + $0x30] sm:$0xff]
        %v1386 = vld [vmem:[%s1064 + $0x38] sm:$0xff]
        %v1387 = vld [vmem:[%s1064 + $0x40] sm:$0xff]
        %v1388 = vld [vmem:[%s1064 + $0x48] sm:$0xff]
        %v1389 = vld [vmem:[%s1064 + $0x50] sm:$0xff]
        %v1390 = vld [vmem:[%s1064 + $0x58] sm:$0xff]
        %v1391 = vld [vmem:[%s1064 + $0x60] sm:$0xff]
        %v1392 = vld [vmem:[%s1064 + $0x68] sm:$0xff]
        %v1393 = vld [vmem:[%s1064 + $0x70] sm:$0xff]
        %v1394 = vld [vmem:[%s1064 + $0x78] sm:$0xff]
        %v1395 = vld [vmem:[%s1064 + $0x80] sm:$0xff]
        %v1396 = vld [vmem:[%s1064 + $0x88] sm:$0xff]
        %v1397 = vld [vmem:[%s1064 + $0x90] sm:$0xff]
        %v1398 = vld [vmem:[%s1064 + $0x98] sm:$0xff]
        %v1399 = vld [vmem:[%s1064 + $0xa0] sm:$0xff]
        %v1400 = vld [vmem:[%s1064 + $0xa8] sm:$0xff]
        %v1401 = vld [vmem:[%s1064 + $0xb0] sm:$0xff]
        %v1402 = vld [vmem:[%s1064 + $0xb8] sm:$0xff]
        %v1403 = vld [vmem:[%s1064 + $0xc0] sm:$0xff]
        %v1404 = vld [vmem:[%s1064 + $0xc8] sm:$0xff]
        %v1405 = vld [vmem:[%s1064 + $0xd0] sm:$0xff]
        %v1406 = vld [vmem:[%s1064 + $0xd8] sm:$0xff]
        %v1407 = vld [vmem:[%s1064 + $0xe0] sm:$0xff]
        %v1408 = vld [vmem:[%s1064 + $0xe8] sm:$0xff]
        %v1409 = vld [vmem:[%s1064 + $0xf0] sm:$0xff]
        %v1410 = vld [vmem:[%s1064 + $0xf8] sm:$0xff]
        %v1411 = vld [vmem:[%s1064 + $0x100] sm:$0xff]
        %v1412 = vld [vmem:[%s1064 + $0x108] sm:$0xff]
        %v1413 = vld [vmem:[%s1064 + $0x110] sm:$0xff]
        %v1414 = vld [vmem:[%s1064 + $0x118] sm:$0xff]
        %v1415 = vld [vmem:[%s1064 + $0x120] sm:$0xff]
        %v1416 = vld [vmem:[%s1064 + $0x128] sm:$0xff]
        %v1417 = vld [vmem:[%s1064 + $0x130] sm:$0xff]
        %v1418 = vld [vmem:[%s1064 + $0x138] sm:$0xff]
        %v1419 = vld [vmem:[%s1064 + $0x140] sm:$0xff]
        %v1420 = vld [vmem:[%s1064 + $0x148] sm:$0xff]
        %v1421 = vld [vmem:[%s1064 + $0x150] sm:$0xff]
        %v1422 = vld [vmem:[%s1064 + $0x158] sm:$0xff]
        %v1423 = vld [vmem:[%s1064 + $0x160] sm:$0xff]
        %v1424 = vld [vmem:[%s1064 + $0x168] sm:$0xff]
        %v1425 = vld [vmem:[%s1064 + $0x170] sm:$0xff]
        %v1426 = vld [vmem:[%s1064 + $0x178] sm:$0xff]
        %v1427 = vld [vmem:[%s1064 + $0x180] sm:$0xff]
        %v1428 = vld [vmem:[%s1064 + $0x188] sm:$0xff]
        %v1429 = vld [vmem:[%s1064 + $0x190] sm:$0xff]
        %v1430 = vld [vmem:[%s1064 + $0x198] sm:$0xff]
        %v1431 = vld [vmem:[%s1064 + $0x1a0] sm:$0xff]
        %v1432 = vld [vmem:[%s1064 + $0x1a8] sm:$0xff]
        %v1433 = vld [vmem:[%s1064 + $0x1b0] sm:$0xff]
        %v1434 = vld [vmem:[%s1064 + $0x1b8] sm:$0xff]
        %v1435 = vld [vmem:[%s1064 + $0x1c0] sm:$0xff]
        %v1436 = vld [vmem:[%s1064 + $0x1c8] sm:$0xff]
        %v1437 = vld [vmem:[%s1064 + $0x1d0] sm:$0xff]
        %v1438 = vld [vmem:[%s1064 + $0x1d8] sm:$0xff]
        %v1439 = vld [vmem:[%s1064 + $0x1e0] sm:$0xff]
        %v1440 = vld [vmem:[%s1064 + $0x1e8] sm:$0xff]
        %v1441 = vld [vmem:[%s1064 + $0x1f0] sm:$0xff]
        %v1442 = vld [vmem:[%s1064 + $0x1f8] sm:$0xff]
        %vm1443 = vcmask 130048
        %v1445 = vsel %vm1443, %v1315, 0
        %v1448 = vsel %vm1443, %v1316, 0
        %v1451 = vsel %vm1443, %v1317, 0
        %v1454 = vsel %vm1443, %v1318, 0
        %v1457 = vsel %vm1443, %v1319, 0
        %v1460 = vsel %vm1443, %v1320, 0
        %v1463 = vsel %vm1443, %v1321, 0
        %v1466 = vsel %vm1443, %v1322, 0
        %v1469 = vsel %vm1443, %v1323, 0
        %v1472 = vsel %vm1443, %v1324, 0
        %v1475 = vsel %vm1443, %v1325, 0
        %v1478 = vsel %vm1443, %v1326, 0
        %v1481 = vsel %vm1443, %v1327, 0
        %v1484 = vsel %vm1443, %v1328, 0
        %v1487 = vsel %vm1443, %v1329, 0
        %v1490 = vsel %vm1443, %v1330, 0
        %v1493 = vsel %vm1443, %v1379, 0
        %v1496 = vsel %vm1443, %v1380, 0
        %v1499 = vsel %vm1443, %v1381, 0
        %v1502 = vsel %vm1443, %v1382, 0
        %v1505 = vsel %vm1443, %v1383, 0
        %v1508 = vsel %vm1443, %v1384, 0
        %v1511 = vsel %vm1443, %v1385, 0
        %v1514 = vsel %vm1443, %v1386, 0
        %v1517 = vsel %vm1443, %v1387, 0
        %v1520 = vsel %vm1443, %v1388, 0
        %v1523 = vsel %vm1443, %v1389, 0
        %v1526 = vsel %vm1443, %v1390, 0
        %v1529 = vsel %vm1443, %v1391, 0
        %v1532 = vsel %vm1443, %v1392, 0
        %v1535 = vsel %vm1443, %v1393, 0
        %v1538 = vsel %vm1443, %v1394, 0
        %1540 = vmatprep.subr.mxu0 0.0
        %1541 = vmatpush1.xpose.msra.mxu0 %v1493
        %1542 = vmatprep.subr.mxu0 0.0
        %1543 = vmatpush1.xpose.msra.mxu0 %v1496
        %1544 = vmatprep.subr.mxu0 0.0
        %1545 = vmatpush1.xpose.msra.mxu0 %v1499
        %1546 = vmatprep.subr.mxu0 0.0
        %1547 = vmatpush1.xpose.msra.mxu0 %v1502
        %1548 = vmatprep.subr.mxu0 0.0
        %1549 = vmatpush1.xpose.msra.mxu0 %v1505
        %1550 = vmatprep.subr.mxu0 0.0
        %1551 = vmatpush1.xpose.msra.mxu0 %v1508
        %1552 = vmatprep.subr.mxu0 0.0
        %1553 = vmatpush1.xpose.msra.mxu0 %v1511
        %1554 = vmatprep.subr.mxu0 0.0
        %1555 = vmatpush1.xpose.msra.mxu0 %v1514
        %1556 = vmatprep.subr.mxu0 0.0
        %1557 = vmatpush1.xpose.msra.mxu0 %v1517
        %1558 = vmatprep.subr.mxu0 0.0
        %1559 = vmatpush1.xpose.msra.mxu0 %v1520
        %1560 = vmatprep.subr.mxu0 0.0
        %1561 = vmatpush1.xpose.msra.mxu0 %v1523
        %1562 = vmatprep.subr.mxu0 0.0
        %1563 = vmatpush1.xpose.msra.mxu0 %v1526
        %1564 = vmatprep.subr.mxu0 0.0
        %1565 = vmatpush1.xpose.msra.mxu0 %v1529
        %1566 = vmatprep.subr.mxu0 0.0
        %1567 = vmatpush1.xpose.msra.mxu0 %v1532
        %1568 = vmatprep.subr.mxu0 0.0
        %1569 = vmatpush1.xpose.msra.mxu0 %v1535
        %1570 = vmatprep.subr.mxu0 0.0
        %1571 = vmatpush1.xpose.msra.mxu0 %v1538
        %1572 = vmatprep.subr.mxu0 0.0
        %1573 = vmatpush1.xpose.msra.mxu0 0.0
        %1574 = vmatprep.subr.mxu0 0.0
        %1575 = vmatpush1.xpose.msra.mxu0 0.0
        %1576 = vmatprep.subr.mxu0 0.0
        %1577 = vmatpush1.xpose.msra.mxu0 0.0
        %1578 = vmatprep.subr.mxu0 0.0
        %1579 = vmatpush1.xpose.msra.mxu0 0.0
        %1580 = vmatprep.subr.mxu0 0.0
        %1581 = vmatpush1.xpose.msra.mxu0 0.0
        %1582 = vmatprep.subr.mxu0 0.0
        %1583 = vmatpush1.xpose.msra.mxu0 0.0
        %1584 = vmatprep.subr.mxu0 0.0
        %1585 = vmatpush1.xpose.msra.mxu0 0.0
        %1586 = vmatprep.subr.mxu0 0.0
        %1587 = vmatpush1.xpose.msra.mxu0 0.0
        %1588 = vmatprep.subr.mxu0 0.0
        %1589 = vmatpush1.xpose.msra.mxu0 0.0
        %1590 = vmatprep.subr.mxu0 0.0
        %1591 = vmatpush1.xpose.msra.mxu0 0.0
        %1592 = vmatprep.subr.mxu0 0.0
        %1593 = vmatpush1.xpose.msra.mxu0 0.0
        %1594 = vmatprep.subr.mxu0 0.0
        %1595 = vmatpush1.xpose.msra.mxu0 0.0
        %1596 = vmatprep.subr.mxu0 0.0
        %1597 = vmatpush1.xpose.msra.mxu0 0.0
        %1598 = vmatprep.subr.mxu0 0.0
        %1599 = vmatpush1.xpose.msra.mxu0 0.0
        %1600 = vmatprep.subr.mxu0 0.0
        %1601 = vmatpush1.xpose.msra.mxu0 0.0
        %1602 = vmatprep.subr.mxu0 0.0
        %1603 = vmatpush1.xpose.msra.mxu0 0.0
        %1604 = vmatprep.mubr.f32.mxu0 0.0
        %1605 = vmatmul.mubr.f32.gmra.mrb[0].mxu0 %v1445
        %v1606 = vpop.f32.mrb[0].mxu0
        %v1607 = vadd.f32 0.0, %v1606
        %v1608 = vpop.f32.mrb[0].mxu0
        %1609 = vmatprep.mubr.f32.mxu0 0.0
        %1610 = vmatmul.mubr.f32.gmra.mrb[0].mxu0 %v1448
        %v1611 = vpop.f32.mrb[0].mxu0
        %v1612 = vadd.f32 0.0, %v1611
        %v1613 = vpop.f32.mrb[0].mxu0
        %1614 = vmatprep.mubr.f32.mxu0 0.0
        %1615 = vmatmul.mubr.f32.gmra.mrb[0].mxu0 %v1451
        %v1616 = vpop.f32.mrb[0].mxu0
        %v1617 = vadd.f32 0.0, %v1616
        %v1618 = vpop.f32.mrb[0].mxu0
        %1619 = vmatprep.mubr.f32.mxu0 0.0
        %1620 = vmatmul.mubr.f32.gmra.mrb[0].mxu0 %v1454
        %v1621 = vpop.f32.mrb[0].mxu0
        %v1622 = vadd.f32 0.0, %v1621
        %v1623 = vpop.f32.mrb[0].mxu0
        %1624 = vmatprep.mubr.f32.mxu0 0.0
        %1625 = vmatmul.mubr.f32.gmra.mrb[0].mxu0 %v1457
        %v1626 = vpop.f32.mrb[0].mxu0
        %v1627 = vadd.f32 0.0, %v1626
        %v1628 = vpop.f32.mrb[0].mxu0
        %1629 = vmatprep.mubr.f32.mxu0 0.0
        %1630 = vmatmul.mubr.f32.gmra.mrb[0].mxu0 %v1460
        %v1631 = vpop.f32.mrb[0].mxu0
        %v1632 = vadd.f32 0.0, %v1631
        %v1633 = vpop.f32.mrb[0].mxu0
        %1634 = vmatprep.mubr.f32.mxu0 0.0
        %1635 = vmatmul.mubr.f32.gmra.mrb[0].mxu0 %v1463
        %v1636 = vpop.f32.mrb[0].mxu0
        %v1637 = vadd.f32 0.0, %v1636
        %v1638 = vpop.f32.mrb[0].mxu0
        %1639 = vmatprep.mubr.f32.mxu0 0.0
        %1640 = vmatmul.mubr.f32.gmra.mrb[0].mxu0 %v1466
        %v1641 = vpop.f32.mrb[0].mxu0
        %v1642 = vadd.f32 0.0, %v1641
        %v1643 = vpop.f32.mrb[0].mxu0
        %1644 = vmatprep.mubr.f32.mxu0 0.0
        %1645 = vmatmul.mubr.f32.gmra.mrb[0].mxu0 %v1469
        %v1646 = vpop.f32.mrb[0].mxu0
        %v1647 = vadd.f32 0.0, %v1646
        %v1648 = vpop.f32.mrb[0].mxu0
        %1649 = vmatprep.mubr.f32.mxu0 0.0
        %1650 = vmatmul.mubr.f32.gmra.mrb[0].mxu0 %v1472
        %v1651 = vpop.f32.mrb[0].mxu0
        %v1652 = vadd.f32 0.0, %v1651
        %v1653 = vpop.f32.mrb[0].mxu0
        %1654 = vmatprep.mubr.f32.mxu0 0.0
        %1655 = vmatmul.mubr.f32.gmra.mrb[0].mxu0 %v1475
        %v1656 = vpop.f32.mrb[0].mxu0
        %v1657 = vadd.f32 0.0, %v1656
        %v1658 = vpop.f32.mrb[0].mxu0
        %1659 = vmatprep.mubr.f32.mxu0 0.0
        %1660 = vmatmul.mubr.f32.gmra.mrb[0].mxu0 %v1478
        %v1661 = vpop.f32.mrb[0].mxu0
        %v1662 = vadd.f32 0.0, %v1661
        %v1663 = vpop.f32.mrb[0].mxu0
        %1664 = vmatprep.mubr.f32.mxu0 0.0
        %1665 = vmatmul.mubr.f32.gmra.mrb[0].mxu0 %v1481
        %v1666 = vpop.f32.mrb[0].mxu0
        %v1667 = vadd.f32 0.0, %v1666
        %v1668 = vpop.f32.mrb[0].mxu0
        %1669 = vmatprep.mubr.f32.mxu0 0.0
        %1670 = vmatmul.mubr.f32.gmra.mrb[0].mxu0 %v1484
        %v1671 = vpop.f32.mrb[0].mxu0
        %v1672 = vadd.f32 0.0, %v1671
        %v1673 = vpop.f32.mrb[0].mxu0
        %1674 = vmatprep.mubr.f32.mxu0 0.0
        %1675 = vmatmul.mubr.f32.gmra.mrb[0].mxu0 %v1487
        %v1676 = vpop.f32.mrb[0].mxu0
        %v1677 = vadd.f32 0.0, %v1676
        %v1678 = vpop.f32.mrb[0].mxu0
        %1679 = vmatprep.mubr.f32.mxu0 0.0
        %1680 = vmatmul.mubr.f32.gmra.mrb[0].mxu0 %v1490
        %v1681 = vpop.f32.mrb[0].mxu0
        %v1682 = vadd.f32 0.0, %v1681
        %v1683 = vpop.f32.mrb[0].mxu0
        %1684 = vdwg.mxu0
        %v1686 = vsel %vm1443, %v1331, 0
        %v1689 = vsel %vm1443, %v1332, 0
        %v1692 = vsel %vm1443, %v1333, 0
        %v1695 = vsel %vm1443, %v1334, 0
        %v1698 = vsel %vm1443, %v1335, 0
        %v1701 = vsel %vm1443, %v1336, 0
        %v1704 = vsel %vm1443, %v1337, 0
        %v1707 = vsel %vm1443, %v1338, 0
        %v1710 = vsel %vm1443, %v1339, 0
        %v1713 = vsel %vm1443, %v1340, 0
        %v1716 = vsel %vm1443, %v1341, 0
        %v1719 = vsel %vm1443, %v1342, 0
        %v1722 = vsel %vm1443, %v1343, 0
        %v1725 = vsel %vm1443, %v1344, 0
        %v1728 = vsel %vm1443, %v1345, 0
        %v1731 = vsel %vm1443, %v1346, 0
        %v1734 = vsel %vm1443, %v1395, 0
        %v1737 = vsel %vm1443, %v1396, 0
        %v1740 = vsel %vm1443, %v1397, 0
        %v1743 = vsel %vm1443, %v1398, 0
        %v1746 = vsel %vm1443, %v1399, 0
        %v1749 = vsel %vm1443, %v1400, 0
        %v1752 = vsel %vm1443, %v1401, 0
        %v1755 = vsel %vm1443, %v1402, 0
        %v1758 = vsel %vm1443, %v1403, 0
        %v1761 = vsel %vm1443, %v1404, 0
        %v1764 = vsel %vm1443, %v1405, 0
        %v1767 = vsel %vm1443, %v1406, 0
        %v1770 = vsel %vm1443, %v1407, 0
        %v1773 = vsel %vm1443, %v1408, 0
        %v1776 = vsel %vm1443, %v1409, 0
        %v1779 = vsel %vm1443, %v1410, 0
        %1781 = vmatprep.subr.mxu0 0.0
        %1782 = vmatpush1.xpose.msra.mxu0 %v1734
        %1783 = vmatprep.subr.mxu0 0.0
        %1784 = vmatpush1.xpose.msra.mxu0 %v1737
        %1785 = vmatprep.subr.mxu0 0.0
        %1786 = vmatpush1.xpose.msra.mxu0 %v1740
        %1787 = vmatprep.subr.mxu0 0.0
        %1788 = vmatpush1.xpose.msra.mxu0 %v1743
        %1789 = vmatprep.subr.mxu0 0.0
        %1790 = vmatpush1.xpose.msra.mxu0 %v1746
        %1791 = vmatprep.subr.mxu0 0.0
        %1792 = vmatpush1.xpose.msra.mxu0 %v1749
        %1793 = vmatprep.subr.mxu0 0.0
        %1794 = vmatpush1.xpose.msra.mxu0 %v1752
        %1795 = vmatprep.subr.mxu0 0.0
        %1796 = vmatpush1.xpose.msra.mxu0 %v1755
        %1797 = vmatprep.subr.mxu0 0.0
        %1798 = vmatpush1.xpose.msra.mxu0 %v1758
        %1799 = vmatprep.subr.mxu0 0.0
        %1800 = vmatpush1.xpose.msra.mxu0 %v1761
        %1801 = vmatprep.subr.mxu0 0.0
        %1802 = vmatpush1.xpose.msra.mxu0 %v1764
        %1803 = vmatprep.subr.mxu0 0.0
        %1804 = vmatpush1.xpose.msra.mxu0 %v1767
        %1805 = vmatprep.subr.mxu0 0.0
        %1806 = vmatpush1.xpose.msra.mxu0 %v1770
        %1807 = vmatprep.subr.mxu0 0.0
        %1808 = vmatpush1.xpose.msra.mxu0 %v1773
        %1809 = vmatprep.subr.mxu0 0.0
        %1810 = vmatpush1.xpose.msra.mxu0 %v1776
        %1811 = vmatprep.subr.mxu0 0.0
        %1812 = vmatpush1.xpose.msra.mxu0 %v1779
        %1813 = vmatprep.subr.mxu0 0.0
        %1814 = vmatpush1.xpose.msra.mxu0 0.0
        %1815 = vmatprep.subr.mxu0 0.0
        %1816 = vmatpush1.xpose.msra.mxu0 0.0
        %1817 = vmatprep.subr.mxu0 0.0
        %1818 = vmatpush1.xpose.msra.mxu0 0.0
        %1819 = vmatprep.subr.mxu0 0.0
        %1820 = vmatpush1.xpose.msra.mxu0 0.0
        %1821 = vmatprep.subr.mxu0 0.0
        %1822 = vmatpush1.xpose.msra.mxu0 0.0
        %1823 = vmatprep.subr.mxu0 0.0
        %1824 = vmatpush1.xpose.msra.mxu0 0.0
        %1825 = vmatprep.subr.mxu0 0.0
        %1826 = vmatpush1.xpose.msra.mxu0 0.0
        %1827 = vmatprep.subr.mxu0 0.0
        %1828 = vmatpush1.xpose.msra.mxu0 0.0
        %1829 = vmatprep.subr.mxu0 0.0
        %1830 = vmatpush1.xpose.msra.mxu0 0.0
        %1831 = vmatprep.subr.mxu0 0.0
        %1832 = vmatpush1.xpose.msra.mxu0 0.0
        %1833 = vmatprep.subr.mxu0 0.0
        %1834 = vmatpush1.xpose.msra.mxu0 0.0
        %1835 = vmatprep.subr.mxu0 0.0
        %1836 = vmatpush1.xpose.msra.mxu0 0.0
        %1837 = vmatprep.subr.mxu0 0.0
        %1838 = vmatpush1.xpose.msra.mxu0 0.0
        %1839 = vmatprep.subr.mxu0 0.0
        %1840 = vmatpush1.xpose.msra.mxu0 0.0
        %1841 = vmatprep.subr.mxu0 0.0
        %1842 = vmatpush1.xpose.msra.mxu0 0.0
        %1843 = vmatprep.subr.mxu0 0.0
        %1844 = vmatpush1.xpose.msra.mxu0 0.0
        %1845 = vmatprep.mubr.f32.mxu0 0.0
        %1846 = vmatmul.mubr.f32.gmra.mrb[0].mxu0 %v1686
        %v1847 = vpop.f32.mrb[0].mxu0
        %v1848 = vadd.f32 0.0, %v1847
        %v1849 = vpop.f32.mrb[0].mxu0
        %1850 = vmatprep.mubr.f32.mxu0 0.0
        %1851 = vmatmul.mubr.f32.gmra.mrb[0].mxu0 %v1689
        %v1852 = vpop.f32.mrb[0].mxu0
        %v1853 = vadd.f32 0.0, %v1852
        %v1854 = vpop.f32.mrb[0].mxu0
        %1855 = vmatprep.mubr.f32.mxu0 0.0
        %1856 = vmatmul.mubr.f32.gmra.mrb[0].mxu0 %v1692
        %v1857 = vpop.f32.mrb[0].mxu0
        %v1858 = vadd.f32 0.0, %v1857
        %v1859 = vpop.f32.mrb[0].mxu0
        %1860 = vmatprep.mubr.f32.mxu0 0.0
        %1861 = vmatmul.mubr.f32.gmra.mrb[0].mxu0 %v1695
        %v1862 = vpop.f32.mrb[0].mxu0
        %v1863 = vadd.f32 0.0, %v1862
        %v1864 = vpop.f32.mrb[0].mxu0
        %1865 = vmatprep.mubr.f32.mxu0 0.0
        %1866 = vmatmul.mubr.f32.gmra.mrb[0].mxu0 %v1698
        %v1867 = vpop.f32.mrb[0].mxu0
        %v1868 = vadd.f32 0.0, %v1867
        %v1869 = vpop.f32.mrb[0].mxu0
        %1870 = vmatprep.mubr.f32.mxu0 0.0
        %1871 = vmatmul.mubr.f32.gmra.mrb[0].mxu0 %v1701
        %v1872 = vpop.f32.mrb[0].mxu0
        %v1873 = vadd.f32 0.0, %v1872
        %v1874 = vpop.f32.mrb[0].mxu0
        %1875 = vmatprep.mubr.f32.mxu0 0.0
        %1876 = vmatmul.mubr.f32.gmra.mrb[0].mxu0 %v1704
        %v1877 = vpop.f32.mrb[0].mxu0
        %v1878 = vadd.f32 0.0, %v1877
        %v1879 = vpop.f32.mrb[0].mxu0
        %1880 = vmatprep.mubr.f32.mxu0 0.0
        %1881 = vmatmul.mubr.f32.gmra.mrb[0].mxu0 %v1707
        %v1882 = vpop.f32.mrb[0].mxu0
        %v1883 = vadd.f32 0.0, %v1882
        %v1884 = vpop.f32.mrb[0].mxu0
        %1885 = vmatprep.mubr.f32.mxu0 0.0
        %1886 = vmatmul.mubr.f32.gmra.mrb[0].mxu0 %v1710
        %v1887 = vpop.f32.mrb[0].mxu0
        %v1888 = vadd.f32 0.0, %v1887
        %v1889 = vpop.f32.mrb[0].mxu0
        %1890 = vmatprep.mubr.f32.mxu0 0.0
        %1891 = vmatmul.mubr.f32.gmra.mrb[0].mxu0 %v1713
        %v1892 = vpop.f32.mrb[0].mxu0
        %v1893 = vadd.f32 0.0, %v1892
        %v1894 = vpop.f32.mrb[0].mxu0
        %1895 = vmatprep.mubr.f32.mxu0 0.0
        %1896 = vmatmul.mubr.f32.gmra.mrb[0].mxu0 %v1716
        %v1897 = vpop.f32.mrb[0].mxu0
        %v1898 = vadd.f32 0.0, %v1897
        %v1899 = vpop.f32.mrb[0].mxu0
        %1900 = vmatprep.mubr.f32.mxu0 0.0
        %1901 = vmatmul.mubr.f32.gmra.mrb[0].mxu0 %v1719
        %v1902 = vpop.f32.mrb[0].mxu0
        %v1903 = vadd.f32 0.0, %v1902
        %v1904 = vpop.f32.mrb[0].mxu0
        %1905 = vmatprep.mubr.f32.mxu0 0.0
        %1906 = vmatmul.mubr.f32.gmra.mrb[0].mxu0 %v1722
        %v1907 = vpop.f32.mrb[0].mxu0
        %v1908 = vadd.f32 0.0, %v1907
        %v1909 = vpop.f32.mrb[0].mxu0
        %1910 = vmatprep.mubr.f32.mxu0 0.0
        %1911 = vmatmul.mubr.f32.gmra.mrb[0].mxu0 %v1725
        %v1912 = vpop.f32.mrb[0].mxu0
        %v1913 = vadd.f32 0.0, %v1912
        %v1914 = vpop.f32.mrb[0].mxu0
        %1915 = vmatprep.mubr.f32.mxu0 0.0
        %1916 = vmatmul.mubr.f32.gmra.mrb[0].mxu0 %v1728
        %v1917 = vpop.f32.mrb[0].mxu0
        %v1918 = vadd.f32 0.0, %v1917
        %v1919 = vpop.f32.mrb[0].mxu0
        %1920 = vmatprep.mubr.f32.mxu0 0.0
        %1921 = vmatmul.mubr.f32.gmra.mrb[0].mxu0 %v1731
        %v1922 = vpop.f32.mrb[0].mxu0
        %v1923 = vadd.f32 0.0, %v1922
        %v1924 = vpop.f32.mrb[0].mxu0
        %1925 = vdwg.mxu0
        %v1927 = vsel %vm1443, %v1347, 0
        %v1930 = vsel %vm1443, %v1348, 0
        %v1933 = vsel %vm1443, %v1349, 0
        %v1936 = vsel %vm1443, %v1350, 0
        %v1939 = vsel %vm1443, %v1351, 0
        %v1942 = vsel %vm1443, %v1352, 0
        %v1945 = vsel %vm1443, %v1353, 0
        %v1948 = vsel %vm1443, %v1354, 0
        %v1951 = vsel %vm1443, %v1355, 0
        %v1954 = vsel %vm1443, %v1356, 0
        %v1957 = vsel %vm1443, %v1357, 0
        %v1960 = vsel %vm1443, %v1358, 0
        %v1963 = vsel %vm1443, %v1359, 0
        %v1966 = vsel %vm1443, %v1360, 0
        %v1969 = vsel %vm1443, %v1361, 0
        %v1972 = vsel %vm1443, %v1362, 0
        %v1975 = vsel %vm1443, %v1411, 0
        %v1978 = vsel %vm1443, %v1412, 0
        %v1981 = vsel %vm1443, %v1413, 0
        %v1984 = vsel %vm1443, %v1414, 0
        %v1987 = vsel %vm1443, %v1415, 0
        %v1990 = vsel %vm1443, %v1416, 0
        %v1993 = vsel %vm1443, %v1417, 0
        %v1996 = vsel %vm1443, %v1418, 0
        %v1999 = vsel %vm1443, %v1419, 0
        %v2002 = vsel %vm1443, %v1420, 0
        %v2005 = vsel %vm1443, %v1421, 0
        %v2008 = vsel %vm1443, %v1422, 0
        %v2011 = vsel %vm1443, %v1423, 0
        %v2014 = vsel %vm1443, %v1424, 0
        %v2017 = vsel %vm1443, %v1425, 0
        %v2020 = vsel %vm1443, %v1426, 0
        %2022 = vmatprep.subr.mxu0 0.0
        %2023 = vmatpush1.xpose.msra.mxu0 %v1975
        %2024 = vmatprep.subr.mxu0 0.0
        %2025 = vmatpush1.xpose.msra.mxu0 %v1978
        %2026 = vmatprep.subr.mxu0 0.0
        %2027 = vmatpush1.xpose.msra.mxu0 %v1981
        %2028 = vmatprep.subr.mxu0 0.0
        %2029 = vmatpush1.xpose.msra.mxu0 %v1984
        %2030 = vmatprep.subr.mxu0 0.0
        %2031 = vmatpush1.xpose.msra.mxu0 %v1987
        %2032 = vmatprep.subr.mxu0 0.0
        %2033 = vmatpush1.xpose.msra.mxu0 %v1990
        %2034 = vmatprep.subr.mxu0 0.0
        %2035 = vmatpush1.xpose.msra.mxu0 %v1993
        %2036 = vmatprep.subr.mxu0 0.0
        %2037 = vmatpush1.xpose.msra.mxu0 %v1996
        %2038 = vmatprep.subr.mxu0 0.0
        %2039 = vmatpush1.xpose.msra.mxu0 %v1999
        %2040 = vmatprep.subr.mxu0 0.0
        %2041 = vmatpush1.xpose.msra.mxu0 %v2002
        %2042 = vmatprep.subr.mxu0 0.0
        %2043 = vmatpush1.xpose.msra.mxu0 %v2005
        %2044 = vmatprep.subr.mxu0 0.0
        %2045 = vmatpush1.xpose.msra.mxu0 %v2008
        %2046 = vmatprep.subr.mxu0 0.0
        %2047 = vmatpush1.xpose.msra.mxu0 %v2011
        %2048 = vmatprep.subr.mxu0 0.0
        %2049 = vmatpush1.xpose.msra.mxu0 %v2014
        %2050 = vmatprep.subr.mxu0 0.0
        %2051 = vmatpush1.xpose.msra.mxu0 %v2017
        %2052 = vmatprep.subr.mxu0 0.0
        %2053 = vmatpush1.xpose.msra.mxu0 %v2020
        %2054 = vmatprep.subr.mxu0 0.0
        %2055 = vmatpush1.xpose.msra.mxu0 0.0
        %2056 = vmatprep.subr.mxu0 0.0
        %2057 = vmatpush1.xpose.msra.mxu0 0.0
        %2058 = vmatprep.subr.mxu0 0.0
        %2059 = vmatpush1.xpose.msra.mxu0 0.0
        %2060 = vmatprep.subr.mxu0 0.0
        %2061 = vmatpush1.xpose.msra.mxu0 0.0
        %2062 = vmatprep.subr.mxu0 0.0
        %2063 = vmatpush1.xpose.msra.mxu0 0.0
        %2064 = vmatprep.subr.mxu0 0.0
        %2065 = vmatpush1.xpose.msra.mxu0 0.0
        %2066 = vmatprep.subr.mxu0 0.0
        %2067 = vmatpush1.xpose.msra.mxu0 0.0
        %2068 = vmatprep.subr.mxu0 0.0
        %2069 = vmatpush1.xpose.msra.mxu0 0.0
        %2070 = vmatprep.subr.mxu0 0.0
        %2071 = vmatpush1.xpose.msra.mxu0 0.0
        %2072 = vmatprep.subr.mxu0 0.0
        %2073 = vmatpush1.xpose.msra.mxu0 0.0
        %2074 = vmatprep.subr.mxu0 0.0
        %2075 = vmatpush1.xpose.msra.mxu0 0.0
        %2076 = vmatprep.subr.mxu0 0.0
        %2077 = vmatpush1.xpose.msra.mxu0 0.0
        %2078 = vmatprep.subr.mxu0 0.0
        %2079 = vmatpush1.xpose.msra.mxu0 0.0
        %2080 = vmatprep.subr.mxu0 0.0
        %2081 = vmatpush1.xpose.msra.mxu0 0.0
        %2082 = vmatprep.subr.mxu0 0.0
        %2083 = vmatpush1.xpose.msra.mxu0 0.0
        %2084 = vmatprep.subr.mxu0 0.0
        %2085 = vmatpush1.xpose.msra.mxu0 0.0
        %2086 = vmatprep.mubr.f32.mxu0 0.0
        %2087 = vmatmul.mubr.f32.gmra.mrb[0].mxu0 %v1927
        %v2088 = vpop.f32.mrb[0].mxu0
        %v2089 = vadd.f32 0.0, %v2088
        %v2090 = vpop.f32.mrb[0].mxu0
        %2091 = vmatprep.mubr.f32.mxu0 0.0
        %2092 = vmatmul.mubr.f32.gmra.mrb[0].mxu0 %v1930
        %v2093 = vpop.f32.mrb[0].mxu0
        %v2094 = vadd.f32 0.0, %v2093
        %v2095 = vpop.f32.mrb[0].mxu0
        %2096 = vmatprep.mubr.f32.mxu0 0.0
        %2097 = vmatmul.mubr.f32.gmra.mrb[0].mxu0 %v1933
        %v2098 = vpop.f32.mrb[0].mxu0
        %v2099 = vadd.f32 0.0, %v2098
        %v2100 = vpop.f32.mrb[0].mxu0
        %2101 = vmatprep.mubr.f32.mxu0 0.0
        %2102 = vmatmul.mubr.f32.gmra.mrb[0].mxu0 %v1936
        %v2103 = vpop.f32.mrb[0].mxu0
        %v2104 = vadd.f32 0.0, %v2103
        %v2105 = vpop.f32.mrb[0].mxu0
        %2106 = vmatprep.mubr.f32.mxu0 0.0
        %2107 = vmatmul.mubr.f32.gmra.mrb[0].mxu0 %v1939
        %v2108 = vpop.f32.mrb[0].mxu0
        %v2109 = vadd.f32 0.0, %v2108
        %v2110 = vpop.f32.mrb[0].mxu0
        %2111 = vmatprep.mubr.f32.mxu0 0.0
        %2112 = vmatmul.mubr.f32.gmra.mrb[0].mxu0 %v1942
        %v2113 = vpop.f32.mrb[0].mxu0
        %v2114 = vadd.f32 0.0, %v2113
        %v2115 = vpop.f32.mrb[0].mxu0
        %2116 = vmatprep.mubr.f32.mxu0 0.0
        %2117 = vmatmul.mubr.f32.gmra.mrb[0].mxu0 %v1945
        %v2118 = vpop.f32.mrb[0].mxu0
        %v2119 = vadd.f32 0.0, %v2118
        %v2120 = vpop.f32.mrb[0].mxu0
        %2121 = vmatprep.mubr.f32.mxu0 0.0
        %2122 = vmatmul.mubr.f32.gmra.mrb[0].mxu0 %v1948
        %v2123 = vpop.f32.mrb[0].mxu0
        %v2124 = vadd.f32 0.0, %v2123
        %v2125 = vpop.f32.mrb[0].mxu0
        %2126 = vmatprep.mubr.f32.mxu0 0.0
        %2127 = vmatmul.mubr.f32.gmra.mrb[0].mxu0 %v1951
        %v2128 = vpop.f32.mrb[0].mxu0
        %v2129 = vadd.f32 0.0, %v2128
        %v2130 = vpop.f32.mrb[0].mxu0
        %2131 = vmatprep.mubr.f32.mxu0 0.0
        %2132 = vmatmul.mubr.f32.gmra.mrb[0].mxu0 %v1954
        %v2133 = vpop.f32.mrb[0].mxu0
        %v2134 = vadd.f32 0.0, %v2133
        %v2135 = vpop.f32.mrb[0].mxu0
        %2136 = vmatprep.mubr.f32.mxu0 0.0
        %2137 = vmatmul.mubr.f32.gmra.mrb[0].mxu0 %v1957
        %v2138 = vpop.f32.mrb[0].mxu0
        %v2139 = vadd.f32 0.0, %v2138
        %v2140 = vpop.f32.mrb[0].mxu0
        %2141 = vmatprep.mubr.f32.mxu0 0.0
        %2142 = vmatmul.mubr.f32.gmra.mrb[0].mxu0 %v1960
        %v2143 = vpop.f32.mrb[0].mxu0
        %v2144 = vadd.f32 0.0, %v2143
        %v2145 = vpop.f32.mrb[0].mxu0
        %2146 = vmatprep.mubr.f32.mxu0 0.0
        %2147 = vmatmul.mubr.f32.gmra.mrb[0].mxu0 %v1963
        %v2148 = vpop.f32.mrb[0].mxu0
        %v2149 = vadd.f32 0.0, %v2148
        %v2150 = vpop.f32.mrb[0].mxu0
        %2151 = vmatprep.mubr.f32.mxu0 0.0
        %2152 = vmatmul.mubr.f32.gmra.mrb[0].mxu0 %v1966
        %v2153 = vpop.f32.mrb[0].mxu0
        %v2154 = vadd.f32 0.0, %v2153
        %v2155 = vpop.f32.mrb[0].mxu0
        %2156 = vmatprep.mubr.f32.mxu0 0.0
        %2157 = vmatmul.mubr.f32.gmra.mrb[0].mxu0 %v1969
        %v2158 = vpop.f32.mrb[0].mxu0
        %v2159 = vadd.f32 0.0, %v2158
        %v2160 = vpop.f32.mrb[0].mxu0
        %2161 = vmatprep.mubr.f32.mxu0 0.0
        %2162 = vmatmul.mubr.f32.gmra.mrb[0].mxu0 %v1972
        %v2163 = vpop.f32.mrb[0].mxu0
        %v2164 = vadd.f32 0.0, %v2163
        %v2165 = vpop.f32.mrb[0].mxu0
        %2166 = vdwg.mxu0
        %v2168 = vsel %vm1443, %v1363, 0
        %v2171 = vsel %vm1443, %v1364, 0
        %v2174 = vsel %vm1443, %v1365, 0
        %v2177 = vsel %vm1443, %v1366, 0
        %v2180 = vsel %vm1443, %v1367, 0
        %v2183 = vsel %vm1443, %v1368, 0
        %v2186 = vsel %vm1443, %v1369, 0
        %v2189 = vsel %vm1443, %v1370, 0
        %v2192 = vsel %vm1443, %v1371, 0
        %v2195 = vsel %vm1443, %v1372, 0
        %v2198 = vsel %vm1443, %v1373, 0
        %v2201 = vsel %vm1443, %v1374, 0
        %v2204 = vsel %vm1443, %v1375, 0
        %v2207 = vsel %vm1443, %v1376, 0
        %v2210 = vsel %vm1443, %v1377, 0
        %v2213 = vsel %vm1443, %v1378, 0
        %v2216 = vsel %vm1443, %v1427, 0
        %v2219 = vsel %vm1443, %v1428, 0
        %v2222 = vsel %vm1443, %v1429, 0
        %v2225 = vsel %vm1443, %v1430, 0
        %v2228 = vsel %vm1443, %v1431, 0
        %v2231 = vsel %vm1443, %v1432, 0
        %v2234 = vsel %vm1443, %v1433, 0
        %v2237 = vsel %vm1443, %v1434, 0
        %v2240 = vsel %vm1443, %v1435, 0
        %v2243 = vsel %vm1443, %v1436, 0
        %v2246 = vsel %vm1443, %v1437, 0
        %v2249 = vsel %vm1443, %v1438, 0
        %v2252 = vsel %vm1443, %v1439, 0
        %v2255 = vsel %vm1443, %v1440, 0
        %v2258 = vsel %vm1443, %v1441, 0
        %v2261 = vsel %vm1443, %v1442, 0
        %2263 = vmatprep.subr.mxu0 0.0
        %2264 = vmatpush1.xpose.msra.mxu0 %v2216
        %2265 = vmatprep.subr.mxu0 0.0
        %2266 = vmatpush1.xpose.msra.mxu0 %v2219
        %2267 = vmatprep.subr.mxu0 0.0
        %2268 = vmatpush1.xpose.msra.mxu0 %v2222
        %2269 = vmatprep.subr.mxu0 0.0
        %2270 = vmatpush1.xpose.msra.mxu0 %v2225
        %2271 = vmatprep.subr.mxu0 0.0
        %2272 = vmatpush1.xpose.msra.mxu0 %v2228
        %2273 = vmatprep.subr.mxu0 0.0
        %2274 = vmatpush1.xpose.msra.mxu0 %v2231
        %2275 = vmatprep.subr.mxu0 0.0
        %2276 = vmatpush1.xpose.msra.mxu0 %v2234
        %2277 = vmatprep.subr.mxu0 0.0
        %2278 = vmatpush1.xpose.msra.mxu0 %v2237
        %2279 = vmatprep.subr.mxu0 0.0
        %2280 = vmatpush1.xpose.msra.mxu0 %v2240
        %2281 = vmatprep.subr.mxu0 0.0
        %2282 = vmatpush1.xpose.msra.mxu0 %v2243
        %2283 = vmatprep.subr.mxu0 0.0
        %2284 = vmatpush1.xpose.msra.mxu0 %v2246
        %2285 = vmatprep.subr.mxu0 0.0
        %2286 = vmatpush1.xpose.msra.mxu0 %v2249
        %2287 = vmatprep.subr.mxu0 0.0
        %2288 = vmatpush1.xpose.msra.mxu0 %v2252
        %2289 = vmatprep.subr.mxu0 0.0
        %2290 = vmatpush1.xpose.msra.mxu0 %v2255
        %2291 = vmatprep.subr.mxu0 0.0
        %2292 = vmatpush1.xpose.msra.mxu0 %v2258
        %2293 = vmatprep.subr.mxu0 0.0
        %2294 = vmatpush1.xpose.msra.mxu0 %v2261
        %2295 = vmatprep.subr.mxu0 0.0
        %2296 = vmatpush1.xpose.msra.mxu0 0.0
        %2297 = vmatprep.subr.mxu0 0.0
        %2298 = vmatpush1.xpose.msra.mxu0 0.0
        %2299 = vmatprep.subr.mxu0 0.0
        %2300 = vmatpush1.xpose.msra.mxu0 0.0
        %2301 = vmatprep.subr.mxu0 0.0
        %2302 = vmatpush1.xpose.msra.mxu0 0.0
        %2303 = vmatprep.subr.mxu0 0.0
        %2304 = vmatpush1.xpose.msra.mxu0 0.0
        %2305 = vmatprep.subr.mxu0 0.0
        %2306 = vmatpush1.xpose.msra.mxu0 0.0
        %2307 = vmatprep.subr.mxu0 0.0
        %2308 = vmatpush1.xpose.msra.mxu0 0.0
        %2309 = vmatprep.subr.mxu0 0.0
        %2310 = vmatpush1.xpose.msra.mxu0 0.0
        %2311 = vmatprep.subr.mxu0 0.0
        %2312 = vmatpush1.xpose.msra.mxu0 0.0
        %2313 = vmatprep.subr.mxu0 0.0
        %2314 = vmatpush1.xpose.msra.mxu0 0.0
        %2315 = vmatprep.subr.mxu0 0.0
        %2316 = vmatpush1.xpose.msra.mxu0 0.0
        %2317 = vmatprep.subr.mxu0 0.0
        %2318 = vmatpush1.xpose.msra.mxu0 0.0
        %2319 = vmatprep.subr.mxu0 0.0
        %2320 = vmatpush1.xpose.msra.mxu0 0.0
        %2321 = vmatprep.subr.mxu0 0.0
        %2322 = vmatpush1.xpose.msra.mxu0 0.0
        %2323 = vmatprep.subr.mxu0 0.0
        %2324 = vmatpush1.xpose.msra.mxu0 0.0
        %2325 = vmatprep.subr.mxu0 0.0
        %2326 = vmatpush1.xpose.msra.mxu0 0.0
        %2327 = vmatprep.mubr.f32.mxu0 0.0
        %2328 = vmatmul.mubr.f32.gmra.mrb[0].mxu0 %v2168
        %v2329 = vpop.f32.mrb[0].mxu0
        %v2330 = vadd.f32 0.0, %v2329
        %v2331 = vpop.f32.mrb[0].mxu0
        %2332 = vmatprep.mubr.f32.mxu0 0.0
        %2333 = vmatmul.mubr.f32.gmra.mrb[0].mxu0 %v2171
        %v2334 = vpop.f32.mrb[0].mxu0
        %v2335 = vadd.f32 0.0, %v2334
        %v2336 = vpop.f32.mrb[0].mxu0
        %2337 = vmatprep.mubr.f32.mxu0 0.0
        %2338 = vmatmul.mubr.f32.gmra.mrb[0].mxu0 %v2174
        %v2339 = vpop.f32.mrb[0].mxu0
        %v2340 = vadd.f32 0.0, %v2339
        %v2341 = vpop.f32.mrb[0].mxu0
        %2342 = vmatprep.mubr.f32.mxu0 0.0
        %2343 = vmatmul.mubr.f32.gmra.mrb[0].mxu0 %v2177
        %v2344 = vpop.f32.mrb[0].mxu0
        %v2345 = vadd.f32 0.0, %v2344
        %v2346 = vpop.f32.mrb[0].mxu0
        %2347 = vmatprep.mubr.f32.mxu0 0.0
        %2348 = vmatmul.mubr.f32.gmra.mrb[0].mxu0 %v2180
        %v2349 = vpop.f32.mrb[0].mxu0
        %v2350 = vadd.f32 0.0, %v2349
        %v2351 = vpop.f32.mrb[0].mxu0
        %2352 = vmatprep.mubr.f32.mxu0 0.0
        %2353 = vmatmul.mubr.f32.gmra.mrb[0].mxu0 %v2183
        %v2354 = vpop.f32.mrb[0].mxu0
        %v2355 = vadd.f32 0.0, %v2354
        %v2356 = vpop.f32.mrb[0].mxu0
        %2357 = vmatprep.mubr.f32.mxu0 0.0
        %2358 = vmatmul.mubr.f32.gmra.mrb[0].mxu0 %v2186
        %v2359 = vpop.f32.mrb[0].mxu0
        %v2360 = vadd.f32 0.0, %v2359
        %v2361 = vpop.f32.mrb[0].mxu0
        %2362 = vmatprep.mubr.f32.mxu0 0.0
        %2363 = vmatmul.mubr.f32.gmra.mrb[0].mxu0 %v2189
        %v2364 = vpop.f32.mrb[0].mxu0
        %v2365 = vadd.f32 0.0, %v2364
        %v2366 = vpop.f32.mrb[0].mxu0
        %2367 = vmatprep.mubr.f32.mxu0 0.0
        %2368 = vmatmul.mubr.f32.gmra.mrb[0].mxu0 %v2192
        %v2369 = vpop.f32.mrb[0].mxu0
        %v2370 = vadd.f32 0.0, %v2369
        %v2371 = vpop.f32.mrb[0].mxu0
        %2372 = vmatprep.mubr.f32.mxu0 0.0
        %2373 = vmatmul.mubr.f32.gmra.mrb[0].mxu0 %v2195
        %v2374 = vpop.f32.mrb[0].mxu0
        %v2375 = vadd.f32 0.0, %v2374
        %v2376 = vpop.f32.mrb[0].mxu0
        %2377 = vmatprep.mubr.f32.mxu0 0.0
        %2378 = vmatmul.mubr.f32.gmra.mrb[0].mxu0 %v2198
        %v2379 = vpop.f32.mrb[0].mxu0
        %v2380 = vadd.f32 0.0, %v2379
        %v2381 = vpop.f32.mrb[0].mxu0
        %2382 = vmatprep.mubr.f32.mxu0 0.0
        %2383 = vmatmul.mubr.f32.gmra.mrb[0].mxu0 %v2201
        %v2384 = vpop.f32.mrb[0].mxu0
        %v2385 = vadd.f32 0.0, %v2384
        %v2386 = vpop.f32.mrb[0].mxu0
        %2387 = vmatprep.mubr.f32.mxu0 0.0
        %2388 = vmatmul.mubr.f32.gmra.mrb[0].mxu0 %v2204
        %v2389 = vpop.f32.mrb[0].mxu0
        %v2390 = vadd.f32 0.0, %v2389
        %v2391 = vpop.f32.mrb[0].mxu0
        %2392 = vmatprep.mubr.f32.mxu0 0.0
        %2393 = vmatmul.mubr.f32.gmra.mrb[0].mxu0 %v2207
        %v2394 = vpop.f32.mrb[0].mxu0
        %v2395 = vadd.f32 0.0, %v2394
        %v2396 = vpop.f32.mrb[0].mxu0
        %2397 = vmatprep.mubr.f32.mxu0 0.0
        %2398 = vmatmul.mubr.f32.gmra.mrb[0].mxu0 %v2210
        %v2399 = vpop.f32.mrb[0].mxu0
        %v2400 = vadd.f32 0.0, %v2399
        %v2401 = vpop.f32.mrb[0].mxu0
        %2402 = vmatprep.mubr.f32.mxu0 0.0
        %2403 = vmatmul.mubr.f32.gmra.mrb[0].mxu0 %v2213
        %v2404 = vpop.f32.mrb[0].mxu0
        %v2405 = vadd.f32 0.0, %v2404
        %v2406 = vpop.f32.mrb[0].mxu0
        %2407 = vdwg.mxu0
        %v2408 = vld [vmem:[#allocation2] sm:$0xff]
        %v2409 = vld [vmem:[#allocation2 + $0x8] sm:$0xff]
        %v2410 = vld [vmem:[#allocation2 + $0x10] sm:$0xff]
        %v2411 = vld [vmem:[#allocation2 + $0x18] sm:$0xff]
        %v2412 = vld [vmem:[#allocation2 + $0x20] sm:$0xff]
        %v2413 = vld [vmem:[#allocation2 + $0x28] sm:$0xff]
        %v2414 = vld [vmem:[#allocation2 + $0x30] sm:$0xff]
        %v2415 = vld [vmem:[#allocation2 + $0x38] sm:$0xff]
        %v2416 = vld [vmem:[#allocation2 + $0x40] sm:$0xff]
        %v2417 = vld [vmem:[#allocation2 + $0x48] sm:$0xff]
        %v2418 = vld [vmem:[#allocation2 + $0x50] sm:$0xff]
        %v2419 = vld [vmem:[#allocation2 + $0x58] sm:$0xff]
        %v2420 = vld [vmem:[#allocation2 + $0x60] sm:$0xff]
        %v2421 = vld [vmem:[#allocation2 + $0x68] sm:$0xff]
        %v2422 = vld [vmem:[#allocation2 + $0x70] sm:$0xff]
        %v2423 = vld [vmem:[#allocation2 + $0x78] sm:$0xff]
        %v2424 = vld [vmem:[#allocation2 + $0x80] sm:$0xff]
        %v2425 = vld [vmem:[#allocation2 + $0x88] sm:$0xff]
        %v2426 = vld [vmem:[#allocation2 + $0x90] sm:$0xff]
        %v2427 = vld [vmem:[#allocation2 + $0x98] sm:$0xff]
        %v2428 = vld [vmem:[#allocation2 + $0xa0] sm:$0xff]
        %v2429 = vld [vmem:[#allocation2 + $0xa8] sm:$0xff]
        %v2430 = vld [vmem:[#allocation2 + $0xb0] sm:$0xff]
        %v2431 = vld [vmem:[#allocation2 + $0xb8] sm:$0xff]
        %v2432 = vld [vmem:[#allocation2 + $0xc0] sm:$0xff]
        %v2433 = vld [vmem:[#allocation2 + $0xc8] sm:$0xff]
        %v2434 = vld [vmem:[#allocation2 + $0xd0] sm:$0xff]
        %v2435 = vld [vmem:[#allocation2 + $0xd8] sm:$0xff]
        %v2436 = vld [vmem:[#allocation2 + $0xe0] sm:$0xff]
        %v2437 = vld [vmem:[#allocation2 + $0xe8] sm:$0xff]
        %v2438 = vld [vmem:[#allocation2 + $0xf0] sm:$0xff]
        %v2439 = vld [vmem:[#allocation2 + $0xf8] sm:$0xff]
        %v2440 = vld [vmem:[#allocation2 + $0x100] sm:$0xff]
        %v2441 = vld [vmem:[#allocation2 + $0x108] sm:$0xff]
        %v2442 = vld [vmem:[#allocation2 + $0x110] sm:$0xff]
        %v2443 = vld [vmem:[#allocation2 + $0x118] sm:$0xff]
        %v2444 = vld [vmem:[#allocation2 + $0x120] sm:$0xff]
        %v2445 = vld [vmem:[#allocation2 + $0x128] sm:$0xff]
        %v2446 = vld [vmem:[#allocation2 + $0x130] sm:$0xff]
        %v2447 = vld [vmem:[#allocation2 + $0x138] sm:$0xff]
        %v2448 = vld [vmem:[#allocation2 + $0x140] sm:$0xff]
        %v2449 = vld [vmem:[#allocation2 + $0x148] sm:$0xff]
        %v2450 = vld [vmem:[#allocation2 + $0x150] sm:$0xff]
        %v2451 = vld [vmem:[#allocation2 + $0x158] sm:$0xff]
        %v2452 = vld [vmem:[#allocation2 + $0x160] sm:$0xff]
        %v2453 = vld [vmem:[#allocation2 + $0x168] sm:$0xff]
        %v2454 = vld [vmem:[#allocation2 + $0x170] sm:$0xff]
        %v2455 = vld [vmem:[#allocation2 + $0x178] sm:$0xff]
        %v2456 = vld [vmem:[#allocation2 + $0x180] sm:$0xff]
        %v2457 = vld [vmem:[#allocation2 + $0x188] sm:$0xff]
        %v2458 = vld [vmem:[#allocation2 + $0x190] sm:$0xff]
        %v2459 = vld [vmem:[#allocation2 + $0x198] sm:$0xff]
        %v2460 = vld [vmem:[#allocation2 + $0x1a0] sm:$0xff]
        %v2461 = vld [vmem:[#allocation2 + $0x1a8] sm:$0xff]
        %v2462 = vld [vmem:[#allocation2 + $0x1b0] sm:$0xff]
        %v2463 = vld [vmem:[#allocation2 + $0x1b8] sm:$0xff]
        %v2464 = vld [vmem:[#allocation2 + $0x1c0] sm:$0xff]
        %v2465 = vld [vmem:[#allocation2 + $0x1c8] sm:$0xff]
        %v2466 = vld [vmem:[#allocation2 + $0x1d0] sm:$0xff]
        %v2467 = vld [vmem:[#allocation2 + $0x1d8] sm:$0xff]
        %v2468 = vld [vmem:[#allocation2 + $0x1e0] sm:$0xff]
        %v2469 = vld [vmem:[#allocation2 + $0x1e8] sm:$0xff]
        %v2470 = vld [vmem:[#allocation2 + $0x1f0] sm:$0xff]
        %v2471 = vld [vmem:[#allocation2 + $0x1f8] sm:$0xff]
        %2472 = vmax.xlane.f32.xlu0 %v1607
        %v2473 = vpop.xlane.xlu0 %2472
        %2474 = vmax.xlane.f32.xlu0 %v1612
        %v2475 = vpop.xlane.xlu0 %2474
        %2476 = vmax.xlane.f32.xlu0 %v1617
        %v2477 = vpop.xlane.xlu0 %2476
        %2478 = vmax.xlane.f32.xlu0 %v1622
        %v2479 = vpop.xlane.xlu0 %2478
        %2480 = vmax.xlane.f32.xlu0 %v1627
        %v2481 = vpop.xlane.xlu0 %2480
        %2482 = vmax.xlane.f32.xlu0 %v1632
        %v2483 = vpop.xlane.xlu0 %2482
        %2484 = vmax.xlane.f32.xlu0 %v1637
        %v2485 = vpop.xlane.xlu0 %2484
        %2486 = vmax.xlane.f32.xlu0 %v1642
        %v2487 = vpop.xlane.xlu0 %2486
        %2488 = vmax.xlane.f32.xlu0 %v1647
        %v2489 = vpop.xlane.xlu0 %2488
        %2490 = vmax.xlane.f32.xlu0 %v1652
        %v2491 = vpop.xlane.xlu0 %2490
        %2492 = vmax.xlane.f32.xlu0 %v1657
        %v2493 = vpop.xlane.xlu0 %2492
        %2494 = vmax.xlane.f32.xlu0 %v1662
        %v2495 = vpop.xlane.xlu0 %2494
        %2496 = vmax.xlane.f32.xlu0 %v1667
        %v2497 = vpop.xlane.xlu0 %2496
        %2498 = vmax.xlane.f32.xlu0 %v1672
        %v2499 = vpop.xlane.xlu0 %2498
        %2500 = vmax.xlane.f32.xlu0 %v1677
        %v2501 = vpop.xlane.xlu0 %2500
        %2502 = vmax.xlane.f32.xlu0 %v1682
        %v2503 = vpop.xlane.xlu0 %2502
        %2504 = vmax.xlane.f32.xlu0 %v1848
        %v2505 = vpop.xlane.xlu0 %2504
        %2506 = vmax.xlane.f32.xlu0 %v1853
        %v2507 = vpop.xlane.xlu0 %2506
        %2508 = vmax.xlane.f32.xlu0 %v1858
        %v2509 = vpop.xlane.xlu0 %2508
        %2510 = vmax.xlane.f32.xlu0 %v1863
        %v2511 = vpop.xlane.xlu0 %2510
        %2512 = vmax.xlane.f32.xlu0 %v1868
        %v2513 = vpop.xlane.xlu0 %2512
        %2514 = vmax.xlane.f32.xlu0 %v1873
        %v2515 = vpop.xlane.xlu0 %2514
        %2516 = vmax.xlane.f32.xlu0 %v1878
        %v2517 = vpop.xlane.xlu0 %2516
        %2518 = vmax.xlane.f32.xlu0 %v1883
        %v2519 = vpop.xlane.xlu0 %2518
        %2520 = vmax.xlane.f32.xlu0 %v1888
        %v2521 = vpop.xlane.xlu0 %2520
        %2522 = vmax.xlane.f32.xlu0 %v1893
        %v2523 = vpop.xlane.xlu0 %2522
        %2524 = vmax.xlane.f32.xlu0 %v1898
        %v2525 = vpop.xlane.xlu0 %2524
        %2526 = vmax.xlane.f32.xlu0 %v1903
        %v2527 = vpop.xlane.xlu0 %2526
        %2528 = vmax.xlane.f32.xlu0 %v1908
        %v2529 = vpop.xlane.xlu0 %2528
        %2530 = vmax.xlane.f32.xlu0 %v1913
        %v2531 = vpop.xlane.xlu0 %2530
        %2532 = vmax.xlane.f32.xlu0 %v1918
        %v2533 = vpop.xlane.xlu0 %2532
        %2534 = vmax.xlane.f32.xlu0 %v1923
        %v2535 = vpop.xlane.xlu0 %2534
        %2536 = vmax.xlane.f32.xlu0 %v2089
        %v2537 = vpop.xlane.xlu0 %2536
        %2538 = vmax.xlane.f32.xlu0 %v2094
        %v2539 = vpop.xlane.xlu0 %2538
        %2540 = vmax.xlane.f32.xlu0 %v2099
        %v2541 = vpop.xlane.xlu0 %2540
        %2542 = vmax.xlane.f32.xlu0 %v2104
        %v2543 = vpop.xlane.xlu0 %2542
        %2544 = vmax.xlane.f32.xlu0 %v2109
        %v2545 = vpop.xlane.xlu0 %2544
        %2546 = vmax.xlane.f32.xlu0 %v2114
        %v2547 = vpop.xlane.xlu0 %2546
        %2548 = vmax.xlane.f32.xlu0 %v2119
        %v2549 = vpop.xlane.xlu0 %2548
        %2550 = vmax.xlane.f32.xlu0 %v2124
        %v2551 = vpop.xlane.xlu0 %2550
        %2552 = vmax.xlane.f32.xlu0 %v2129
        %v2553 = vpop.xlane.xlu0 %2552
        %2554 = vmax.xlane.f32.xlu0 %v2134
        %v2555 = vpop.xlane.xlu0 %2554
        %2556 = vmax.xlane.f32.xlu0 %v2139
        %v2557 = vpop.xlane.xlu0 %2556
        %2558 = vmax.xlane.f32.xlu0 %v2144
        %v2559 = vpop.xlane.xlu0 %2558
        %2560 = vmax.xlane.f32.xlu0 %v2149
        %v2561 = vpop.xlane.xlu0 %2560
        %2562 = vmax.xlane.f32.xlu0 %v2154
        %v2563 = vpop.xlane.xlu0 %2562
        %2564 = vmax.xlane.f32.xlu0 %v2159
        %v2565 = vpop.xlane.xlu0 %2564
        %2566 = vmax.xlane.f32.xlu0 %v2164
        %v2567 = vpop.xlane.xlu0 %2566
        %2568 = vmax.xlane.f32.xlu0 %v2330
        %v2569 = vpop.xlane.xlu0 %2568
        %2570 = vmax.xlane.f32.xlu0 %v2335
        %v2571 = vpop.xlane.xlu0 %2570
        %2572 = vmax.xlane.f32.xlu0 %v2340
        %v2573 = vpop.xlane.xlu0 %2572
        %2574 = vmax.xlane.f32.xlu0 %v2345
        %v2575 = vpop.xlane.xlu0 %2574
        %2576 = vmax.xlane.f32.xlu0 %v2350
        %v2577 = vpop.xlane.xlu0 %2576
        %2578 = vmax.xlane.f32.xlu0 %v2355
        %v2579 = vpop.xlane.xlu0 %2578
        %2580 = vmax.xlane.f32.xlu0 %v2360
        %v2581 = vpop.xlane.xlu0 %2580
        %2582 = vmax.xlane.f32.xlu0 %v2365
        %v2583 = vpop.xlane.xlu0 %2582
        %2584 = vmax.xlane.f32.xlu0 %v2370
        %v2585 = vpop.xlane.xlu0 %2584
        %2586 = vmax.xlane.f32.xlu0 %v2375
        %v2587 = vpop.xlane.xlu0 %2586
        %2588 = vmax.xlane.f32.xlu0 %v2380
        %v2589 = vpop.xlane.xlu0 %2588
        %2590 = vmax.xlane.f32.xlu0 %v2385
        %v2591 = vpop.xlane.xlu0 %2590
        %2592 = vmax.xlane.f32.xlu0 %v2390
        %v2593 = vpop.xlane.xlu0 %2592
        %2594 = vmax.xlane.f32.xlu0 %v2395
        %v2595 = vpop.xlane.xlu0 %2594
        %2596 = vmax.xlane.f32.xlu0 %v2400
        %v2597 = vpop.xlane.xlu0 %2596
        %2598 = vmax.xlane.f32.xlu0 %v2405
        %v2599 = vpop.xlane.xlu0 %2598
        %v2600 = vmax.f32 %v2408, %v2473
        %v2601 = vmax.f32 %v2409, %v2475
        %v2602 = vmax.f32 %v2410, %v2477
        %v2603 = vmax.f32 %v2411, %v2479
        %v2604 = vmax.f32 %v2412, %v2481
        %v2605 = vmax.f32 %v2413, %v2483
        %v2606 = vmax.f32 %v2414, %v2485
        %v2607 = vmax.f32 %v2415, %v2487
        %v2608 = vmax.f32 %v2416, %v2489
        %v2609 = vmax.f32 %v2417, %v2491
        %v2610 = vmax.f32 %v2418, %v2493
        %v2611 = vmax.f32 %v2419, %v2495
        %v2612 = vmax.f32 %v2420, %v2497
        %v2613 = vmax.f32 %v2421, %v2499
        %v2614 = vmax.f32 %v2422, %v2501
        %v2615 = vmax.f32 %v2423, %v2503
        %v2616 = vmax.f32 %v2424, %v2505
        %v2617 = vmax.f32 %v2425, %v2507
        %v2618 = vmax.f32 %v2426, %v2509
        %v2619 = vmax.f32 %v2427, %v2511
        %v2620 = vmax.f32 %v2428, %v2513
        %v2621 = vmax.f32 %v2429, %v2515
        %v2622 = vmax.f32 %v2430, %v2517
        %v2623 = vmax.f32 %v2431, %v2519
        %v2624 = vmax.f32 %v2432, %v2521
        %v2625 = vmax.f32 %v2433, %v2523
        %v2626 = vmax.f32 %v2434, %v2525
        %v2627 = vmax.f32 %v2435, %v2527
        %v2628 = vmax.f32 %v2436, %v2529
        %v2629 = vmax.f32 %v2437, %v2531
        %v2630 = vmax.f32 %v2438, %v2533
        %v2631 = vmax.f32 %v2439, %v2535
        %v2632 = vmax.f32 %v2440, %v2537
        %v2633 = vmax.f32 %v2441, %v2539
        %v2634 = vmax.f32 %v2442, %v2541
        %v2635 = vmax.f32 %v2443, %v2543
        %v2636 = vmax.f32 %v2444, %v2545
        %v2637 = vmax.f32 %v2445, %v2547
        %v2638 = vmax.f32 %v2446, %v2549
        %v2639 = vmax.f32 %v2447, %v2551
        %v2640 = vmax.f32 %v2448, %v2553
        %v2641 = vmax.f32 %v2449, %v2555
        %v2642 = vmax.f32 %v2450, %v2557
        %v2643 = vmax.f32 %v2451, %v2559
        %v2644 = vmax.f32 %v2452, %v2561
        %v2645 = vmax.f32 %v2453, %v2563
        %v2646 = vmax.f32 %v2454, %v2565
        %v2647 = vmax.f32 %v2455, %v2567
        %v2648 = vmax.f32 %v2456, %v2569
        %v2649 = vmax.f32 %v2457, %v2571
        %v2650 = vmax.f32 %v2458, %v2573
        %v2651 = vmax.f32 %v2459, %v2575
        %v2652 = vmax.f32 %v2460, %v2577
        %v2653 = vmax.f32 %v2461, %v2579
        %v2654 = vmax.f32 %v2462, %v2581
        %v2655 = vmax.f32 %v2463, %v2583
        %v2656 = vmax.f32 %v2464, %v2585
        %v2657 = vmax.f32 %v2465, %v2587
        %v2658 = vmax.f32 %v2466, %v2589
        %v2659 = vmax.f32 %v2467, %v2591
        %v2660 = vmax.f32 %v2468, %v2593
        %v2661 = vmax.f32 %v2469, %v2595
        %v2662 = vmax.f32 %v2470, %v2597
        %v2663 = vmax.f32 %v2471, %v2599
        %v2664 = vsub.f32 %v2408, %v2600
        %v2665 = vsub.f32 %v2409, %v2601
        %v2666 = vsub.f32 %v2410, %v2602
        %v2667 = vsub.f32 %v2411, %v2603
        %v2668 = vsub.f32 %v2412, %v2604
        %v2669 = vsub.f32 %v2413, %v2605
        %v2670 = vsub.f32 %v2414, %v2606
        %v2671 = vsub.f32 %v2415, %v2607
        %v2672 = vsub.f32 %v2416, %v2608
        %v2673 = vsub.f32 %v2417, %v2609
        %v2674 = vsub.f32 %v2418, %v2610
        %v2675 = vsub.f32 %v2419, %v2611
        %v2676 = vsub.f32 %v2420, %v2612
        %v2677 = vsub.f32 %v2421, %v2613
        %v2678 = vsub.f32 %v2422, %v2614
        %v2679 = vsub.f32 %v2423, %v2615
        %v2680 = vsub.f32 %v2424, %v2616
        %v2681 = vsub.f32 %v2425, %v2617
        %v2682 = vsub.f32 %v2426, %v2618
        %v2683 = vsub.f32 %v2427, %v2619
        %v2684 = vsub.f32 %v2428, %v2620
        %v2685 = vsub.f32 %v2429, %v2621
        %v2686 = vsub.f32 %v2430, %v2622
        %v2687 = vsub.f32 %v2431, %v2623
        %v2688 = vsub.f32 %v2432, %v2624
        %v2689 = vsub.f32 %v2433, %v2625
        %v2690 = vsub.f32 %v2434, %v2626
        %v2691 = vsub.f32 %v2435, %v2627
        %v2692 = vsub.f32 %v2436, %v2628
        %v2693 = vsub.f32 %v2437, %v2629
        %v2694 = vsub.f32 %v2438, %v2630
        %v2695 = vsub.f32 %v2439, %v2631
        %v2696 = vsub.f32 %v2440, %v2632
        %v2697 = vsub.f32 %v2441, %v2633
        %v2698 = vsub.f32 %v2442, %v2634
        %v2699 = vsub.f32 %v2443, %v2635
        %v2700 = vsub.f32 %v2444, %v2636
        %v2701 = vsub.f32 %v2445, %v2637
        %v2702 = vsub.f32 %v2446, %v2638
        %v2703 = vsub.f32 %v2447, %v2639
        %v2704 = vsub.f32 %v2448, %v2640
        %v2705 = vsub.f32 %v2449, %v2641
        %v2706 = vsub.f32 %v2450, %v2642
        %v2707 = vsub.f32 %v2451, %v2643
        %v2708 = vsub.f32 %v2452, %v2644
        %v2709 = vsub.f32 %v2453, %v2645
        %v2710 = vsub.f32 %v2454, %v2646
        %v2711 = vsub.f32 %v2455, %v2647
        %v2712 = vsub.f32 %v2456, %v2648
        %v2713 = vsub.f32 %v2457, %v2649
        %v2714 = vsub.f32 %v2458, %v2650
        %v2715 = vsub.f32 %v2459, %v2651
        %v2716 = vsub.f32 %v2460, %v2652
        %v2717 = vsub.f32 %v2461, %v2653
        %v2718 = vsub.f32 %v2462, %v2654
        %v2719 = vsub.f32 %v2463, %v2655
        %v2720 = vsub.f32 %v2464, %v2656
        %v2721 = vsub.f32 %v2465, %v2657
        %v2722 = vsub.f32 %v2466, %v2658
        %v2723 = vsub.f32 %v2467, %v2659
        %v2724 = vsub.f32 %v2468, %v2660
        %v2725 = vsub.f32 %v2469, %v2661
        %v2726 = vsub.f32 %v2470, %v2662
        %v2727 = vsub.f32 %v2471, %v2663
        %v2728 = vmul.f32 %v2664, 1.442695
        %v2729 = vpow.pop %v2728
        %v2730 = vmul.f32 %v2665, 1.442695
        %v2731 = vpow.pop %v2730
        %v2732 = vmul.f32 %v2666, 1.442695
        %v2733 = vpow.pop %v2732
        %v2734 = vmul.f32 %v2667, 1.442695
        %v2735 = vpow.pop %v2734
        %v2736 = vmul.f32 %v2668, 1.442695
        %v2737 = vpow.pop %v2736
        %v2738 = vmul.f32 %v2669, 1.442695
        %v2739 = vpow.pop %v2738
        %v2740 = vmul.f32 %v2670, 1.442695
        %v2741 = vpow.pop %v2740
        %v2742 = vmul.f32 %v2671, 1.442695
        %v2743 = vpow.pop %v2742
        %v2744 = vmul.f32 %v2672, 1.442695
        %v2745 = vpow.pop %v2744
        %v2746 = vmul.f32 %v2673, 1.442695
        %v2747 = vpow.pop %v2746
        %v2748 = vmul.f32 %v2674, 1.442695
        %v2749 = vpow.pop %v2748
        %v2750 = vmul.f32 %v2675, 1.442695
        %v2751 = vpow.pop %v2750
        %v2752 = vmul.f32 %v2676, 1.442695
        %v2753 = vpow.pop %v2752
        %v2754 = vmul.f32 %v2677, 1.442695
        %v2755 = vpow.pop %v2754
        %v2756 = vmul.f32 %v2678, 1.442695
        %v2757 = vpow.pop %v2756
        %v2758 = vmul.f32 %v2679, 1.442695
        %v2759 = vpow.pop %v2758
        %v2760 = vmul.f32 %v2680, 1.442695
        %v2761 = vpow.pop %v2760
        %v2762 = vmul.f32 %v2681, 1.442695
        %v2763 = vpow.pop %v2762
        %v2764 = vmul.f32 %v2682, 1.442695
        %v2765 = vpow.pop %v2764
        %v2766 = vmul.f32 %v2683, 1.442695
        %v2767 = vpow.pop %v2766
        %v2768 = vmul.f32 %v2684, 1.442695
        %v2769 = vpow.pop %v2768
        %v2770 = vmul.f32 %v2685, 1.442695
        %v2771 = vpow.pop %v2770
        %v2772 = vmul.f32 %v2686, 1.442695
        %v2773 = vpow.pop %v2772
        %v2774 = vmul.f32 %v2687, 1.442695
        %v2775 = vpow.pop %v2774
        %v2776 = vmul.f32 %v2688, 1.442695
        %v2777 = vpow.pop %v2776
        %v2778 = vmul.f32 %v2689, 1.442695
        %v2779 = vpow.pop %v2778
        %v2780 = vmul.f32 %v2690, 1.442695
        %v2781 = vpow.pop %v2780
        %v2782 = vmul.f32 %v2691, 1.442695
        %v2783 = vpow.pop %v2782
        %v2784 = vmul.f32 %v2692, 1.442695
        %v2785 = vpow.pop %v2784
        %v2786 = vmul.f32 %v2693, 1.442695
        %v2787 = vpow.pop %v2786
        %v2788 = vmul.f32 %v2694, 1.442695
        %v2789 = vpow.pop %v2788
        %v2790 = vmul.f32 %v2695, 1.442695
        %v2791 = vpow.pop %v2790
        %v2792 = vmul.f32 %v2696, 1.442695
        %v2793 = vpow.pop %v2792
        %v2794 = vmul.f32 %v2697, 1.442695
        %v2795 = vpow.pop %v2794
        %v2796 = vmul.f32 %v2698, 1.442695
        %v2797 = vpow.pop %v2796
        %v2798 = vmul.f32 %v2699, 1.442695
        %v2799 = vpow.pop %v2798
        %v2800 = vmul.f32 %v2700, 1.442695
        %v2801 = vpow.pop %v2800
        %v2802 = vmul.f32 %v2701, 1.442695
        %v2803 = vpow.pop %v2802
        %v2804 = vmul.f32 %v2702, 1.442695
        %v2805 = vpow.pop %v2804
        %v2806 = vmul.f32 %v2703, 1.442695
        %v2807 = vpow.pop %v2806
        %v2808 = vmul.f32 %v2704, 1.442695
        %v2809 = vpow.pop %v2808
        %v2810 = vmul.f32 %v2705, 1.442695
        %v2811 = vpow.pop %v2810
        %v2812 = vmul.f32 %v2706, 1.442695
        %v2813 = vpow.pop %v2812
        %v2814 = vmul.f32 %v2707, 1.442695
        %v2815 = vpow.pop %v2814
        %v2816 = vmul.f32 %v2708, 1.442695
        %v2817 = vpow.pop %v2816
        %v2818 = vmul.f32 %v2709, 1.442695
        %v2819 = vpow.pop %v2818
        %v2820 = vmul.f32 %v2710, 1.442695
        %v2821 = vpow.pop %v2820
        %v2822 = vmul.f32 %v2711, 1.442695
        %v2823 = vpow.pop %v2822
        %v2824 = vmul.f32 %v2712, 1.442695
        %v2825 = vpow.pop %v2824
        %v2826 = vmul.f32 %v2713, 1.442695
        %v2827 = vpow.pop %v2826
        %v2828 = vmul.f32 %v2714, 1.442695
        %v2829 = vpow.pop %v2828
        %v2830 = vmul.f32 %v2715, 1.442695
        %v2831 = vpow.pop %v2830
        %v2832 = vmul.f32 %v2716, 1.442695
        %v2833 = vpow.pop %v2832
        %v2834 = vmul.f32 %v2717, 1.442695
        %v2835 = vpow.pop %v2834
        %v2836 = vmul.f32 %v2718, 1.442695
        %v2837 = vpow.pop %v2836
        %v2838 = vmul.f32 %v2719, 1.442695
        %v2839 = vpow.pop %v2838
        %v2840 = vmul.f32 %v2720, 1.442695
        %v2841 = vpow.pop %v2840
        %v2842 = vmul.f32 %v2721, 1.442695
        %v2843 = vpow.pop %v2842
        %v2844 = vmul.f32 %v2722, 1.442695
        %v2845 = vpow.pop %v2844
        %v2846 = vmul.f32 %v2723, 1.442695
        %v2847 = vpow.pop %v2846
        %v2848 = vmul.f32 %v2724, 1.442695
        %v2849 = vpow.pop %v2848
        %v2850 = vmul.f32 %v2725, 1.442695
        %v2851 = vpow.pop %v2850
        %v2852 = vmul.f32 %v2726, 1.442695
        %v2853 = vpow.pop %v2852
        %v2854 = vmul.f32 %v2727, 1.442695
        %v2855 = vpow.pop %v2854
        %2857 = vset.pattern.permute.xlu0 0
        %2858 = vperm.xlu0 %2857, %v2600
        %v2859 = vpop.permute.xlu0 %2858
        %2862 = vset.pattern.permute.xlu0 0
        %2863 = vperm.xlu0 %2862, %v2601
        %v2864 = vpop.permute.xlu0 %2863
        %2867 = vset.pattern.permute.xlu0 0
        %2868 = vperm.xlu0 %2867, %v2602
        %v2869 = vpop.permute.xlu0 %2868
        %2872 = vset.pattern.permute.xlu0 0
        %2873 = vperm.xlu0 %2872, %v2603
        %v2874 = vpop.permute.xlu0 %2873
        %2877 = vset.pattern.permute.xlu0 0
        %2878 = vperm.xlu0 %2877, %v2604
        %v2879 = vpop.permute.xlu0 %2878
        %2882 = vset.pattern.permute.xlu0 0
        %2883 = vperm.xlu0 %2882, %v2605
        %v2884 = vpop.permute.xlu0 %2883
        %2887 = vset.pattern.permute.xlu0 0
        %2888 = vperm.xlu0 %2887, %v2606
        %v2889 = vpop.permute.xlu0 %2888
        %2892 = vset.pattern.permute.xlu0 0
        %2893 = vperm.xlu0 %2892, %v2607
        %v2894 = vpop.permute.xlu0 %2893
        %2897 = vset.pattern.permute.xlu0 0
        %2898 = vperm.xlu0 %2897, %v2608
        %v2899 = vpop.permute.xlu0 %2898
        %2902 = vset.pattern.permute.xlu0 0
        %2903 = vperm.xlu0 %2902, %v2609
        %v2904 = vpop.permute.xlu0 %2903
        %2907 = vset.pattern.permute.xlu0 0
        %2908 = vperm.xlu0 %2907, %v2610
        %v2909 = vpop.permute.xlu0 %2908
        %2912 = vset.pattern.permute.xlu0 0
        %2913 = vperm.xlu0 %2912, %v2611
        %v2914 = vpop.permute.xlu0 %2913
        %2917 = vset.pattern.permute.xlu0 0
        %2918 = vperm.xlu0 %2917, %v2612
        %v2919 = vpop.permute.xlu0 %2918
        %2922 = vset.pattern.permute.xlu0 0
        %2923 = vperm.xlu0 %2922, %v2613
        %v2924 = vpop.permute.xlu0 %2923
        %2927 = vset.pattern.permute.xlu0 0
        %2928 = vperm.xlu0 %2927, %v2614
        %v2929 = vpop.permute.xlu0 %2928
        %2932 = vset.pattern.permute.xlu0 0
        %2933 = vperm.xlu0 %2932, %v2615
        %v2934 = vpop.permute.xlu0 %2933
        %2937 = vset.pattern.permute.xlu0 0
        %2938 = vperm.xlu0 %2937, %v2616
        %v2939 = vpop.permute.xlu0 %2938
        %2942 = vset.pattern.permute.xlu0 0
        %2943 = vperm.xlu0 %2942, %v2617
        %v2944 = vpop.permute.xlu0 %2943
        %2947 = vset.pattern.permute.xlu0 0
        %2948 = vperm.xlu0 %2947, %v2618
        %v2949 = vpop.permute.xlu0 %2948
        %2952 = vset.pattern.permute.xlu0 0
        %2953 = vperm.xlu0 %2952, %v2619
        %v2954 = vpop.permute.xlu0 %2953
        %2957 = vset.pattern.permute.xlu0 0
        %2958 = vperm.xlu0 %2957, %v2620
        %v2959 = vpop.permute.xlu0 %2958
        %2962 = vset.pattern.permute.xlu0 0
        %2963 = vperm.xlu0 %2962, %v2621
        %v2964 = vpop.permute.xlu0 %2963
        %2967 = vset.pattern.permute.xlu0 0
        %2968 = vperm.xlu0 %2967, %v2622
        %v2969 = vpop.permute.xlu0 %2968
        %2972 = vset.pattern.permute.xlu0 0
        %2973 = vperm.xlu0 %2972, %v2623
        %v2974 = vpop.permute.xlu0 %2973
        %2977 = vset.pattern.permute.xlu0 0
        %2978 = vperm.xlu0 %2977, %v2624
        %v2979 = vpop.permute.xlu0 %2978
        %2982 = vset.pattern.permute.xlu0 0
        %2983 = vperm.xlu0 %2982, %v2625
        %v2984 = vpop.permute.xlu0 %2983
        %2987 = vset.pattern.permute.xlu0 0
        %2988 = vperm.xlu0 %2987, %v2626
        %v2989 = vpop.permute.xlu0 %2988
        %2992 = vset.pattern.permute.xlu0 0
        %2993 = vperm.xlu0 %2992, %v2627
        %v2994 = vpop.permute.xlu0 %2993
        %2997 = vset.pattern.permute.xlu0 0
        %2998 = vperm.xlu0 %2997, %v2628
        %v2999 = vpop.permute.xlu0 %2998
        %3002 = vset.pattern.permute.xlu0 0
        %3003 = vperm.xlu0 %3002, %v2629
        %v3004 = vpop.permute.xlu0 %3003
        %3007 = vset.pattern.permute.xlu0 0
        %3008 = vperm.xlu0 %3007, %v2630
        %v3009 = vpop.permute.xlu0 %3008
        %3012 = vset.pattern.permute.xlu0 0
        %3013 = vperm.xlu0 %3012, %v2631
        %v3014 = vpop.permute.xlu0 %3013
        %3017 = vset.pattern.permute.xlu0 0
        %3018 = vperm.xlu0 %3017, %v2632
        %v3019 = vpop.permute.xlu0 %3018
        %3022 = vset.pattern.permute.xlu0 0
        %3023 = vperm.xlu0 %3022, %v2633
        %v3024 = vpop.permute.xlu0 %3023
        %3027 = vset.pattern.permute.xlu0 0
        %3028 = vperm.xlu0 %3027, %v2634
        %v3029 = vpop.permute.xlu0 %3028
        %3032 = vset.pattern.permute.xlu0 0
        %3033 = vperm.xlu0 %3032, %v2635
        %v3034 = vpop.permute.xlu0 %3033
        %3037 = vset.pattern.permute.xlu0 0
        %3038 = vperm.xlu0 %3037, %v2636
        %v3039 = vpop.permute.xlu0 %3038
        %3042 = vset.pattern.permute.xlu0 0
        %3043 = vperm.xlu0 %3042, %v2637
        %v3044 = vpop.permute.xlu0 %3043
        %3047 = vset.pattern.permute.xlu0 0
        %3048 = vperm.xlu0 %3047, %v2638
        %v3049 = vpop.permute.xlu0 %3048
        %3052 = vset.pattern.permute.xlu0 0
        %3053 = vperm.xlu0 %3052, %v2639
        %v3054 = vpop.permute.xlu0 %3053
        %3057 = vset.pattern.permute.xlu0 0
        %3058 = vperm.xlu0 %3057, %v2640
        %v3059 = vpop.permute.xlu0 %3058
        %3062 = vset.pattern.permute.xlu0 0
        %3063 = vperm.xlu0 %3062, %v2641
        %v3064 = vpop.permute.xlu0 %3063
        %3067 = vset.pattern.permute.xlu0 0
        %3068 = vperm.xlu0 %3067, %v2642
        %v3069 = vpop.permute.xlu0 %3068
        %3072 = vset.pattern.permute.xlu0 0
        %3073 = vperm.xlu0 %3072, %v2643
        %v3074 = vpop.permute.xlu0 %3073
        %3077 = vset.pattern.permute.xlu0 0
        %3078 = vperm.xlu0 %3077, %v2644
        %v3079 = vpop.permute.xlu0 %3078
        %3082 = vset.pattern.permute.xlu0 0
        %3083 = vperm.xlu0 %3082, %v2645
        %v3084 = vpop.permute.xlu0 %3083
        %3087 = vset.pattern.permute.xlu0 0
        %3088 = vperm.xlu0 %3087, %v2646
        %v3089 = vpop.permute.xlu0 %3088
        %3092 = vset.pattern.permute.xlu0 0
        %3093 = vperm.xlu0 %3092, %v2647
        %v3094 = vpop.permute.xlu0 %3093
        %3097 = vset.pattern.permute.xlu0 0
        %3098 = vperm.xlu0 %3097, %v2648
        %v3099 = vpop.permute.xlu0 %3098
        %3102 = vset.pattern.permute.xlu0 0
        %3103 = vperm.xlu0 %3102, %v2649
        %v3104 = vpop.permute.xlu0 %3103
        %3107 = vset.pattern.permute.xlu0 0
        %3108 = vperm.xlu0 %3107, %v2650
        %v3109 = vpop.permute.xlu0 %3108
        %3112 = vset.pattern.permute.xlu0 0
        %3113 = vperm.xlu0 %3112, %v2651
        %v3114 = vpop.permute.xlu0 %3113
        %3117 = vset.pattern.permute.xlu0 0
        %3118 = vperm.xlu0 %3117, %v2652
        %v3119 = vpop.permute.xlu0 %3118
        %3122 = vset.pattern.permute.xlu0 0
        %3123 = vperm.xlu0 %3122, %v2653
        %v3124 = vpop.permute.xlu0 %3123
        %3127 = vset.pattern.permute.xlu0 0
        %3128 = vperm.xlu0 %3127, %v2654
        %v3129 = vpop.permute.xlu0 %3128
        %3132 = vset.pattern.permute.xlu0 0
        %3133 = vperm.xlu0 %3132, %v2655
        %v3134 = vpop.permute.xlu0 %3133
        %3137 = vset.pattern.permute.xlu0 0
        %3138 = vperm.xlu0 %3137, %v2656
        %v3139 = vpop.permute.xlu0 %3138
        %3142 = vset.pattern.permute.xlu0 0
        %3143 = vperm.xlu0 %3142, %v2657
        %v3144 = vpop.permute.xlu0 %3143
        %3147 = vset.pattern.permute.xlu0 0
        %3148 = vperm.xlu0 %3147, %v2658
        %v3149 = vpop.permute.xlu0 %3148
        %3152 = vset.pattern.permute.xlu0 0
        %3153 = vperm.xlu0 %3152, %v2659
        %v3154 = vpop.permute.xlu0 %3153
        %3157 = vset.pattern.permute.xlu0 0
        %3158 = vperm.xlu0 %3157, %v2660
        %v3159 = vpop.permute.xlu0 %3158
        %3162 = vset.pattern.permute.xlu0 0
        %3163 = vperm.xlu0 %3162, %v2661
        %v3164 = vpop.permute.xlu0 %3163
        %3167 = vset.pattern.permute.xlu0 0
        %3168 = vperm.xlu0 %3167, %v2662
        %v3169 = vpop.permute.xlu0 %3168
        %3172 = vset.pattern.permute.xlu0 0
        %3173 = vperm.xlu0 %3172, %v2663
        %v3174 = vpop.permute.xlu0 %3173
        %v3176 = vsub.f32 %v1607, %v2859
        %v3177 = vsub.f32 %v1612, %v2864
        %v3178 = vsub.f32 %v1617, %v2869
        %v3179 = vsub.f32 %v1622, %v2874
        %v3180 = vsub.f32 %v1627, %v2879
        %v3181 = vsub.f32 %v1632, %v2884
        %v3182 = vsub.f32 %v1637, %v2889
        %v3183 = vsub.f32 %v1642, %v2894
        %v3184 = vsub.f32 %v1647, %v2899
        %v3185 = vsub.f32 %v1652, %v2904
        %v3186 = vsub.f32 %v1657, %v2909
        %v3187 = vsub.f32 %v1662, %v2914
        %v3188 = vsub.f32 %v1667, %v2919
        %v3189 = vsub.f32 %v1672, %v2924
        %v3190 = vsub.f32 %v1677, %v2929
        %v3191 = vsub.f32 %v1682, %v2934
        %v3192 = vsub.f32 %v1848, %v2939
        %v3193 = vsub.f32 %v1853, %v2944
        %v3194 = vsub.f32 %v1858, %v2949
        %v3195 = vsub.f32 %v1863, %v2954
        %v3196 = vsub.f32 %v1868, %v2959
        %v3197 = vsub.f32 %v1873, %v2964
        %v3198 = vsub.f32 %v1878, %v2969
        %v3199 = vsub.f32 %v1883, %v2974
        %v3200 = vsub.f32 %v1888, %v2979
        %v3201 = vsub.f32 %v1893, %v2984
        %v3202 = vsub.f32 %v1898, %v2989
        %v3203 = vsub.f32 %v1903, %v2994
        %v3204 = vsub.f32 %v1908, %v2999
        %v3205 = vsub.f32 %v1913, %v3004
        %v3206 = vsub.f32 %v1918, %v3009
        %v3207 = vsub.f32 %v1923, %v3014
        %v3208 = vsub.f32 %v2089, %v3019
        %v3209 = vsub.f32 %v2094, %v3024
        %v3210 = vsub.f32 %v2099, %v3029
        %v3211 = vsub.f32 %v2104, %v3034
        %v3212 = vsub.f32 %v2109, %v3039
        %v3213 = vsub.f32 %v2114, %v3044
        %v3214 = vsub.f32 %v2119, %v3049
        %v3215 = vsub.f32 %v2124, %v3054
        %v3216 = vsub.f32 %v2129, %v3059
        %v3217 = vsub.f32 %v2134, %v3064
        %v3218 = vsub.f32 %v2139, %v3069
        %v3219 = vsub.f32 %v2144, %v3074
        %v3220 = vsub.f32 %v2149, %v3079
        %v3221 = vsub.f32 %v2154, %v3084
        %v3222 = vsub.f32 %v2159, %v3089
        %v3223 = vsub.f32 %v2164, %v3094
        %v3224 = vsub.f32 %v2330, %v3099
        %v3225 = vsub.f32 %v2335, %v3104
        %v3226 = vsub.f32 %v2340, %v3109
        %v3227 = vsub.f32 %v2345, %v3114
        %v3228 = vsub.f32 %v2350, %v3119
        %v3229 = vsub.f32 %v2355, %v3124
        %v3230 = vsub.f32 %v2360, %v3129
        %v3231 = vsub.f32 %v2365, %v3134
        %v3232 = vsub.f32 %v2370, %v3139
        %v3233 = vsub.f32 %v2375, %v3144
        %v3234 = vsub.f32 %v2380, %v3149
        %v3235 = vsub.f32 %v2385, %v3154
        %v3236 = vsub.f32 %v2390, %v3159
        %v3237 = vsub.f32 %v2395, %v3164
        %v3238 = vsub.f32 %v2400, %v3169
        %v3239 = vsub.f32 %v2405, %v3174
        %v3240 = vmul.f32 %v3176, 1.442695
        %v3241 = vpow.pop %v3240
        %v3242 = vmul.f32 %v3177, 1.442695
        %v3243 = vpow.pop %v3242
        %v3244 = vmul.f32 %v3178, 1.442695
        %v3245 = vpow.pop %v3244
        %v3246 = vmul.f32 %v3179, 1.442695
        %v3247 = vpow.pop %v3246
        %v3248 = vmul.f32 %v3180, 1.442695
        %v3249 = vpow.pop %v3248
        %v3250 = vmul.f32 %v3181, 1.442695
        %v3251 = vpow.pop %v3250
        %v3252 = vmul.f32 %v3182, 1.442695
        %v3253 = vpow.pop %v3252
        %v3254 = vmul.f32 %v3183, 1.442695
        %v3255 = vpow.pop %v3254
        %v3256 = vmul.f32 %v3184, 1.442695
        %v3257 = vpow.pop %v3256
        %v3258 = vmul.f32 %v3185, 1.442695
        %v3259 = vpow.pop %v3258
        %v3260 = vmul.f32 %v3186, 1.442695
        %v3261 = vpow.pop %v3260
        %v3262 = vmul.f32 %v3187, 1.442695
        %v3263 = vpow.pop %v3262
        %v3264 = vmul.f32 %v3188, 1.442695
        %v3265 = vpow.pop %v3264
        %v3266 = vmul.f32 %v3189, 1.442695
        %v3267 = vpow.pop %v3266
        %v3268 = vmul.f32 %v3190, 1.442695
        %v3269 = vpow.pop %v3268
        %v3270 = vmul.f32 %v3191, 1.442695
        %v3271 = vpow.pop %v3270
        %v3272 = vmul.f32 %v3192, 1.442695
        %v3273 = vpow.pop %v3272
        %v3274 = vmul.f32 %v3193, 1.442695
        %v3275 = vpow.pop %v3274
        %v3276 = vmul.f32 %v3194, 1.442695
        %v3277 = vpow.pop %v3276
        %v3278 = vmul.f32 %v3195, 1.442695
        %v3279 = vpow.pop %v3278
        %v3280 = vmul.f32 %v3196, 1.442695
        %v3281 = vpow.pop %v3280
        %v3282 = vmul.f32 %v3197, 1.442695
        %v3283 = vpow.pop %v3282
        %v3284 = vmul.f32 %v3198, 1.442695
        %v3285 = vpow.pop %v3284
        %v3286 = vmul.f32 %v3199, 1.442695
        %v3287 = vpow.pop %v3286
        %v3288 = vmul.f32 %v3200, 1.442695
        %v3289 = vpow.pop %v3288
        %v3290 = vmul.f32 %v3201, 1.442695
        %v3291 = vpow.pop %v3290
        %v3292 = vmul.f32 %v3202, 1.442695
        %v3293 = vpow.pop %v3292
        %v3294 = vmul.f32 %v3203, 1.442695
        %v3295 = vpow.pop %v3294
        %v3296 = vmul.f32 %v3204, 1.442695
        %v3297 = vpow.pop %v3296
        %v3298 = vmul.f32 %v3205, 1.442695
        %v3299 = vpow.pop %v3298
        %v3300 = vmul.f32 %v3206, 1.442695
        %v3301 = vpow.pop %v3300
        %v3302 = vmul.f32 %v3207, 1.442695
        %v3303 = vpow.pop %v3302
        %v3304 = vmul.f32 %v3208, 1.442695
        %v3305 = vpow.pop %v3304
        %v3306 = vmul.f32 %v3209, 1.442695
        %v3307 = vpow.pop %v3306
        %v3308 = vmul.f32 %v3210, 1.442695
        %v3309 = vpow.pop %v3308
        %v3310 = vmul.f32 %v3211, 1.442695
        %v3311 = vpow.pop %v3310
        %v3312 = vmul.f32 %v3212, 1.442695
        %v3313 = vpow.pop %v3312
        %v3314 = vmul.f32 %v3213, 1.442695
        %v3315 = vpow.pop %v3314
        %v3316 = vmul.f32 %v3214, 1.442695
        %v3317 = vpow.pop %v3316
        %v3318 = vmul.f32 %v3215, 1.442695
        %v3319 = vpow.pop %v3318
        %v3320 = vmul.f32 %v3216, 1.442695
        %v3321 = vpow.pop %v3320
        %v3322 = vmul.f32 %v3217, 1.442695
        %v3323 = vpow.pop %v3322
        %v3324 = vmul.f32 %v3218, 1.442695
        %v3325 = vpow.pop %v3324
        %v3326 = vmul.f32 %v3219, 1.442695
        %v3327 = vpow.pop %v3326
        %v3328 = vmul.f32 %v3220, 1.442695
        %v3329 = vpow.pop %v3328
        %v3330 = vmul.f32 %v3221, 1.442695
        %v3331 = vpow.pop %v3330
        %v3332 = vmul.f32 %v3222, 1.442695
        %v3333 = vpow.pop %v3332
        %v3334 = vmul.f32 %v3223, 1.442695
        %v3335 = vpow.pop %v3334
        %v3336 = vmul.f32 %v3224, 1.442695
        %v3337 = vpow.pop %v3336
        %v3338 = vmul.f32 %v3225, 1.442695
        %v3339 = vpow.pop %v3338
        %v3340 = vmul.f32 %v3226, 1.442695
        %v3341 = vpow.pop %v3340
        %v3342 = vmul.f32 %v3227, 1.442695
        %v3343 = vpow.pop %v3342
        %v3344 = vmul.f32 %v3228, 1.442695
        %v3345 = vpow.pop %v3344
        %v3346 = vmul.f32 %v3229, 1.442695
        %v3347 = vpow.pop %v3346
        %v3348 = vmul.f32 %v3230, 1.442695
        %v3349 = vpow.pop %v3348
        %v3350 = vmul.f32 %v3231, 1.442695
        %v3351 = vpow.pop %v3350
        %v3352 = vmul.f32 %v3232, 1.442695
        %v3353 = vpow.pop %v3352
        %v3354 = vmul.f32 %v3233, 1.442695
        %v3355 = vpow.pop %v3354
        %v3356 = vmul.f32 %v3234, 1.442695
        %v3357 = vpow.pop %v3356
        %v3358 = vmul.f32 %v3235, 1.442695
        %v3359 = vpow.pop %v3358
        %v3360 = vmul.f32 %v3236, 1.442695
        %v3361 = vpow.pop %v3360
        %v3362 = vmul.f32 %v3237, 1.442695
        %v3363 = vpow.pop %v3362
        %v3364 = vmul.f32 %v3238, 1.442695
        %v3365 = vpow.pop %v3364
        %v3366 = vmul.f32 %v3239, 1.442695
        %v3367 = vpow.pop %v3366
        %v3368 = vld [vmem:[#allocation3] sm:$0xff]
        %v3369 = vld [vmem:[#allocation3 + $0x8] sm:$0xff]
        %v3370 = vld [vmem:[#allocation3 + $0x10] sm:$0xff]
        %v3371 = vld [vmem:[#allocation3 + $0x18] sm:$0xff]
        %v3372 = vld [vmem:[#allocation3 + $0x20] sm:$0xff]
        %v3373 = vld [vmem:[#allocation3 + $0x28] sm:$0xff]
        %v3374 = vld [vmem:[#allocation3 + $0x30] sm:$0xff]
        %v3375 = vld [vmem:[#allocation3 + $0x38] sm:$0xff]
        %v3376 = vld [vmem:[#allocation3 + $0x40] sm:$0xff]
        %v3377 = vld [vmem:[#allocation3 + $0x48] sm:$0xff]
        %v3378 = vld [vmem:[#allocation3 + $0x50] sm:$0xff]
        %v3379 = vld [vmem:[#allocation3 + $0x58] sm:$0xff]
        %v3380 = vld [vmem:[#allocation3 + $0x60] sm:$0xff]
        %v3381 = vld [vmem:[#allocation3 + $0x68] sm:$0xff]
        %v3382 = vld [vmem:[#allocation3 + $0x70] sm:$0xff]
        %v3383 = vld [vmem:[#allocation3 + $0x78] sm:$0xff]
        %v3384 = vld [vmem:[#allocation3 + $0x80] sm:$0xff]
        %v3385 = vld [vmem:[#allocation3 + $0x88] sm:$0xff]
        %v3386 = vld [vmem:[#allocation3 + $0x90] sm:$0xff]
        %v3387 = vld [vmem:[#allocation3 + $0x98] sm:$0xff]
        %v3388 = vld [vmem:[#allocation3 + $0xa0] sm:$0xff]
        %v3389 = vld [vmem:[#allocation3 + $0xa8] sm:$0xff]
        %v3390 = vld [vmem:[#allocation3 + $0xb0] sm:$0xff]
        %v3391 = vld [vmem:[#allocation3 + $0xb8] sm:$0xff]
        %v3392 = vld [vmem:[#allocation3 + $0xc0] sm:$0xff]
        %v3393 = vld [vmem:[#allocation3 + $0xc8] sm:$0xff]
        %v3394 = vld [vmem:[#allocation3 + $0xd0] sm:$0xff]
        %v3395 = vld [vmem:[#allocation3 + $0xd8] sm:$0xff]
        %v3396 = vld [vmem:[#allocation3 + $0xe0] sm:$0xff]
        %v3397 = vld [vmem:[#allocation3 + $0xe8] sm:$0xff]
        %v3398 = vld [vmem:[#allocation3 + $0xf0] sm:$0xff]
        %v3399 = vld [vmem:[#allocation3 + $0xf8] sm:$0xff]
        %v3400 = vld [vmem:[#allocation3 + $0x100] sm:$0xff]
        %v3401 = vld [vmem:[#allocation3 + $0x108] sm:$0xff]
        %v3402 = vld [vmem:[#allocation3 + $0x110] sm:$0xff]
        %v3403 = vld [vmem:[#allocation3 + $0x118] sm:$0xff]
        %v3404 = vld [vmem:[#allocation3 + $0x120] sm:$0xff]
        %v3405 = vld [vmem:[#allocation3 + $0x128] sm:$0xff]
        %v3406 = vld [vmem:[#allocation3 + $0x130] sm:$0xff]
        %v3407 = vld [vmem:[#allocation3 + $0x138] sm:$0xff]
        %v3408 = vld [vmem:[#allocation3 + $0x140] sm:$0xff]
        %v3409 = vld [vmem:[#allocation3 + $0x148] sm:$0xff]
        %v3410 = vld [vmem:[#allocation3 + $0x150] sm:$0xff]
        %v3411 = vld [vmem:[#allocation3 + $0x158] sm:$0xff]
        %v3412 = vld [vmem:[#allocation3 + $0x160] sm:$0xff]
        %v3413 = vld [vmem:[#allocation3 + $0x168] sm:$0xff]
        %v3414 = vld [vmem:[#allocation3 + $0x170] sm:$0xff]
        %v3415 = vld [vmem:[#allocation3 + $0x178] sm:$0xff]
        %v3416 = vld [vmem:[#allocation3 + $0x180] sm:$0xff]
        %v3417 = vld [vmem:[#allocation3 + $0x188] sm:$0xff]
        %v3418 = vld [vmem:[#allocation3 + $0x190] sm:$0xff]
        %v3419 = vld [vmem:[#allocation3 + $0x198] sm:$0xff]
        %v3420 = vld [vmem:[#allocation3 + $0x1a0] sm:$0xff]
        %v3421 = vld [vmem:[#allocation3 + $0x1a8] sm:$0xff]
        %v3422 = vld [vmem:[#allocation3 + $0x1b0] sm:$0xff]
        %v3423 = vld [vmem:[#allocation3 + $0x1b8] sm:$0xff]
        %v3424 = vld [vmem:[#allocation3 + $0x1c0] sm:$0xff]
        %v3425 = vld [vmem:[#allocation3 + $0x1c8] sm:$0xff]
        %v3426 = vld [vmem:[#allocation3 + $0x1d0] sm:$0xff]
        %v3427 = vld [vmem:[#allocation3 + $0x1d8] sm:$0xff]
        %v3428 = vld [vmem:[#allocation3 + $0x1e0] sm:$0xff]
        %v3429 = vld [vmem:[#allocation3 + $0x1e8] sm:$0xff]
        %v3430 = vld [vmem:[#allocation3 + $0x1f0] sm:$0xff]
        %v3431 = vld [vmem:[#allocation3 + $0x1f8] sm:$0xff]
        %v3432 = vmul.f32 %v2729, %v3368
        %v3433 = vmul.f32 %v2731, %v3369
        %v3434 = vmul.f32 %v2733, %v3370
        %v3435 = vmul.f32 %v2735, %v3371
        %v3436 = vmul.f32 %v2737, %v3372
        %v3437 = vmul.f32 %v2739, %v3373
        %v3438 = vmul.f32 %v2741, %v3374
        %v3439 = vmul.f32 %v2743, %v3375
        %v3440 = vmul.f32 %v2745, %v3376
        %v3441 = vmul.f32 %v2747, %v3377
        %v3442 = vmul.f32 %v2749, %v3378
        %v3443 = vmul.f32 %v2751, %v3379
        %v3444 = vmul.f32 %v2753, %v3380
        %v3445 = vmul.f32 %v2755, %v3381
        %v3446 = vmul.f32 %v2757, %v3382
        %v3447 = vmul.f32 %v2759, %v3383
        %v3448 = vmul.f32 %v2761, %v3384
        %v3449 = vmul.f32 %v2763, %v3385
        %v3450 = vmul.f32 %v2765, %v3386
        %v3451 = vmul.f32 %v2767, %v3387
        %v3452 = vmul.f32 %v2769, %v3388
        %v3453 = vmul.f32 %v2771, %v3389
        %v3454 = vmul.f32 %v2773, %v3390
        %v3455 = vmul.f32 %v2775, %v3391
        %v3456 = vmul.f32 %v2777, %v3392
        %v3457 = vmul.f32 %v2779, %v3393
        %v3458 = vmul.f32 %v2781, %v3394
        %v3459 = vmul.f32 %v2783, %v3395
        %v3460 = vmul.f32 %v2785, %v3396
        %v3461 = vmul.f32 %v2787, %v3397
        %v3462 = vmul.f32 %v2789, %v3398
        %v3463 = vmul.f32 %v2791, %v3399
        %v3464 = vmul.f32 %v2793, %v3400
        %v3465 = vmul.f32 %v2795, %v3401
        %v3466 = vmul.f32 %v2797, %v3402
        %v3467 = vmul.f32 %v2799, %v3403
        %v3468 = vmul.f32 %v2801, %v3404
        %v3469 = vmul.f32 %v2803, %v3405
        %v3470 = vmul.f32 %v2805, %v3406
        %v3471 = vmul.f32 %v2807, %v3407
        %v3472 = vmul.f32 %v2809, %v3408
        %v3473 = vmul.f32 %v2811, %v3409
        %v3474 = vmul.f32 %v2813, %v3410
        %v3475 = vmul.f32 %v2815, %v3411
        %v3476 = vmul.f32 %v2817, %v3412
        %v3477 = vmul.f32 %v2819, %v3413
        %v3478 = vmul.f32 %v2821, %v3414
        %v3479 = vmul.f32 %v2823, %v3415
        %v3480 = vmul.f32 %v2825, %v3416
        %v3481 = vmul.f32 %v2827, %v3417
        %v3482 = vmul.f32 %v2829, %v3418
        %v3483 = vmul.f32 %v2831, %v3419
        %v3484 = vmul.f32 %v2833, %v3420
        %v3485 = vmul.f32 %v2835, %v3421
        %v3486 = vmul.f32 %v2837, %v3422
        %v3487 = vmul.f32 %v2839, %v3423
        %v3488 = vmul.f32 %v2841, %v3424
        %v3489 = vmul.f32 %v2843, %v3425
        %v3490 = vmul.f32 %v2845, %v3426
        %v3491 = vmul.f32 %v2847, %v3427
        %v3492 = vmul.f32 %v2849, %v3428
        %v3493 = vmul.f32 %v2851, %v3429
        %v3494 = vmul.f32 %v2853, %v3430
        %v3495 = vmul.f32 %v2855, %v3431
        %3496 = vadd.xlane.f32.xlu0 %v3241
        %v3497 = vpop.xlane.xlu0 %3496
        %3498 = vadd.xlane.f32.xlu0 %v3243
        %v3499 = vpop.xlane.xlu0 %3498
        %3500 = vadd.xlane.f32.xlu0 %v3245
        %v3501 = vpop.xlane.xlu0 %3500
        %3502 = vadd.xlane.f32.xlu0 %v3247
        %v3503 = vpop.xlane.xlu0 %3502
        %3504 = vadd.xlane.f32.xlu0 %v3249
        %v3505 = vpop.xlane.xlu0 %3504
        %3506 = vadd.xlane.f32.xlu0 %v3251
        %v3507 = vpop.xlane.xlu0 %3506
        %3508 = vadd.xlane.f32.xlu0 %v3253
        %v3509 = vpop.xlane.xlu0 %3508
        %3510 = vadd.xlane.f32.xlu0 %v3255
        %v3511 = vpop.xlane.xlu0 %3510
        %3512 = vadd.xlane.f32.xlu0 %v3257
        %v3513 = vpop.xlane.xlu0 %3512
        %3514 = vadd.xlane.f32.xlu0 %v3259
        %v3515 = vpop.xlane.xlu0 %3514
        %3516 = vadd.xlane.f32.xlu0 %v3261
        %v3517 = vpop.xlane.xlu0 %3516
        %3518 = vadd.xlane.f32.xlu0 %v3263
        %v3519 = vpop.xlane.xlu0 %3518
        %3520 = vadd.xlane.f32.xlu0 %v3265
        %v3521 = vpop.xlane.xlu0 %3520
        %3522 = vadd.xlane.f32.xlu0 %v3267
        %v3523 = vpop.xlane.xlu0 %3522
        %3524 = vadd.xlane.f32.xlu0 %v3269
        %v3525 = vpop.xlane.xlu0 %3524
        %3526 = vadd.xlane.f32.xlu0 %v3271
        %v3527 = vpop.xlane.xlu0 %3526
        %3528 = vadd.xlane.f32.xlu0 %v3273
        %v3529 = vpop.xlane.xlu0 %3528
        %3530 = vadd.xlane.f32.xlu0 %v3275
        %v3531 = vpop.xlane.xlu0 %3530
        %3532 = vadd.xlane.f32.xlu0 %v3277
        %v3533 = vpop.xlane.xlu0 %3532
        %3534 = vadd.xlane.f32.xlu0 %v3279
        %v3535 = vpop.xlane.xlu0 %3534
        %3536 = vadd.xlane.f32.xlu0 %v3281
        %v3537 = vpop.xlane.xlu0 %3536
        %3538 = vadd.xlane.f32.xlu0 %v3283
        %v3539 = vpop.xlane.xlu0 %3538
        %3540 = vadd.xlane.f32.xlu0 %v3285
        %v3541 = vpop.xlane.xlu0 %3540
        %3542 = vadd.xlane.f32.xlu0 %v3287
        %v3543 = vpop.xlane.xlu0 %3542
        %3544 = vadd.xlane.f32.xlu0 %v3289
        %v3545 = vpop.xlane.xlu0 %3544
        %3546 = vadd.xlane.f32.xlu0 %v3291
        %v3547 = vpop.xlane.xlu0 %3546
        %3548 = vadd.xlane.f32.xlu0 %v3293
        %v3549 = vpop.xlane.xlu0 %3548
        %3550 = vadd.xlane.f32.xlu0 %v3295
        %v3551 = vpop.xlane.xlu0 %3550
        %3552 = vadd.xlane.f32.xlu0 %v3297
        %v3553 = vpop.xlane.xlu0 %3552
        %3554 = vadd.xlane.f32.xlu0 %v3299
        %v3555 = vpop.xlane.xlu0 %3554
        %3556 = vadd.xlane.f32.xlu0 %v3301
        %v3557 = vpop.xlane.xlu0 %3556
        %3558 = vadd.xlane.f32.xlu0 %v3303
        %v3559 = vpop.xlane.xlu0 %3558
        %3560 = vadd.xlane.f32.xlu0 %v3305
        %v3561 = vpop.xlane.xlu0 %3560
        %3562 = vadd.xlane.f32.xlu0 %v3307
        %v3563 = vpop.xlane.xlu0 %3562
        %3564 = vadd.xlane.f32.xlu0 %v3309
        %v3565 = vpop.xlane.xlu0 %3564
        %3566 = vadd.xlane.f32.xlu0 %v3311
        %v3567 = vpop.xlane.xlu0 %3566
        %3568 = vadd.xlane.f32.xlu0 %v3313
        %v3569 = vpop.xlane.xlu0 %3568
        %3570 = vadd.xlane.f32.xlu0 %v3315
        %v3571 = vpop.xlane.xlu0 %3570
        %3572 = vadd.xlane.f32.xlu0 %v3317
        %v3573 = vpop.xlane.xlu0 %3572
        %3574 = vadd.xlane.f32.xlu0 %v3319
        %v3575 = vpop.xlane.xlu0 %3574
        %3576 = vadd.xlane.f32.xlu0 %v3321
        %v3577 = vpop.xlane.xlu0 %3576
        %3578 = vadd.xlane.f32.xlu0 %v3323
        %v3579 = vpop.xlane.xlu0 %3578
        %3580 = vadd.xlane.f32.xlu0 %v3325
        %v3581 = vpop.xlane.xlu0 %3580
        %3582 = vadd.xlane.f32.xlu0 %v3327
        %v3583 = vpop.xlane.xlu0 %3582
        %3584 = vadd.xlane.f32.xlu0 %v3329
        %v3585 = vpop.xlane.xlu0 %3584
        %3586 = vadd.xlane.f32.xlu0 %v3331
        %v3587 = vpop.xlane.xlu0 %3586
        %3588 = vadd.xlane.f32.xlu0 %v3333
        %v3589 = vpop.xlane.xlu0 %3588
        %3590 = vadd.xlane.f32.xlu0 %v3335
        %v3591 = vpop.xlane.xlu0 %3590
        %3592 = vadd.xlane.f32.xlu0 %v3337
        %v3593 = vpop.xlane.xlu0 %3592
        %3594 = vadd.xlane.f32.xlu0 %v3339
        %v3595 = vpop.xlane.xlu0 %3594
        %3596 = vadd.xlane.f32.xlu0 %v3341
        %v3597 = vpop.xlane.xlu0 %3596
        %3598 = vadd.xlane.f32.xlu0 %v3343
        %v3599 = vpop.xlane.xlu0 %3598
        %3600 = vadd.xlane.f32.xlu0 %v3345
        %v3601 = vpop.xlane.xlu0 %3600
        %3602 = vadd.xlane.f32.xlu0 %v3347
        %v3603 = vpop.xlane.xlu0 %3602
        %3604 = vadd.xlane.f32.xlu0 %v3349
        %v3605 = vpop.xlane.xlu0 %3604
        %3606 = vadd.xlane.f32.xlu0 %v3351
        %v3607 = vpop.xlane.xlu0 %3606
        %3608 = vadd.xlane.f32.xlu0 %v3353
        %v3609 = vpop.xlane.xlu0 %3608
        %3610 = vadd.xlane.f32.xlu0 %v3355
        %v3611 = vpop.xlane.xlu0 %3610
        %3612 = vadd.xlane.f32.xlu0 %v3357
        %v3613 = vpop.xlane.xlu0 %3612
        %3614 = vadd.xlane.f32.xlu0 %v3359
        %v3615 = vpop.xlane.xlu0 %3614
        %3616 = vadd.xlane.f32.xlu0 %v3361
        %v3617 = vpop.xlane.xlu0 %3616
        %3618 = vadd.xlane.f32.xlu0 %v3363
        %v3619 = vpop.xlane.xlu0 %3618
        %3620 = vadd.xlane.f32.xlu0 %v3365
        %v3621 = vpop.xlane.xlu0 %3620
        %3622 = vadd.xlane.f32.xlu0 %v3367
        %v3623 = vpop.xlane.xlu0 %3622
        %v3624 = vadd.f32 %v3432, %v3497
        %v3625 = vadd.f32 %v3433, %v3499
        %v3626 = vadd.f32 %v3434, %v3501
        %v3627 = vadd.f32 %v3435, %v3503
        %v3628 = vadd.f32 %v3436, %v3505
        %v3629 = vadd.f32 %v3437, %v3507
        %v3630 = vadd.f32 %v3438, %v3509
        %v3631 = vadd.f32 %v3439, %v3511
        %v3632 = vadd.f32 %v3440, %v3513
        %v3633 = vadd.f32 %v3441, %v3515
        %v3634 = vadd.f32 %v3442, %v3517
        %v3635 = vadd.f32 %v3443, %v3519
        %v3636 = vadd.f32 %v3444, %v3521
        %v3637 = vadd.f32 %v3445, %v3523
        %v3638 = vadd.f32 %v3446, %v3525
        %v3639 = vadd.f32 %v3447, %v3527
        %v3640 = vadd.f32 %v3448, %v3529
        %v3641 = vadd.f32 %v3449, %v3531
        %v3642 = vadd.f32 %v3450, %v3533
        %v3643 = vadd.f32 %v3451, %v3535
        %v3644 = vadd.f32 %v3452, %v3537
        %v3645 = vadd.f32 %v3453, %v3539
        %v3646 = vadd.f32 %v3454, %v3541
        %v3647 = vadd.f32 %v3455, %v3543
        %v3648 = vadd.f32 %v3456, %v3545
        %v3649 = vadd.f32 %v3457, %v3547
        %v3650 = vadd.f32 %v3458, %v3549
        %v3651 = vadd.f32 %v3459, %v3551
        %v3652 = vadd.f32 %v3460, %v3553
        %v3653 = vadd.f32 %v3461, %v3555
        %v3654 = vadd.f32 %v3462, %v3557
        %v3655 = vadd.f32 %v3463, %v3559
        %v3656 = vadd.f32 %v3464, %v3561
        %v3657 = vadd.f32 %v3465, %v3563
        %v3658 = vadd.f32 %v3466, %v3565
        %v3659 = vadd.f32 %v3467, %v3567
        %v3660 = vadd.f32 %v3468, %v3569
        %v3661 = vadd.f32 %v3469, %v3571
        %v3662 = vadd.f32 %v3470, %v3573
        %v3663 = vadd.f32 %v3471, %v3575
        %v3664 = vadd.f32 %v3472, %v3577
        %v3665 = vadd.f32 %v3473, %v3579
        %v3666 = vadd.f32 %v3474, %v3581
        %v3667 = vadd.f32 %v3475, %v3583
        %v3668 = vadd.f32 %v3476, %v3585
        %v3669 = vadd.f32 %v3477, %v3587
        %v3670 = vadd.f32 %v3478, %v3589
        %v3671 = vadd.f32 %v3479, %v3591
        %v3672 = vadd.f32 %v3480, %v3593
        %v3673 = vadd.f32 %v3481, %v3595
        %v3674 = vadd.f32 %v3482, %v3597
        %v3675 = vadd.f32 %v3483, %v3599
        %v3676 = vadd.f32 %v3484, %v3601
        %v3677 = vadd.f32 %v3485, %v3603
        %v3678 = vadd.f32 %v3486, %v3605
        %v3679 = vadd.f32 %v3487, %v3607
        %v3680 = vadd.f32 %v3488, %v3609
        %v3681 = vadd.f32 %v3489, %v3611
        %v3682 = vadd.f32 %v3490, %v3613
        %v3683 = vadd.f32 %v3491, %v3615
        %v3684 = vadd.f32 %v3492, %v3617
        %v3685 = vadd.f32 %v3493, %v3619
        %v3686 = vadd.f32 %v3494, %v3621
        %v3687 = vadd.f32 %v3495, %v3623
        %vm3688 = vcmask 7168
        %3689 = vst.msk [vmem:[#allocation3] sm:$0xff] %vm3688, %v3624
        %3690 = vst.msk [vmem:[#allocation3 + $0x8] sm:$0xff] %vm3688, %v3625
        %3691 = vst.msk [vmem:[#allocation3 + $0x10] sm:$0xff] %vm3688, %v3626
        %3692 = vst.msk [vmem:[#allocation3 + $0x18] sm:$0xff] %vm3688, %v3627
        %3693 = vst.msk [vmem:[#allocation3 + $0x20] sm:$0xff] %vm3688, %v3628
        %3694 = vst.msk [vmem:[#allocation3 + $0x28] sm:$0xff] %vm3688, %v3629
        %3695 = vst.msk [vmem:[#allocation3 + $0x30] sm:$0xff] %vm3688, %v3630
        %3696 = vst.msk [vmem:[#allocation3 + $0x38] sm:$0xff] %vm3688, %v3631
        %3697 = vst.msk [vmem:[#allocation3 + $0x40] sm:$0xff] %vm3688, %v3632
        %3698 = vst.msk [vmem:[#allocation3 + $0x48] sm:$0xff] %vm3688, %v3633
        %3699 = vst.msk [vmem:[#allocation3 + $0x50] sm:$0xff] %vm3688, %v3634
        %3700 = vst.msk [vmem:[#allocation3 + $0x58] sm:$0xff] %vm3688, %v3635
        %3701 = vst.msk [vmem:[#allocation3 + $0x60] sm:$0xff] %vm3688, %v3636
        %3702 = vst.msk [vmem:[#allocation3 + $0x68] sm:$0xff] %vm3688, %v3637
        %3703 = vst.msk [vmem:[#allocation3 + $0x70] sm:$0xff] %vm3688, %v3638
        %3704 = vst.msk [vmem:[#allocation3 + $0x78] sm:$0xff] %vm3688, %v3639
        %3705 = vst.msk [vmem:[#allocation3 + $0x80] sm:$0xff] %vm3688, %v3640
        %3706 = vst.msk [vmem:[#allocation3 + $0x88] sm:$0xff] %vm3688, %v3641
        %3707 = vst.msk [vmem:[#allocation3 + $0x90] sm:$0xff] %vm3688, %v3642
        %3708 = vst.msk [vmem:[#allocation3 + $0x98] sm:$0xff] %vm3688, %v3643
        %3709 = vst.msk [vmem:[#allocation3 + $0xa0] sm:$0xff] %vm3688, %v3644
        %3710 = vst.msk [vmem:[#allocation3 + $0xa8] sm:$0xff] %vm3688, %v3645
        %3711 = vst.msk [vmem:[#allocation3 + $0xb0] sm:$0xff] %vm3688, %v3646
        %3712 = vst.msk [vmem:[#allocation3 + $0xb8] sm:$0xff] %vm3688, %v3647
        %3713 = vst.msk [vmem:[#allocation3 + $0xc0] sm:$0xff] %vm3688, %v3648
        %3714 = vst.msk [vmem:[#allocation3 + $0xc8] sm:$0xff] %vm3688, %v3649
        %3715 = vst.msk [vmem:[#allocation3 + $0xd0] sm:$0xff] %vm3688, %v3650
        %3716 = vst.msk [vmem:[#allocation3 + $0xd8] sm:$0xff] %vm3688, %v3651
        %3717 = vst.msk [vmem:[#allocation3 + $0xe0] sm:$0xff] %vm3688, %v3652
        %3718 = vst.msk [vmem:[#allocation3 + $0xe8] sm:$0xff] %vm3688, %v3653
        %3719 = vst.msk [vmem:[#allocation3 + $0xf0] sm:$0xff] %vm3688, %v3654
        %3720 = vst.msk [vmem:[#allocation3 + $0xf8] sm:$0xff] %vm3688, %v3655
        %3721 = vst.msk [vmem:[#allocation3 + $0x100] sm:$0xff] %vm3688, %v3656
        %3722 = vst.msk [vmem:[#allocation3 + $0x108] sm:$0xff] %vm3688, %v3657
        %3723 = vst.msk [vmem:[#allocation3 + $0x110] sm:$0xff] %vm3688, %v3658
        %3724 = vst.msk [vmem:[#allocation3 + $0x118] sm:$0xff] %vm3688, %v3659
        %3725 = vst.msk [vmem:[#allocation3 + $0x120] sm:$0xff] %vm3688, %v3660
        %3726 = vst.msk [vmem:[#allocation3 + $0x128] sm:$0xff] %vm3688, %v3661
        %3727 = vst.msk [vmem:[#allocation3 + $0x130] sm:$0xff] %vm3688, %v3662
        %3728 = vst.msk [vmem:[#allocation3 + $0x138] sm:$0xff] %vm3688, %v3663
        %3729 = vst.msk [vmem:[#allocation3 + $0x140] sm:$0xff] %vm3688, %v3664
        %3730 = vst.msk [vmem:[#allocation3 + $0x148] sm:$0xff] %vm3688, %v3665
        %3731 = vst.msk [vmem:[#allocation3 + $0x150] sm:$0xff] %vm3688, %v3666
        %3732 = vst.msk [vmem:[#allocation3 + $0x158] sm:$0xff] %vm3688, %v3667
        %3733 = vst.msk [vmem:[#allocation3 + $0x160] sm:$0xff] %vm3688, %v3668
        %3734 = vst.msk [vmem:[#allocation3 + $0x168] sm:$0xff] %vm3688, %v3669
        %3735 = vst.msk [vmem:[#allocation3 + $0x170] sm:$0xff] %vm3688, %v3670
        %3736 = vst.msk [vmem:[#allocation3 + $0x178] sm:$0xff] %vm3688, %v3671
        %3737 = vst.msk [vmem:[#allocation3 + $0x180] sm:$0xff] %vm3688, %v3672
        %3738 = vst.msk [vmem:[#allocation3 + $0x188] sm:$0xff] %vm3688, %v3673
        %3739 = vst.msk [vmem:[#allocation3 + $0x190] sm:$0xff] %vm3688, %v3674
        %3740 = vst.msk [vmem:[#allocation3 + $0x198] sm:$0xff] %vm3688, %v3675
        %3741 = vst.msk [vmem:[#allocation3 + $0x1a0] sm:$0xff] %vm3688, %v3676
        %3742 = vst.msk [vmem:[#allocation3 + $0x1a8] sm:$0xff] %vm3688, %v3677
        %3743 = vst.msk [vmem:[#allocation3 + $0x1b0] sm:$0xff] %vm3688, %v3678
        %3744 = vst.msk [vmem:[#allocation3 + $0x1b8] sm:$0xff] %vm3688, %v3679
        %3745 = vst.msk [vmem:[#allocation3 + $0x1c0] sm:$0xff] %vm3688, %v3680
        %3746 = vst.msk [vmem:[#allocation3 + $0x1c8] sm:$0xff] %vm3688, %v3681
        %3747 = vst.msk [vmem:[#allocation3 + $0x1d0] sm:$0xff] %vm3688, %v3682
        %3748 = vst.msk [vmem:[#allocation3 + $0x1d8] sm:$0xff] %vm3688, %v3683
        %3749 = vst.msk [vmem:[#allocation3 + $0x1e0] sm:$0xff] %vm3688, %v3684
        %3750 = vst.msk [vmem:[#allocation3 + $0x1e8] sm:$0xff] %vm3688, %v3685
        %3751 = vst.msk [vmem:[#allocation3 + $0x1f0] sm:$0xff] %vm3688, %v3686
        %3752 = vst.msk [vmem:[#allocation3 + $0x1f8] sm:$0xff] %vm3688, %v3687
        %v3753 = vld [vmem:[#allocation4] sm:$0xff]
        %v3754 = vld [vmem:[#allocation4 + $0x8] sm:$0xff]
        %v3755 = vld [vmem:[#allocation4 + $0x10] sm:$0xff]
        %v3756 = vld [vmem:[#allocation4 + $0x18] sm:$0xff]
        %v3757 = vld [vmem:[#allocation4 + $0x20] sm:$0xff]
        %v3758 = vld [vmem:[#allocation4 + $0x28] sm:$0xff]
        %v3759 = vld [vmem:[#allocation4 + $0x30] sm:$0xff]
        %v3760 = vld [vmem:[#allocation4 + $0x38] sm:$0xff]
        %v3761 = vld [vmem:[#allocation4 + $0x40] sm:$0xff]
        %v3762 = vld [vmem:[#allocation4 + $0x48] sm:$0xff]
        %v3763 = vld [vmem:[#allocation4 + $0x50] sm:$0xff]
        %v3764 = vld [vmem:[#allocation4 + $0x58] sm:$0xff]
        %v3765 = vld [vmem:[#allocation4 + $0x60] sm:$0xff]
        %v3766 = vld [vmem:[#allocation4 + $0x68] sm:$0xff]
        %v3767 = vld [vmem:[#allocation4 + $0x70] sm:$0xff]
        %v3768 = vld [vmem:[#allocation4 + $0x78] sm:$0xff]
        %v3769 = vld [vmem:[#allocation4 + $0x80] sm:$0xff]
        %v3770 = vld [vmem:[#allocation4 + $0x88] sm:$0xff]
        %v3771 = vld [vmem:[#allocation4 + $0x90] sm:$0xff]
        %v3772 = vld [vmem:[#allocation4 + $0x98] sm:$0xff]
        %v3773 = vld [vmem:[#allocation4 + $0xa0] sm:$0xff]
        %v3774 = vld [vmem:[#allocation4 + $0xa8] sm:$0xff]
        %v3775 = vld [vmem:[#allocation4 + $0xb0] sm:$0xff]
        %v3776 = vld [vmem:[#allocation4 + $0xb8] sm:$0xff]
        %v3777 = vld [vmem:[#allocation4 + $0xc0] sm:$0xff]
        %v3778 = vld [vmem:[#allocation4 + $0xc8] sm:$0xff]
        %v3779 = vld [vmem:[#allocation4 + $0xd0] sm:$0xff]
        %v3780 = vld [vmem:[#allocation4 + $0xd8] sm:$0xff]
        %v3781 = vld [vmem:[#allocation4 + $0xe0] sm:$0xff]
        %v3782 = vld [vmem:[#allocation4 + $0xe8] sm:$0xff]
        %v3783 = vld [vmem:[#allocation4 + $0xf0] sm:$0xff]
        %v3784 = vld [vmem:[#allocation4 + $0xf8] sm:$0xff]
        %v3785 = vld [vmem:[#allocation4 + $0x100] sm:$0xff]
        %v3786 = vld [vmem:[#allocation4 + $0x108] sm:$0xff]
        %v3787 = vld [vmem:[#allocation4 + $0x110] sm:$0xff]
        %v3788 = vld [vmem:[#allocation4 + $0x118] sm:$0xff]
        %v3789 = vld [vmem:[#allocation4 + $0x120] sm:$0xff]
        %v3790 = vld [vmem:[#allocation4 + $0x128] sm:$0xff]
        %v3791 = vld [vmem:[#allocation4 + $0x130] sm:$0xff]
        %v3792 = vld [vmem:[#allocation4 + $0x138] sm:$0xff]
        %v3793 = vld [vmem:[#allocation4 + $0x140] sm:$0xff]
        %v3794 = vld [vmem:[#allocation4 + $0x148] sm:$0xff]
        %v3795 = vld [vmem:[#allocation4 + $0x150] sm:$0xff]
        %v3796 = vld [vmem:[#allocation4 + $0x158] sm:$0xff]
        %v3797 = vld [vmem:[#allocation4 + $0x160] sm:$0xff]
        %v3798 = vld [vmem:[#allocation4 + $0x168] sm:$0xff]
        %v3799 = vld [vmem:[#allocation4 + $0x170] sm:$0xff]
        %v3800 = vld [vmem:[#allocation4 + $0x178] sm:$0xff]
        %v3801 = vld [vmem:[#allocation4 + $0x180] sm:$0xff]
        %v3802 = vld [vmem:[#allocation4 + $0x188] sm:$0xff]
        %v3803 = vld [vmem:[#allocation4 + $0x190] sm:$0xff]
        %v3804 = vld [vmem:[#allocation4 + $0x198] sm:$0xff]
        %v3805 = vld [vmem:[#allocation4 + $0x1a0] sm:$0xff]
        %v3806 = vld [vmem:[#allocation4 + $0x1a8] sm:$0xff]
        %v3807 = vld [vmem:[#allocation4 + $0x1b0] sm:$0xff]
        %v3808 = vld [vmem:[#allocation4 + $0x1b8] sm:$0xff]
        %v3809 = vld [vmem:[#allocation4 + $0x1c0] sm:$0xff]
        %v3810 = vld [vmem:[#allocation4 + $0x1c8] sm:$0xff]
        %v3811 = vld [vmem:[#allocation4 + $0x1d0] sm:$0xff]
        %v3812 = vld [vmem:[#allocation4 + $0x1d8] sm:$0xff]
        %v3813 = vld [vmem:[#allocation4 + $0x1e0] sm:$0xff]
        %v3814 = vld [vmem:[#allocation4 + $0x1e8] sm:$0xff]
        %v3815 = vld [vmem:[#allocation4 + $0x1f0] sm:$0xff]
        %v3816 = vld [vmem:[#allocation4 + $0x1f8] sm:$0xff]
        %3818 = vset.pattern.permute.xlu0 0
        %3819 = vperm.xlu0 %3818, %v2729
        %v3820 = vpop.permute.xlu0 %3819
        %3823 = vset.pattern.permute.xlu0 0
        %3824 = vperm.xlu0 %3823, %v2731
        %v3825 = vpop.permute.xlu0 %3824
        %3828 = vset.pattern.permute.xlu0 0
        %3829 = vperm.xlu0 %3828, %v2733
        %v3830 = vpop.permute.xlu0 %3829
        %3833 = vset.pattern.permute.xlu0 0
        %3834 = vperm.xlu0 %3833, %v2735
        %v3835 = vpop.permute.xlu0 %3834
        %3838 = vset.pattern.permute.xlu0 0
        %3839 = vperm.xlu0 %3838, %v2737
        %v3840 = vpop.permute.xlu0 %3839
        %3843 = vset.pattern.permute.xlu0 0
        %3844 = vperm.xlu0 %3843, %v2739
        %v3845 = vpop.permute.xlu0 %3844
        %3848 = vset.pattern.permute.xlu0 0
        %3849 = vperm.xlu0 %3848, %v2741
        %v3850 = vpop.permute.xlu0 %3849
        %3853 = vset.pattern.permute.xlu0 0
        %3854 = vperm.xlu0 %3853, %v2743
        %v3855 = vpop.permute.xlu0 %3854
        %3858 = vset.pattern.permute.xlu0 0
        %3859 = vperm.xlu0 %3858, %v2745
        %v3860 = vpop.permute.xlu0 %3859
        %3863 = vset.pattern.permute.xlu0 0
        %3864 = vperm.xlu0 %3863, %v2747
        %v3865 = vpop.permute.xlu0 %3864
        %3868 = vset.pattern.permute.xlu0 0
        %3869 = vperm.xlu0 %3868, %v2749
        %v3870 = vpop.permute.xlu0 %3869
        %3873 = vset.pattern.permute.xlu0 0
        %3874 = vperm.xlu0 %3873, %v2751
        %v3875 = vpop.permute.xlu0 %3874
        %3878 = vset.pattern.permute.xlu0 0
        %3879 = vperm.xlu0 %3878, %v2753
        %v3880 = vpop.permute.xlu0 %3879
        %3883 = vset.pattern.permute.xlu0 0
        %3884 = vperm.xlu0 %3883, %v2755
        %v3885 = vpop.permute.xlu0 %3884
        %3888 = vset.pattern.permute.xlu0 0
        %3889 = vperm.xlu0 %3888, %v2757
        %v3890 = vpop.permute.xlu0 %3889
        %3893 = vset.pattern.permute.xlu0 0
        %3894 = vperm.xlu0 %3893, %v2759
        %v3895 = vpop.permute.xlu0 %3894
        %3898 = vset.pattern.permute.xlu0 0
        %3899 = vperm.xlu0 %3898, %v2761
        %v3900 = vpop.permute.xlu0 %3899
        %3903 = vset.pattern.permute.xlu0 0
        %3904 = vperm.xlu0 %3903, %v2763
        %v3905 = vpop.permute.xlu0 %3904
        %3908 = vset.pattern.permute.xlu0 0
        %3909 = vperm.xlu0 %3908, %v2765
        %v3910 = vpop.permute.xlu0 %3909
        %3913 = vset.pattern.permute.xlu0 0
        %3914 = vperm.xlu0 %3913, %v2767
        %v3915 = vpop.permute.xlu0 %3914
        %3918 = vset.pattern.permute.xlu0 0
        %3919 = vperm.xlu0 %3918, %v2769
        %v3920 = vpop.permute.xlu0 %3919
        %3923 = vset.pattern.permute.xlu0 0
        %3924 = vperm.xlu0 %3923, %v2771
        %v3925 = vpop.permute.xlu0 %3924
        %3928 = vset.pattern.permute.xlu0 0
        %3929 = vperm.xlu0 %3928, %v2773
        %v3930 = vpop.permute.xlu0 %3929
        %3933 = vset.pattern.permute.xlu0 0
        %3934 = vperm.xlu0 %3933, %v2775
        %v3935 = vpop.permute.xlu0 %3934
        %3938 = vset.pattern.permute.xlu0 0
        %3939 = vperm.xlu0 %3938, %v2777
        %v3940 = vpop.permute.xlu0 %3939
        %3943 = vset.pattern.permute.xlu0 0
        %3944 = vperm.xlu0 %3943, %v2779
        %v3945 = vpop.permute.xlu0 %3944
        %3948 = vset.pattern.permute.xlu0 0
        %3949 = vperm.xlu0 %3948, %v2781
        %v3950 = vpop.permute.xlu0 %3949
        %3953 = vset.pattern.permute.xlu0 0
        %3954 = vperm.xlu0 %3953, %v2783
        %v3955 = vpop.permute.xlu0 %3954
        %3958 = vset.pattern.permute.xlu0 0
        %3959 = vperm.xlu0 %3958, %v2785
        %v3960 = vpop.permute.xlu0 %3959
        %3963 = vset.pattern.permute.xlu0 0
        %3964 = vperm.xlu0 %3963, %v2787
        %v3965 = vpop.permute.xlu0 %3964
        %3968 = vset.pattern.permute.xlu0 0
        %3969 = vperm.xlu0 %3968, %v2789
        %v3970 = vpop.permute.xlu0 %3969
        %3973 = vset.pattern.permute.xlu0 0
        %3974 = vperm.xlu0 %3973, %v2791
        %v3975 = vpop.permute.xlu0 %3974
        %3978 = vset.pattern.permute.xlu0 0
        %3979 = vperm.xlu0 %3978, %v2793
        %v3980 = vpop.permute.xlu0 %3979
        %3983 = vset.pattern.permute.xlu0 0
        %3984 = vperm.xlu0 %3983, %v2795
        %v3985 = vpop.permute.xlu0 %3984
        %3988 = vset.pattern.permute.xlu0 0
        %3989 = vperm.xlu0 %3988, %v2797
        %v3990 = vpop.permute.xlu0 %3989
        %3993 = vset.pattern.permute.xlu0 0
        %3994 = vperm.xlu0 %3993, %v2799
        %v3995 = vpop.permute.xlu0 %3994
        %3998 = vset.pattern.permute.xlu0 0
        %3999 = vperm.xlu0 %3998, %v2801
        %v4000 = vpop.permute.xlu0 %3999
        %4003 = vset.pattern.permute.xlu0 0
        %4004 = vperm.xlu0 %4003, %v2803
        %v4005 = vpop.permute.xlu0 %4004
        %4008 = vset.pattern.permute.xlu0 0
        %4009 = vperm.xlu0 %4008, %v2805
        %v4010 = vpop.permute.xlu0 %4009
        %4013 = vset.pattern.permute.xlu0 0
        %4014 = vperm.xlu0 %4013, %v2807
        %v4015 = vpop.permute.xlu0 %4014
        %4018 = vset.pattern.permute.xlu0 0
        %4019 = vperm.xlu0 %4018, %v2809
        %v4020 = vpop.permute.xlu0 %4019
        %4023 = vset.pattern.permute.xlu0 0
        %4024 = vperm.xlu0 %4023, %v2811
        %v4025 = vpop.permute.xlu0 %4024
        %4028 = vset.pattern.permute.xlu0 0
        %4029 = vperm.xlu0 %4028, %v2813
        %v4030 = vpop.permute.xlu0 %4029
        %4033 = vset.pattern.permute.xlu0 0
        %4034 = vperm.xlu0 %4033, %v2815
        %v4035 = vpop.permute.xlu0 %4034
        %4038 = vset.pattern.permute.xlu0 0
        %4039 = vperm.xlu0 %4038, %v2817
        %v4040 = vpop.permute.xlu0 %4039
        %4043 = vset.pattern.permute.xlu0 0
        %4044 = vperm.xlu0 %4043, %v2819
        %v4045 = vpop.permute.xlu0 %4044
        %4048 = vset.pattern.permute.xlu0 0
        %4049 = vperm.xlu0 %4048, %v2821
        %v4050 = vpop.permute.xlu0 %4049
        %4053 = vset.pattern.permute.xlu0 0
        %4054 = vperm.xlu0 %4053, %v2823
        %v4055 = vpop.permute.xlu0 %4054
        %4058 = vset.pattern.permute.xlu0 0
        %4059 = vperm.xlu0 %4058, %v2825
        %v4060 = vpop.permute.xlu0 %4059
        %4063 = vset.pattern.permute.xlu0 0
        %4064 = vperm.xlu0 %4063, %v2827
        %v4065 = vpop.permute.xlu0 %4064
        %4068 = vset.pattern.permute.xlu0 0
        %4069 = vperm.xlu0 %4068, %v2829
        %v4070 = vpop.permute.xlu0 %4069
        %4073 = vset.pattern.permute.xlu0 0
        %4074 = vperm.xlu0 %4073, %v2831
        %v4075 = vpop.permute.xlu0 %4074
        %4078 = vset.pattern.permute.xlu0 0
        %4079 = vperm.xlu0 %4078, %v2833
        %v4080 = vpop.permute.xlu0 %4079
        %4083 = vset.pattern.permute.xlu0 0
        %4084 = vperm.xlu0 %4083, %v2835
        %v4085 = vpop.permute.xlu0 %4084
        %4088 = vset.pattern.permute.xlu0 0
        %4089 = vperm.xlu0 %4088, %v2837
        %v4090 = vpop.permute.xlu0 %4089
        %4093 = vset.pattern.permute.xlu0 0
        %4094 = vperm.xlu0 %4093, %v2839
        %v4095 = vpop.permute.xlu0 %4094
        %4098 = vset.pattern.permute.xlu0 0
        %4099 = vperm.xlu0 %4098, %v2841
        %v4100 = vpop.permute.xlu0 %4099
        %4103 = vset.pattern.permute.xlu0 0
        %4104 = vperm.xlu0 %4103, %v2843
        %v4105 = vpop.permute.xlu0 %4104
        %4108 = vset.pattern.permute.xlu0 0
        %4109 = vperm.xlu0 %4108, %v2845
        %v4110 = vpop.permute.xlu0 %4109
        %4113 = vset.pattern.permute.xlu0 0
        %4114 = vperm.xlu0 %4113, %v2847
        %v4115 = vpop.permute.xlu0 %4114
        %4118 = vset.pattern.permute.xlu0 0
        %4119 = vperm.xlu0 %4118, %v2849
        %v4120 = vpop.permute.xlu0 %4119
        %4123 = vset.pattern.permute.xlu0 0
        %4124 = vperm.xlu0 %4123, %v2851
        %v4125 = vpop.permute.xlu0 %4124
        %4128 = vset.pattern.permute.xlu0 0
        %4129 = vperm.xlu0 %4128, %v2853
        %v4130 = vpop.permute.xlu0 %4129
        %4133 = vset.pattern.permute.xlu0 0
        %4134 = vperm.xlu0 %4133, %v2855
        %v4135 = vpop.permute.xlu0 %4134
        %v4137 = vmul.f32 %v3820, %v3753
        %v4138 = vmul.f32 %v3825, %v3754
        %v4139 = vmul.f32 %v3830, %v3755
        %v4140 = vmul.f32 %v3835, %v3756
        %v4141 = vmul.f32 %v3840, %v3757
        %v4142 = vmul.f32 %v3845, %v3758
        %v4143 = vmul.f32 %v3850, %v3759
        %v4144 = vmul.f32 %v3855, %v3760
        %v4145 = vmul.f32 %v3860, %v3761
        %v4146 = vmul.f32 %v3865, %v3762
        %v4147 = vmul.f32 %v3870, %v3763
        %v4148 = vmul.f32 %v3875, %v3764
        %v4149 = vmul.f32 %v3880, %v3765
        %v4150 = vmul.f32 %v3885, %v3766
        %v4151 = vmul.f32 %v3890, %v3767
        %v4152 = vmul.f32 %v3895, %v3768
        %v4153 = vmul.f32 %v3900, %v3769
        %v4154 = vmul.f32 %v3905, %v3770
        %v4155 = vmul.f32 %v3910, %v3771
        %v4156 = vmul.f32 %v3915, %v3772
        %v4157 = vmul.f32 %v3920, %v3773
        %v4158 = vmul.f32 %v3925, %v3774
        %v4159 = vmul.f32 %v3930, %v3775
        %v4160 = vmul.f32 %v3935, %v3776
        %v4161 = vmul.f32 %v3940, %v3777
        %v4162 = vmul.f32 %v3945, %v3778
        %v4163 = vmul.f32 %v3950, %v3779
        %v4164 = vmul.f32 %v3955, %v3780
        %v4165 = vmul.f32 %v3960, %v3781
        %v4166 = vmul.f32 %v3965, %v3782
        %v4167 = vmul.f32 %v3970, %v3783
        %v4168 = vmul.f32 %v3975, %v3784
        %v4169 = vmul.f32 %v3980, %v3785
        %v4170 = vmul.f32 %v3985, %v3786
        %v4171 = vmul.f32 %v3990, %v3787
        %v4172 = vmul.f32 %v3995, %v3788
        %v4173 = vmul.f32 %v4000, %v3789
        %v4174 = vmul.f32 %v4005, %v3790
        %v4175 = vmul.f32 %v4010, %v3791
        %v4176 = vmul.f32 %v4015, %v3792
        %v4177 = vmul.f32 %v4020, %v3793
        %v4178 = vmul.f32 %v4025, %v3794
        %v4179 = vmul.f32 %v4030, %v3795
        %v4180 = vmul.f32 %v4035, %v3796
        %v4181 = vmul.f32 %v4040, %v3797
        %v4182 = vmul.f32 %v4045, %v3798
        %v4183 = vmul.f32 %v4050, %v3799
        %v4184 = vmul.f32 %v4055, %v3800
        %v4185 = vmul.f32 %v4060, %v3801
        %v4186 = vmul.f32 %v4065, %v3802
        %v4187 = vmul.f32 %v4070, %v3803
        %v4188 = vmul.f32 %v4075, %v3804
        %v4189 = vmul.f32 %v4080, %v3805
        %v4190 = vmul.f32 %v4085, %v3806
        %v4191 = vmul.f32 %v4090, %v3807
        %v4192 = vmul.f32 %v4095, %v3808
        %v4193 = vmul.f32 %v4100, %v3809
        %v4194 = vmul.f32 %v4105, %v3810
        %v4195 = vmul.f32 %v4110, %v3811
        %v4196 = vmul.f32 %v4115, %v3812
        %v4197 = vmul.f32 %v4120, %v3813
        %v4198 = vmul.f32 %v4125, %v3814
        %v4199 = vmul.f32 %v4130, %v3815
        %v4200 = vmul.f32 %v4135, %v3816
        %v4201 = vld [vmem:[%s1071] sm:$0xff]
        %v4202 = vld [vmem:[%s1071 + $0x8] sm:$0xff]
        %v4203 = vld [vmem:[%s1071 + $0x10] sm:$0xff]
        %v4204 = vld [vmem:[%s1071 + $0x18] sm:$0xff]
        %v4205 = vld [vmem:[%s1071 + $0x20] sm:$0xff]
        %v4206 = vld [vmem:[%s1071 + $0x28] sm:$0xff]
        %v4207 = vld [vmem:[%s1071 + $0x30] sm:$0xff]
        %v4208 = vld [vmem:[%s1071 + $0x38] sm:$0xff]
        %v4209 = vld [vmem:[%s1071 + $0x40] sm:$0xff]
        %v4210 = vld [vmem:[%s1071 + $0x48] sm:$0xff]
        %v4211 = vld [vmem:[%s1071 + $0x50] sm:$0xff]
        %v4212 = vld [vmem:[%s1071 + $0x58] sm:$0xff]
        %v4213 = vld [vmem:[%s1071 + $0x60] sm:$0xff]
        %v4214 = vld [vmem:[%s1071 + $0x68] sm:$0xff]
        %v4215 = vld [vmem:[%s1071 + $0x70] sm:$0xff]
        %v4216 = vld [vmem:[%s1071 + $0x78] sm:$0xff]
        %v4217 = vld [vmem:[%s1071 + $0x80] sm:$0xff]
        %v4218 = vld [vmem:[%s1071 + $0x88] sm:$0xff]
        %v4219 = vld [vmem:[%s1071 + $0x90] sm:$0xff]
        %v4220 = vld [vmem:[%s1071 + $0x98] sm:$0xff]
        %v4221 = vld [vmem:[%s1071 + $0xa0] sm:$0xff]
        %v4222 = vld [vmem:[%s1071 + $0xa8] sm:$0xff]
        %v4223 = vld [vmem:[%s1071 + $0xb0] sm:$0xff]
        %v4224 = vld [vmem:[%s1071 + $0xb8] sm:$0xff]
        %v4225 = vld [vmem:[%s1071 + $0xc0] sm:$0xff]
        %v4226 = vld [vmem:[%s1071 + $0xc8] sm:$0xff]
        %v4227 = vld [vmem:[%s1071 + $0xd0] sm:$0xff]
        %v4228 = vld [vmem:[%s1071 + $0xd8] sm:$0xff]
        %v4229 = vld [vmem:[%s1071 + $0xe0] sm:$0xff]
        %v4230 = vld [vmem:[%s1071 + $0xe8] sm:$0xff]
        %v4231 = vld [vmem:[%s1071 + $0xf0] sm:$0xff]
        %v4232 = vld [vmem:[%s1071 + $0xf8] sm:$0xff]
        %v4233 = vld [vmem:[%s1071 + $0x100] sm:$0xff]
        %v4234 = vld [vmem:[%s1071 + $0x108] sm:$0xff]
        %v4235 = vld [vmem:[%s1071 + $0x110] sm:$0xff]
        %v4236 = vld [vmem:[%s1071 + $0x118] sm:$0xff]
        %v4237 = vld [vmem:[%s1071 + $0x120] sm:$0xff]
        %v4238 = vld [vmem:[%s1071 + $0x128] sm:$0xff]
        %v4239 = vld [vmem:[%s1071 + $0x130] sm:$0xff]
        %v4240 = vld [vmem:[%s1071 + $0x138] sm:$0xff]
        %v4241 = vld [vmem:[%s1071 + $0x140] sm:$0xff]
        %v4242 = vld [vmem:[%s1071 + $0x148] sm:$0xff]
        %v4243 = vld [vmem:[%s1071 + $0x150] sm:$0xff]
        %v4244 = vld [vmem:[%s1071 + $0x158] sm:$0xff]
        %v4245 = vld [vmem:[%s1071 + $0x160] sm:$0xff]
        %v4246 = vld [vmem:[%s1071 + $0x168] sm:$0xff]
        %v4247 = vld [vmem:[%s1071 + $0x170] sm:$0xff]
        %v4248 = vld [vmem:[%s1071 + $0x178] sm:$0xff]
        %v4249 = vld [vmem:[%s1071 + $0x180] sm:$0xff]
        %v4250 = vld [vmem:[%s1071 + $0x188] sm:$0xff]
        %v4251 = vld [vmem:[%s1071 + $0x190] sm:$0xff]
        %v4252 = vld [vmem:[%s1071 + $0x198] sm:$0xff]
        %v4253 = vld [vmem:[%s1071 + $0x1a0] sm:$0xff]
        %v4254 = vld [vmem:[%s1071 + $0x1a8] sm:$0xff]
        %v4255 = vld [vmem:[%s1071 + $0x1b0] sm:$0xff]
        %v4256 = vld [vmem:[%s1071 + $0x1b8] sm:$0xff]
        %v4257 = vld [vmem:[%s1071 + $0x1c0] sm:$0xff]
        %v4258 = vld [vmem:[%s1071 + $0x1c8] sm:$0xff]
        %v4259 = vld [vmem:[%s1071 + $0x1d0] sm:$0xff]
        %v4260 = vld [vmem:[%s1071 + $0x1d8] sm:$0xff]
        %v4261 = vld [vmem:[%s1071 + $0x1e0] sm:$0xff]
        %v4262 = vld [vmem:[%s1071 + $0x1e8] sm:$0xff]
        %v4263 = vld [vmem:[%s1071 + $0x1f0] sm:$0xff]
        %v4264 = vld [vmem:[%s1071 + $0x1f8] sm:$0xff]
        %4265 = vmatprep.subr.mxu0 0.0
        %4266 = vmatpush1.msra.mxu0 %v4201
        %4267 = vmatprep.subr.mxu0 0.0
        %4268 = vmatpush1.msra.mxu0 %v4202
        %4269 = vmatprep.subr.mxu0 0.0
        %4270 = vmatpush1.msra.mxu0 %v4203
        %4271 = vmatprep.subr.mxu0 0.0
        %4272 = vmatpush1.msra.mxu0 %v4204
        %4273 = vmatprep.subr.mxu0 0.0
        %4274 = vmatpush1.msra.mxu0 %v4205
        %4275 = vmatprep.subr.mxu0 0.0
        %4276 = vmatpush1.msra.mxu0 %v4206
        %4277 = vmatprep.subr.mxu0 0.0
        %4278 = vmatpush1.msra.mxu0 %v4207
        %4279 = vmatprep.subr.mxu0 0.0
        %4280 = vmatpush1.msra.mxu0 %v4208
        %4281 = vmatprep.subr.mxu0 0.0
        %4282 = vmatpush1.msra.mxu0 %v4209
        %4283 = vmatprep.subr.mxu0 0.0
        %4284 = vmatpush1.msra.mxu0 %v4210
        %4285 = vmatprep.subr.mxu0 0.0
        %4286 = vmatpush1.msra.mxu0 %v4211
        %4287 = vmatprep.subr.mxu0 0.0
        %4288 = vmatpush1.msra.mxu0 %v4212
        %4289 = vmatprep.subr.mxu0 0.0
        %4290 = vmatpush1.msra.mxu0 %v4213
        %4291 = vmatprep.subr.mxu0 0.0
        %4292 = vmatpush1.msra.mxu0 %v4214
        %4293 = vmatprep.subr.mxu0 0.0
        %4294 = vmatpush1.msra.mxu0 %v4215
        %4295 = vmatprep.subr.mxu0 0.0
        %4296 = vmatpush1.msra.mxu0 %v4216
        %4297 = vmatprep.subr.mxu0 0.0
        %4298 = vmatpush1.msra.mxu0 0.0
        %4299 = vmatprep.subr.mxu0 0.0
        %4300 = vmatpush1.msra.mxu0 0.0
        %4301 = vmatprep.subr.mxu0 0.0
        %4302 = vmatpush1.msra.mxu0 0.0
        %4303 = vmatprep.subr.mxu0 0.0
        %4304 = vmatpush1.msra.mxu0 0.0
        %4305 = vmatprep.subr.mxu0 0.0
        %4306 = vmatpush1.msra.mxu0 0.0
        %4307 = vmatprep.subr.mxu0 0.0
        %4308 = vmatpush1.msra.mxu0 0.0
        %4309 = vmatprep.subr.mxu0 0.0
        %4310 = vmatpush1.msra.mxu0 0.0
        %4311 = vmatprep.subr.mxu0 0.0
        %4312 = vmatpush1.msra.mxu0 0.0
        %4313 = vmatprep.subr.mxu0 0.0
        %4314 = vmatpush1.msra.mxu0 0.0
        %4315 = vmatprep.subr.mxu0 0.0
        %4316 = vmatpush1.msra.mxu0 0.0
        %4317 = vmatprep.subr.mxu0 0.0
        %4318 = vmatpush1.msra.mxu0 0.0
        %4319 = vmatprep.subr.mxu0 0.0
        %4320 = vmatpush1.msra.mxu0 0.0
        %4321 = vmatprep.subr.mxu0 0.0
        %4322 = vmatpush1.msra.mxu0 0.0
        %4323 = vmatprep.subr.mxu0 0.0
        %4324 = vmatpush1.msra.mxu0 0.0
        %4325 = vmatprep.subr.mxu0 0.0
        %4326 = vmatpush1.msra.mxu0 0.0
        %4327 = vmatprep.subr.mxu0 0.0
        %4328 = vmatpush1.msra.mxu0 0.0
        %4329 = vmatprep.mubr.f32.mxu0 0.0
        %4330 = vmatmul.mubr.f32.gmra.mrb[0].mxu0 %v3241
        %v4331 = vpop.f32.mrb[0].mxu0
        %v4332 = vadd.f32 0.0, %v4331
        %v4333 = vpop.f32.mrb[0].mxu0
        %4334 = vmatprep.mubr.f32.mxu0 0.0
        %4335 = vmatmul.mubr.f32.gmra.mrb[0].mxu0 %v3243
        %v4336 = vpop.f32.mrb[0].mxu0
        %v4337 = vadd.f32 0.0, %v4336
        %v4338 = vpop.f32.mrb[0].mxu0
        %4339 = vmatprep.mubr.f32.mxu0 0.0
        %4340 = vmatmul.mubr.f32.gmra.mrb[0].mxu0 %v3245
        %v4341 = vpop.f32.mrb[0].mxu0
        %v4342 = vadd.f32 0.0, %v4341
        %v4343 = vpop.f32.mrb[0].mxu0
        %4344 = vmatprep.mubr.f32.mxu0 0.0
        %4345 = vmatmul.mubr.f32.gmra.mrb[0].mxu0 %v3247
        %v4346 = vpop.f32.mrb[0].mxu0
        %v4347 = vadd.f32 0.0, %v4346
        %v4348 = vpop.f32.mrb[0].mxu0
        %4349 = vmatprep.mubr.f32.mxu0 0.0
        %4350 = vmatmul.mubr.f32.gmra.mrb[0].mxu0 %v3249
        %v4351 = vpop.f32.mrb[0].mxu0
        %v4352 = vadd.f32 0.0, %v4351
        %v4353 = vpop.f32.mrb[0].mxu0
        %4354 = vmatprep.mubr.f32.mxu0 0.0
        %4355 = vmatmul.mubr.f32.gmra.mrb[0].mxu0 %v3251
        %v4356 = vpop.f32.mrb[0].mxu0
        %v4357 = vadd.f32 0.0, %v4356
        %v4358 = vpop.f32.mrb[0].mxu0
        %4359 = vmatprep.mubr.f32.mxu0 0.0
        %4360 = vmatmul.mubr.f32.gmra.mrb[0].mxu0 %v3253
        %v4361 = vpop.f32.mrb[0].mxu0
        %v4362 = vadd.f32 0.0, %v4361
        %v4363 = vpop.f32.mrb[0].mxu0
        %4364 = vmatprep.mubr.f32.mxu0 0.0
        %4365 = vmatmul.mubr.f32.gmra.mrb[0].mxu0 %v3255
        %v4366 = vpop.f32.mrb[0].mxu0
        %v4367 = vadd.f32 0.0, %v4366
        %v4368 = vpop.f32.mrb[0].mxu0
        %4369 = vmatprep.mubr.f32.mxu0 0.0
        %4370 = vmatmul.mubr.f32.gmra.mrb[0].mxu0 %v3257
        %v4371 = vpop.f32.mrb[0].mxu0
        %v4372 = vadd.f32 0.0, %v4371
        %v4373 = vpop.f32.mrb[0].mxu0
        %4374 = vmatprep.mubr.f32.mxu0 0.0
        %4375 = vmatmul.mubr.f32.gmra.mrb[0].mxu0 %v3259
        %v4376 = vpop.f32.mrb[0].mxu0
        %v4377 = vadd.f32 0.0, %v4376
        %v4378 = vpop.f32.mrb[0].mxu0
        %4379 = vmatprep.mubr.f32.mxu0 0.0
        %4380 = vmatmul.mubr.f32.gmra.mrb[0].mxu0 %v3261
        %v4381 = vpop.f32.mrb[0].mxu0
        %v4382 = vadd.f32 0.0, %v4381
        %v4383 = vpop.f32.mrb[0].mxu0
        %4384 = vmatprep.mubr.f32.mxu0 0.0
        %4385 = vmatmul.mubr.f32.gmra.mrb[0].mxu0 %v3263
        %v4386 = vpop.f32.mrb[0].mxu0
        %v4387 = vadd.f32 0.0, %v4386
        %v4388 = vpop.f32.mrb[0].mxu0
        %4389 = vmatprep.mubr.f32.mxu0 0.0
        %4390 = vmatmul.mubr.f32.gmra.mrb[0].mxu0 %v3265
        %v4391 = vpop.f32.mrb[0].mxu0
        %v4392 = vadd.f32 0.0, %v4391
        %v4393 = vpop.f32.mrb[0].mxu0
        %4394 = vmatprep.mubr.f32.mxu0 0.0
        %4395 = vmatmul.mubr.f32.gmra.mrb[0].mxu0 %v3267
        %v4396 = vpop.f32.mrb[0].mxu0
        %v4397 = vadd.f32 0.0, %v4396
        %v4398 = vpop.f32.mrb[0].mxu0
        %4399 = vmatprep.mubr.f32.mxu0 0.0
        %4400 = vmatmul.mubr.f32.gmra.mrb[0].mxu0 %v3269
        %v4401 = vpop.f32.mrb[0].mxu0
        %v4402 = vadd.f32 0.0, %v4401
        %v4403 = vpop.f32.mrb[0].mxu0
        %4404 = vmatprep.mubr.f32.mxu0 0.0
        %4405 = vmatmul.mubr.f32.gmra.mrb[0].mxu0 %v3271
        %v4406 = vpop.f32.mrb[0].mxu0
        %v4407 = vadd.f32 0.0, %v4406
        %v4408 = vpop.f32.mrb[0].mxu0
        %4409 = vdwg.mxu0
        %4410 = vmatprep.subr.mxu0 0.0
        %4411 = vmatpush1.msra.mxu0 %v4217
        %4412 = vmatprep.subr.mxu0 0.0
        %4413 = vmatpush1.msra.mxu0 %v4218
        %4414 = vmatprep.subr.mxu0 0.0
        %4415 = vmatpush1.msra.mxu0 %v4219
        %4416 = vmatprep.subr.mxu0 0.0
        %4417 = vmatpush1.msra.mxu0 %v4220
        %4418 = vmatprep.subr.mxu0 0.0
        %4419 = vmatpush1.msra.mxu0 %v4221
        %4420 = vmatprep.subr.mxu0 0.0
        %4421 = vmatpush1.msra.mxu0 %v4222
        %4422 = vmatprep.subr.mxu0 0.0
        %4423 = vmatpush1.msra.mxu0 %v4223
        %4424 = vmatprep.subr.mxu0 0.0
        %4425 = vmatpush1.msra.mxu0 %v4224
        %4426 = vmatprep.subr.mxu0 0.0
        %4427 = vmatpush1.msra.mxu0 %v4225
        %4428 = vmatprep.subr.mxu0 0.0
        %4429 = vmatpush1.msra.mxu0 %v4226
        %4430 = vmatprep.subr.mxu0 0.0
        %4431 = vmatpush1.msra.mxu0 %v4227
        %4432 = vmatprep.subr.mxu0 0.0
        %4433 = vmatpush1.msra.mxu0 %v4228
        %4434 = vmatprep.subr.mxu0 0.0
        %4435 = vmatpush1.msra.mxu0 %v4229
        %4436 = vmatprep.subr.mxu0 0.0
        %4437 = vmatpush1.msra.mxu0 %v4230
        %4438 = vmatprep.subr.mxu0 0.0
        %4439 = vmatpush1.msra.mxu0 %v4231
        %4440 = vmatprep.subr.mxu0 0.0
        %4441 = vmatpush1.msra.mxu0 %v4232
        %4442 = vmatprep.subr.mxu0 0.0
        %4443 = vmatpush1.msra.mxu0 0.0
        %4444 = vmatprep.subr.mxu0 0.0
        %4445 = vmatpush1.msra.mxu0 0.0
        %4446 = vmatprep.subr.mxu0 0.0
        %4447 = vmatpush1.msra.mxu0 0.0
        %4448 = vmatprep.subr.mxu0 0.0
        %4449 = vmatpush1.msra.mxu0 0.0
        %4450 = vmatprep.subr.mxu0 0.0
        %4451 = vmatpush1.msra.mxu0 0.0
        %4452 = vmatprep.subr.mxu0 0.0
        %4453 = vmatpush1.msra.mxu0 0.0
        %4454 = vmatprep.subr.mxu0 0.0
        %4455 = vmatpush1.msra.mxu0 0.0
        %4456 = vmatprep.subr.mxu0 0.0
        %4457 = vmatpush1.msra.mxu0 0.0
        %4458 = vmatprep.subr.mxu0 0.0
        %4459 = vmatpush1.msra.mxu0 0.0
        %4460 = vmatprep.subr.mxu0 0.0
        %4461 = vmatpush1.msra.mxu0 0.0
        %4462 = vmatprep.subr.mxu0 0.0
        %4463 = vmatpush1.msra.mxu0 0.0
        %4464 = vmatprep.subr.mxu0 0.0
        %4465 = vmatpush1.msra.mxu0 0.0
        %4466 = vmatprep.subr.mxu0 0.0
        %4467 = vmatpush1.msra.mxu0 0.0
        %4468 = vmatprep.subr.mxu0 0.0
        %4469 = vmatpush1.msra.mxu0 0.0
        %4470 = vmatprep.subr.mxu0 0.0
        %4471 = vmatpush1.msra.mxu0 0.0
        %4472 = vmatprep.subr.mxu0 0.0
        %4473 = vmatpush1.msra.mxu0 0.0
        %4474 = vmatprep.mubr.f32.mxu0 0.0
        %4475 = vmatmul.mubr.f32.gmra.mrb[0].mxu0 %v3273
        %v4476 = vpop.f32.mrb[0].mxu0
        %v4477 = vadd.f32 0.0, %v4476
        %v4478 = vpop.f32.mrb[0].mxu0
        %4479 = vmatprep.mubr.f32.mxu0 0.0
        %4480 = vmatmul.mubr.f32.gmra.mrb[0].mxu0 %v3275
        %v4481 = vpop.f32.mrb[0].mxu0
        %v4482 = vadd.f32 0.0, %v4481
        %v4483 = vpop.f32.mrb[0].mxu0
        %4484 = vmatprep.mubr.f32.mxu0 0.0
        %4485 = vmatmul.mubr.f32.gmra.mrb[0].mxu0 %v3277
        %v4486 = vpop.f32.mrb[0].mxu0
        %v4487 = vadd.f32 0.0, %v4486
        %v4488 = vpop.f32.mrb[0].mxu0
        %4489 = vmatprep.mubr.f32.mxu0 0.0
        %4490 = vmatmul.mubr.f32.gmra.mrb[0].mxu0 %v3279
        %v4491 = vpop.f32.mrb[0].mxu0
        %v4492 = vadd.f32 0.0, %v4491
        %v4493 = vpop.f32.mrb[0].mxu0
        %4494 = vmatprep.mubr.f32.mxu0 0.0
        %4495 = vmatmul.mubr.f32.gmra.mrb[0].mxu0 %v3281
        %v4496 = vpop.f32.mrb[0].mxu0
        %v4497 = vadd.f32 0.0, %v4496
        %v4498 = vpop.f32.mrb[0].mxu0
        %4499 = vmatprep.mubr.f32.mxu0 0.0
        %4500 = vmatmul.mubr.f32.gmra.mrb[0].mxu0 %v3283
        %v4501 = vpop.f32.mrb[0].mxu0
        %v4502 = vadd.f32 0.0, %v4501
        %v4503 = vpop.f32.mrb[0].mxu0
        %4504 = vmatprep.mubr.f32.mxu0 0.0
        %4505 = vmatmul.mubr.f32.gmra.mrb[0].mxu0 %v3285
        %v4506 = vpop.f32.mrb[0].mxu0
        %v4507 = vadd.f32 0.0, %v4506
        %v4508 = vpop.f32.mrb[0].mxu0
        %4509 = vmatprep.mubr.f32.mxu0 0.0
        %4510 = vmatmul.mubr.f32.gmra.mrb[0].mxu0 %v3287
        %v4511 = vpop.f32.mrb[0].mxu0
        %v4512 = vadd.f32 0.0, %v4511
        %v4513 = vpop.f32.mrb[0].mxu0
        %4514 = vmatprep.mubr.f32.mxu0 0.0
        %4515 = vmatmul.mubr.f32.gmra.mrb[0].mxu0 %v3289
        %v4516 = vpop.f32.mrb[0].mxu0
        %v4517 = vadd.f32 0.0, %v4516
        %v4518 = vpop.f32.mrb[0].mxu0
        %4519 = vmatprep.mubr.f32.mxu0 0.0
        %4520 = vmatmul.mubr.f32.gmra.mrb[0].mxu0 %v3291
        %v4521 = vpop.f32.mrb[0].mxu0
        %v4522 = vadd.f32 0.0, %v4521
        %v4523 = vpop.f32.mrb[0].mxu0
        %4524 = vmatprep.mubr.f32.mxu0 0.0
        %4525 = vmatmul.mubr.f32.gmra.mrb[0].mxu0 %v3293
        %v4526 = vpop.f32.mrb[0].mxu0
        %v4527 = vadd.f32 0.0, %v4526
        %v4528 = vpop.f32.mrb[0].mxu0
        %4529 = vmatprep.mubr.f32.mxu0 0.0
        %4530 = vmatmul.mubr.f32.gmra.mrb[0].mxu0 %v3295
        %v4531 = vpop.f32.mrb[0].mxu0
        %v4532 = vadd.f32 0.0, %v4531
        %v4533 = vpop.f32.mrb[0].mxu0
        %4534 = vmatprep.mubr.f32.mxu0 0.0
        %4535 = vmatmul.mubr.f32.gmra.mrb[0].mxu0 %v3297
        %v4536 = vpop.f32.mrb[0].mxu0
        %v4537 = vadd.f32 0.0, %v4536
        %v4538 = vpop.f32.mrb[0].mxu0
        %4539 = vmatprep.mubr.f32.mxu0 0.0
        %4540 = vmatmul.mubr.f32.gmra.mrb[0].mxu0 %v3299
        %v4541 = vpop.f32.mrb[0].mxu0
        %v4542 = vadd.f32 0.0, %v4541
        %v4543 = vpop.f32.mrb[0].mxu0
        %4544 = vmatprep.mubr.f32.mxu0 0.0
        %4545 = vmatmul.mubr.f32.gmra.mrb[0].mxu0 %v3301
        %v4546 = vpop.f32.mrb[0].mxu0
        %v4547 = vadd.f32 0.0, %v4546
        %v4548 = vpop.f32.mrb[0].mxu0
        %4549 = vmatprep.mubr.f32.mxu0 0.0
        %4550 = vmatmul.mubr.f32.gmra.mrb[0].mxu0 %v3303
        %v4551 = vpop.f32.mrb[0].mxu0
        %v4552 = vadd.f32 0.0, %v4551
        %v4553 = vpop.f32.mrb[0].mxu0
        %4554 = vdwg.mxu0
        %4555 = vmatprep.subr.mxu0 0.0
        %4556 = vmatpush1.msra.mxu0 %v4233
        %4557 = vmatprep.subr.mxu0 0.0
        %4558 = vmatpush1.msra.mxu0 %v4234
        %4559 = vmatprep.subr.mxu0 0.0
        %4560 = vmatpush1.msra.mxu0 %v4235
        %4561 = vmatprep.subr.mxu0 0.0
        %4562 = vmatpush1.msra.mxu0 %v4236
        %4563 = vmatprep.subr.mxu0 0.0
        %4564 = vmatpush1.msra.mxu0 %v4237
        %4565 = vmatprep.subr.mxu0 0.0
        %4566 = vmatpush1.msra.mxu0 %v4238
        %4567 = vmatprep.subr.mxu0 0.0
        %4568 = vmatpush1.msra.mxu0 %v4239
        %4569 = vmatprep.subr.mxu0 0.0
        %4570 = vmatpush1.msra.mxu0 %v4240
        %4571 = vmatprep.subr.mxu0 0.0
        %4572 = vmatpush1.msra.mxu0 %v4241
        %4573 = vmatprep.subr.mxu0 0.0
        %4574 = vmatpush1.msra.mxu0 %v4242
        %4575 = vmatprep.subr.mxu0 0.0
        %4576 = vmatpush1.msra.mxu0 %v4243
        %4577 = vmatprep.subr.mxu0 0.0
        %4578 = vmatpush1.msra.mxu0 %v4244
        %4579 = vmatprep.subr.mxu0 0.0
        %4580 = vmatpush1.msra.mxu0 %v4245
        %4581 = vmatprep.subr.mxu0 0.0
        %4582 = vmatpush1.msra.mxu0 %v4246
        %4583 = vmatprep.subr.mxu0 0.0
        %4584 = vmatpush1.msra.mxu0 %v4247
        %4585 = vmatprep.subr.mxu0 0.0
        %4586 = vmatpush1.msra.mxu0 %v4248
        %4587 = vmatprep.subr.mxu0 0.0
        %4588 = vmatpush1.msra.mxu0 0.0
        %4589 = vmatprep.subr.mxu0 0.0
        %4590 = vmatpush1.msra.mxu0 0.0
        %4591 = vmatprep.subr.mxu0 0.0
        %4592 = vmatpush1.msra.mxu0 0.0
        %4593 = vmatprep.subr.mxu0 0.0
        %4594 = vmatpush1.msra.mxu0 0.0
        %4595 = vmatprep.subr.mxu0 0.0
        %4596 = vmatpush1.msra.mxu0 0.0
        %4597 = vmatprep.subr.mxu0 0.0
        %4598 = vmatpush1.msra.mxu0 0.0
        %4599 = vmatprep.subr.mxu0 0.0
        %4600 = vmatpush1.msra.mxu0 0.0
        %4601 = vmatprep.subr.mxu0 0.0
        %4602 = vmatpush1.msra.mxu0 0.0
        %4603 = vmatprep.subr.mxu0 0.0
        %4604 = vmatpush1.msra.mxu0 0.0
        %4605 = vmatprep.subr.mxu0 0.0
        %4606 = vmatpush1.msra.mxu0 0.0
        %4607 = vmatprep.subr.mxu0 0.0
        %4608 = vmatpush1.msra.mxu0 0.0
        %4609 = vmatprep.subr.mxu0 0.0
        %4610 = vmatpush1.msra.mxu0 0.0
        %4611 = vmatprep.subr.mxu0 0.0
        %4612 = vmatpush1.msra.mxu0 0.0
        %4613 = vmatprep.subr.mxu0 0.0
        %4614 = vmatpush1.msra.mxu0 0.0
        %4615 = vmatprep.subr.mxu0 0.0
        %4616 = vmatpush1.msra.mxu0 0.0
        %4617 = vmatprep.subr.mxu0 0.0
        %4618 = vmatpush1.msra.mxu0 0.0
        %4619 = vmatprep.mubr.f32.mxu0 0.0
        %4620 = vmatmul.mubr.f32.gmra.mrb[0].mxu0 %v3305
        %v4621 = vpop.f32.mrb[0].mxu0
        %v4622 = vadd.f32 0.0, %v4621
        %v4623 = vpop.f32.mrb[0].mxu0
        %4624 = vmatprep.mubr.f32.mxu0 0.0
        %4625 = vmatmul.mubr.f32.gmra.mrb[0].mxu0 %v3307
        %v4626 = vpop.f32.mrb[0].mxu0
        %v4627 = vadd.f32 0.0, %v4626
        %v4628 = vpop.f32.mrb[0].mxu0
        %4629 = vmatprep.mubr.f32.mxu0 0.0
        %4630 = vmatmul.mubr.f32.gmra.mrb[0].mxu0 %v3309
        %v4631 = vpop.f32.mrb[0].mxu0
        %v4632 = vadd.f32 0.0, %v4631
        %v4633 = vpop.f32.mrb[0].mxu0
        %4634 = vmatprep.mubr.f32.mxu0 0.0
        %4635 = vmatmul.mubr.f32.gmra.mrb[0].mxu0 %v3311
        %v4636 = vpop.f32.mrb[0].mxu0
        %v4637 = vadd.f32 0.0, %v4636
        %v4638 = vpop.f32.mrb[0].mxu0
        %4639 = vmatprep.mubr.f32.mxu0 0.0
        %4640 = vmatmul.mubr.f32.gmra.mrb[0].mxu0 %v3313
        %v4641 = vpop.f32.mrb[0].mxu0
        %v4642 = vadd.f32 0.0, %v4641
        %v4643 = vpop.f32.mrb[0].mxu0
        %4644 = vmatprep.mubr.f32.mxu0 0.0
        %4645 = vmatmul.mubr.f32.gmra.mrb[0].mxu0 %v3315
        %v4646 = vpop.f32.mrb[0].mxu0
        %v4647 = vadd.f32 0.0, %v4646
        %v4648 = vpop.f32.mrb[0].mxu0
        %4649 = vmatprep.mubr.f32.mxu0 0.0
        %4650 = vmatmul.mubr.f32.gmra.mrb[0].mxu0 %v3317
        %v4651 = vpop.f32.mrb[0].mxu0
        %v4652 = vadd.f32 0.0, %v4651
        %v4653 = vpop.f32.mrb[0].mxu0
        %4654 = vmatprep.mubr.f32.mxu0 0.0
        %4655 = vmatmul.mubr.f32.gmra.mrb[0].mxu0 %v3319
        %v4656 = vpop.f32.mrb[0].mxu0
        %v4657 = vadd.f32 0.0, %v4656
        %v4658 = vpop.f32.mrb[0].mxu0
        %4659 = vmatprep.mubr.f32.mxu0 0.0
        %4660 = vmatmul.mubr.f32.gmra.mrb[0].mxu0 %v3321
        %v4661 = vpop.f32.mrb[0].mxu0
        %v4662 = vadd.f32 0.0, %v4661
        %v4663 = vpop.f32.mrb[0].mxu0
        %4664 = vmatprep.mubr.f32.mxu0 0.0
        %4665 = vmatmul.mubr.f32.gmra.mrb[0].mxu0 %v3323
        %v4666 = vpop.f32.mrb[0].mxu0
        %v4667 = vadd.f32 0.0, %v4666
        %v4668 = vpop.f32.mrb[0].mxu0
        %4669 = vmatprep.mubr.f32.mxu0 0.0
        %4670 = vmatmul.mubr.f32.gmra.mrb[0].mxu0 %v3325
        %v4671 = vpop.f32.mrb[0].mxu0
        %v4672 = vadd.f32 0.0, %v4671
        %v4673 = vpop.f32.mrb[0].mxu0
        %4674 = vmatprep.mubr.f32.mxu0 0.0
        %4675 = vmatmul.mubr.f32.gmra.mrb[0].mxu0 %v3327
        %v4676 = vpop.f32.mrb[0].mxu0
        %v4677 = vadd.f32 0.0, %v4676
        %v4678 = vpop.f32.mrb[0].mxu0
        %4679 = vmatprep.mubr.f32.mxu0 0.0
        %4680 = vmatmul.mubr.f32.gmra.mrb[0].mxu0 %v3329
        %v4681 = vpop.f32.mrb[0].mxu0
        %v4682 = vadd.f32 0.0, %v4681
        %v4683 = vpop.f32.mrb[0].mxu0
        %4684 = vmatprep.mubr.f32.mxu0 0.0
        %4685 = vmatmul.mubr.f32.gmra.mrb[0].mxu0 %v3331
        %v4686 = vpop.f32.mrb[0].mxu0
        %v4687 = vadd.f32 0.0, %v4686
        %v4688 = vpop.f32.mrb[0].mxu0
        %4689 = vmatprep.mubr.f32.mxu0 0.0
        %4690 = vmatmul.mubr.f32.gmra.mrb[0].mxu0 %v3333
        %v4691 = vpop.f32.mrb[0].mxu0
        %v4692 = vadd.f32 0.0, %v4691
        %v4693 = vpop.f32.mrb[0].mxu0
        %4694 = vmatprep.mubr.f32.mxu0 0.0
        %4695 = vmatmul.mubr.f32.gmra.mrb[0].mxu0 %v3335
        %v4696 = vpop.f32.mrb[0].mxu0
        %v4697 = vadd.f32 0.0, %v4696
        %v4698 = vpop.f32.mrb[0].mxu0
        %4699 = vdwg.mxu0
        %4700 = vmatprep.subr.mxu0 0.0
        %4701 = vmatpush1.msra.mxu0 %v4249
        %4702 = vmatprep.subr.mxu0 0.0
        %4703 = vmatpush1.msra.mxu0 %v4250
        %4704 = vmatprep.subr.mxu0 0.0
        %4705 = vmatpush1.msra.mxu0 %v4251
        %4706 = vmatprep.subr.mxu0 0.0
        %4707 = vmatpush1.msra.mxu0 %v4252
        %4708 = vmatprep.subr.mxu0 0.0
        %4709 = vmatpush1.msra.mxu0 %v4253
        %4710 = vmatprep.subr.mxu0 0.0
        %4711 = vmatpush1.msra.mxu0 %v4254
        %4712 = vmatprep.subr.mxu0 0.0
        %4713 = vmatpush1.msra.mxu0 %v4255
        %4714 = vmatprep.subr.mxu0 0.0
        %4715 = vmatpush1.msra.mxu0 %v4256
        %4716 = vmatprep.subr.mxu0 0.0
        %4717 = vmatpush1.msra.mxu0 %v4257
        %4718 = vmatprep.subr.mxu0 0.0
        %4719 = vmatpush1.msra.mxu0 %v4258
        %4720 = vmatprep.subr.mxu0 0.0
        %4721 = vmatpush1.msra.mxu0 %v4259
        %4722 = vmatprep.subr.mxu0 0.0
        %4723 = vmatpush1.msra.mxu0 %v4260
        %4724 = vmatprep.subr.mxu0 0.0
        %4725 = vmatpush1.msra.mxu0 %v4261
        %4726 = vmatprep.subr.mxu0 0.0
        %4727 = vmatpush1.msra.mxu0 %v4262
        %4728 = vmatprep.subr.mxu0 0.0
        %4729 = vmatpush1.msra.mxu0 %v4263
        %4730 = vmatprep.subr.mxu0 0.0
        %4731 = vmatpush1.msra.mxu0 %v4264
        %4732 = vmatprep.subr.mxu0 0.0
        %4733 = vmatpush1.msra.mxu0 0.0
        %4734 = vmatprep.subr.mxu0 0.0
        %4735 = vmatpush1.msra.mxu0 0.0
        %4736 = vmatprep.subr.mxu0 0.0
        %4737 = vmatpush1.msra.mxu0 0.0
        %4738 = vmatprep.subr.mxu0 0.0
        %4739 = vmatpush1.msra.mxu0 0.0
        %4740 = vmatprep.subr.mxu0 0.0
        %4741 = vmatpush1.msra.mxu0 0.0
        %4742 = vmatprep.subr.mxu0 0.0
        %4743 = vmatpush1.msra.mxu0 0.0
        %4744 = vmatprep.subr.mxu0 0.0
        %4745 = vmatpush1.msra.mxu0 0.0
        %4746 = vmatprep.subr.mxu0 0.0
        %4747 = vmatpush1.msra.mxu0 0.0
        %4748 = vmatprep.subr.mxu0 0.0
        %4749 = vmatpush1.msra.mxu0 0.0
        %4750 = vmatprep.subr.mxu0 0.0
        %4751 = vmatpush1.msra.mxu0 0.0
        %4752 = vmatprep.subr.mxu0 0.0
        %4753 = vmatpush1.msra.mxu0 0.0
        %4754 = vmatprep.subr.mxu0 0.0
        %4755 = vmatpush1.msra.mxu0 0.0
        %4756 = vmatprep.subr.mxu0 0.0
        %4757 = vmatpush1.msra.mxu0 0.0
        %4758 = vmatprep.subr.mxu0 0.0
        %4759 = vmatpush1.msra.mxu0 0.0
        %4760 = vmatprep.subr.mxu0 0.0
        %4761 = vmatpush1.msra.mxu0 0.0
        %4762 = vmatprep.subr.mxu0 0.0
        %4763 = vmatpush1.msra.mxu0 0.0
        %4764 = vmatprep.mubr.f32.mxu0 0.0
        %4765 = vmatmul.mubr.f32.gmra.mrb[0].mxu0 %v3337
        %v4766 = vpop.f32.mrb[0].mxu0
        %v4767 = vadd.f32 0.0, %v4766
        %v4768 = vpop.f32.mrb[0].mxu0
        %4769 = vmatprep.mubr.f32.mxu0 0.0
        %4770 = vmatmul.mubr.f32.gmra.mrb[0].mxu0 %v3339
        %v4771 = vpop.f32.mrb[0].mxu0
        %v4772 = vadd.f32 0.0, %v4771
        %v4773 = vpop.f32.mrb[0].mxu0
        %4774 = vmatprep.mubr.f32.mxu0 0.0
        %4775 = vmatmul.mubr.f32.gmra.mrb[0].mxu0 %v3341
        %v4776 = vpop.f32.mrb[0].mxu0
        %v4777 = vadd.f32 0.0, %v4776
        %v4778 = vpop.f32.mrb[0].mxu0
        %4779 = vmatprep.mubr.f32.mxu0 0.0
        %4780 = vmatmul.mubr.f32.gmra.mrb[0].mxu0 %v3343
        %v4781 = vpop.f32.mrb[0].mxu0
        %v4782 = vadd.f32 0.0, %v4781
        %v4783 = vpop.f32.mrb[0].mxu0
        %4784 = vmatprep.mubr.f32.mxu0 0.0
        %4785 = vmatmul.mubr.f32.gmra.mrb[0].mxu0 %v3345
        %v4786 = vpop.f32.mrb[0].mxu0
        %v4787 = vadd.f32 0.0, %v4786
        %v4788 = vpop.f32.mrb[0].mxu0
        %4789 = vmatprep.mubr.f32.mxu0 0.0
        %4790 = vmatmul.mubr.f32.gmra.mrb[0].mxu0 %v3347
        %v4791 = vpop.f32.mrb[0].mxu0
        %v4792 = vadd.f32 0.0, %v4791
        %v4793 = vpop.f32.mrb[0].mxu0
        %4794 = vmatprep.mubr.f32.mxu0 0.0
        %4795 = vmatmul.mubr.f32.gmra.mrb[0].mxu0 %v3349
        %v4796 = vpop.f32.mrb[0].mxu0
        %v4797 = vadd.f32 0.0, %v4796
        %v4798 = vpop.f32.mrb[0].mxu0
        %4799 = vmatprep.mubr.f32.mxu0 0.0
        %4800 = vmatmul.mubr.f32.gmra.mrb[0].mxu0 %v3351
        %v4801 = vpop.f32.mrb[0].mxu0
        %v4802 = vadd.f32 0.0, %v4801
        %v4803 = vpop.f32.mrb[0].mxu0
        %4804 = vmatprep.mubr.f32.mxu0 0.0
        %4805 = vmatmul.mubr.f32.gmra.mrb[0].mxu0 %v3353
        %v4806 = vpop.f32.mrb[0].mxu0
        %v4807 = vadd.f32 0.0, %v4806
        %v4808 = vpop.f32.mrb[0].mxu0
        %4809 = vmatprep.mubr.f32.mxu0 0.0
        %4810 = vmatmul.mubr.f32.gmra.mrb[0].mxu0 %v3355
        %v4811 = vpop.f32.mrb[0].mxu0
        %v4812 = vadd.f32 0.0, %v4811
        %v4813 = vpop.f32.mrb[0].mxu0
        %4814 = vmatprep.mubr.f32.mxu0 0.0
        %4815 = vmatmul.mubr.f32.gmra.mrb[0].mxu0 %v3357
        %v4816 = vpop.f32.mrb[0].mxu0
        %v4817 = vadd.f32 0.0, %v4816
        %v4818 = vpop.f32.mrb[0].mxu0
        %4819 = vmatprep.mubr.f32.mxu0 0.0
        %4820 = vmatmul.mubr.f32.gmra.mrb[0].mxu0 %v3359
        %v4821 = vpop.f32.mrb[0].mxu0
        %v4822 = vadd.f32 0.0, %v4821
        %v4823 = vpop.f32.mrb[0].mxu0
        %4824 = vmatprep.mubr.f32.mxu0 0.0
        %4825 = vmatmul.mubr.f32.gmra.mrb[0].mxu0 %v3361
        %v4826 = vpop.f32.mrb[0].mxu0
        %v4827 = vadd.f32 0.0, %v4826
        %v4828 = vpop.f32.mrb[0].mxu0
        %4829 = vmatprep.mubr.f32.mxu0 0.0
        %4830 = vmatmul.mubr.f32.gmra.mrb[0].mxu0 %v3363
        %v4831 = vpop.f32.mrb[0].mxu0
        %v4832 = vadd.f32 0.0, %v4831
        %v4833 = vpop.f32.mrb[0].mxu0
        %4834 = vmatprep.mubr.f32.mxu0 0.0
        %4835 = vmatmul.mubr.f32.gmra.mrb[0].mxu0 %v3365
        %v4836 = vpop.f32.mrb[0].mxu0
        %v4837 = vadd.f32 0.0, %v4836
        %v4838 = vpop.f32.mrb[0].mxu0
        %4839 = vmatprep.mubr.f32.mxu0 0.0
        %4840 = vmatmul.mubr.f32.gmra.mrb[0].mxu0 %v3367
        %v4841 = vpop.f32.mrb[0].mxu0
        %v4842 = vadd.f32 0.0, %v4841
        %v4843 = vpop.f32.mrb[0].mxu0
        %4844 = vdwg.mxu0
        %v4845 = vadd.f32 %v4137, %v4332
        %v4846 = vadd.f32 %v4138, %v4337
        %v4847 = vadd.f32 %v4139, %v4342
        %v4848 = vadd.f32 %v4140, %v4347
        %v4849 = vadd.f32 %v4141, %v4352
        %v4850 = vadd.f32 %v4142, %v4357
        %v4851 = vadd.f32 %v4143, %v4362
        %v4852 = vadd.f32 %v4144, %v4367
        %v4853 = vadd.f32 %v4145, %v4372
        %v4854 = vadd.f32 %v4146, %v4377
        %v4855 = vadd.f32 %v4147, %v4382
        %v4856 = vadd.f32 %v4148, %v4387
        %v4857 = vadd.f32 %v4149, %v4392
        %v4858 = vadd.f32 %v4150, %v4397
        %v4859 = vadd.f32 %v4151, %v4402
        %v4860 = vadd.f32 %v4152, %v4407
        %v4861 = vadd.f32 %v4153, %v4477
        %v4862 = vadd.f32 %v4154, %v4482
        %v4863 = vadd.f32 %v4155, %v4487
        %v4864 = vadd.f32 %v4156, %v4492
        %v4865 = vadd.f32 %v4157, %v4497
        %v4866 = vadd.f32 %v4158, %v4502
        %v4867 = vadd.f32 %v4159, %v4507
        %v4868 = vadd.f32 %v4160, %v4512
        %v4869 = vadd.f32 %v4161, %v4517
        %v4870 = vadd.f32 %v4162, %v4522
        %v4871 = vadd.f32 %v4163, %v4527
        %v4872 = vadd.f32 %v4164, %v4532
        %v4873 = vadd.f32 %v4165, %v4537
        %v4874 = vadd.f32 %v4166, %v4542
        %v4875 = vadd.f32 %v4167, %v4547
        %v4876 = vadd.f32 %v4168, %v4552
        %v4877 = vadd.f32 %v4169, %v4622
        %v4878 = vadd.f32 %v4170, %v4627
        %v4879 = vadd.f32 %v4171, %v4632
        %v4880 = vadd.f32 %v4172, %v4637
        %v4881 = vadd.f32 %v4173, %v4642
        %v4882 = vadd.f32 %v4174, %v4647
        %v4883 = vadd.f32 %v4175, %v4652
        %v4884 = vadd.f32 %v4176, %v4657
        %v4885 = vadd.f32 %v4177, %v4662
        %v4886 = vadd.f32 %v4178, %v4667
        %v4887 = vadd.f32 %v4179, %v4672
        %v4888 = vadd.f32 %v4180, %v4677
        %v4889 = vadd.f32 %v4181, %v4682
        %v4890 = vadd.f32 %v4182, %v4687
        %v4891 = vadd.f32 %v4183, %v4692
        %v4892 = vadd.f32 %v4184, %v4697
        %v4893 = vadd.f32 %v4185, %v4767
        %v4894 = vadd.f32 %v4186, %v4772
        %v4895 = vadd.f32 %v4187, %v4777
        %v4896 = vadd.f32 %v4188, %v4782
        %v4897 = vadd.f32 %v4189, %v4787
        %v4898 = vadd.f32 %v4190, %v4792
        %v4899 = vadd.f32 %v4191, %v4797
        %v4900 = vadd.f32 %v4192, %v4802
        %v4901 = vadd.f32 %v4193, %v4807
        %v4902 = vadd.f32 %v4194, %v4812
        %v4903 = vadd.f32 %v4195, %v4817
        %v4904 = vadd.f32 %v4196, %v4822
        %v4905 = vadd.f32 %v4197, %v4827
        %v4906 = vadd.f32 %v4198, %v4832
        %v4907 = vadd.f32 %v4199, %v4837
        %v4908 = vadd.f32 %v4200, %v4842
        %4909 = vst.msk [vmem:[#allocation4] sm:$0xff] %vm1443, %v4845
        %4910 = vst.msk [vmem:[#allocation4 + $0x8] sm:$0xff] %vm1443, %v4846
        %4911 = vst.msk [vmem:[#allocation4 + $0x10] sm:$0xff] %vm1443, %v4847
        %4912 = vst.msk [vmem:[#allocation4 + $0x18] sm:$0xff] %vm1443, %v4848
        %4913 = vst.msk [vmem:[#allocation4 + $0x20] sm:$0xff] %vm1443, %v4849
        %4914 = vst.msk [vmem:[#allocation4 + $0x28] sm:$0xff] %vm1443, %v4850
        %4915 = vst.msk [vmem:[#allocation4 + $0x30] sm:$0xff] %vm1443, %v4851
        %4916 = vst.msk [vmem:[#allocation4 + $0x38] sm:$0xff] %vm1443, %v4852
        %4917 = vst.msk [vmem:[#allocation4 + $0x40] sm:$0xff] %vm1443, %v4853
        %4918 = vst.msk [vmem:[#allocation4 + $0x48] sm:$0xff] %vm1443, %v4854
        %4919 = vst.msk [vmem:[#allocation4 + $0x50] sm:$0xff] %vm1443, %v4855
        %4920 = vst.msk [vmem:[#allocation4 + $0x58] sm:$0xff] %vm1443, %v4856
        %4921 = vst.msk [vmem:[#allocation4 + $0x60] sm:$0xff] %vm1443, %v4857
        %4922 = vst.msk [vmem:[#allocation4 + $0x68] sm:$0xff] %vm1443, %v4858
        %4923 = vst.msk [vmem:[#allocation4 + $0x70] sm:$0xff] %vm1443, %v4859
        %4924 = vst.msk [vmem:[#allocation4 + $0x78] sm:$0xff] %vm1443, %v4860
        %4925 = vst.msk [vmem:[#allocation4 + $0x80] sm:$0xff] %vm1443, %v4861
        %4926 = vst.msk [vmem:[#allocation4 + $0x88] sm:$0xff] %vm1443, %v4862
        %4927 = vst.msk [vmem:[#allocation4 + $0x90] sm:$0xff] %vm1443, %v4863
        %4928 = vst.msk [vmem:[#allocation4 + $0x98] sm:$0xff] %vm1443, %v4864
        %4929 = vst.msk [vmem:[#allocation4 + $0xa0] sm:$0xff] %vm1443, %v4865
        %4930 = vst.msk [vmem:[#allocation4 + $0xa8] sm:$0xff] %vm1443, %v4866
        %4931 = vst.msk [vmem:[#allocation4 + $0xb0] sm:$0xff] %vm1443, %v4867
        %4932 = vst.msk [vmem:[#allocation4 + $0xb8] sm:$0xff] %vm1443, %v4868
        %4933 = vst.msk [vmem:[#allocation4 + $0xc0] sm:$0xff] %vm1443, %v4869
        %4934 = vst.msk [vmem:[#allocation4 + $0xc8] sm:$0xff] %vm1443, %v4870
        %4935 = vst.msk [vmem:[#allocation4 + $0xd0] sm:$0xff] %vm1443, %v4871
        %4936 = vst.msk [vmem:[#allocation4 + $0xd8] sm:$0xff] %vm1443, %v4872
        %4937 = vst.msk [vmem:[#allocation4 + $0xe0] sm:$0xff] %vm1443, %v4873
        %4938 = vst.msk [vmem:[#allocation4 + $0xe8] sm:$0xff] %vm1443, %v4874
        %4939 = vst.msk [vmem:[#allocation4 + $0xf0] sm:$0xff] %vm1443, %v4875
        %4940 = vst.msk [vmem:[#allocation4 + $0xf8] sm:$0xff] %vm1443, %v4876
        %4941 = vst.msk [vmem:[#allocation4 + $0x100] sm:$0xff] %vm1443, %v4877
        %4942 = vst.msk [vmem:[#allocation4 + $0x108] sm:$0xff] %vm1443, %v4878
        %4943 = vst.msk [vmem:[#allocation4 + $0x110] sm:$0xff] %vm1443, %v4879
        %4944 = vst.msk [vmem:[#allocation4 + $0x118] sm:$0xff] %vm1443, %v4880
        %4945 = vst.msk [vmem:[#allocation4 + $0x120] sm:$0xff] %vm1443, %v4881
        %4946 = vst.msk [vmem:[#allocation4 + $0x128] sm:$0xff] %vm1443, %v4882
        %4947 = vst.msk [vmem:[#allocation4 + $0x130] sm:$0xff] %vm1443, %v4883
        %4948 = vst.msk [vmem:[#allocation4 + $0x138] sm:$0xff] %vm1443, %v4884
        %4949 = vst.msk [vmem:[#allocation4 + $0x140] sm:$0xff] %vm1443, %v4885
        %4950 = vst.msk [vmem:[#allocation4 + $0x148] sm:$0xff] %vm1443, %v4886
        %4951 = vst.msk [vmem:[#allocation4 + $0x150] sm:$0xff] %vm1443, %v4887
        %4952 = vst.msk [vmem:[#allocation4 + $0x158] sm:$0xff] %vm1443, %v4888
        %4953 = vst.msk [vmem:[#allocation4 + $0x160] sm:$0xff] %vm1443, %v4889
        %4954 = vst.msk [vmem:[#allocation4 + $0x168] sm:$0xff] %vm1443, %v4890
        %4955 = vst.msk [vmem:[#allocation4 + $0x170] sm:$0xff] %vm1443, %v4891
        %4956 = vst.msk [vmem:[#allocation4 + $0x178] sm:$0xff] %vm1443, %v4892
        %4957 = vst.msk [vmem:[#allocation4 + $0x180] sm:$0xff] %vm1443, %v4893
        %4958 = vst.msk [vmem:[#allocation4 + $0x188] sm:$0xff] %vm1443, %v4894
        %4959 = vst.msk [vmem:[#allocation4 + $0x190] sm:$0xff] %vm1443, %v4895
        %4960 = vst.msk [vmem:[#allocation4 + $0x198] sm:$0xff] %vm1443, %v4896
        %4961 = vst.msk [vmem:[#allocation4 + $0x1a0] sm:$0xff] %vm1443, %v4897
        %4962 = vst.msk [vmem:[#allocation4 + $0x1a8] sm:$0xff] %vm1443, %v4898
        %4963 = vst.msk [vmem:[#allocation4 + $0x1b0] sm:$0xff] %vm1443, %v4899
        %4964 = vst.msk [vmem:[#allocation4 + $0x1b8] sm:$0xff] %vm1443, %v4900
        %4965 = vst.msk [vmem:[#allocation4 + $0x1c0] sm:$0xff] %vm1443, %v4901
        %4966 = vst.msk [vmem:[#allocation4 + $0x1c8] sm:$0xff] %vm1443, %v4902
        %4967 = vst.msk [vmem:[#allocation4 + $0x1d0] sm:$0xff] %vm1443, %v4903
        %4968 = vst.msk [vmem:[#allocation4 + $0x1d8] sm:$0xff] %vm1443, %v4904
        %4969 = vst.msk [vmem:[#allocation4 + $0x1e0] sm:$0xff] %vm1443, %v4905
        %4970 = vst.msk [vmem:[#allocation4 + $0x1e8] sm:$0xff] %vm1443, %v4906
        %4971 = vst.msk [vmem:[#allocation4 + $0x1f0] sm:$0xff] %vm1443, %v4907
        %4972 = vst.msk [vmem:[#allocation4 + $0x1f8] sm:$0xff] %vm1443, %v4908
        %4973 = vst.msk [vmem:[#allocation2] sm:$0xff] %vm3688, %v2600
        %4974 = vst.msk [vmem:[#allocation2 + $0x8] sm:$0xff] %vm3688, %v2601
        %4975 = vst.msk [vmem:[#allocation2 + $0x10] sm:$0xff] %vm3688, %v2602
        %4976 = vst.msk [vmem:[#allocation2 + $0x18] sm:$0xff] %vm3688, %v2603
        %4977 = vst.msk [vmem:[#allocation2 + $0x20] sm:$0xff] %vm3688, %v2604
        %4978 = vst.msk [vmem:[#allocation2 + $0x28] sm:$0xff] %vm3688, %v2605
        %4979 = vst.msk [vmem:[#allocation2 + $0x30] sm:$0xff] %vm3688, %v2606
        %4980 = vst.msk [vmem:[#allocation2 + $0x38] sm:$0xff] %vm3688, %v2607
        %4981 = vst.msk [vmem:[#allocation2 + $0x40] sm:$0xff] %vm3688, %v2608
        %4982 = vst.msk [vmem:[#allocation2 + $0x48] sm:$0xff] %vm3688, %v2609
        %4983 = vst.msk [vmem:[#allocation2 + $0x50] sm:$0xff] %vm3688, %v2610
        %4984 = vst.msk [vmem:[#allocation2 + $0x58] sm:$0xff] %vm3688, %v2611
        %4985 = vst.msk [vmem:[#allocation2 + $0x60] sm:$0xff] %vm3688, %v2612
        %4986 = vst.msk [vmem:[#allocation2 + $0x68] sm:$0xff] %vm3688, %v2613
        %4987 = vst.msk [vmem:[#allocation2 + $0x70] sm:$0xff] %vm3688, %v2614
        %4988 = vst.msk [vmem:[#allocation2 + $0x78] sm:$0xff] %vm3688, %v2615
        %4989 = vst.msk [vmem:[#allocation2 + $0x80] sm:$0xff] %vm3688, %v2616
        %4990 = vst.msk [vmem:[#allocation2 + $0x88] sm:$0xff] %vm3688, %v2617
        %4991 = vst.msk [vmem:[#allocation2 + $0x90] sm:$0xff] %vm3688, %v2618
        %4992 = vst.msk [vmem:[#allocation2 + $0x98] sm:$0xff] %vm3688, %v2619
        %4993 = vst.msk [vmem:[#allocation2 + $0xa0] sm:$0xff] %vm3688, %v2620
        %4994 = vst.msk [vmem:[#allocation2 + $0xa8] sm:$0xff] %vm3688, %v2621
        %4995 = vst.msk [vmem:[#allocation2 + $0xb0] sm:$0xff] %vm3688, %v2622
        %4996 = vst.msk [vmem:[#allocation2 + $0xb8] sm:$0xff] %vm3688, %v2623
        %4997 = vst.msk [vmem:[#allocation2 + $0xc0] sm:$0xff] %vm3688, %v2624
        %4998 = vst.msk [vmem:[#allocation2 + $0xc8] sm:$0xff] %vm3688, %v2625
        %4999 = vst.msk [vmem:[#allocation2 + $0xd0] sm:$0xff] %vm3688, %v2626
        %5000 = vst.msk [vmem:[#allocation2 + $0xd8] sm:$0xff] %vm3688, %v2627
        %5001 = vst.msk [vmem:[#allocation2 + $0xe0] sm:$0xff] %vm3688, %v2628
        %5002 = vst.msk [vmem:[#allocation2 + $0xe8] sm:$0xff] %vm3688, %v2629
        %5003 = vst.msk [vmem:[#allocation2 + $0xf0] sm:$0xff] %vm3688, %v2630
        %5004 = vst.msk [vmem:[#allocation2 + $0xf8] sm:$0xff] %vm3688, %v2631
        %5005 = vst.msk [vmem:[#allocation2 + $0x100] sm:$0xff] %vm3688, %v2632
        %5006 = vst.msk [vmem:[#allocation2 + $0x108] sm:$0xff] %vm3688, %v2633
        %5007 = vst.msk [vmem:[#allocation2 + $0x110] sm:$0xff] %vm3688, %v2634
        %5008 = vst.msk [vmem:[#allocation2 + $0x118] sm:$0xff] %vm3688, %v2635
        %5009 = vst.msk [vmem:[#allocation2 + $0x120] sm:$0xff] %vm3688, %v2636
        %5010 = vst.msk [vmem:[#allocation2 + $0x128] sm:$0xff] %vm3688, %v2637
        %5011 = vst.msk [vmem:[#allocation2 + $0x130] sm:$0xff] %vm3688, %v2638
        %5012 = vst.msk [vmem:[#allocation2 + $0x138] sm:$0xff] %vm3688, %v2639
        %5013 = vst.msk [vmem:[#allocation2 + $0x140] sm:$0xff] %vm3688, %v2640
        %5014 = vst.msk [vmem:[#allocation2 + $0x148] sm:$0xff] %vm3688, %v2641
        %5015 = vst.msk [vmem:[#allocation2 + $0x150] sm:$0xff] %vm3688, %v2642
        %5016 = vst.msk [vmem:[#allocation2 + $0x158] sm:$0xff] %vm3688, %v2643
        %5017 = vst.msk [vmem:[#allocation2 + $0x160] sm:$0xff] %vm3688, %v2644
        %5018 = vst.msk [vmem:[#allocation2 + $0x168] sm:$0xff] %vm3688, %v2645
        %5019 = vst.msk [vmem:[#allocation2 + $0x170] sm:$0xff] %vm3688, %v2646
        %5020 = vst.msk [vmem:[#allocation2 + $0x178] sm:$0xff] %vm3688, %v2647
        %5021 = vst.msk [vmem:[#allocation2 + $0x180] sm:$0xff] %vm3688, %v2648
        %5022 = vst.msk [vmem:[#allocation2 + $0x188] sm:$0xff] %vm3688, %v2649
        %5023 = vst.msk [vmem:[#allocation2 + $0x190] sm:$0xff] %vm3688, %v2650
        %5024 = vst.msk [vmem:[#allocation2 + $0x198] sm:$0xff] %vm3688, %v2651
        %5025 = vst.msk [vmem:[#allocation2 + $0x1a0] sm:$0xff] %vm3688, %v2652
        %5026 = vst.msk [vmem:[#allocation2 + $0x1a8] sm:$0xff] %vm3688, %v2653
        %5027 = vst.msk [vmem:[#allocation2 + $0x1b0] sm:$0xff] %vm3688, %v2654
        %5028 = vst.msk [vmem:[#allocation2 + $0x1b8] sm:$0xff] %vm3688, %v2655
        %5029 = vst.msk [vmem:[#allocation2 + $0x1c0] sm:$0xff] %vm3688, %v2656
        %5030 = vst.msk [vmem:[#allocation2 + $0x1c8] sm:$0xff] %vm3688, %v2657
        %5031 = vst.msk [vmem:[#allocation2 + $0x1d0] sm:$0xff] %vm3688, %v2658
        %5032 = vst.msk [vmem:[#allocation2 + $0x1d8] sm:$0xff] %vm3688, %v2659
        %5033 = vst.msk [vmem:[#allocation2 + $0x1e0] sm:$0xff] %vm3688, %v2660
        %5034 = vst.msk [vmem:[#allocation2 + $0x1e8] sm:$0xff] %vm3688, %v2661
        %5035 = vst.msk [vmem:[#allocation2 + $0x1f0] sm:$0xff] %vm3688, %v2662
        %5036 = vst.msk [vmem:[#allocation2 + $0x1f8] sm:$0xff] %vm3688, %v2663
        %p5037 = scmp.eq.s32.totalorder %s21, 2
        // Predicated region
        $region151: #{scaled_dot_product_attention.1} parent=133 // pred_check
          %p5038 = pneg %p5037
        $region152: #{scaled_dot_product_attention.1} parent=133 // pred_check_branch
          %5040 = sbr.rel (%p5038) target = $region154
        $region153: #{scaled_dot_product_attention.1} parent=133 // pred_region
          %v5041 = vld [vmem:[#allocation4] sm:$0xff]
          %v5042 = vld [vmem:[#allocation4 + $0x8] sm:$0xff]
          %v5043 = vld [vmem:[#allocation4 + $0x10] sm:$0xff]
          %v5044 = vld [vmem:[#allocation4 + $0x18] sm:$0xff]
          %v5045 = vld [vmem:[#allocation4 + $0x20] sm:$0xff]
          %v5046 = vld [vmem:[#allocation4 + $0x28] sm:$0xff]
          %v5047 = vld [vmem:[#allocation4 + $0x30] sm:$0xff]
          %v5048 = vld [vmem:[#allocation4 + $0x38] sm:$0xff]
          %v5049 = vld [vmem:[#allocation4 + $0x40] sm:$0xff]
          %v5050 = vld [vmem:[#allocation4 + $0x48] sm:$0xff]
          %v5051 = vld [vmem:[#allocation4 + $0x50] sm:$0xff]
          %v5052 = vld [vmem:[#allocation4 + $0x58] sm:$0xff]
          %v5053 = vld [vmem:[#allocation4 + $0x60] sm:$0xff]
          %v5054 = vld [vmem:[#allocation4 + $0x68] sm:$0xff]
          %v5055 = vld [vmem:[#allocation4 + $0x70] sm:$0xff]
          %v5056 = vld [vmem:[#allocation4 + $0x78] sm:$0xff]
          %v5057 = vld [vmem:[#allocation4 + $0x80] sm:$0xff]
          %v5058 = vld [vmem:[#allocation4 + $0x88] sm:$0xff]
          %v5059 = vld [vmem:[#allocation4 + $0x90] sm:$0xff]
          %v5060 = vld [vmem:[#allocation4 + $0x98] sm:$0xff]
          %v5061 = vld [vmem:[#allocation4 + $0xa0] sm:$0xff]
          %v5062 = vld [vmem:[#allocation4 + $0xa8] sm:$0xff]
          %v5063 = vld [vmem:[#allocation4 + $0xb0] sm:$0xff]
          %v5064 = vld [vmem:[#allocation4 + $0xb8] sm:$0xff]
          %v5065 = vld [vmem:[#allocation4 + $0xc0] sm:$0xff]
          %v5066 = vld [vmem:[#allocation4 + $0xc8] sm:$0xff]
          %v5067 = vld [vmem:[#allocation4 + $0xd0] sm:$0xff]
          %v5068 = vld [vmem:[#allocation4 + $0xd8] sm:$0xff]
          %v5069 = vld [vmem:[#allocation4 + $0xe0] sm:$0xff]
          %v5070 = vld [vmem:[#allocation4 + $0xe8] sm:$0xff]
          %v5071 = vld [vmem:[#allocation4 + $0xf0] sm:$0xff]
          %v5072 = vld [vmem:[#allocation4 + $0xf8] sm:$0xff]
          %v5073 = vld [vmem:[#allocation4 + $0x100] sm:$0xff]
          %v5074 = vld [vmem:[#allocation4 + $0x108] sm:$0xff]
          %v5075 = vld [vmem:[#allocation4 + $0x110] sm:$0xff]
          %v5076 = vld [vmem:[#allocation4 + $0x118] sm:$0xff]
          %v5077 = vld [vmem:[#allocation4 + $0x120] sm:$0xff]
          %v5078 = vld [vmem:[#allocation4 + $0x128] sm:$0xff]
          %v5079 = vld [vmem:[#allocation4 + $0x130] sm:$0xff]
          %v5080 = vld [vmem:[#allocation4 + $0x138] sm:$0xff]
          %v5081 = vld [vmem:[#allocation4 + $0x140] sm:$0xff]
          %v5082 = vld [vmem:[#allocation4 + $0x148] sm:$0xff]
          %v5083 = vld [vmem:[#allocation4 + $0x150] sm:$0xff]
          %v5084 = vld [vmem:[#allocation4 + $0x158] sm:$0xff]
          %v5085 = vld [vmem:[#allocation4 + $0x160] sm:$0xff]
          %v5086 = vld [vmem:[#allocation4 + $0x168] sm:$0xff]
          %v5087 = vld [vmem:[#allocation4 + $0x170] sm:$0xff]
          %v5088 = vld [vmem:[#allocation4 + $0x178] sm:$0xff]
          %v5089 = vld [vmem:[#allocation4 + $0x180] sm:$0xff]
          %v5090 = vld [vmem:[#allocation4 + $0x188] sm:$0xff]
          %v5091 = vld [vmem:[#allocation4 + $0x190] sm:$0xff]
          %v5092 = vld [vmem:[#allocation4 + $0x198] sm:$0xff]
          %v5093 = vld [vmem:[#allocation4 + $0x1a0] sm:$0xff]
          %v5094 = vld [vmem:[#allocation4 + $0x1a8] sm:$0xff]
          %v5095 = vld [vmem:[#allocation4 + $0x1b0] sm:$0xff]
          %v5096 = vld [vmem:[#allocation4 + $0x1b8] sm:$0xff]
          %v5097 = vld [vmem:[#allocation4 + $0x1c0] sm:$0xff]
          %v5098 = vld [vmem:[#allocation4 + $0x1c8] sm:$0xff]
          %v5099 = vld [vmem:[#allocation4 + $0x1d0] sm:$0xff]
          %v5100 = vld [vmem:[#allocation4 + $0x1d8] sm:$0xff]
          %v5101 = vld [vmem:[#allocation4 + $0x1e0] sm:$0xff]
          %v5102 = vld [vmem:[#allocation4 + $0x1e8] sm:$0xff]
          %v5103 = vld [vmem:[#allocation4 + $0x1f0] sm:$0xff]
          %v5104 = vld [vmem:[#allocation4 + $0x1f8] sm:$0xff]
          %v5105 = vld [vmem:[#allocation3] sm:$0xff]
          %v5106 = vld [vmem:[#allocation3 + $0x8] sm:$0xff]
          %v5107 = vld [vmem:[#allocation3 + $0x10] sm:$0xff]
          %v5108 = vld [vmem:[#allocation3 + $0x18] sm:$0xff]
          %v5109 = vld [vmem:[#allocation3 + $0x20] sm:$0xff]
          %v5110 = vld [vmem:[#allocation3 + $0x28] sm:$0xff]
          %v5111 = vld [vmem:[#allocation3 + $0x30] sm:$0xff]
          %v5112 = vld [vmem:[#allocation3 + $0x38] sm:$0xff]
          %v5113 = vld [vmem:[#allocation3 + $0x40] sm:$0xff]
          %v5114 = vld [vmem:[#allocation3 + $0x48] sm:$0xff]
          %v5115 = vld [vmem:[#allocation3 + $0x50] sm:$0xff]
          %v5116 = vld [vmem:[#allocation3 + $0x58] sm:$0xff]
          %v5117 = vld [vmem:[#allocation3 + $0x60] sm:$0xff]
          %v5118 = vld [vmem:[#allocation3 + $0x68] sm:$0xff]
          %v5119 = vld [vmem:[#allocation3 + $0x70] sm:$0xff]
          %v5120 = vld [vmem:[#allocation3 + $0x78] sm:$0xff]
          %v5121 = vld [vmem:[#allocation3 + $0x80] sm:$0xff]
          %v5122 = vld [vmem:[#allocation3 + $0x88] sm:$0xff]
          %v5123 = vld [vmem:[#allocation3 + $0x90] sm:$0xff]
          %v5124 = vld [vmem:[#allocation3 + $0x98] sm:$0xff]
          %v5125 = vld [vmem:[#allocation3 + $0xa0] sm:$0xff]
          %v5126 = vld [vmem:[#allocation3 + $0xa8] sm:$0xff]
          %v5127 = vld [vmem:[#allocation3 + $0xb0] sm:$0xff]
          %v5128 = vld [vmem:[#allocation3 + $0xb8] sm:$0xff]
          %v5129 = vld [vmem:[#allocation3 + $0xc0] sm:$0xff]
          %v5130 = vld [vmem:[#allocation3 + $0xc8] sm:$0xff]
          %v5131 = vld [vmem:[#allocation3 + $0xd0] sm:$0xff]
          %v5132 = vld [vmem:[#allocation3 + $0xd8] sm:$0xff]
          %v5133 = vld [vmem:[#allocation3 + $0xe0] sm:$0xff]
          %v5134 = vld [vmem:[#allocation3 + $0xe8] sm:$0xff]
          %v5135 = vld [vmem:[#allocation3 + $0xf0] sm:$0xff]
          %v5136 = vld [vmem:[#allocation3 + $0xf8] sm:$0xff]
          %v5137 = vld [vmem:[#allocation3 + $0x100] sm:$0xff]
          %v5138 = vld [vmem:[#allocation3 + $0x108] sm:$0xff]
          %v5139 = vld [vmem:[#allocation3 + $0x110] sm:$0xff]
          %v5140 = vld [vmem:[#allocation3 + $0x118] sm:$0xff]
          %v5141 = vld [vmem:[#allocation3 + $0x120] sm:$0xff]
          %v5142 = vld [vmem:[#allocation3 + $0x128] sm:$0xff]
          %v5143 = vld [vmem:[#allocation3 + $0x130] sm:$0xff]
          %v5144 = vld [vmem:[#allocation3 + $0x138] sm:$0xff]
          %v5145 = vld [vmem:[#allocation3 + $0x140] sm:$0xff]
          %v5146 = vld [vmem:[#allocation3 + $0x148] sm:$0xff]
          %v5147 = vld [vmem:[#allocation3 + $0x150] sm:$0xff]
          %v5148 = vld [vmem:[#allocation3 + $0x158] sm:$0xff]
          %v5149 = vld [vmem:[#allocation3 + $0x160] sm:$0xff]
          %v5150 = vld [vmem:[#allocation3 + $0x168] sm:$0xff]
          %v5151 = vld [vmem:[#allocation3 + $0x170] sm:$0xff]
          %v5152 = vld [vmem:[#allocation3 + $0x178] sm:$0xff]
          %v5153 = vld [vmem:[#allocation3 + $0x180] sm:$0xff]
          %v5154 = vld [vmem:[#allocation3 + $0x188] sm:$0xff]
          %v5155 = vld [vmem:[#allocation3 + $0x190] sm:$0xff]
          %v5156 = vld [vmem:[#allocation3 + $0x198] sm:$0xff]
          %v5157 = vld [vmem:[#allocation3 + $0x1a0] sm:$0xff]
          %v5158 = vld [vmem:[#allocation3 + $0x1a8] sm:$0xff]
          %v5159 = vld [vmem:[#allocation3 + $0x1b0] sm:$0xff]
          %v5160 = vld [vmem:[#allocation3 + $0x1b8] sm:$0xff]
          %v5161 = vld [vmem:[#allocation3 + $0x1c0] sm:$0xff]
          %v5162 = vld [vmem:[#allocation3 + $0x1c8] sm:$0xff]
          %v5163 = vld [vmem:[#allocation3 + $0x1d0] sm:$0xff]
          %v5164 = vld [vmem:[#allocation3 + $0x1d8] sm:$0xff]
          %v5165 = vld [vmem:[#allocation3 + $0x1e0] sm:$0xff]
          %v5166 = vld [vmem:[#allocation3 + $0x1e8] sm:$0xff]
          %v5167 = vld [vmem:[#allocation3 + $0x1f0] sm:$0xff]
          %v5168 = vld [vmem:[#allocation3 + $0x1f8] sm:$0xff]
          %5170 = vset.pattern.permute.xlu0 0
          %5171 = vperm.xlu0 %5170, %v5105
          %v5172 = vpop.permute.xlu0 %5171
          %5175 = vset.pattern.permute.xlu0 0
          %5176 = vperm.xlu0 %5175, %v5106
          %v5177 = vpop.permute.xlu0 %5176
          %5180 = vset.pattern.permute.xlu0 0
          %5181 = vperm.xlu0 %5180, %v5107
          %v5182 = vpop.permute.xlu0 %5181
          %5185 = vset.pattern.permute.xlu0 0
          %5186 = vperm.xlu0 %5185, %v5108
          %v5187 = vpop.permute.xlu0 %5186
          %5190 = vset.pattern.permute.xlu0 0
          %5191 = vperm.xlu0 %5190, %v5109
          %v5192 = vpop.permute.xlu0 %5191
          %5195 = vset.pattern.permute.xlu0 0
          %5196 = vperm.xlu0 %5195, %v5110
          %v5197 = vpop.permute.xlu0 %5196
          %5200 = vset.pattern.permute.xlu0 0
          %5201 = vperm.xlu0 %5200, %v5111
          %v5202 = vpop.permute.xlu0 %5201
          %5205 = vset.pattern.permute.xlu0 0
          %5206 = vperm.xlu0 %5205, %v5112
          %v5207 = vpop.permute.xlu0 %5206
          %5210 = vset.pattern.permute.xlu0 0
          %5211 = vperm.xlu0 %5210, %v5113
          %v5212 = vpop.permute.xlu0 %5211
          %5215 = vset.pattern.permute.xlu0 0
          %5216 = vperm.xlu0 %5215, %v5114
          %v5217 = vpop.permute.xlu0 %5216
          %5220 = vset.pattern.permute.xlu0 0
          %5221 = vperm.xlu0 %5220, %v5115
          %v5222 = vpop.permute.xlu0 %5221
          %5225 = vset.pattern.permute.xlu0 0
          %5226 = vperm.xlu0 %5225, %v5116
          %v5227 = vpop.permute.xlu0 %5226
          %5230 = vset.pattern.permute.xlu0 0
          %5231 = vperm.xlu0 %5230, %v5117
          %v5232 = vpop.permute.xlu0 %5231
          %5235 = vset.pattern.permute.xlu0 0
          %5236 = vperm.xlu0 %5235, %v5118
          %v5237 = vpop.permute.xlu0 %5236
          %5240 = vset.pattern.permute.xlu0 0
          %5241 = vperm.xlu0 %5240, %v5119
          %v5242 = vpop.permute.xlu0 %5241
          %5245 = vset.pattern.permute.xlu0 0
          %5246 = vperm.xlu0 %5245, %v5120
          %v5247 = vpop.permute.xlu0 %5246
          %5250 = vset.pattern.permute.xlu0 0
          %5251 = vperm.xlu0 %5250, %v5121
          %v5252 = vpop.permute.xlu0 %5251
          %5255 = vset.pattern.permute.xlu0 0
          %5256 = vperm.xlu0 %5255, %v5122
          %v5257 = vpop.permute.xlu0 %5256
          %5260 = vset.pattern.permute.xlu0 0
          %5261 = vperm.xlu0 %5260, %v5123
          %v5262 = vpop.permute.xlu0 %5261
          %5265 = vset.pattern.permute.xlu0 0
          %5266 = vperm.xlu0 %5265, %v5124
          %v5267 = vpop.permute.xlu0 %5266
          %5270 = vset.pattern.permute.xlu0 0
          %5271 = vperm.xlu0 %5270, %v5125
          %v5272 = vpop.permute.xlu0 %5271
          %5275 = vset.pattern.permute.xlu0 0
          %5276 = vperm.xlu0 %5275, %v5126
          %v5277 = vpop.permute.xlu0 %5276
          %5280 = vset.pattern.permute.xlu0 0
          %5281 = vperm.xlu0 %5280, %v5127
          %v5282 = vpop.permute.xlu0 %5281
          %5285 = vset.pattern.permute.xlu0 0
          %5286 = vperm.xlu0 %5285, %v5128
          %v5287 = vpop.permute.xlu0 %5286
          %5290 = vset.pattern.permute.xlu0 0
          %5291 = vperm.xlu0 %5290, %v5129
          %v5292 = vpop.permute.xlu0 %5291
          %5295 = vset.pattern.permute.xlu0 0
          %5296 = vperm.xlu0 %5295, %v5130
          %v5297 = vpop.permute.xlu0 %5296
          %5300 = vset.pattern.permute.xlu0 0
          %5301 = vperm.xlu0 %5300, %v5131
          %v5302 = vpop.permute.xlu0 %5301
          %5305 = vset.pattern.permute.xlu0 0
          %5306 = vperm.xlu0 %5305, %v5132
          %v5307 = vpop.permute.xlu0 %5306
          %5310 = vset.pattern.permute.xlu0 0
          %5311 = vperm.xlu0 %5310, %v5133
          %v5312 = vpop.permute.xlu0 %5311
          %5315 = vset.pattern.permute.xlu0 0
          %5316 = vperm.xlu0 %5315, %v5134
          %v5317 = vpop.permute.xlu0 %5316
          %5320 = vset.pattern.permute.xlu0 0
          %5321 = vperm.xlu0 %5320, %v5135
          %v5322 = vpop.permute.xlu0 %5321
          %5325 = vset.pattern.permute.xlu0 0
          %5326 = vperm.xlu0 %5325, %v5136
          %v5327 = vpop.permute.xlu0 %5326
          %5330 = vset.pattern.permute.xlu0 0
          %5331 = vperm.xlu0 %5330, %v5137
          %v5332 = vpop.permute.xlu0 %5331
          %5335 = vset.pattern.permute.xlu0 0
          %5336 = vperm.xlu0 %5335, %v5138
          %v5337 = vpop.permute.xlu0 %5336
          %5340 = vset.pattern.permute.xlu0 0
          %5341 = vperm.xlu0 %5340, %v5139
          %v5342 = vpop.permute.xlu0 %5341
          %5345 = vset.pattern.permute.xlu0 0
          %5346 = vperm.xlu0 %5345, %v5140
          %v5347 = vpop.permute.xlu0 %5346
          %5350 = vset.pattern.permute.xlu0 0
          %5351 = vperm.xlu0 %5350, %v5141
          %v5352 = vpop.permute.xlu0 %5351
          %5355 = vset.pattern.permute.xlu0 0
          %5356 = vperm.xlu0 %5355, %v5142
          %v5357 = vpop.permute.xlu0 %5356
          %5360 = vset.pattern.permute.xlu0 0
          %5361 = vperm.xlu0 %5360, %v5143
          %v5362 = vpop.permute.xlu0 %5361
          %5365 = vset.pattern.permute.xlu0 0
          %5366 = vperm.xlu0 %5365, %v5144
          %v5367 = vpop.permute.xlu0 %5366
          %5370 = vset.pattern.permute.xlu0 0
          %5371 = vperm.xlu0 %5370, %v5145
          %v5372 = vpop.permute.xlu0 %5371
          %5375 = vset.pattern.permute.xlu0 0
          %5376 = vperm.xlu0 %5375, %v5146
          %v5377 = vpop.permute.xlu0 %5376
          %5380 = vset.pattern.permute.xlu0 0
          %5381 = vperm.xlu0 %5380, %v5147
          %v5382 = vpop.permute.xlu0 %5381
          %5385 = vset.pattern.permute.xlu0 0
          %5386 = vperm.xlu0 %5385, %v5148
          %v5387 = vpop.permute.xlu0 %5386
          %5390 = vset.pattern.permute.xlu0 0
          %5391 = vperm.xlu0 %5390, %v5149
          %v5392 = vpop.permute.xlu0 %5391
          %5395 = vset.pattern.permute.xlu0 0
          %5396 = vperm.xlu0 %5395, %v5150
          %v5397 = vpop.permute.xlu0 %5396
          %5400 = vset.pattern.permute.xlu0 0
          %5401 = vperm.xlu0 %5400, %v5151
          %v5402 = vpop.permute.xlu0 %5401
          %5405 = vset.pattern.permute.xlu0 0
          %5406 = vperm.xlu0 %5405, %v5152
          %v5407 = vpop.permute.xlu0 %5406
          %5410 = vset.pattern.permute.xlu0 0
          %5411 = vperm.xlu0 %5410, %v5153
          %v5412 = vpop.permute.xlu0 %5411
          %5415 = vset.pattern.permute.xlu0 0
          %5416 = vperm.xlu0 %5415, %v5154
          %v5417 = vpop.permute.xlu0 %5416
          %5420 = vset.pattern.permute.xlu0 0
          %5421 = vperm.xlu0 %5420, %v5155
          %v5422 = vpop.permute.xlu0 %5421
          %5425 = vset.pattern.permute.xlu0 0
          %5426 = vperm.xlu0 %5425, %v5156
          %v5427 = vpop.permute.xlu0 %5426
          %5430 = vset.pattern.permute.xlu0 0
          %5431 = vperm.xlu0 %5430, %v5157
          %v5432 = vpop.permute.xlu0 %5431
          %5435 = vset.pattern.permute.xlu0 0
          %5436 = vperm.xlu0 %5435, %v5158
          %v5437 = vpop.permute.xlu0 %5436
          %5440 = vset.pattern.permute.xlu0 0
          %5441 = vperm.xlu0 %5440, %v5159
          %v5442 = vpop.permute.xlu0 %5441
          %5445 = vset.pattern.permute.xlu0 0
          %5446 = vperm.xlu0 %5445, %v5160
          %v5447 = vpop.permute.xlu0 %5446
          %5450 = vset.pattern.permute.xlu0 0
          %5451 = vperm.xlu0 %5450, %v5161
          %v5452 = vpop.permute.xlu0 %5451
          %5455 = vset.pattern.permute.xlu0 0
          %5456 = vperm.xlu0 %5455, %v5162
          %v5457 = vpop.permute.xlu0 %5456
          %5460 = vset.pattern.permute.xlu0 0
          %5461 = vperm.xlu0 %5460, %v5163
          %v5462 = vpop.permute.xlu0 %5461
          %5465 = vset.pattern.permute.xlu0 0
          %5466 = vperm.xlu0 %5465, %v5164
          %v5467 = vpop.permute.xlu0 %5466
          %5470 = vset.pattern.permute.xlu0 0
          %5471 = vperm.xlu0 %5470, %v5165
          %v5472 = vpop.permute.xlu0 %5471
          %5475 = vset.pattern.permute.xlu0 0
          %5476 = vperm.xlu0 %5475, %v5166
          %v5477 = vpop.permute.xlu0 %5476
          %5480 = vset.pattern.permute.xlu0 0
          %5481 = vperm.xlu0 %5480, %v5167
          %v5482 = vpop.permute.xlu0 %5481
          %5485 = vset.pattern.permute.xlu0 0
          %5486 = vperm.xlu0 %5485, %v5168
          %v5487 = vpop.permute.xlu0 %5486
          %v5489 = vrcp.pop %v5172
          %v5490 = vmul.f32 %v5041, %v5489
          %v5491 = vrcp.pop %v5177
          %v5492 = vmul.f32 %v5042, %v5491
          %v5493 = vrcp.pop %v5182
          %v5494 = vmul.f32 %v5043, %v5493
          %v5495 = vrcp.pop %v5187
          %v5496 = vmul.f32 %v5044, %v5495
          %v5497 = vrcp.pop %v5192
          %v5498 = vmul.f32 %v5045, %v5497
          %v5499 = vrcp.pop %v5197
          %v5500 = vmul.f32 %v5046, %v5499
          %v5501 = vrcp.pop %v5202
          %v5502 = vmul.f32 %v5047, %v5501
          %v5503 = vrcp.pop %v5207
          %v5504 = vmul.f32 %v5048, %v5503
          %v5505 = vrcp.pop %v5212
          %v5506 = vmul.f32 %v5049, %v5505
          %v5507 = vrcp.pop %v5217
          %v5508 = vmul.f32 %v5050, %v5507
          %v5509 = vrcp.pop %v5222
          %v5510 = vmul.f32 %v5051, %v5509
          %v5511 = vrcp.pop %v5227
          %v5512 = vmul.f32 %v5052, %v5511
          %v5513 = vrcp.pop %v5232
          %v5514 = vmul.f32 %v5053, %v5513
          %v5515 = vrcp.pop %v5237
          %v5516 = vmul.f32 %v5054, %v5515
          %v5517 = vrcp.pop %v5242
          %v5518 = vmul.f32 %v5055, %v5517
          %v5519 = vrcp.pop %v5247
          %v5520 = vmul.f32 %v5056, %v5519
          %v5521 = vrcp.pop %v5252
          %v5522 = vmul.f32 %v5057, %v5521
          %v5523 = vrcp.pop %v5257
          %v5524 = vmul.f32 %v5058, %v5523
          %v5525 = vrcp.pop %v5262
          %v5526 = vmul.f32 %v5059, %v5525
          %v5527 = vrcp.pop %v5267
          %v5528 = vmul.f32 %v5060, %v5527
          %v5529 = vrcp.pop %v5272
          %v5530 = vmul.f32 %v5061, %v5529
          %v5531 = vrcp.pop %v5277
          %v5532 = vmul.f32 %v5062, %v5531
          %v5533 = vrcp.pop %v5282
          %v5534 = vmul.f32 %v5063, %v5533
          %v5535 = vrcp.pop %v5287
          %v5536 = vmul.f32 %v5064, %v5535
          %v5537 = vrcp.pop %v5292
          %v5538 = vmul.f32 %v5065, %v5537
          %v5539 = vrcp.pop %v5297
          %v5540 = vmul.f32 %v5066, %v5539
          %v5541 = vrcp.pop %v5302
          %v5542 = vmul.f32 %v5067, %v5541
          %v5543 = vrcp.pop %v5307
          %v5544 = vmul.f32 %v5068, %v5543
          %v5545 = vrcp.pop %v5312
          %v5546 = vmul.f32 %v5069, %v5545
          %v5547 = vrcp.pop %v5317
          %v5548 = vmul.f32 %v5070, %v5547
          %v5549 = vrcp.pop %v5322
          %v5550 = vmul.f32 %v5071, %v5549
          %v5551 = vrcp.pop %v5327
          %v5552 = vmul.f32 %v5072, %v5551
          %v5553 = vrcp.pop %v5332
          %v5554 = vmul.f32 %v5073, %v5553
          %v5555 = vrcp.pop %v5337
          %v5556 = vmul.f32 %v5074, %v5555
          %v5557 = vrcp.pop %v5342
          %v5558 = vmul.f32 %v5075, %v5557
          %v5559 = vrcp.pop %v5347
          %v5560 = vmul.f32 %v5076, %v5559
          %v5561 = vrcp.pop %v5352
          %v5562 = vmul.f32 %v5077, %v5561
          %v5563 = vrcp.pop %v5357
          %v5564 = vmul.f32 %v5078, %v5563
          %v5565 = vrcp.pop %v5362
          %v5566 = vmul.f32 %v5079, %v5565
          %v5567 = vrcp.pop %v5367
          %v5568 = vmul.f32 %v5080, %v5567
          %v5569 = vrcp.pop %v5372
          %v5570 = vmul.f32 %v5081, %v5569
          %v5571 = vrcp.pop %v5377
          %v5572 = vmul.f32 %v5082, %v5571
          %v5573 = vrcp.pop %v5382
          %v5574 = vmul.f32 %v5083, %v5573
          %v5575 = vrcp.pop %v5387
          %v5576 = vmul.f32 %v5084, %v5575
          %v5577 = vrcp.pop %v5392
          %v5578 = vmul.f32 %v5085, %v5577
          %v5579 = vrcp.pop %v5397
          %v5580 = vmul.f32 %v5086, %v5579
          %v5581 = vrcp.pop %v5402
          %v5582 = vmul.f32 %v5087, %v5581
          %v5583 = vrcp.pop %v5407
          %v5584 = vmul.f32 %v5088, %v5583
          %v5585 = vrcp.pop %v5412
          %v5586 = vmul.f32 %v5089, %v5585
          %v5587 = vrcp.pop %v5417
          %v5588 = vmul.f32 %v5090, %v5587
          %v5589 = vrcp.pop %v5422
          %v5590 = vmul.f32 %v5091, %v5589
          %v5591 = vrcp.pop %v5427
          %v5592 = vmul.f32 %v5092, %v5591
          %v5593 = vrcp.pop %v5432
          %v5594 = vmul.f32 %v5093, %v5593
          %v5595 = vrcp.pop %v5437
          %v5596 = vmul.f32 %v5094, %v5595
          %v5597 = vrcp.pop %v5442
          %v5598 = vmul.f32 %v5095, %v5597
          %v5599 = vrcp.pop %v5447
          %v5600 = vmul.f32 %v5096, %v5599
          %v5601 = vrcp.pop %v5452
          %v5602 = vmul.f32 %v5097, %v5601
          %v5603 = vrcp.pop %v5457
          %v5604 = vmul.f32 %v5098, %v5603
          %v5605 = vrcp.pop %v5462
          %v5606 = vmul.f32 %v5099, %v5605
          %v5607 = vrcp.pop %v5467
          %v5608 = vmul.f32 %v5100, %v5607
          %v5609 = vrcp.pop %v5472
          %v5610 = vmul.f32 %v5101, %v5609
          %v5611 = vrcp.pop %v5477
          %v5612 = vmul.f32 %v5102, %v5611
          %v5613 = vrcp.pop %v5482
          %v5614 = vmul.f32 %v5103, %v5613
          %v5615 = vrcp.pop %v5487
          %v5616 = vmul.f32 %v5104, %v5615
          %v5617 = vcombine.low %v5490, %v5554
          %v5618 = vcombine.high %v5490, %v5554
          %v5620 = vunpack.c.l.s4 1983009808
          %v5621 = vunpack.c.0.s8 %v5620
          %v5622 = vlaneseq
          %v5623 = vshrl.u32 %v5622, 7
          %v5624 = vsub.s32 %v5621, %v5623
          %v5625 = vrot.slane %v5617, %v5624
          %v5627 = vunpack.c.l.s4 1983009808
          %v5628 = vunpack.c.0.s8 %v5627
          %v5629 = vlaneseq
          %v5630 = vshrl.u32 %v5629, 7
          %v5631 = vsub.s32 %v5628, %v5630
          %v5632 = vrot.slane %v5618, %v5631
          %v5633 = vcombine.low %v5522, %v5586
          %v5634 = vcombine.high %v5522, %v5586
          %v5636 = vunpack.c.l.s4 1983009808
          %v5637 = vunpack.c.0.s8 %v5636
          %v5638 = vlaneseq
          %v5639 = vshrl.u32 %v5638, 7
          %v5640 = vsub.s32 %v5637, %v5639
          %v5641 = vrot.slane %v5633, %v5640
          %v5643 = vunpack.c.l.s4 1983009808
          %v5644 = vunpack.c.0.s8 %v5643
          %v5645 = vlaneseq
          %v5646 = vshrl.u32 %v5645, 7
          %v5647 = vsub.s32 %v5644, %v5646
          %v5648 = vrot.slane %v5634, %v5647
          %v5649 = vcombine.low %v5625, %v5641
          %v5650 = vcombine.high %v5625, %v5641
          %v5652 = vunpack.c.l.s4 1934713408
          %v5653 = vunpack.c.0.s8 %v5652
          %v5654 = vlaneseq
          %v5655 = vshrl.u32 %v5654, 7
          %v5656 = vsub.s32 %v5653, %v5655
          %v5657 = vrot.slane %v5649, %v5656
          %v5659 = vunpack.c.l.s4 1934713408
          %v5660 = vunpack.c.0.s8 %v5659
          %v5661 = vlaneseq
          %v5662 = vshrl.u32 %v5661, 7
          %v5663 = vsub.s32 %v5660, %v5662
          %v5664 = vrot.slane %v5650, %v5663
          %v5665 = vcombine.low %v5632, %v5648
          %v5666 = vcombine.high %v5632, %v5648
          %v5668 = vunpack.c.l.s4 1934713408
          %v5669 = vunpack.c.0.s8 %v5668
          %v5670 = vlaneseq
          %v5671 = vshrl.u32 %v5670, 7
          %v5672 = vsub.s32 %v5669, %v5671
          %v5673 = vrot.slane %v5665, %v5672
          %v5675 = vunpack.c.l.s4 1934713408
          %v5676 = vunpack.c.0.s8 %v5675
          %v5677 = vlaneseq
          %v5678 = vshrl.u32 %v5677, 7
          %v5679 = vsub.s32 %v5676, %v5678
          %v5680 = vrot.slane %v5666, %v5679
          %v5681 = vcombine.high %v5657, 0.0
          %v5682 = vcombine.high %v5664, 0.0
          %v5683 = vcombine.high %v5673, 0.0
          %v5684 = vcombine.high %v5680, 0.0
          %v5685 = vcombine.low %v5492, %v5556
          %v5686 = vcombine.high %v5492, %v5556
          %v5688 = vunpack.c.l.s4 1983009808
          %v5689 = vunpack.c.0.s8 %v5688
          %v5690 = vlaneseq
          %v5691 = vshrl.u32 %v5690, 7
          %v5692 = vsub.s32 %v5689, %v5691
          %v5693 = vrot.slane %v5685, %v5692
          %v5695 = vunpack.c.l.s4 1983009808
          %v5696 = vunpack.c.0.s8 %v5695
          %v5697 = vlaneseq
          %v5698 = vshrl.u32 %v5697, 7
          %v5699 = vsub.s32 %v5696, %v5698
          %v5700 = vrot.slane %v5686, %v5699
          %v5701 = vcombine.low %v5524, %v5588
          %v5702 = vcombine.high %v5524, %v5588
          %v5704 = vunpack.c.l.s4 1983009808
          %v5705 = vunpack.c.0.s8 %v5704
          %v5706 = vlaneseq
          %v5707 = vshrl.u32 %v5706, 7
          %v5708 = vsub.s32 %v5705, %v5707
          %v5709 = vrot.slane %v5701, %v5708
          %v5711 = vunpack.c.l.s4 1983009808
          %v5712 = vunpack.c.0.s8 %v5711
          %v5713 = vlaneseq
          %v5714 = vshrl.u32 %v5713, 7
          %v5715 = vsub.s32 %v5712, %v5714
          %v5716 = vrot.slane %v5702, %v5715
          %v5717 = vcombine.low %v5693, %v5709
          %v5718 = vcombine.high %v5693, %v5709
          %v5720 = vunpack.c.l.s4 1934713408
          %v5721 = vunpack.c.0.s8 %v5720
          %v5722 = vlaneseq
          %v5723 = vshrl.u32 %v5722, 7
          %v5724 = vsub.s32 %v5721, %v5723
          %v5725 = vrot.slane %v5717, %v5724
          %v5727 = vunpack.c.l.s4 1934713408
          %v5728 = vunpack.c.0.s8 %v5727
          %v5729 = vlaneseq
          %v5730 = vshrl.u32 %v5729, 7
          %v5731 = vsub.s32 %v5728, %v5730
          %v5732 = vrot.slane %v5718, %v5731
          %v5733 = vcombine.low %v5700, %v5716
          %v5734 = vcombine.high %v5700, %v5716
          %v5736 = vunpack.c.l.s4 1934713408
          %v5737 = vunpack.c.0.s8 %v5736
          %v5738 = vlaneseq
          %v5739 = vshrl.u32 %v5738, 7
          %v5740 = vsub.s32 %v5737, %v5739
          %v5741 = vrot.slane %v5733, %v5740
          %v5743 = vunpack.c.l.s4 1934713408
          %v5744 = vunpack.c.0.s8 %v5743
          %v5745 = vlaneseq
          %v5746 = vshrl.u32 %v5745, 7
          %v5747 = vsub.s32 %v5744, %v5746
          %v5748 = vrot.slane %v5734, %v5747
          %v5749 = vcombine.high %v5725, 0.0
          %v5750 = vcombine.high %v5732, 0.0
          %v5751 = vcombine.high %v5741, 0.0
          %v5752 = vcombine.high %v5748, 0.0
          %v5753 = vcombine.low %v5494, %v5558
          %v5754 = vcombine.high %v5494, %v5558
          %v5756 = vunpack.c.l.s4 1983009808
          %v5757 = vunpack.c.0.s8 %v5756
          %v5758 = vlaneseq
          %v5759 = vshrl.u32 %v5758, 7
          %v5760 = vsub.s32 %v5757, %v5759
          %v5761 = vrot.slane %v5753, %v5760
          %v5763 = vunpack.c.l.s4 1983009808
          %v5764 = vunpack.c.0.s8 %v5763
          %v5765 = vlaneseq
          %v5766 = vshrl.u32 %v5765, 7
          %v5767 = vsub.s32 %v5764, %v5766
          %v5768 = vrot.slane %v5754, %v5767
          %v5769 = vcombine.low %v5526, %v5590
          %v5770 = vcombine.high %v5526, %v5590
          %v5772 = vunpack.c.l.s4 1983009808
          %v5773 = vunpack.c.0.s8 %v5772
          %v5774 = vlaneseq
          %v5775 = vshrl.u32 %v5774, 7
          %v5776 = vsub.s32 %v5773, %v5775
          %v5777 = vrot.slane %v5769, %v5776
          %v5779 = vunpack.c.l.s4 1983009808
          %v5780 = vunpack.c.0.s8 %v5779
          %v5781 = vlaneseq
          %v5782 = vshrl.u32 %v5781, 7
          %v5783 = vsub.s32 %v5780, %v5782
          %v5784 = vrot.slane %v5770, %v5783
          %v5785 = vcombine.low %v5761, %v5777
          %v5786 = vcombine.high %v5761, %v5777
          %v5788 = vunpack.c.l.s4 1934713408
          %v5789 = vunpack.c.0.s8 %v5788
          %v5790 = vlaneseq
          %v5791 = vshrl.u32 %v5790, 7
          %v5792 = vsub.s32 %v5789, %v5791
          %v5793 = vrot.slane %v5785, %v5792
          %v5795 = vunpack.c.l.s4 1934713408
          %v5796 = vunpack.c.0.s8 %v5795
          %v5797 = vlaneseq
          %v5798 = vshrl.u32 %v5797, 7
          %v5799 = vsub.s32 %v5796, %v5798
          %v5800 = vrot.slane %v5786, %v5799
          %v5801 = vcombine.low %v5768, %v5784
          %v5802 = vcombine.high %v5768, %v5784
          %v5804 = vunpack.c.l.s4 1934713408
          %v5805 = vunpack.c.0.s8 %v5804
          %v5806 = vlaneseq
          %v5807 = vshrl.u32 %v5806, 7
          %v5808 = vsub.s32 %v5805, %v5807
          %v5809 = vrot.slane %v5801, %v5808
          %v5811 = vunpack.c.l.s4 1934713408
          %v5812 = vunpack.c.0.s8 %v5811
          %v5813 = vlaneseq
          %v5814 = vshrl.u32 %v5813, 7
          %v5815 = vsub.s32 %v5812, %v5814
          %v5816 = vrot.slane %v5802, %v5815
          %v5817 = vcombine.high %v5793, 0.0
          %v5818 = vcombine.high %v5800, 0.0
          %v5819 = vcombine.high %v5809, 0.0
          %v5820 = vcombine.high %v5816, 0.0
          %v5821 = vcombine.low %v5496, %v5560
          %v5822 = vcombine.high %v5496, %v5560
          %v5824 = vunpack.c.l.s4 1983009808
          %v5825 = vunpack.c.0.s8 %v5824
          %v5826 = vlaneseq
          %v5827 = vshrl.u32 %v5826, 7
          %v5828 = vsub.s32 %v5825, %v5827
          %v5829 = vrot.slane %v5821, %v5828
          %v5831 = vunpack.c.l.s4 1983009808
          %v5832 = vunpack.c.0.s8 %v5831
          %v5833 = vlaneseq
          %v5834 = vshrl.u32 %v5833, 7
          %v5835 = vsub.s32 %v5832, %v5834
          %v5836 = vrot.slane %v5822, %v5835
          %v5837 = vcombine.low %v5528, %v5592
          %v5838 = vcombine.high %v5528, %v5592
          %v5840 = vunpack.c.l.s4 1983009808
          %v5841 = vunpack.c.0.s8 %v5840
          %v5842 = vlaneseq
          %v5843 = vshrl.u32 %v5842, 7
          %v5844 = vsub.s32 %v5841, %v5843
          %v5845 = vrot.slane %v5837, %v5844
          %v5847 = vunpack.c.l.s4 1983009808
          %v5848 = vunpack.c.0.s8 %v5847
          %v5849 = vlaneseq
          %v5850 = vshrl.u32 %v5849, 7
          %v5851 = vsub.s32 %v5848, %v5850
          %v5852 = vrot.slane %v5838, %v5851
          %v5853 = vcombine.low %v5829, %v5845
          %v5854 = vcombine.high %v5829, %v5845
          %v5856 = vunpack.c.l.s4 1934713408
          %v5857 = vunpack.c.0.s8 %v5856
          %v5858 = vlaneseq
          %v5859 = vshrl.u32 %v5858, 7
          %v5860 = vsub.s32 %v5857, %v5859
          %v5861 = vrot.slane %v5853, %v5860
          %v5863 = vunpack.c.l.s4 1934713408
          %v5864 = vunpack.c.0.s8 %v5863
          %v5865 = vlaneseq
          %v5866 = vshrl.u32 %v5865, 7
          %v5867 = vsub.s32 %v5864, %v5866
          %v5868 = vrot.slane %v5854, %v5867
          %v5869 = vcombine.low %v5836, %v5852
          %v5870 = vcombine.high %v5836, %v5852
          %v5872 = vunpack.c.l.s4 1934713408
          %v5873 = vunpack.c.0.s8 %v5872
          %v5874 = vlaneseq
          %v5875 = vshrl.u32 %v5874, 7
          %v5876 = vsub.s32 %v5873, %v5875
          %v5877 = vrot.slane %v5869, %v5876
          %v5879 = vunpack.c.l.s4 1934713408
          %v5880 = vunpack.c.0.s8 %v5879
          %v5881 = vlaneseq
          %v5882 = vshrl.u32 %v5881, 7
          %v5883 = vsub.s32 %v5880, %v5882
          %v5884 = vrot.slane %v5870, %v5883
          %v5885 = vcombine.high %v5861, 0.0
          %v5886 = vcombine.high %v5868, 0.0
          %v5887 = vcombine.high %v5877, 0.0
          %v5888 = vcombine.high %v5884, 0.0
          %v5889 = vcombine.low %v5498, %v5562
          %v5890 = vcombine.high %v5498, %v5562
          %v5892 = vunpack.c.l.s4 1983009808
          %v5893 = vunpack.c.0.s8 %v5892
          %v5894 = vlaneseq
          %v5895 = vshrl.u32 %v5894, 7
          %v5896 = vsub.s32 %v5893, %v5895
          %v5897 = vrot.slane %v5889, %v5896
          %v5899 = vunpack.c.l.s4 1983009808
          %v5900 = vunpack.c.0.s8 %v5899
          %v5901 = vlaneseq
          %v5902 = vshrl.u32 %v5901, 7
          %v5903 = vsub.s32 %v5900, %v5902
          %v5904 = vrot.slane %v5890, %v5903
          %v5905 = vcombine.low %v5530, %v5594
          %v5906 = vcombine.high %v5530, %v5594
          %v5908 = vunpack.c.l.s4 1983009808
          %v5909 = vunpack.c.0.s8 %v5908
          %v5910 = vlaneseq
          %v5911 = vshrl.u32 %v5910, 7
          %v5912 = vsub.s32 %v5909, %v5911
          %v5913 = vrot.slane %v5905, %v5912
          %v5915 = vunpack.c.l.s4 1983009808
          %v5916 = vunpack.c.0.s8 %v5915
          %v5917 = vlaneseq
          %v5918 = vshrl.u32 %v5917, 7
          %v5919 = vsub.s32 %v5916, %v5918
          %v5920 = vrot.slane %v5906, %v5919
          %v5921 = vcombine.low %v5897, %v5913
          %v5922 = vcombine.high %v5897, %v5913
          %v5924 = vunpack.c.l.s4 1934713408
          %v5925 = vunpack.c.0.s8 %v5924
          %v5926 = vlaneseq
          %v5927 = vshrl.u32 %v5926, 7
          %v5928 = vsub.s32 %v5925, %v5927
          %v5929 = vrot.slane %v5921, %v5928
          %v5931 = vunpack.c.l.s4 1934713408
          %v5932 = vunpack.c.0.s8 %v5931
          %v5933 = vlaneseq
          %v5934 = vshrl.u32 %v5933, 7
          %v5935 = vsub.s32 %v5932, %v5934
          %v5936 = vrot.slane %v5922, %v5935
          %v5937 = vcombine.low %v5904, %v5920
          %v5938 = vcombine.high %v5904, %v5920
          %v5940 = vunpack.c.l.s4 1934713408
          %v5941 = vunpack.c.0.s8 %v5940
          %v5942 = vlaneseq
          %v5943 = vshrl.u32 %v5942, 7
          %v5944 = vsub.s32 %v5941, %v5943
          %v5945 = vrot.slane %v5937, %v5944
          %v5947 = vunpack.c.l.s4 1934713408
          %v5948 = vunpack.c.0.s8 %v5947
          %v5949 = vlaneseq
          %v5950 = vshrl.u32 %v5949, 7
          %v5951 = vsub.s32 %v5948, %v5950
          %v5952 = vrot.slane %v5938, %v5951
          %v5953 = vcombine.high %v5929, 0.0
          %v5954 = vcombine.high %v5936, 0.0
          %v5955 = vcombine.high %v5945, 0.0
          %v5956 = vcombine.high %v5952, 0.0
          %v5957 = vcombine.low %v5500, %v5564
          %v5958 = vcombine.high %v5500, %v5564
          %v5960 = vunpack.c.l.s4 1983009808
          %v5961 = vunpack.c.0.s8 %v5960
          %v5962 = vlaneseq
          %v5963 = vshrl.u32 %v5962, 7
          %v5964 = vsub.s32 %v5961, %v5963
          %v5965 = vrot.slane %v5957, %v5964
          %v5967 = vunpack.c.l.s4 1983009808
          %v5968 = vunpack.c.0.s8 %v5967
          %v5969 = vlaneseq
          %v5970 = vshrl.u32 %v5969, 7
          %v5971 = vsub.s32 %v5968, %v5970
          %v5972 = vrot.slane %v5958, %v5971
          %v5973 = vcombine.low %v5532, %v5596
          %v5974 = vcombine.high %v5532, %v5596
          %v5976 = vunpack.c.l.s4 1983009808
          %v5977 = vunpack.c.0.s8 %v5976
          %v5978 = vlaneseq
          %v5979 = vshrl.u32 %v5978, 7
          %v5980 = vsub.s32 %v5977, %v5979
          %v5981 = vrot.slane %v5973, %v5980
          %v5983 = vunpack.c.l.s4 1983009808
          %v5984 = vunpack.c.0.s8 %v5983
          %v5985 = vlaneseq
          %v5986 = vshrl.u32 %v5985, 7
          %v5987 = vsub.s32 %v5984, %v5986
          %v5988 = vrot.slane %v5974, %v5987
          %v5989 = vcombine.low %v5965, %v5981
          %v5990 = vcombine.high %v5965, %v5981
          %v5992 = vunpack.c.l.s4 1934713408
          %v5993 = vunpack.c.0.s8 %v5992
          %v5994 = vlaneseq
          %v5995 = vshrl.u32 %v5994, 7
          %v5996 = vsub.s32 %v5993, %v5995
          %v5997 = vrot.slane %v5989, %v5996
          %v5999 = vunpack.c.l.s4 1934713408
          %v6000 = vunpack.c.0.s8 %v5999
          %v6001 = vlaneseq
          %v6002 = vshrl.u32 %v6001, 7
          %v6003 = vsub.s32 %v6000, %v6002
          %v6004 = vrot.slane %v5990, %v6003
          %v6005 = vcombine.low %v5972, %v5988
          %v6006 = vcombine.high %v5972, %v5988
          %v6008 = vunpack.c.l.s4 1934713408
          %v6009 = vunpack.c.0.s8 %v6008
          %v6010 = vlaneseq
          %v6011 = vshrl.u32 %v6010, 7
          %v6012 = vsub.s32 %v6009, %v6011
          %v6013 = vrot.slane %v6005, %v6012
          %v6015 = vunpack.c.l.s4 1934713408
          %v6016 = vunpack.c.0.s8 %v6015
          %v6017 = vlaneseq
          %v6018 = vshrl.u32 %v6017, 7
          %v6019 = vsub.s32 %v6016, %v6018
          %v6020 = vrot.slane %v6006, %v6019
          %v6021 = vcombine.high %v5997, 0.0
          %v6022 = vcombine.high %v6004, 0.0
          %v6023 = vcombine.high %v6013, 0.0
          %v6024 = vcombine.high %v6020, 0.0
          %v6025 = vcombine.low %v5502, %v5566
          %v6026 = vcombine.high %v5502, %v5566
          %v6028 = vunpack.c.l.s4 1983009808
          %v6029 = vunpack.c.0.s8 %v6028
          %v6030 = vlaneseq
          %v6031 = vshrl.u32 %v6030, 7
          %v6032 = vsub.s32 %v6029, %v6031
          %v6033 = vrot.slane %v6025, %v6032
          %v6035 = vunpack.c.l.s4 1983009808
          %v6036 = vunpack.c.0.s8 %v6035
          %v6037 = vlaneseq
          %v6038 = vshrl.u32 %v6037, 7
          %v6039 = vsub.s32 %v6036, %v6038
          %v6040 = vrot.slane %v6026, %v6039
          %v6041 = vcombine.low %v5534, %v5598
          %v6042 = vcombine.high %v5534, %v5598
          %v6044 = vunpack.c.l.s4 1983009808
          %v6045 = vunpack.c.0.s8 %v6044
          %v6046 = vlaneseq
          %v6047 = vshrl.u32 %v6046, 7
          %v6048 = vsub.s32 %v6045, %v6047
          %v6049 = vrot.slane %v6041, %v6048
          %v6051 = vunpack.c.l.s4 1983009808
          %v6052 = vunpack.c.0.s8 %v6051
          %v6053 = vlaneseq
          %v6054 = vshrl.u32 %v6053, 7
          %v6055 = vsub.s32 %v6052, %v6054
          %v6056 = vrot.slane %v6042, %v6055
          %v6057 = vcombine.low %v6033, %v6049
          %v6058 = vcombine.high %v6033, %v6049
          %v6060 = vunpack.c.l.s4 1934713408
          %v6061 = vunpack.c.0.s8 %v6060
          %v6062 = vlaneseq
          %v6063 = vshrl.u32 %v6062, 7
          %v6064 = vsub.s32 %v6061, %v6063
          %v6065 = vrot.slane %v6057, %v6064
          %v6067 = vunpack.c.l.s4 1934713408
          %v6068 = vunpack.c.0.s8 %v6067
          %v6069 = vlaneseq
          %v6070 = vshrl.u32 %v6069, 7
          %v6071 = vsub.s32 %v6068, %v6070
          %v6072 = vrot.slane %v6058, %v6071
          %v6073 = vcombine.low %v6040, %v6056
          %v6074 = vcombine.high %v6040, %v6056
          %v6076 = vunpack.c.l.s4 1934713408
          %v6077 = vunpack.c.0.s8 %v6076
          %v6078 = vlaneseq
          %v6079 = vshrl.u32 %v6078, 7
          %v6080 = vsub.s32 %v6077, %v6079
          %v6081 = vrot.slane %v6073, %v6080
          %v6083 = vunpack.c.l.s4 1934713408
          %v6084 = vunpack.c.0.s8 %v6083
          %v6085 = vlaneseq
          %v6086 = vshrl.u32 %v6085, 7
          %v6087 = vsub.s32 %v6084, %v6086
          %v6088 = vrot.slane %v6074, %v6087
          %v6089 = vcombine.high %v6065, 0.0
          %v6090 = vcombine.high %v6072, 0.0
          %v6091 = vcombine.high %v6081, 0.0
          %v6092 = vcombine.high %v6088, 0.0
          %v6093 = vcombine.low %v5504, %v5568
          %v6094 = vcombine.high %v5504, %v5568
          %v6096 = vunpack.c.l.s4 1983009808
          %v6097 = vunpack.c.0.s8 %v6096
          %v6098 = vlaneseq
          %v6099 = vshrl.u32 %v6098, 7
          %v6100 = vsub.s32 %v6097, %v6099
          %v6101 = vrot.slane %v6093, %v6100
          %v6103 = vunpack.c.l.s4 1983009808
          %v6104 = vunpack.c.0.s8 %v6103
          %v6105 = vlaneseq
          %v6106 = vshrl.u32 %v6105, 7
          %v6107 = vsub.s32 %v6104, %v6106
          %v6108 = vrot.slane %v6094, %v6107
          %v6109 = vcombine.low %v5536, %v5600
          %v6110 = vcombine.high %v5536, %v5600
          %v6112 = vunpack.c.l.s4 1983009808
          %v6113 = vunpack.c.0.s8 %v6112
          %v6114 = vlaneseq
          %v6115 = vshrl.u32 %v6114, 7
          %v6116 = vsub.s32 %v6113, %v6115
          %v6117 = vrot.slane %v6109, %v6116
          %v6119 = vunpack.c.l.s4 1983009808
          %v6120 = vunpack.c.0.s8 %v6119
          %v6121 = vlaneseq
          %v6122 = vshrl.u32 %v6121, 7
          %v6123 = vsub.s32 %v6120, %v6122
          %v6124 = vrot.slane %v6110, %v6123
          %v6125 = vcombine.low %v6101, %v6117
          %v6126 = vcombine.high %v6101, %v6117
          %v6128 = vunpack.c.l.s4 1934713408
          %v6129 = vunpack.c.0.s8 %v6128
          %v6130 = vlaneseq
          %v6131 = vshrl.u32 %v6130, 7
          %v6132 = vsub.s32 %v6129, %v6131
          %v6133 = vrot.slane %v6125, %v6132
          %v6135 = vunpack.c.l.s4 1934713408
          %v6136 = vunpack.c.0.s8 %v6135
          %v6137 = vlaneseq
          %v6138 = vshrl.u32 %v6137, 7
          %v6139 = vsub.s32 %v6136, %v6138
          %v6140 = vrot.slane %v6126, %v6139
          %v6141 = vcombine.low %v6108, %v6124
          %v6142 = vcombine.high %v6108, %v6124
          %v6144 = vunpack.c.l.s4 1934713408
          %v6145 = vunpack.c.0.s8 %v6144
          %v6146 = vlaneseq
          %v6147 = vshrl.u32 %v6146, 7
          %v6148 = vsub.s32 %v6145, %v6147
          %v6149 = vrot.slane %v6141, %v6148
          %v6151 = vunpack.c.l.s4 1934713408
          %v6152 = vunpack.c.0.s8 %v6151
          %v6153 = vlaneseq
          %v6154 = vshrl.u32 %v6153, 7
          %v6155 = vsub.s32 %v6152, %v6154
          %v6156 = vrot.slane %v6142, %v6155
          %v6157 = vcombine.high %v6133, 0.0
          %v6158 = vcombine.high %v6140, 0.0
          %v6159 = vcombine.high %v6149, 0.0
          %v6160 = vcombine.high %v6156, 0.0
          %v6161 = vcombine.low %v5506, %v5570
          %v6162 = vcombine.high %v5506, %v5570
          %v6164 = vunpack.c.l.s4 1983009808
          %v6165 = vunpack.c.0.s8 %v6164
          %v6166 = vlaneseq
          %v6167 = vshrl.u32 %v6166, 7
          %v6168 = vsub.s32 %v6165, %v6167
          %v6169 = vrot.slane %v6161, %v6168
          %v6171 = vunpack.c.l.s4 1983009808
          %v6172 = vunpack.c.0.s8 %v6171
          %v6173 = vlaneseq
          %v6174 = vshrl.u32 %v6173, 7
          %v6175 = vsub.s32 %v6172, %v6174
          %v6176 = vrot.slane %v6162, %v6175
          %v6177 = vcombine.low %v5538, %v5602
          %v6178 = vcombine.high %v5538, %v5602
          %v6180 = vunpack.c.l.s4 1983009808
          %v6181 = vunpack.c.0.s8 %v6180
          %v6182 = vlaneseq
          %v6183 = vshrl.u32 %v6182, 7
          %v6184 = vsub.s32 %v6181, %v6183
          %v6185 = vrot.slane %v6177, %v6184
          %v6187 = vunpack.c.l.s4 1983009808
          %v6188 = vunpack.c.0.s8 %v6187
          %v6189 = vlaneseq
          %v6190 = vshrl.u32 %v6189, 7
          %v6191 = vsub.s32 %v6188, %v6190
          %v6192 = vrot.slane %v6178, %v6191
          %v6193 = vcombine.low %v6169, %v6185
          %v6194 = vcombine.high %v6169, %v6185
          %v6196 = vunpack.c.l.s4 1934713408
          %v6197 = vunpack.c.0.s8 %v6196
          %v6198 = vlaneseq
          %v6199 = vshrl.u32 %v6198, 7
          %v6200 = vsub.s32 %v6197, %v6199
          %v6201 = vrot.slane %v6193, %v6200
          %v6203 = vunpack.c.l.s4 1934713408
          %v6204 = vunpack.c.0.s8 %v6203
          %v6205 = vlaneseq
          %v6206 = vshrl.u32 %v6205, 7
          %v6207 = vsub.s32 %v6204, %v6206
          %v6208 = vrot.slane %v6194, %v6207
          %v6209 = vcombine.low %v6176, %v6192
          %v6210 = vcombine.high %v6176, %v6192
          %v6212 = vunpack.c.l.s4 1934713408
          %v6213 = vunpack.c.0.s8 %v6212
          %v6214 = vlaneseq
          %v6215 = vshrl.u32 %v6214, 7
          %v6216 = vsub.s32 %v6213, %v6215
          %v6217 = vrot.slane %v6209, %v6216
          %v6219 = vunpack.c.l.s4 1934713408
          %v6220 = vunpack.c.0.s8 %v6219
          %v6221 = vlaneseq
          %v6222 = vshrl.u32 %v6221, 7
          %v6223 = vsub.s32 %v6220, %v6222
          %v6224 = vrot.slane %v6210, %v6223
          %v6225 = vcombine.high %v6201, 0.0
          %v6226 = vcombine.high %v6208, 0.0
          %v6227 = vcombine.high %v6217, 0.0
          %v6228 = vcombine.high %v6224, 0.0
          %v6229 = vcombine.low %v5508, %v5572
          %v6230 = vcombine.high %v5508, %v5572
          %v6232 = vunpack.c.l.s4 1983009808
          %v6233 = vunpack.c.0.s8 %v6232
          %v6234 = vlaneseq
          %v6235 = vshrl.u32 %v6234, 7
          %v6236 = vsub.s32 %v6233, %v6235
          %v6237 = vrot.slane %v6229, %v6236
          %v6239 = vunpack.c.l.s4 1983009808
          %v6240 = vunpack.c.0.s8 %v6239
          %v6241 = vlaneseq
          %v6242 = vshrl.u32 %v6241, 7
          %v6243 = vsub.s32 %v6240, %v6242
          %v6244 = vrot.slane %v6230, %v6243
          %v6245 = vcombine.low %v5540, %v5604
          %v6246 = vcombine.high %v5540, %v5604
          %v6248 = vunpack.c.l.s4 1983009808
          %v6249 = vunpack.c.0.s8 %v6248
          %v6250 = vlaneseq
          %v6251 = vshrl.u32 %v6250, 7
          %v6252 = vsub.s32 %v6249, %v6251
          %v6253 = vrot.slane %v6245, %v6252
          %v6255 = vunpack.c.l.s4 1983009808
          %v6256 = vunpack.c.0.s8 %v6255
          %v6257 = vlaneseq
          %v6258 = vshrl.u32 %v6257, 7
          %v6259 = vsub.s32 %v6256, %v6258
          %v6260 = vrot.slane %v6246, %v6259
          %v6261 = vcombine.low %v6237, %v6253
          %v6262 = vcombine.high %v6237, %v6253
          %v6264 = vunpack.c.l.s4 1934713408
          %v6265 = vunpack.c.0.s8 %v6264
          %v6266 = vlaneseq
          %v6267 = vshrl.u32 %v6266, 7
          %v6268 = vsub.s32 %v6265, %v6267
          %v6269 = vrot.slane %v6261, %v6268
          %v6271 = vunpack.c.l.s4 1934713408
          %v6272 = vunpack.c.0.s8 %v6271
          %v6273 = vlaneseq
          %v6274 = vshrl.u32 %v6273, 7
          %v6275 = vsub.s32 %v6272, %v6274
          %v6276 = vrot.slane %v6262, %v6275
          %v6277 = vcombine.low %v6244, %v6260
          %v6278 = vcombine.high %v6244, %v6260
          %v6280 = vunpack.c.l.s4 1934713408
          %v6281 = vunpack.c.0.s8 %v6280
          %v6282 = vlaneseq
          %v6283 = vshrl.u32 %v6282, 7
          %v6284 = vsub.s32 %v6281, %v6283
          %v6285 = vrot.slane %v6277, %v6284
          %v6287 = vunpack.c.l.s4 1934713408
          %v6288 = vunpack.c.0.s8 %v6287
          %v6289 = vlaneseq
          %v6290 = vshrl.u32 %v6289, 7
          %v6291 = vsub.s32 %v6288, %v6290
          %v6292 = vrot.slane %v6278, %v6291
          %v6293 = vcombine.high %v6269, 0.0
          %v6294 = vcombine.high %v6276, 0.0
          %v6295 = vcombine.high %v6285, 0.0
          %v6296 = vcombine.high %v6292, 0.0
          %v6297 = vcombine.low %v5510, %v5574
          %v6298 = vcombine.high %v5510, %v5574
          %v6300 = vunpack.c.l.s4 1983009808
          %v6301 = vunpack.c.0.s8 %v6300
          %v6302 = vlaneseq
          %v6303 = vshrl.u32 %v6302, 7
          %v6304 = vsub.s32 %v6301, %v6303
          %v6305 = vrot.slane %v6297, %v6304
          %v6307 = vunpack.c.l.s4 1983009808
          %v6308 = vunpack.c.0.s8 %v6307
          %v6309 = vlaneseq
          %v6310 = vshrl.u32 %v6309, 7
          %v6311 = vsub.s32 %v6308, %v6310
          %v6312 = vrot.slane %v6298, %v6311
          %v6313 = vcombine.low %v5542, %v5606
          %v6314 = vcombine.high %v5542, %v5606
          %v6316 = vunpack.c.l.s4 1983009808
          %v6317 = vunpack.c.0.s8 %v6316
          %v6318 = vlaneseq
          %v6319 = vshrl.u32 %v6318, 7
          %v6320 = vsub.s32 %v6317, %v6319
          %v6321 = vrot.slane %v6313, %v6320
          %v6323 = vunpack.c.l.s4 1983009808
          %v6324 = vunpack.c.0.s8 %v6323
          %v6325 = vlaneseq
          %v6326 = vshrl.u32 %v6325, 7
          %v6327 = vsub.s32 %v6324, %v6326
          %v6328 = vrot.slane %v6314, %v6327
          %v6329 = vcombine.low %v6305, %v6321
          %v6330 = vcombine.high %v6305, %v6321
          %v6332 = vunpack.c.l.s4 1934713408
          %v6333 = vunpack.c.0.s8 %v6332
          %v6334 = vlaneseq
          %v6335 = vshrl.u32 %v6334, 7
          %v6336 = vsub.s32 %v6333, %v6335
          %v6337 = vrot.slane %v6329, %v6336
          %v6339 = vunpack.c.l.s4 1934713408
          %v6340 = vunpack.c.0.s8 %v6339
          %v6341 = vlaneseq
          %v6342 = vshrl.u32 %v6341, 7
          %v6343 = vsub.s32 %v6340, %v6342
          %v6344 = vrot.slane %v6330, %v6343
          %v6345 = vcombine.low %v6312, %v6328
          %v6346 = vcombine.high %v6312, %v6328
          %v6348 = vunpack.c.l.s4 1934713408
          %v6349 = vunpack.c.0.s8 %v6348
          %v6350 = vlaneseq
          %v6351 = vshrl.u32 %v6350, 7
          %v6352 = vsub.s32 %v6349, %v6351
          %v6353 = vrot.slane %v6345, %v6352
          %v6355 = vunpack.c.l.s4 1934713408
          %v6356 = vunpack.c.0.s8 %v6355
          %v6357 = vlaneseq
          %v6358 = vshrl.u32 %v6357, 7
          %v6359 = vsub.s32 %v6356, %v6358
          %v6360 = vrot.slane %v6346, %v6359
          %v6361 = vcombine.high %v6337, 0.0
          %v6362 = vcombine.high %v6344, 0.0
          %v6363 = vcombine.high %v6353, 0.0
          %v6364 = vcombine.high %v6360, 0.0
          %v6365 = vcombine.low %v5512, %v5576
          %v6366 = vcombine.high %v5512, %v5576
          %v6368 = vunpack.c.l.s4 1983009808
          %v6369 = vunpack.c.0.s8 %v6368
          %v6370 = vlaneseq
          %v6371 = vshrl.u32 %v6370, 7
          %v6372 = vsub.s32 %v6369, %v6371
          %v6373 = vrot.slane %v6365, %v6372
          %v6375 = vunpack.c.l.s4 1983009808
          %v6376 = vunpack.c.0.s8 %v6375
          %v6377 = vlaneseq
          %v6378 = vshrl.u32 %v6377, 7
          %v6379 = vsub.s32 %v6376, %v6378
          %v6380 = vrot.slane %v6366, %v6379
          %v6381 = vcombine.low %v5544, %v5608
          %v6382 = vcombine.high %v5544, %v5608
          %v6384 = vunpack.c.l.s4 1983009808
          %v6385 = vunpack.c.0.s8 %v6384
          %v6386 = vlaneseq
          %v6387 = vshrl.u32 %v6386, 7
          %v6388 = vsub.s32 %v6385, %v6387
          %v6389 = vrot.slane %v6381, %v6388
          %v6391 = vunpack.c.l.s4 1983009808
          %v6392 = vunpack.c.0.s8 %v6391
          %v6393 = vlaneseq
          %v6394 = vshrl.u32 %v6393, 7
          %v6395 = vsub.s32 %v6392, %v6394
          %v6396 = vrot.slane %v6382, %v6395
          %v6397 = vcombine.low %v6373, %v6389
          %v6398 = vcombine.high %v6373, %v6389
          %v6400 = vunpack.c.l.s4 1934713408
          %v6401 = vunpack.c.0.s8 %v6400
          %v6402 = vlaneseq
          %v6403 = vshrl.u32 %v6402, 7
          %v6404 = vsub.s32 %v6401, %v6403
          %v6405 = vrot.slane %v6397, %v6404
          %v6407 = vunpack.c.l.s4 1934713408
          %v6408 = vunpack.c.0.s8 %v6407
          %v6409 = vlaneseq
          %v6410 = vshrl.u32 %v6409, 7
          %v6411 = vsub.s32 %v6408, %v6410
          %v6412 = vrot.slane %v6398, %v6411
          %v6413 = vcombine.low %v6380, %v6396
          %v6414 = vcombine.high %v6380, %v6396
          %v6416 = vunpack.c.l.s4 1934713408
          %v6417 = vunpack.c.0.s8 %v6416
          %v6418 = vlaneseq
          %v6419 = vshrl.u32 %v6418, 7
          %v6420 = vsub.s32 %v6417, %v6419
          %v6421 = vrot.slane %v6413, %v6420
          %v6423 = vunpack.c.l.s4 1934713408
          %v6424 = vunpack.c.0.s8 %v6423
          %v6425 = vlaneseq
          %v6426 = vshrl.u32 %v6425, 7
          %v6427 = vsub.s32 %v6424, %v6426
          %v6428 = vrot.slane %v6414, %v6427
          %v6429 = vcombine.high %v6405, 0.0
          %v6430 = vcombine.high %v6412, 0.0
          %v6431 = vcombine.high %v6421, 0.0
          %v6432 = vcombine.high %v6428, 0.0
          %v6433 = vcombine.low %v5514, %v5578
          %v6434 = vcombine.high %v5514, %v5578
          %v6436 = vunpack.c.l.s4 1983009808
          %v6437 = vunpack.c.0.s8 %v6436
          %v6438 = vlaneseq
          %v6439 = vshrl.u32 %v6438, 7
          %v6440 = vsub.s32 %v6437, %v6439
          %v6441 = vrot.slane %v6433, %v6440
          %v6443 = vunpack.c.l.s4 1983009808
          %v6444 = vunpack.c.0.s8 %v6443
          %v6445 = vlaneseq
          %v6446 = vshrl.u32 %v6445, 7
          %v6447 = vsub.s32 %v6444, %v6446
          %v6448 = vrot.slane %v6434, %v6447
          %v6449 = vcombine.low %v5546, %v5610
          %v6450 = vcombine.high %v5546, %v5610
          %v6452 = vunpack.c.l.s4 1983009808
          %v6453 = vunpack.c.0.s8 %v6452
          %v6454 = vlaneseq
          %v6455 = vshrl.u32 %v6454, 7
          %v6456 = vsub.s32 %v6453, %v6455
          %v6457 = vrot.slane %v6449, %v6456
          %v6459 = vunpack.c.l.s4 1983009808
          %v6460 = vunpack.c.0.s8 %v6459
          %v6461 = vlaneseq
          %v6462 = vshrl.u32 %v6461, 7
          %v6463 = vsub.s32 %v6460, %v6462
          %v6464 = vrot.slane %v6450, %v6463
          %v6465 = vcombine.low %v6441, %v6457
          %v6466 = vcombine.high %v6441, %v6457
          %v6468 = vunpack.c.l.s4 1934713408
          %v6469 = vunpack.c.0.s8 %v6468
          %v6470 = vlaneseq
          %v6471 = vshrl.u32 %v6470, 7
          %v6472 = vsub.s32 %v6469, %v6471
          %v6473 = vrot.slane %v6465, %v6472
          %v6475 = vunpack.c.l.s4 1934713408
          %v6476 = vunpack.c.0.s8 %v6475
          %v6477 = vlaneseq
          %v6478 = vshrl.u32 %v6477, 7
          %v6479 = vsub.s32 %v6476, %v6478
          %v6480 = vrot.slane %v6466, %v6479
          %v6481 = vcombine.low %v6448, %v6464
          %v6482 = vcombine.high %v6448, %v6464
          %v6484 = vunpack.c.l.s4 1934713408
          %v6485 = vunpack.c.0.s8 %v6484
          %v6486 = vlaneseq
          %v6487 = vshrl.u32 %v6486, 7
          %v6488 = vsub.s32 %v6485, %v6487
          %v6489 = vrot.slane %v6481, %v6488
          %v6491 = vunpack.c.l.s4 1934713408
          %v6492 = vunpack.c.0.s8 %v6491
          %v6493 = vlaneseq
          %v6494 = vshrl.u32 %v6493, 7
          %v6495 = vsub.s32 %v6492, %v6494
          %v6496 = vrot.slane %v6482, %v6495
          %v6497 = vcombine.high %v6473, 0.0
          %v6498 = vcombine.high %v6480, 0.0
          %v6499 = vcombine.high %v6489, 0.0
          %v6500 = vcombine.high %v6496, 0.0
          %v6501 = vcombine.low %v5516, %v5580
          %v6502 = vcombine.high %v5516, %v5580
          %v6504 = vunpack.c.l.s4 1983009808
          %v6505 = vunpack.c.0.s8 %v6504
          %v6506 = vlaneseq
          %v6507 = vshrl.u32 %v6506, 7
          %v6508 = vsub.s32 %v6505, %v6507
          %v6509 = vrot.slane %v6501, %v6508
          %v6511 = vunpack.c.l.s4 1983009808
          %v6512 = vunpack.c.0.s8 %v6511
          %v6513 = vlaneseq
          %v6514 = vshrl.u32 %v6513, 7
          %v6515 = vsub.s32 %v6512, %v6514
          %v6516 = vrot.slane %v6502, %v6515
          %v6517 = vcombine.low %v5548, %v5612
          %v6518 = vcombine.high %v5548, %v5612
          %v6520 = vunpack.c.l.s4 1983009808
          %v6521 = vunpack.c.0.s8 %v6520
          %v6522 = vlaneseq
          %v6523 = vshrl.u32 %v6522, 7
          %v6524 = vsub.s32 %v6521, %v6523
          %v6525 = vrot.slane %v6517, %v6524
          %v6527 = vunpack.c.l.s4 1983009808
          %v6528 = vunpack.c.0.s8 %v6527
          %v6529 = vlaneseq
          %v6530 = vshrl.u32 %v6529, 7
          %v6531 = vsub.s32 %v6528, %v6530
          %v6532 = vrot.slane %v6518, %v6531
          %v6533 = vcombine.low %v6509, %v6525
          %v6534 = vcombine.high %v6509, %v6525
          %v6536 = vunpack.c.l.s4 1934713408
          %v6537 = vunpack.c.0.s8 %v6536
          %v6538 = vlaneseq
          %v6539 = vshrl.u32 %v6538, 7
          %v6540 = vsub.s32 %v6537, %v6539
          %v6541 = vrot.slane %v6533, %v6540
          %v6543 = vunpack.c.l.s4 1934713408
          %v6544 = vunpack.c.0.s8 %v6543
          %v6545 = vlaneseq
          %v6546 = vshrl.u32 %v6545, 7
          %v6547 = vsub.s32 %v6544, %v6546
          %v6548 = vrot.slane %v6534, %v6547
          %v6549 = vcombine.low %v6516, %v6532
          %v6550 = vcombine.high %v6516, %v6532
          %v6552 = vunpack.c.l.s4 1934713408
          %v6553 = vunpack.c.0.s8 %v6552
          %v6554 = vlaneseq
          %v6555 = vshrl.u32 %v6554, 7
          %v6556 = vsub.s32 %v6553, %v6555
          %v6557 = vrot.slane %v6549, %v6556
          %v6559 = vunpack.c.l.s4 1934713408
          %v6560 = vunpack.c.0.s8 %v6559
          %v6561 = vlaneseq
          %v6562 = vshrl.u32 %v6561, 7
          %v6563 = vsub.s32 %v6560, %v6562
          %v6564 = vrot.slane %v6550, %v6563
          %v6565 = vcombine.high %v6541, 0.0
          %v6566 = vcombine.high %v6548, 0.0
          %v6567 = vcombine.high %v6557, 0.0
          %v6568 = vcombine.high %v6564, 0.0
          %v6569 = vcombine.low %v5518, %v5582
          %v6570 = vcombine.high %v5518, %v5582
          %v6572 = vunpack.c.l.s4 1983009808
          %v6573 = vunpack.c.0.s8 %v6572
          %v6574 = vlaneseq
          %v6575 = vshrl.u32 %v6574, 7
          %v6576 = vsub.s32 %v6573, %v6575
          %v6577 = vrot.slane %v6569, %v6576
          %v6579 = vunpack.c.l.s4 1983009808
          %v6580 = vunpack.c.0.s8 %v6579
          %v6581 = vlaneseq
          %v6582 = vshrl.u32 %v6581, 7
          %v6583 = vsub.s32 %v6580, %v6582
          %v6584 = vrot.slane %v6570, %v6583
          %v6585 = vcombine.low %v5550, %v5614
          %v6586 = vcombine.high %v5550, %v5614
          %v6588 = vunpack.c.l.s4 1983009808
          %v6589 = vunpack.c.0.s8 %v6588
          %v6590 = vlaneseq
          %v6591 = vshrl.u32 %v6590, 7
          %v6592 = vsub.s32 %v6589, %v6591
          %v6593 = vrot.slane %v6585, %v6592
          %v6595 = vunpack.c.l.s4 1983009808
          %v6596 = vunpack.c.0.s8 %v6595
          %v6597 = vlaneseq
          %v6598 = vshrl.u32 %v6597, 7
          %v6599 = vsub.s32 %v6596, %v6598
          %v6600 = vrot.slane %v6586, %v6599
          %v6601 = vcombine.low %v6577, %v6593
          %v6602 = vcombine.high %v6577, %v6593
          %v6604 = vunpack.c.l.s4 1934713408
          %v6605 = vunpack.c.0.s8 %v6604
          %v6606 = vlaneseq
          %v6607 = vshrl.u32 %v6606, 7
          %v6608 = vsub.s32 %v6605, %v6607
          %v6609 = vrot.slane %v6601, %v6608
          %v6611 = vunpack.c.l.s4 1934713408
          %v6612 = vunpack.c.0.s8 %v6611
          %v6613 = vlaneseq
          %v6614 = vshrl.u32 %v6613, 7
          %v6615 = vsub.s32 %v6612, %v6614
          %v6616 = vrot.slane %v6602, %v6615
          %v6617 = vcombine.low %v6584, %v6600
          %v6618 = vcombine.high %v6584, %v6600
          %v6620 = vunpack.c.l.s4 1934713408
          %v6621 = vunpack.c.0.s8 %v6620
          %v6622 = vlaneseq
          %v6623 = vshrl.u32 %v6622, 7
          %v6624 = vsub.s32 %v6621, %v6623
          %v6625 = vrot.slane %v6617, %v6624
          %v6627 = vunpack.c.l.s4 1934713408
          %v6628 = vunpack.c.0.s8 %v6627
          %v6629 = vlaneseq
          %v6630 = vshrl.u32 %v6629, 7
          %v6631 = vsub.s32 %v6628, %v6630
          %v6632 = vrot.slane %v6618, %v6631
          %v6633 = vcombine.high %v6609, 0.0
          %v6634 = vcombine.high %v6616, 0.0
          %v6635 = vcombine.high %v6625, 0.0
          %v6636 = vcombine.high %v6632, 0.0
          %v6637 = vcombine.low %v5520, %v5584
          %v6638 = vcombine.high %v5520, %v5584
          %v6640 = vunpack.c.l.s4 1983009808
          %v6641 = vunpack.c.0.s8 %v6640
          %v6642 = vlaneseq
          %v6643 = vshrl.u32 %v6642, 7
          %v6644 = vsub.s32 %v6641, %v6643
          %v6645 = vrot.slane %v6637, %v6644
          %v6647 = vunpack.c.l.s4 1983009808
          %v6648 = vunpack.c.0.s8 %v6647
          %v6649 = vlaneseq
          %v6650 = vshrl.u32 %v6649, 7
          %v6651 = vsub.s32 %v6648, %v6650
          %v6652 = vrot.slane %v6638, %v6651
          %v6653 = vcombine.low %v5552, %v5616
          %v6654 = vcombine.high %v5552, %v5616
          %v6656 = vunpack.c.l.s4 1983009808
          %v6657 = vunpack.c.0.s8 %v6656
          %v6658 = vlaneseq
          %v6659 = vshrl.u32 %v6658, 7
          %v6660 = vsub.s32 %v6657, %v6659
          %v6661 = vrot.slane %v6653, %v6660
          %v6663 = vunpack.c.l.s4 1983009808
          %v6664 = vunpack.c.0.s8 %v6663
          %v6665 = vlaneseq
          %v6666 = vshrl.u32 %v6665, 7
          %v6667 = vsub.s32 %v6664, %v6666
          %v6668 = vrot.slane %v6654, %v6667
          %v6669 = vcombine.low %v6645, %v6661
          %v6670 = vcombine.high %v6645, %v6661
          %v6672 = vunpack.c.l.s4 1934713408
          %v6673 = vunpack.c.0.s8 %v6672
          %v6674 = vlaneseq
          %v6675 = vshrl.u32 %v6674, 7
          %v6676 = vsub.s32 %v6673, %v6675
          %v6677 = vrot.slane %v6669, %v6676
          %v6679 = vunpack.c.l.s4 1934713408
          %v6680 = vunpack.c.0.s8 %v6679
          %v6681 = vlaneseq
          %v6682 = vshrl.u32 %v6681, 7
          %v6683 = vsub.s32 %v6680, %v6682
          %v6684 = vrot.slane %v6670, %v6683
          %v6685 = vcombine.low %v6652, %v6668
          %v6686 = vcombine.high %v6652, %v6668
          %v6688 = vunpack.c.l.s4 1934713408
          %v6689 = vunpack.c.0.s8 %v6688
          %v6690 = vlaneseq
          %v6691 = vshrl.u32 %v6690, 7
          %v6692 = vsub.s32 %v6689, %v6691
          %v6693 = vrot.slane %v6685, %v6692
          %v6695 = vunpack.c.l.s4 1934713408
          %v6696 = vunpack.c.0.s8 %v6695
          %v6697 = vlaneseq
          %v6698 = vshrl.u32 %v6697, 7
          %v6699 = vsub.s32 %v6696, %v6698
          %v6700 = vrot.slane %v6686, %v6699
          %v6701 = vcombine.high %v6677, 0.0
          %v6702 = vcombine.high %v6684, 0.0
          %v6703 = vcombine.high %v6693, 0.0
          %v6704 = vcombine.high %v6700, 0.0
          %v6705 = vcombine.low %v5657, %v5664
          %v6707 = vunpack.c.l.s4 1983009808
          %v6708 = vunpack.c.0.s8 %v6707
          %v6709 = vlaneseq
          %v6710 = vshrl.u32 %v6709, 7
          %v6711 = vsub.s32 %v6708, %v6710
          %v6712 = vrot.slane %v6705, %v6711
          %v6713 = vcombine.low %v5681, %v5682
          %v6715 = vunpack.c.l.s4 1983009808
          %v6716 = vunpack.c.0.s8 %v6715
          %v6717 = vlaneseq
          %v6718 = vshrl.u32 %v6717, 7
          %v6719 = vsub.s32 %v6716, %v6718
          %v6720 = vrot.slane %v6713, %v6719
          %v6721 = vcombine.low %v5673, %v5680
          %v6723 = vunpack.c.l.s4 1983009808
          %v6724 = vunpack.c.0.s8 %v6723
          %v6725 = vlaneseq
          %v6726 = vshrl.u32 %v6725, 7
          %v6727 = vsub.s32 %v6724, %v6726
          %v6728 = vrot.slane %v6721, %v6727
          %v6729 = vcombine.low %v5683, %v5684
          %v6731 = vunpack.c.l.s4 1983009808
          %v6732 = vunpack.c.0.s8 %v6731
          %v6733 = vlaneseq
          %v6734 = vshrl.u32 %v6733, 7
          %v6735 = vsub.s32 %v6732, %v6734
          %v6736 = vrot.slane %v6729, %v6735
          %v6737 = vcombine.low %v6712, %v6720
          %v6738 = vcombine.high %v6712, %v6720
          %v6740 = vunpack.c.l.s4 1934713408
          %v6741 = vunpack.c.0.s8 %v6740
          %v6742 = vlaneseq
          %v6743 = vshrl.u32 %v6742, 7
          %v6744 = vsub.s32 %v6741, %v6743
          %v6745 = vrot.slane %v6737, %v6744
          %v6747 = vunpack.c.l.s4 1934713408
          %v6748 = vunpack.c.0.s8 %v6747
          %v6749 = vlaneseq
          %v6750 = vshrl.u32 %v6749, 7
          %v6751 = vsub.s32 %v6748, %v6750
          %v6752 = vrot.slane %v6738, %v6751
          %v6753 = vcombine.low %v6728, %v6736
          %v6754 = vcombine.high %v6728, %v6736
          %v6756 = vunpack.c.l.s4 1934713408
          %v6757 = vunpack.c.0.s8 %v6756
          %v6758 = vlaneseq
          %v6759 = vshrl.u32 %v6758, 7
          %v6760 = vsub.s32 %v6757, %v6759
          %v6761 = vrot.slane %v6753, %v6760
          %v6763 = vunpack.c.l.s4 1934713408
          %v6764 = vunpack.c.0.s8 %v6763
          %v6765 = vlaneseq
          %v6766 = vshrl.u32 %v6765, 7
          %v6767 = vsub.s32 %v6764, %v6766
          %v6768 = vrot.slane %v6754, %v6767
          %v6769 = vcombine.low %v6745, %v6761
          %v6770 = vcombine.high %v6745, %v6761
          %v6771 = vcombine.low %v6752, %v6768
          %v6772 = vcombine.high %v6752, %v6768
          %v6773 = vcombine.low %v5725, %v5732
          %v6775 = vunpack.c.l.s4 1983009808
          %v6776 = vunpack.c.0.s8 %v6775
          %v6777 = vlaneseq
          %v6778 = vshrl.u32 %v6777, 7
          %v6779 = vsub.s32 %v6776, %v6778
          %v6780 = vrot.slane %v6773, %v6779
          %v6781 = vcombine.low %v5749, %v5750
          %v6783 = vunpack.c.l.s4 1983009808
          %v6784 = vunpack.c.0.s8 %v6783
          %v6785 = vlaneseq
          %v6786 = vshrl.u32 %v6785, 7
          %v6787 = vsub.s32 %v6784, %v6786
          %v6788 = vrot.slane %v6781, %v6787
          %v6789 = vcombine.low %v5741, %v5748
          %v6791 = vunpack.c.l.s4 1983009808
          %v6792 = vunpack.c.0.s8 %v6791
          %v6793 = vlaneseq
          %v6794 = vshrl.u32 %v6793, 7
          %v6795 = vsub.s32 %v6792, %v6794
          %v6796 = vrot.slane %v6789, %v6795
          %v6797 = vcombine.low %v5751, %v5752
          %v6799 = vunpack.c.l.s4 1983009808
          %v6800 = vunpack.c.0.s8 %v6799
          %v6801 = vlaneseq
          %v6802 = vshrl.u32 %v6801, 7
          %v6803 = vsub.s32 %v6800, %v6802
          %v6804 = vrot.slane %v6797, %v6803
          %v6805 = vcombine.low %v6780, %v6788
          %v6806 = vcombine.high %v6780, %v6788
          %v6808 = vunpack.c.l.s4 1934713408
          %v6809 = vunpack.c.0.s8 %v6808
          %v6810 = vlaneseq
          %v6811 = vshrl.u32 %v6810, 7
          %v6812 = vsub.s32 %v6809, %v6811
          %v6813 = vrot.slane %v6805, %v6812
          %v6815 = vunpack.c.l.s4 1934713408
          %v6816 = vunpack.c.0.s8 %v6815
          %v6817 = vlaneseq
          %v6818 = vshrl.u32 %v6817, 7
          %v6819 = vsub.s32 %v6816, %v6818
          %v6820 = vrot.slane %v6806, %v6819
          %v6821 = vcombine.low %v6796, %v6804
          %v6822 = vcombine.high %v6796, %v6804
          %v6824 = vunpack.c.l.s4 1934713408
          %v6825 = vunpack.c.0.s8 %v6824
          %v6826 = vlaneseq
          %v6827 = vshrl.u32 %v6826, 7
          %v6828 = vsub.s32 %v6825, %v6827
          %v6829 = vrot.slane %v6821, %v6828
          %v6831 = vunpack.c.l.s4 1934713408
          %v6832 = vunpack.c.0.s8 %v6831
          %v6833 = vlaneseq
          %v6834 = vshrl.u32 %v6833, 7
          %v6835 = vsub.s32 %v6832, %v6834
          %v6836 = vrot.slane %v6822, %v6835
          %v6837 = vcombine.low %v6813, %v6829
          %v6838 = vcombine.high %v6813, %v6829
          %v6839 = vcombine.low %v6820, %v6836
          %v6840 = vcombine.high %v6820, %v6836
          %v6841 = vcombine.low %v5793, %v5800
          %v6843 = vunpack.c.l.s4 1983009808
          %v6844 = vunpack.c.0.s8 %v6843
          %v6845 = vlaneseq
          %v6846 = vshrl.u32 %v6845, 7
          %v6847 = vsub.s32 %v6844, %v6846
          %v6848 = vrot.slane %v6841, %v6847
          %v6849 = vcombine.low %v5817, %v5818
          %v6851 = vunpack.c.l.s4 1983009808
          %v6852 = vunpack.c.0.s8 %v6851
          %v6853 = vlaneseq
          %v6854 = vshrl.u32 %v6853, 7
          %v6855 = vsub.s32 %v6852, %v6854
          %v6856 = vrot.slane %v6849, %v6855
          %v6857 = vcombine.low %v5809, %v5816
          %v6859 = vunpack.c.l.s4 1983009808
          %v6860 = vunpack.c.0.s8 %v6859
          %v6861 = vlaneseq
          %v6862 = vshrl.u32 %v6861, 7
          %v6863 = vsub.s32 %v6860, %v6862
          %v6864 = vrot.slane %v6857, %v6863
          %v6865 = vcombine.low %v5819, %v5820
          %v6867 = vunpack.c.l.s4 1983009808
          %v6868 = vunpack.c.0.s8 %v6867
          %v6869 = vlaneseq
          %v6870 = vshrl.u32 %v6869, 7
          %v6871 = vsub.s32 %v6868, %v6870
          %v6872 = vrot.slane %v6865, %v6871
          %v6873 = vcombine.low %v6848, %v6856
          %v6874 = vcombine.high %v6848, %v6856
          %v6876 = vunpack.c.l.s4 1934713408
          %v6877 = vunpack.c.0.s8 %v6876
          %v6878 = vlaneseq
          %v6879 = vshrl.u32 %v6878, 7
          %v6880 = vsub.s32 %v6877, %v6879
          %v6881 = vrot.slane %v6873, %v6880
          %v6883 = vunpack.c.l.s4 1934713408
          %v6884 = vunpack.c.0.s8 %v6883
          %v6885 = vlaneseq
          %v6886 = vshrl.u32 %v6885, 7
          %v6887 = vsub.s32 %v6884, %v6886
          %v6888 = vrot.slane %v6874, %v6887
          %v6889 = vcombine.low %v6864, %v6872
          %v6890 = vcombine.high %v6864, %v6872
          %v6892 = vunpack.c.l.s4 1934713408
          %v6893 = vunpack.c.0.s8 %v6892
          %v6894 = vlaneseq
          %v6895 = vshrl.u32 %v6894, 7
          %v6896 = vsub.s32 %v6893, %v6895
          %v6897 = vrot.slane %v6889, %v6896
          %v6899 = vunpack.c.l.s4 1934713408
          %v6900 = vunpack.c.0.s8 %v6899
          %v6901 = vlaneseq
          %v6902 = vshrl.u32 %v6901, 7
          %v6903 = vsub.s32 %v6900, %v6902
          %v6904 = vrot.slane %v6890, %v6903
          %v6905 = vcombine.low %v6881, %v6897
          %v6906 = vcombine.high %v6881, %v6897
          %v6907 = vcombine.low %v6888, %v6904
          %v6908 = vcombine.high %v6888, %v6904
          %v6909 = vcombine.low %v5861, %v5868
          %v6911 = vunpack.c.l.s4 1983009808
          %v6912 = vunpack.c.0.s8 %v6911
          %v6913 = vlaneseq
          %v6914 = vshrl.u32 %v6913, 7
          %v6915 = vsub.s32 %v6912, %v6914
          %v6916 = vrot.slane %v6909, %v6915
          %v6917 = vcombine.low %v5885, %v5886
          %v6919 = vunpack.c.l.s4 1983009808
          %v6920 = vunpack.c.0.s8 %v6919
          %v6921 = vlaneseq
          %v6922 = vshrl.u32 %v6921, 7
          %v6923 = vsub.s32 %v6920, %v6922
          %v6924 = vrot.slane %v6917, %v6923
          %v6925 = vcombine.low %v5877, %v5884
          %v6927 = vunpack.c.l.s4 1983009808
          %v6928 = vunpack.c.0.s8 %v6927
          %v6929 = vlaneseq
          %v6930 = vshrl.u32 %v6929, 7
          %v6931 = vsub.s32 %v6928, %v6930
          %v6932 = vrot.slane %v6925, %v6931
          %v6933 = vcombine.low %v5887, %v5888
          %v6935 = vunpack.c.l.s4 1983009808
          %v6936 = vunpack.c.0.s8 %v6935
          %v6937 = vlaneseq
          %v6938 = vshrl.u32 %v6937, 7
          %v6939 = vsub.s32 %v6936, %v6938
          %v6940 = vrot.slane %v6933, %v6939
          %v6941 = vcombine.low %v6916, %v6924
          %v6942 = vcombine.high %v6916, %v6924
          %v6944 = vunpack.c.l.s4 1934713408
          %v6945 = vunpack.c.0.s8 %v6944
          %v6946 = vlaneseq
          %v6947 = vshrl.u32 %v6946, 7
          %v6948 = vsub.s32 %v6945, %v6947
          %v6949 = vrot.slane %v6941, %v6948
          %v6951 = vunpack.c.l.s4 1934713408
          %v6952 = vunpack.c.0.s8 %v6951
          %v6953 = vlaneseq
          %v6954 = vshrl.u32 %v6953, 7
          %v6955 = vsub.s32 %v6952, %v6954
          %v6956 = vrot.slane %v6942, %v6955
          %v6957 = vcombine.low %v6932, %v6940
          %v6958 = vcombine.high %v6932, %v6940
          %v6960 = vunpack.c.l.s4 1934713408
          %v6961 = vunpack.c.0.s8 %v6960
          %v6962 = vlaneseq
          %v6963 = vshrl.u32 %v6962, 7
          %v6964 = vsub.s32 %v6961, %v6963
          %v6965 = vrot.slane %v6957, %v6964
          %v6967 = vunpack.c.l.s4 1934713408
          %v6968 = vunpack.c.0.s8 %v6967
          %v6969 = vlaneseq
          %v6970 = vshrl.u32 %v6969, 7
          %v6971 = vsub.s32 %v6968, %v6970
          %v6972 = vrot.slane %v6958, %v6971
          %v6973 = vcombine.low %v6949, %v6965
          %v6974 = vcombine.high %v6949, %v6965
          %v6975 = vcombine.low %v6956, %v6972
          %v6976 = vcombine.high %v6956, %v6972
          %v6977 = vcombine.low %v5929, %v5936
          %v6979 = vunpack.c.l.s4 1983009808
          %v6980 = vunpack.c.0.s8 %v6979
          %v6981 = vlaneseq
          %v6982 = vshrl.u32 %v6981, 7
          %v6983 = vsub.s32 %v6980, %v6982
          %v6984 = vrot.slane %v6977, %v6983
          %v6985 = vcombine.low %v5953, %v5954
          %v6987 = vunpack.c.l.s4 1983009808
          %v6988 = vunpack.c.0.s8 %v6987
          %v6989 = vlaneseq
          %v6990 = vshrl.u32 %v6989, 7
          %v6991 = vsub.s32 %v6988, %v6990
          %v6992 = vrot.slane %v6985, %v6991
          %v6993 = vcombine.low %v5945, %v5952
          %v6995 = vunpack.c.l.s4 1983009808
          %v6996 = vunpack.c.0.s8 %v6995
          %v6997 = vlaneseq
          %v6998 = vshrl.u32 %v6997, 7
          %v6999 = vsub.s32 %v6996, %v6998
          %v7000 = vrot.slane %v6993, %v6999
          %v7001 = vcombine.low %v5955, %v5956
          %v7003 = vunpack.c.l.s4 1983009808
          %v7004 = vunpack.c.0.s8 %v7003
          %v7005 = vlaneseq
          %v7006 = vshrl.u32 %v7005, 7
          %v7007 = vsub.s32 %v7004, %v7006
          %v7008 = vrot.slane %v7001, %v7007
          %v7009 = vcombine.low %v6984, %v6992
          %v7010 = vcombine.high %v6984, %v6992
          %v7012 = vunpack.c.l.s4 1934713408
          %v7013 = vunpack.c.0.s8 %v7012
          %v7014 = vlaneseq
          %v7015 = vshrl.u32 %v7014, 7
          %v7016 = vsub.s32 %v7013, %v7015
          %v7017 = vrot.slane %v7009, %v7016
          %v7019 = vunpack.c.l.s4 1934713408
          %v7020 = vunpack.c.0.s8 %v7019
          %v7021 = vlaneseq
          %v7022 = vshrl.u32 %v7021, 7
          %v7023 = vsub.s32 %v7020, %v7022
          %v7024 = vrot.slane %v7010, %v7023
          %v7025 = vcombine.low %v7000, %v7008
          %v7026 = vcombine.high %v7000, %v7008
          %v7028 = vunpack.c.l.s4 1934713408
          %v7029 = vunpack.c.0.s8 %v7028
          %v7030 = vlaneseq
          %v7031 = vshrl.u32 %v7030, 7
          %v7032 = vsub.s32 %v7029, %v7031
          %v7033 = vrot.slane %v7025, %v7032
          %v7035 = vunpack.c.l.s4 1934713408
          %v7036 = vunpack.c.0.s8 %v7035
          %v7037 = vlaneseq
          %v7038 = vshrl.u32 %v7037, 7
          %v7039 = vsub.s32 %v7036, %v7038
          %v7040 = vrot.slane %v7026, %v7039
          %v7041 = vcombine.low %v7017, %v7033
          %v7042 = vcombine.high %v7017, %v7033
          %v7043 = vcombine.low %v7024, %v7040
          %v7044 = vcombine.high %v7024, %v7040
          %v7045 = vcombine.low %v5997, %v6004
          %v7047 = vunpack.c.l.s4 1983009808
          %v7048 = vunpack.c.0.s8 %v7047
          %v7049 = vlaneseq
          %v7050 = vshrl.u32 %v7049, 7
          %v7051 = vsub.s32 %v7048, %v7050
          %v7052 = vrot.slane %v7045, %v7051
          %v7053 = vcombine.low %v6021, %v6022
          %v7055 = vunpack.c.l.s4 1983009808
          %v7056 = vunpack.c.0.s8 %v7055
          %v7057 = vlaneseq
          %v7058 = vshrl.u32 %v7057, 7
          %v7059 = vsub.s32 %v7056, %v7058
          %v7060 = vrot.slane %v7053, %v7059
          %v7061 = vcombine.low %v6013, %v6020
          %v7063 = vunpack.c.l.s4 1983009808
          %v7064 = vunpack.c.0.s8 %v7063
          %v7065 = vlaneseq
          %v7066 = vshrl.u32 %v7065, 7
          %v7067 = vsub.s32 %v7064, %v7066
          %v7068 = vrot.slane %v7061, %v7067
          %v7069 = vcombine.low %v6023, %v6024
          %v7071 = vunpack.c.l.s4 1983009808
          %v7072 = vunpack.c.0.s8 %v7071
          %v7073 = vlaneseq
          %v7074 = vshrl.u32 %v7073, 7
          %v7075 = vsub.s32 %v7072, %v7074
          %v7076 = vrot.slane %v7069, %v7075
          %v7077 = vcombine.low %v7052, %v7060
          %v7078 = vcombine.high %v7052, %v7060
          %v7080 = vunpack.c.l.s4 1934713408
          %v7081 = vunpack.c.0.s8 %v7080
          %v7082 = vlaneseq
          %v7083 = vshrl.u32 %v7082, 7
          %v7084 = vsub.s32 %v7081, %v7083
          %v7085 = vrot.slane %v7077, %v7084
          %v7087 = vunpack.c.l.s4 1934713408
          %v7088 = vunpack.c.0.s8 %v7087
          %v7089 = vlaneseq
          %v7090 = vshrl.u32 %v7089, 7
          %v7091 = vsub.s32 %v7088, %v7090
          %v7092 = vrot.slane %v7078, %v7091
          %v7093 = vcombine.low %v7068, %v7076
          %v7094 = vcombine.high %v7068, %v7076
          %v7096 = vunpack.c.l.s4 1934713408
          %v7097 = vunpack.c.0.s8 %v7096
          %v7098 = vlaneseq
          %v7099 = vshrl.u32 %v7098, 7
          %v7100 = vsub.s32 %v7097, %v7099
          %v7101 = vrot.slane %v7093, %v7100
          %v7103 = vunpack.c.l.s4 1934713408
          %v7104 = vunpack.c.0.s8 %v7103
          %v7105 = vlaneseq
          %v7106 = vshrl.u32 %v7105, 7
          %v7107 = vsub.s32 %v7104, %v7106
          %v7108 = vrot.slane %v7094, %v7107
          %v7109 = vcombine.low %v7085, %v7101
          %v7110 = vcombine.high %v7085, %v7101
          %v7111 = vcombine.low %v7092, %v7108
          %v7112 = vcombine.high %v7092, %v7108
          %v7113 = vcombine.low %v6065, %v6072
          %v7115 = vunpack.c.l.s4 1983009808
          %v7116 = vunpack.c.0.s8 %v7115
          %v7117 = vlaneseq
          %v7118 = vshrl.u32 %v7117, 7
          %v7119 = vsub.s32 %v7116, %v7118
          %v7120 = vrot.slane %v7113, %v7119
          %v7121 = vcombine.low %v6089, %v6090
          %v7123 = vunpack.c.l.s4 1983009808
          %v7124 = vunpack.c.0.s8 %v7123
          %v7125 = vlaneseq
          %v7126 = vshrl.u32 %v7125, 7
          %v7127 = vsub.s32 %v7124, %v7126
          %v7128 = vrot.slane %v7121, %v7127
          %v7129 = vcombine.low %v6081, %v6088
          %v7131 = vunpack.c.l.s4 1983009808
          %v7132 = vunpack.c.0.s8 %v7131
          %v7133 = vlaneseq
          %v7134 = vshrl.u32 %v7133, 7
          %v7135 = vsub.s32 %v7132, %v7134
          %v7136 = vrot.slane %v7129, %v7135
          %v7137 = vcombine.low %v6091, %v6092
          %v7139 = vunpack.c.l.s4 1983009808
          %v7140 = vunpack.c.0.s8 %v7139
          %v7141 = vlaneseq
          %v7142 = vshrl.u32 %v7141, 7
          %v7143 = vsub.s32 %v7140, %v7142
          %v7144 = vrot.slane %v7137, %v7143
          %v7145 = vcombine.low %v7120, %v7128
          %v7146 = vcombine.high %v7120, %v7128
          %v7148 = vunpack.c.l.s4 1934713408
          %v7149 = vunpack.c.0.s8 %v7148
          %v7150 = vlaneseq
          %v7151 = vshrl.u32 %v7150, 7
          %v7152 = vsub.s32 %v7149, %v7151
          %v7153 = vrot.slane %v7145, %v7152
          %v7155 = vunpack.c.l.s4 1934713408
          %v7156 = vunpack.c.0.s8 %v7155
          %v7157 = vlaneseq
          %v7158 = vshrl.u32 %v7157, 7
          %v7159 = vsub.s32 %v7156, %v7158
          %v7160 = vrot.slane %v7146, %v7159
          %v7161 = vcombine.low %v7136, %v7144
          %v7162 = vcombine.high %v7136, %v7144
          %v7164 = vunpack.c.l.s4 1934713408
          %v7165 = vunpack.c.0.s8 %v7164
          %v7166 = vlaneseq
          %v7167 = vshrl.u32 %v7166, 7
          %v7168 = vsub.s32 %v7165, %v7167
          %v7169 = vrot.slane %v7161, %v7168
          %v7171 = vunpack.c.l.s4 1934713408
          %v7172 = vunpack.c.0.s8 %v7171
          %v7173 = vlaneseq
          %v7174 = vshrl.u32 %v7173, 7
          %v7175 = vsub.s32 %v7172, %v7174
          %v7176 = vrot.slane %v7162, %v7175
          %v7177 = vcombine.low %v7153, %v7169
          %v7178 = vcombine.high %v7153, %v7169
          %v7179 = vcombine.low %v7160, %v7176
          %v7180 = vcombine.high %v7160, %v7176
          %v7181 = vcombine.low %v6133, %v6140
          %v7183 = vunpack.c.l.s4 1983009808
          %v7184 = vunpack.c.0.s8 %v7183
          %v7185 = vlaneseq
          %v7186 = vshrl.u32 %v7185, 7
          %v7187 = vsub.s32 %v7184, %v7186
          %v7188 = vrot.slane %v7181, %v7187
          %v7189 = vcombine.low %v6157, %v6158
          %v7191 = vunpack.c.l.s4 1983009808
          %v7192 = vunpack.c.0.s8 %v7191
          %v7193 = vlaneseq
          %v7194 = vshrl.u32 %v7193, 7
          %v7195 = vsub.s32 %v7192, %v7194
          %v7196 = vrot.slane %v7189, %v7195
          %v7197 = vcombine.low %v6149, %v6156
          %v7199 = vunpack.c.l.s4 1983009808
          %v7200 = vunpack.c.0.s8 %v7199
          %v7201 = vlaneseq
          %v7202 = vshrl.u32 %v7201, 7
          %v7203 = vsub.s32 %v7200, %v7202
          %v7204 = vrot.slane %v7197, %v7203
          %v7205 = vcombine.low %v6159, %v6160
          %v7207 = vunpack.c.l.s4 1983009808
          %v7208 = vunpack.c.0.s8 %v7207
          %v7209 = vlaneseq
          %v7210 = vshrl.u32 %v7209, 7
          %v7211 = vsub.s32 %v7208, %v7210
          %v7212 = vrot.slane %v7205, %v7211
          %v7213 = vcombine.low %v7188, %v7196
          %v7214 = vcombine.high %v7188, %v7196
          %v7216 = vunpack.c.l.s4 1934713408
          %v7217 = vunpack.c.0.s8 %v7216
          %v7218 = vlaneseq
          %v7219 = vshrl.u32 %v7218, 7
          %v7220 = vsub.s32 %v7217, %v7219
          %v7221 = vrot.slane %v7213, %v7220
          %v7223 = vunpack.c.l.s4 1934713408
          %v7224 = vunpack.c.0.s8 %v7223
          %v7225 = vlaneseq
          %v7226 = vshrl.u32 %v7225, 7
          %v7227 = vsub.s32 %v7224, %v7226
          %v7228 = vrot.slane %v7214, %v7227
          %v7229 = vcombine.low %v7204, %v7212
          %v7230 = vcombine.high %v7204, %v7212
          %v7232 = vunpack.c.l.s4 1934713408
          %v7233 = vunpack.c.0.s8 %v7232
          %v7234 = vlaneseq
          %v7235 = vshrl.u32 %v7234, 7
          %v7236 = vsub.s32 %v7233, %v7235
          %v7237 = vrot.slane %v7229, %v7236
          %v7239 = vunpack.c.l.s4 1934713408
          %v7240 = vunpack.c.0.s8 %v7239
          %v7241 = vlaneseq
          %v7242 = vshrl.u32 %v7241, 7
          %v7243 = vsub.s32 %v7240, %v7242
          %v7244 = vrot.slane %v7230, %v7243
          %v7245 = vcombine.low %v7221, %v7237
          %v7246 = vcombine.high %v7221, %v7237
          %v7247 = vcombine.low %v7228, %v7244
          %v7248 = vcombine.high %v7228, %v7244
          %v7249 = vcombine.low %v6201, %v6208
          %v7251 = vunpack.c.l.s4 1983009808
          %v7252 = vunpack.c.0.s8 %v7251
          %v7253 = vlaneseq
          %v7254 = vshrl.u32 %v7253, 7
          %v7255 = vsub.s32 %v7252, %v7254
          %v7256 = vrot.slane %v7249, %v7255
          %v7257 = vcombine.low %v6225, %v6226
          %v7259 = vunpack.c.l.s4 1983009808
          %v7260 = vunpack.c.0.s8 %v7259
          %v7261 = vlaneseq
          %v7262 = vshrl.u32 %v7261, 7
          %v7263 = vsub.s32 %v7260, %v7262
          %v7264 = vrot.slane %v7257, %v7263
          %v7265 = vcombine.low %v6217, %v6224
          %v7267 = vunpack.c.l.s4 1983009808
          %v7268 = vunpack.c.0.s8 %v7267
          %v7269 = vlaneseq
          %v7270 = vshrl.u32 %v7269, 7
          %v7271 = vsub.s32 %v7268, %v7270
          %v7272 = vrot.slane %v7265, %v7271
          %v7273 = vcombine.low %v6227, %v6228
          %v7275 = vunpack.c.l.s4 1983009808
          %v7276 = vunpack.c.0.s8 %v7275
          %v7277 = vlaneseq
          %v7278 = vshrl.u32 %v7277, 7
          %v7279 = vsub.s32 %v7276, %v7278
          %v7280 = vrot.slane %v7273, %v7279
          %v7281 = vcombine.low %v7256, %v7264
          %v7282 = vcombine.high %v7256, %v7264
          %v7284 = vunpack.c.l.s4 1934713408
          %v7285 = vunpack.c.0.s8 %v7284
          %v7286 = vlaneseq
          %v7287 = vshrl.u32 %v7286, 7
          %v7288 = vsub.s32 %v7285, %v7287
          %v7289 = vrot.slane %v7281, %v7288
          %v7291 = vunpack.c.l.s4 1934713408
          %v7292 = vunpack.c.0.s8 %v7291
          %v7293 = vlaneseq
          %v7294 = vshrl.u32 %v7293, 7
          %v7295 = vsub.s32 %v7292, %v7294
          %v7296 = vrot.slane %v7282, %v7295
          %v7297 = vcombine.low %v7272, %v7280
          %v7298 = vcombine.high %v7272, %v7280
          %v7300 = vunpack.c.l.s4 1934713408
          %v7301 = vunpack.c.0.s8 %v7300
          %v7302 = vlaneseq
          %v7303 = vshrl.u32 %v7302, 7
          %v7304 = vsub.s32 %v7301, %v7303
          %v7305 = vrot.slane %v7297, %v7304
          %v7307 = vunpack.c.l.s4 1934713408
          %v7308 = vunpack.c.0.s8 %v7307
          %v7309 = vlaneseq
          %v7310 = vshrl.u32 %v7309, 7
          %v7311 = vsub.s32 %v7308, %v7310
          %v7312 = vrot.slane %v7298, %v7311
          %v7313 = vcombine.low %v7289, %v7305
          %v7314 = vcombine.high %v7289, %v7305
          %v7315 = vcombine.low %v7296, %v7312
          %v7316 = vcombine.high %v7296, %v7312
          %v7317 = vcombine.low %v6269, %v6276
          %v7319 = vunpack.c.l.s4 1983009808
          %v7320 = vunpack.c.0.s8 %v7319
          %v7321 = vlaneseq
          %v7322 = vshrl.u32 %v7321, 7
          %v7323 = vsub.s32 %v7320, %v7322
          %v7324 = vrot.slane %v7317, %v7323
          %v7325 = vcombine.low %v6293, %v6294
          %v7327 = vunpack.c.l.s4 1983009808
          %v7328 = vunpack.c.0.s8 %v7327
          %v7329 = vlaneseq
          %v7330 = vshrl.u32 %v7329, 7
          %v7331 = vsub.s32 %v7328, %v7330
          %v7332 = vrot.slane %v7325, %v7331
          %v7333 = vcombine.low %v6285, %v6292
          %v7335 = vunpack.c.l.s4 1983009808
          %v7336 = vunpack.c.0.s8 %v7335
          %v7337 = vlaneseq
          %v7338 = vshrl.u32 %v7337, 7
          %v7339 = vsub.s32 %v7336, %v7338
          %v7340 = vrot.slane %v7333, %v7339
          %v7341 = vcombine.low %v6295, %v6296
          %v7343 = vunpack.c.l.s4 1983009808
          %v7344 = vunpack.c.0.s8 %v7343
          %v7345 = vlaneseq
          %v7346 = vshrl.u32 %v7345, 7
          %v7347 = vsub.s32 %v7344, %v7346
          %v7348 = vrot.slane %v7341, %v7347
          %v7349 = vcombine.low %v7324, %v7332
          %v7350 = vcombine.high %v7324, %v7332
          %v7352 = vunpack.c.l.s4 1934713408
          %v7353 = vunpack.c.0.s8 %v7352
          %v7354 = vlaneseq
          %v7355 = vshrl.u32 %v7354, 7
          %v7356 = vsub.s32 %v7353, %v7355
          %v7357 = vrot.slane %v7349, %v7356
          %v7359 = vunpack.c.l.s4 1934713408
          %v7360 = vunpack.c.0.s8 %v7359
          %v7361 = vlaneseq
          %v7362 = vshrl.u32 %v7361, 7
          %v7363 = vsub.s32 %v7360, %v7362
          %v7364 = vrot.slane %v7350, %v7363
          %v7365 = vcombine.low %v7340, %v7348
          %v7366 = vcombine.high %v7340, %v7348
          %v7368 = vunpack.c.l.s4 1934713408
          %v7369 = vunpack.c.0.s8 %v7368
          %v7370 = vlaneseq
          %v7371 = vshrl.u32 %v7370, 7
          %v7372 = vsub.s32 %v7369, %v7371
          %v7373 = vrot.slane %v7365, %v7372
          %v7375 = vunpack.c.l.s4 1934713408
          %v7376 = vunpack.c.0.s8 %v7375
          %v7377 = vlaneseq
          %v7378 = vshrl.u32 %v7377, 7
          %v7379 = vsub.s32 %v7376, %v7378
          %v7380 = vrot.slane %v7366, %v7379
          %v7381 = vcombine.low %v7357, %v7373
          %v7382 = vcombine.high %v7357, %v7373
          %v7383 = vcombine.low %v7364, %v7380
          %v7384 = vcombine.high %v7364, %v7380
          %v7385 = vcombine.low %v6337, %v6344
          %v7387 = vunpack.c.l.s4 1983009808
          %v7388 = vunpack.c.0.s8 %v7387
          %v7389 = vlaneseq
          %v7390 = vshrl.u32 %v7389, 7
          %v7391 = vsub.s32 %v7388, %v7390
          %v7392 = vrot.slane %v7385, %v7391
          %v7393 = vcombine.low %v6361, %v6362
          %v7395 = vunpack.c.l.s4 1983009808
          %v7396 = vunpack.c.0.s8 %v7395
          %v7397 = vlaneseq
          %v7398 = vshrl.u32 %v7397, 7
          %v7399 = vsub.s32 %v7396, %v7398
          %v7400 = vrot.slane %v7393, %v7399
          %v7401 = vcombine.low %v6353, %v6360
          %v7403 = vunpack.c.l.s4 1983009808
          %v7404 = vunpack.c.0.s8 %v7403
          %v7405 = vlaneseq
          %v7406 = vshrl.u32 %v7405, 7
          %v7407 = vsub.s32 %v7404, %v7406
          %v7408 = vrot.slane %v7401, %v7407
          %v7409 = vcombine.low %v6363, %v6364
          %v7411 = vunpack.c.l.s4 1983009808
          %v7412 = vunpack.c.0.s8 %v7411
          %v7413 = vlaneseq
          %v7414 = vshrl.u32 %v7413, 7
          %v7415 = vsub.s32 %v7412, %v7414
          %v7416 = vrot.slane %v7409, %v7415
          %v7417 = vcombine.low %v7392, %v7400
          %v7418 = vcombine.high %v7392, %v7400
          %v7420 = vunpack.c.l.s4 1934713408
          %v7421 = vunpack.c.0.s8 %v7420
          %v7422 = vlaneseq
          %v7423 = vshrl.u32 %v7422, 7
          %v7424 = vsub.s32 %v7421, %v7423
          %v7425 = vrot.slane %v7417, %v7424
          %v7427 = vunpack.c.l.s4 1934713408
          %v7428 = vunpack.c.0.s8 %v7427
          %v7429 = vlaneseq
          %v7430 = vshrl.u32 %v7429, 7
          %v7431 = vsub.s32 %v7428, %v7430
          %v7432 = vrot.slane %v7418, %v7431
          %v7433 = vcombine.low %v7408, %v7416
          %v7434 = vcombine.high %v7408, %v7416
          %v7436 = vunpack.c.l.s4 1934713408
          %v7437 = vunpack.c.0.s8 %v7436
          %v7438 = vlaneseq
          %v7439 = vshrl.u32 %v7438, 7
          %v7440 = vsub.s32 %v7437, %v7439
          %v7441 = vrot.slane %v7433, %v7440
          %v7443 = vunpack.c.l.s4 1934713408
          %v7444 = vunpack.c.0.s8 %v7443
          %v7445 = vlaneseq
          %v7446 = vshrl.u32 %v7445, 7
          %v7447 = vsub.s32 %v7444, %v7446
          %v7448 = vrot.slane %v7434, %v7447
          %v7449 = vcombine.low %v7425, %v7441
          %v7450 = vcombine.high %v7425, %v7441
          %v7451 = vcombine.low %v7432, %v7448
          %v7452 = vcombine.high %v7432, %v7448
          %v7453 = vcombine.low %v6405, %v6412
          %v7455 = vunpack.c.l.s4 1983009808
          %v7456 = vunpack.c.0.s8 %v7455
          %v7457 = vlaneseq
          %v7458 = vshrl.u32 %v7457, 7
          %v7459 = vsub.s32 %v7456, %v7458
          %v7460 = vrot.slane %v7453, %v7459
          %v7461 = vcombine.low %v6429, %v6430
          %v7463 = vunpack.c.l.s4 1983009808
          %v7464 = vunpack.c.0.s8 %v7463
          %v7465 = vlaneseq
          %v7466 = vshrl.u32 %v7465, 7
          %v7467 = vsub.s32 %v7464, %v7466
          %v7468 = vrot.slane %v7461, %v7467
          %v7469 = vcombine.low %v6421, %v6428
          %v7471 = vunpack.c.l.s4 1983009808
          %v7472 = vunpack.c.0.s8 %v7471
          %v7473 = vlaneseq
          %v7474 = vshrl.u32 %v7473, 7
          %v7475 = vsub.s32 %v7472, %v7474
          %v7476 = vrot.slane %v7469, %v7475
          %v7477 = vcombine.low %v6431, %v6432
          %v7479 = vunpack.c.l.s4 1983009808
          %v7480 = vunpack.c.0.s8 %v7479
          %v7481 = vlaneseq
          %v7482 = vshrl.u32 %v7481, 7
          %v7483 = vsub.s32 %v7480, %v7482
          %v7484 = vrot.slane %v7477, %v7483
          %v7485 = vcombine.low %v7460, %v7468
          %v7486 = vcombine.high %v7460, %v7468
          %v7488 = vunpack.c.l.s4 1934713408
          %v7489 = vunpack.c.0.s8 %v7488
          %v7490 = vlaneseq
          %v7491 = vshrl.u32 %v7490, 7
          %v7492 = vsub.s32 %v7489, %v7491
          %v7493 = vrot.slane %v7485, %v7492
          %v7495 = vunpack.c.l.s4 1934713408
          %v7496 = vunpack.c.0.s8 %v7495
          %v7497 = vlaneseq
          %v7498 = vshrl.u32 %v7497, 7
          %v7499 = vsub.s32 %v7496, %v7498
          %v7500 = vrot.slane %v7486, %v7499
          %v7501 = vcombine.low %v7476, %v7484
          %v7502 = vcombine.high %v7476, %v7484
          %v7504 = vunpack.c.l.s4 1934713408
          %v7505 = vunpack.c.0.s8 %v7504
          %v7506 = vlaneseq
          %v7507 = vshrl.u32 %v7506, 7
          %v7508 = vsub.s32 %v7505, %v7507
          %v7509 = vrot.slane %v7501, %v7508
          %v7511 = vunpack.c.l.s4 1934713408
          %v7512 = vunpack.c.0.s8 %v7511
          %v7513 = vlaneseq
          %v7514 = vshrl.u32 %v7513, 7
          %v7515 = vsub.s32 %v7512, %v7514
          %v7516 = vrot.slane %v7502, %v7515
          %v7517 = vcombine.low %v7493, %v7509
          %v7518 = vcombine.high %v7493, %v7509
          %v7519 = vcombine.low %v7500, %v7516
          %v7520 = vcombine.high %v7500, %v7516
          %v7521 = vcombine.low %v6473, %v6480
          %v7523 = vunpack.c.l.s4 1983009808
          %v7524 = vunpack.c.0.s8 %v7523
          %v7525 = vlaneseq
          %v7526 = vshrl.u32 %v7525, 7
          %v7527 = vsub.s32 %v7524, %v7526
          %v7528 = vrot.slane %v7521, %v7527
          %v7529 = vcombine.low %v6497, %v6498
          %v7531 = vunpack.c.l.s4 1983009808
          %v7532 = vunpack.c.0.s8 %v7531
          %v7533 = vlaneseq
          %v7534 = vshrl.u32 %v7533, 7
          %v7535 = vsub.s32 %v7532, %v7534
          %v7536 = vrot.slane %v7529, %v7535
          %v7537 = vcombine.low %v6489, %v6496
          %v7539 = vunpack.c.l.s4 1983009808
          %v7540 = vunpack.c.0.s8 %v7539
          %v7541 = vlaneseq
          %v7542 = vshrl.u32 %v7541, 7
          %v7543 = vsub.s32 %v7540, %v7542
          %v7544 = vrot.slane %v7537, %v7543
          %v7545 = vcombine.low %v6499, %v6500
          %v7547 = vunpack.c.l.s4 1983009808
          %v7548 = vunpack.c.0.s8 %v7547
          %v7549 = vlaneseq
          %v7550 = vshrl.u32 %v7549, 7
          %v7551 = vsub.s32 %v7548, %v7550
          %v7552 = vrot.slane %v7545, %v7551
          %v7553 = vcombine.low %v7528, %v7536
          %v7554 = vcombine.high %v7528, %v7536
          %v7556 = vunpack.c.l.s4 1934713408
          %v7557 = vunpack.c.0.s8 %v7556
          %v7558 = vlaneseq
          %v7559 = vshrl.u32 %v7558, 7
          %v7560 = vsub.s32 %v7557, %v7559
          %v7561 = vrot.slane %v7553, %v7560
          %v7563 = vunpack.c.l.s4 1934713408
          %v7564 = vunpack.c.0.s8 %v7563
          %v7565 = vlaneseq
          %v7566 = vshrl.u32 %v7565, 7
          %v7567 = vsub.s32 %v7564, %v7566
          %v7568 = vrot.slane %v7554, %v7567
          %v7569 = vcombine.low %v7544, %v7552
          %v7570 = vcombine.high %v7544, %v7552
          %v7572 = vunpack.c.l.s4 1934713408
          %v7573 = vunpack.c.0.s8 %v7572
          %v7574 = vlaneseq
          %v7575 = vshrl.u32 %v7574, 7
          %v7576 = vsub.s32 %v7573, %v7575
          %v7577 = vrot.slane %v7569, %v7576
          %v7579 = vunpack.c.l.s4 1934713408
          %v7580 = vunpack.c.0.s8 %v7579
          %v7581 = vlaneseq
          %v7582 = vshrl.u32 %v7581, 7
          %v7583 = vsub.s32 %v7580, %v7582
          %v7584 = vrot.slane %v7570, %v7583
          %v7585 = vcombine.low %v7561, %v7577
          %v7586 = vcombine.high %v7561, %v7577
          %v7587 = vcombine.low %v7568, %v7584
          %v7588 = vcombine.high %v7568, %v7584
          %v7589 = vcombine.low %v6541, %v6548
          %v7591 = vunpack.c.l.s4 1983009808
          %v7592 = vunpack.c.0.s8 %v7591
          %v7593 = vlaneseq
          %v7594 = vshrl.u32 %v7593, 7
          %v7595 = vsub.s32 %v7592, %v7594
          %v7596 = vrot.slane %v7589, %v7595
          %v7597 = vcombine.low %v6565, %v6566
          %v7599 = vunpack.c.l.s4 1983009808
          %v7600 = vunpack.c.0.s8 %v7599
          %v7601 = vlaneseq
          %v7602 = vshrl.u32 %v7601, 7
          %v7603 = vsub.s32 %v7600, %v7602
          %v7604 = vrot.slane %v7597, %v7603
          %v7605 = vcombine.low %v6557, %v6564
          %v7607 = vunpack.c.l.s4 1983009808
          %v7608 = vunpack.c.0.s8 %v7607
          %v7609 = vlaneseq
          %v7610 = vshrl.u32 %v7609, 7
          %v7611 = vsub.s32 %v7608, %v7610
          %v7612 = vrot.slane %v7605, %v7611
          %v7613 = vcombine.low %v6567, %v6568
          %v7615 = vunpack.c.l.s4 1983009808
          %v7616 = vunpack.c.0.s8 %v7615
          %v7617 = vlaneseq
          %v7618 = vshrl.u32 %v7617, 7
          %v7619 = vsub.s32 %v7616, %v7618
          %v7620 = vrot.slane %v7613, %v7619
          %v7621 = vcombine.low %v7596, %v7604
          %v7622 = vcombine.high %v7596, %v7604
          %v7624 = vunpack.c.l.s4 1934713408
          %v7625 = vunpack.c.0.s8 %v7624
          %v7626 = vlaneseq
          %v7627 = vshrl.u32 %v7626, 7
          %v7628 = vsub.s32 %v7625, %v7627
          %v7629 = vrot.slane %v7621, %v7628
          %v7631 = vunpack.c.l.s4 1934713408
          %v7632 = vunpack.c.0.s8 %v7631
          %v7633 = vlaneseq
          %v7634 = vshrl.u32 %v7633, 7
          %v7635 = vsub.s32 %v7632, %v7634
          %v7636 = vrot.slane %v7622, %v7635
          %v7637 = vcombine.low %v7612, %v7620
          %v7638 = vcombine.high %v7612, %v7620
          %v7640 = vunpack.c.l.s4 1934713408
          %v7641 = vunpack.c.0.s8 %v7640
          %v7642 = vlaneseq
          %v7643 = vshrl.u32 %v7642, 7
          %v7644 = vsub.s32 %v7641, %v7643
          %v7645 = vrot.slane %v7637, %v7644
          %v7647 = vunpack.c.l.s4 1934713408
          %v7648 = vunpack.c.0.s8 %v7647
          %v7649 = vlaneseq
          %v7650 = vshrl.u32 %v7649, 7
          %v7651 = vsub.s32 %v7648, %v7650
          %v7652 = vrot.slane %v7638, %v7651
          %v7653 = vcombine.low %v7629, %v7645
          %v7654 = vcombine.high %v7629, %v7645
          %v7655 = vcombine.low %v7636, %v7652
          %v7656 = vcombine.high %v7636, %v7652
          %v7657 = vcombine.low %v6609, %v6616
          %v7659 = vunpack.c.l.s4 1983009808
          %v7660 = vunpack.c.0.s8 %v7659
          %v7661 = vlaneseq
          %v7662 = vshrl.u32 %v7661, 7
          %v7663 = vsub.s32 %v7660, %v7662
          %v7664 = vrot.slane %v7657, %v7663
          %v7665 = vcombine.low %v6633, %v6634
          %v7667 = vunpack.c.l.s4 1983009808
          %v7668 = vunpack.c.0.s8 %v7667
          %v7669 = vlaneseq
          %v7670 = vshrl.u32 %v7669, 7
          %v7671 = vsub.s32 %v7668, %v7670
          %v7672 = vrot.slane %v7665, %v7671
          %v7673 = vcombine.low %v6625, %v6632
          %v7675 = vunpack.c.l.s4 1983009808
          %v7676 = vunpack.c.0.s8 %v7675
          %v7677 = vlaneseq
          %v7678 = vshrl.u32 %v7677, 7
          %v7679 = vsub.s32 %v7676, %v7678
          %v7680 = vrot.slane %v7673, %v7679
          %v7681 = vcombine.low %v6635, %v6636
          %v7683 = vunpack.c.l.s4 1983009808
          %v7684 = vunpack.c.0.s8 %v7683
          %v7685 = vlaneseq
          %v7686 = vshrl.u32 %v7685, 7
          %v7687 = vsub.s32 %v7684, %v7686
          %v7688 = vrot.slane %v7681, %v7687
          %v7689 = vcombine.low %v7664, %v7672
          %v7690 = vcombine.high %v7664, %v7672
          %v7692 = vunpack.c.l.s4 1934713408
          %v7693 = vunpack.c.0.s8 %v7692
          %v7694 = vlaneseq
          %v7695 = vshrl.u32 %v7694, 7
          %v7696 = vsub.s32 %v7693, %v7695
          %v7697 = vrot.slane %v7689, %v7696
          %v7699 = vunpack.c.l.s4 1934713408
          %v7700 = vunpack.c.0.s8 %v7699
          %v7701 = vlaneseq
          %v7702 = vshrl.u32 %v7701, 7
          %v7703 = vsub.s32 %v7700, %v7702
          %v7704 = vrot.slane %v7690, %v7703
          %v7705 = vcombine.low %v7680, %v7688
          %v7706 = vcombine.high %v7680, %v7688
          %v7708 = vunpack.c.l.s4 1934713408
          %v7709 = vunpack.c.0.s8 %v7708
          %v7710 = vlaneseq
          %v7711 = vshrl.u32 %v7710, 7
          %v7712 = vsub.s32 %v7709, %v7711
          %v7713 = vrot.slane %v7705, %v7712
          %v7715 = vunpack.c.l.s4 1934713408
          %v7716 = vunpack.c.0.s8 %v7715
          %v7717 = vlaneseq
          %v7718 = vshrl.u32 %v7717, 7
          %v7719 = vsub.s32 %v7716, %v7718
          %v7720 = vrot.slane %v7706, %v7719
          %v7721 = vcombine.low %v7697, %v7713
          %v7722 = vcombine.high %v7697, %v7713
          %v7723 = vcombine.low %v7704, %v7720
          %v7724 = vcombine.high %v7704, %v7720
          %v7725 = vcombine.low %v6677, %v6684
          %v7727 = vunpack.c.l.s4 1983009808
          %v7728 = vunpack.c.0.s8 %v7727
          %v7729 = vlaneseq
          %v7730 = vshrl.u32 %v7729, 7
          %v7731 = vsub.s32 %v7728, %v7730
          %v7732 = vrot.slane %v7725, %v7731
          %v7733 = vcombine.low %v6701, %v6702
          %v7735 = vunpack.c.l.s4 1983009808
          %v7736 = vunpack.c.0.s8 %v7735
          %v7737 = vlaneseq
          %v7738 = vshrl.u32 %v7737, 7
          %v7739 = vsub.s32 %v7736, %v7738
          %v7740 = vrot.slane %v7733, %v7739
          %v7741 = vcombine.low %v6693, %v6700
          %v7743 = vunpack.c.l.s4 1983009808
          %v7744 = vunpack.c.0.s8 %v7743
          %v7745 = vlaneseq
          %v7746 = vshrl.u32 %v7745, 7
          %v7747 = vsub.s32 %v7744, %v7746
          %v7748 = vrot.slane %v7741, %v7747
          %v7749 = vcombine.low %v6703, %v6704
          %v7751 = vunpack.c.l.s4 1983009808
          %v7752 = vunpack.c.0.s8 %v7751
          %v7753 = vlaneseq
          %v7754 = vshrl.u32 %v7753, 7
          %v7755 = vsub.s32 %v7752, %v7754
          %v7756 = vrot.slane %v7749, %v7755
          %v7757 = vcombine.low %v7732, %v7740
          %v7758 = vcombine.high %v7732, %v7740
          %v7760 = vunpack.c.l.s4 1934713408
          %v7761 = vunpack.c.0.s8 %v7760
          %v7762 = vlaneseq
          %v7763 = vshrl.u32 %v7762, 7
          %v7764 = vsub.s32 %v7761, %v7763
          %v7765 = vrot.slane %v7757, %v7764
          %v7767 = vunpack.c.l.s4 1934713408
          %v7768 = vunpack.c.0.s8 %v7767
          %v7769 = vlaneseq
          %v7770 = vshrl.u32 %v7769, 7
          %v7771 = vsub.s32 %v7768, %v7770
          %v7772 = vrot.slane %v7758, %v7771
          %v7773 = vcombine.low %v7748, %v7756
          %v7774 = vcombine.high %v7748, %v7756
          %v7776 = vunpack.c.l.s4 1934713408
          %v7777 = vunpack.c.0.s8 %v7776
          %v7778 = vlaneseq
          %v7779 = vshrl.u32 %v7778, 7
          %v7780 = vsub.s32 %v7777, %v7779
          %v7781 = vrot.slane %v7773, %v7780
          %v7783 = vunpack.c.l.s4 1934713408
          %v7784 = vunpack.c.0.s8 %v7783
          %v7785 = vlaneseq
          %v7786 = vshrl.u32 %v7785, 7
          %v7787 = vsub.s32 %v7784, %v7786
          %v7788 = vrot.slane %v7774, %v7787
          %v7789 = vcombine.low %v7765, %v7781
          %v7790 = vcombine.high %v7765, %v7781
          %v7791 = vcombine.low %v7772, %v7788
          %v7792 = vcombine.high %v7772, %v7788
          %7809 = vrot.lane.b32.xlu0 %v6770, 16
          %v7810 = vpop.permute.xlu0 %7809
          %7811 = vrot.lane.b32.xlu0 %v6838, 16
          %v7812 = vpop.permute.xlu0 %7811
          %7813 = vrot.lane.b32.xlu0 %v6906, 16
          %v7814 = vpop.permute.xlu0 %7813
          %7815 = vrot.lane.b32.xlu0 %v6974, 16
          %v7816 = vpop.permute.xlu0 %7815
          %7817 = vrot.lane.b32.xlu0 %v7042, 16
          %v7818 = vpop.permute.xlu0 %7817
          %7819 = vrot.lane.b32.xlu0 %v7110, 16
          %v7820 = vpop.permute.xlu0 %7819
          %7821 = vrot.lane.b32.xlu0 %v7178, 16
          %v7822 = vpop.permute.xlu0 %7821
          %7823 = vrot.lane.b32.xlu0 %v7246, 16
          %v7824 = vpop.permute.xlu0 %7823
          %7825 = vrot.lane.b32.xlu0 %v7314, 16
          %v7826 = vpop.permute.xlu0 %7825
          %7827 = vrot.lane.b32.xlu0 %v7382, 16
          %v7828 = vpop.permute.xlu0 %7827
          %7829 = vrot.lane.b32.xlu0 %v7450, 16
          %v7830 = vpop.permute.xlu0 %7829
          %7831 = vrot.lane.b32.xlu0 %v7518, 16
          %v7832 = vpop.permute.xlu0 %7831
          %7833 = vrot.lane.b32.xlu0 %v7586, 16
          %v7834 = vpop.permute.xlu0 %7833
          %7835 = vrot.lane.b32.xlu0 %v7654, 16
          %v7836 = vpop.permute.xlu0 %7835
          %7837 = vrot.lane.b32.xlu0 %v7722, 16
          %v7838 = vpop.permute.xlu0 %7837
          %7839 = vrot.lane.b32.xlu0 %v7790, 16
          %v7840 = vpop.permute.xlu0 %7839
          %7873 = vrot.lane.b32.xlu0 %v6771, 32
          %v7874 = vpop.permute.xlu0 %7873
          %7875 = vrot.lane.b32.xlu0 %v6839, 32
          %v7876 = vpop.permute.xlu0 %7875
          %7877 = vrot.lane.b32.xlu0 %v6907, 32
          %v7878 = vpop.permute.xlu0 %7877
          %7879 = vrot.lane.b32.xlu0 %v6975, 32
          %v7880 = vpop.permute.xlu0 %7879
          %7881 = vrot.lane.b32.xlu0 %v7043, 32
          %v7882 = vpop.permute.xlu0 %7881
          %7883 = vrot.lane.b32.xlu0 %v7111, 32
          %v7884 = vpop.permute.xlu0 %7883
          %7885 = vrot.lane.b32.xlu0 %v7179, 32
          %v7886 = vpop.permute.xlu0 %7885
          %7887 = vrot.lane.b32.xlu0 %v7247, 32
          %v7888 = vpop.permute.xlu0 %7887
          %7889 = vrot.lane.b32.xlu0 %v7315, 32
          %v7890 = vpop.permute.xlu0 %7889
          %7891 = vrot.lane.b32.xlu0 %v7383, 32
          %v7892 = vpop.permute.xlu0 %7891
          %7893 = vrot.lane.b32.xlu0 %v7451, 32
          %v7894 = vpop.permute.xlu0 %7893
          %7895 = vrot.lane.b32.xlu0 %v7519, 32
          %v7896 = vpop.permute.xlu0 %7895
          %7897 = vrot.lane.b32.xlu0 %v7587, 32
          %v7898 = vpop.permute.xlu0 %7897
          %7899 = vrot.lane.b32.xlu0 %v7655, 32
          %v7900 = vpop.permute.xlu0 %7899
          %7901 = vrot.lane.b32.xlu0 %v7723, 32
          %v7902 = vpop.permute.xlu0 %7901
          %7903 = vrot.lane.b32.xlu0 %v7791, 32
          %v7904 = vpop.permute.xlu0 %7903
          %7937 = vrot.lane.b32.xlu0 %v6772, 48
          %v7938 = vpop.permute.xlu0 %7937
          %7939 = vrot.lane.b32.xlu0 %v6840, 48
          %v7940 = vpop.permute.xlu0 %7939
          %7941 = vrot.lane.b32.xlu0 %v6908, 48
          %v7942 = vpop.permute.xlu0 %7941
          %7943 = vrot.lane.b32.xlu0 %v6976, 48
          %v7944 = vpop.permute.xlu0 %7943
          %7945 = vrot.lane.b32.xlu0 %v7044, 48
          %v7946 = vpop.permute.xlu0 %7945
          %7947 = vrot.lane.b32.xlu0 %v7112, 48
          %v7948 = vpop.permute.xlu0 %7947
          %7949 = vrot.lane.b32.xlu0 %v7180, 48
          %v7950 = vpop.permute.xlu0 %7949
          %7951 = vrot.lane.b32.xlu0 %v7248, 48
          %v7952 = vpop.permute.xlu0 %7951
          %7953 = vrot.lane.b32.xlu0 %v7316, 48
          %v7954 = vpop.permute.xlu0 %7953
          %7955 = vrot.lane.b32.xlu0 %v7384, 48
          %v7956 = vpop.permute.xlu0 %7955
          %7957 = vrot.lane.b32.xlu0 %v7452, 48
          %v7958 = vpop.permute.xlu0 %7957
          %7959 = vrot.lane.b32.xlu0 %v7520, 48
          %v7960 = vpop.permute.xlu0 %7959
          %7961 = vrot.lane.b32.xlu0 %v7588, 48
          %v7962 = vpop.permute.xlu0 %7961
          %7963 = vrot.lane.b32.xlu0 %v7656, 48
          %v7964 = vpop.permute.xlu0 %7963
          %7965 = vrot.lane.b32.xlu0 %v7724, 48
          %v7966 = vpop.permute.xlu0 %7965
          %7967 = vrot.lane.b32.xlu0 %v7792, 48
          %v7968 = vpop.permute.xlu0 %7967
          %v7985 = vsel %vm1443, %v6769, %v7810
          %v7986 = vsel %vm1443, %v6837, %v7812
          %v7987 = vsel %vm1443, %v6905, %v7814
          %v7988 = vsel %vm1443, %v6973, %v7816
          %v7989 = vsel %vm1443, %v7041, %v7818
          %v7990 = vsel %vm1443, %v7109, %v7820
          %v7991 = vsel %vm1443, %v7177, %v7822
          %v7992 = vsel %vm1443, %v7245, %v7824
          %v7993 = vsel %vm1443, %v7313, %v7826
          %v7994 = vsel %vm1443, %v7381, %v7828
          %v7995 = vsel %vm1443, %v7449, %v7830
          %v7996 = vsel %vm1443, %v7517, %v7832
          %v7997 = vsel %vm1443, %v7585, %v7834
          %v7998 = vsel %vm1443, %v7653, %v7836
          %v7999 = vsel %vm1443, %v7721, %v7838
          %v8000 = vsel %vm1443, %v7789, %v7840
          %vm8001 = vcmask 261120
          %v8002 = vsel %vm8001, %v7985, %v7874
          %v8003 = vsel %vm8001, %v7986, %v7876
          %v8004 = vsel %vm8001, %v7987, %v7878
          %v8005 = vsel %vm8001, %v7988, %v7880
          %v8006 = vsel %vm8001, %v7989, %v7882
          %v8007 = vsel %vm8001, %v7990, %v7884
          %v8008 = vsel %vm8001, %v7991, %v7886
          %v8009 = vsel %vm8001, %v7992, %v7888
          %v8010 = vsel %vm8001, %v7993, %v7890
          %v8011 = vsel %vm8001, %v7994, %v7892
          %v8012 = vsel %vm8001, %v7995, %v7894
          %v8013 = vsel %vm8001, %v7996, %v7896
          %v8014 = vsel %vm8001, %v7997, %v7898
          %v8015 = vsel %vm8001, %v7998, %v7900
          %v8016 = vsel %vm8001, %v7999, %v7902
          %v8017 = vsel %vm8001, %v8000, %v7904
          %vm8018 = vcmask 392192
          %v8019 = vsel %vm8018, %v8002, %v7938
          %v8020 = vsel %vm8018, %v8003, %v7940
          %v8021 = vsel %vm8018, %v8004, %v7942
          %v8022 = vsel %vm8018, %v8005, %v7944
          %v8023 = vsel %vm8018, %v8006, %v7946
          %v8024 = vsel %vm8018, %v8007, %v7948
          %v8025 = vsel %vm8018, %v8008, %v7950
          %v8026 = vsel %vm8018, %v8009, %v7952
          %v8027 = vsel %vm8018, %v8010, %v7954
          %v8028 = vsel %vm8018, %v8011, %v7956
          %v8029 = vsel %vm8018, %v8012, %v7958
          %v8030 = vsel %vm8018, %v8013, %v7960
          %v8031 = vsel %vm8018, %v8014, %v7962
          %v8032 = vsel %vm8018, %v8015, %v7964
          %v8033 = vsel %vm8018, %v8016, %v7966
          %v8034 = vsel %vm8018, %v8017, %v7968
          %vm8035 = vcmask 523264
          %8036 = vst.msk [vmem:[%s1115] sm:$0xff] %vm8035, %v8019
          %8037 = vst.msk [vmem:[%s1115 + $0x8] sm:$0xff] %vm8035, %v8020
          %8038 = vst.msk [vmem:[%s1115 + $0x10] sm:$0xff] %vm8035, %v8021
          %8039 = vst.msk [vmem:[%s1115 + $0x18] sm:$0xff] %vm8035, %v8022
          %8040 = vst.msk [vmem:[%s1115 + $0x20] sm:$0xff] %vm8035, %v8023
          %8041 = vst.msk [vmem:[%s1115 + $0x28] sm:$0xff] %vm8035, %v8024
          %8042 = vst.msk [vmem:[%s1115 + $0x30] sm:$0xff] %vm8035, %v8025
          %8043 = vst.msk [vmem:[%s1115 + $0x38] sm:$0xff] %vm8035, %v8026
          %8044 = vst.msk [vmem:[%s1115 + $0x40] sm:$0xff] %vm8035, %v8027
          %8045 = vst.msk [vmem:[%s1115 + $0x48] sm:$0xff] %vm8035, %v8028
          %8046 = vst.msk [vmem:[%s1115 + $0x50] sm:$0xff] %vm8035, %v8029
          %8047 = vst.msk [vmem:[%s1115 + $0x58] sm:$0xff] %vm8035, %v8030
          %8048 = vst.msk [vmem:[%s1115 + $0x60] sm:$0xff] %vm8035, %v8031
          %8049 = vst.msk [vmem:[%s1115 + $0x68] sm:$0xff] %vm8035, %v8032
          %8050 = vst.msk [vmem:[%s1115 + $0x70] sm:$0xff] %vm8035, %v8033
          %8051 = vst.msk [vmem:[%s1115 + $0x78] sm:$0xff] %vm8035, %v8034
        $region154: #{scaled_dot_product_attention.1} parent=133 // pred_fallthru
          _
        %s8052 = smul.u32 16, %s20
        %p8053 = scmp.lt.s32.totalorder %s19, 1
        %s8054 = scalar_select %p8053, %s19, 1
        %p8055 = scmp.lt.s32.totalorder %s8052, 31
        %s8056 = scalar_select %p8055, %s8052, 31
        %s8057 = smul.addr %s8054, 32
        %s8058 = sadd.s32 %s8056, %s8057
        %s8059 = smul.addr %s8058, 8
        %s8060 = scalar_lea.vmem %s3, %s8059
        // Predicated region
        $region155: #{scaled_dot_product_attention.1} parent=133 // pred_check
          %p8061 = pneg %p137
        $region156: #{scaled_dot_product_attention.1} parent=133 // pred_check_branch
          %8063 = sbr.rel (%p8061) target = $region158
        $region157: #{scaled_dot_product_attention.1} parent=133 // pred_region
          %s8064 = smul.u32 16, %s20
        $region158: #{scaled_dot_product_attention.1} parent=133 // pred_fallthru
          _
      $region134: #{scaled_dot_product_attention.1} parent=5 // pred_fallthru
        _
      %p8065 = scmp.le.s32.totalorder 2, %s9
      // Predicated region
      $region159: #{scaled_dot_product_attention.1} parent=5 // pred_check
        %p8066 = pneg %p8065
      $region160: #{scaled_dot_product_attention.1} parent=5 // pred_check_branch
        %8068 = sbr.rel (%p8066) target = $region162
      $region161: #{scaled_dot_product_attention.1} parent=5 // pred_region
        %s8069 = ssub.s32 %s9, 2
        // Predicated region
        $region163: #{scaled_dot_product_attention.1} parent=161 // pred_check
          %p8070 = pneg %p143
        $region164: #{scaled_dot_product_attention.1} parent=161 // pred_check_branch
          %8072 = sbr.rel (%p8070) target = $region166
        $region165: #{scaled_dot_product_attention.1} parent=161 // pred_region
          %s8073 = smul.u32 16, %s23
          %p8074 = scmp.lt.s32.totalorder %s22, 1
          %s8075 = scalar_select %p8074, %s22, 1
          %p8076 = scmp.lt.s32.totalorder %s8073, 31
          %s8077 = scalar_select %p8076, %s8073, 31
          %s8078 = smul.addr %s8075, 32
          %s8079 = sadd.s32 %s8077, %s8078
          %s8080 = smul.addr %s8079, 8
          %s8081 = scalar_lea.vmem %s3, %s8080
        $region166: #{scaled_dot_product_attention.1} parent=161 // pred_fallthru
          _
      $region162: #{scaled_dot_product_attention.1} parent=5 // pred_fallthru
        _
    $region6: #{scaled_dot_product_attention.1} parent=1 // loop_footer
      %s13 = sadd.s32 1, %s9
    $region7: #{scaled_dot_product_attention.1} parent=1 // loop_footer_branch
      %8 = sbr.rel target = $region3
    $region8: #{scaled_dot_product_attention.1} parent=1 // loop_exit
      _

</llo_original>
